<compile_context>
chip_gen: v7x
topology: tpu7x:2x2x1
jax: 0.10.0
libtpu: 0.0.40
codegen_flags: <defaults>
</compile_context>

<pallas_src>
import jax
import jax.numpy as jnp
from jax.experimental import pallas as pl
from jax.experimental.pallas import tpu as pltpu

INPUT_SIZE = 514
HIDDEN = 256
NUM_LAYERS = 3
LIN1_OUT = 256
LIN2_OUT = 25
OUT_PAD = 128                      # lane-dense padded head output (sliced to 25 in the wrapper)

PROJ_ROWS = 256                    # row tile for the hoisted input-projection matmul
MLP_ROWS = 1024                    # row tile for the MLP head
VMEM_LIMIT = 48 * 1024 * 1024      # stays under the 64 MiB physical VMEM on v7x


def _cparams(semantics):
    return pltpu.CompilerParams(dimension_semantics=semantics,
                                vmem_limit_bytes=VMEM_LIMIT)


def _choose_time_chunk(T, B, budget_bytes=8 * 1024 * 1024):
    """Largest divisor of T (<= 64) whose double-buffered chunk traffic fits the budget."""
    per_step = B * (2 * 4 * HIDDEN * 4 + 2 * HIDDEN * 2) * 2  # gates f32 + h out bf16, x2 buffers
    cap = max(1, min(64, budget_bytes // max(per_step, 1)))
    tc = 1
    for d in range(1, min(T, cap) + 1):
        if T % d == 0:
            tc = d
    return tc


# ---------------------------------------------------------------------------
# Hoisted input projections (both directions fused, biases folded in)
# ---------------------------------------------------------------------------
def _proj_in_kernel(x_ref, w_ref, b_ref, gf_ref, gb_ref):
    # x: (rt, 514) bf16, w: (514, 8H) bf16, b: (1, 8H) f32
    g = jnp.dot(x_ref[...], w_ref[...], preferred_element_type=jnp.float32) + b_ref[...]
    gf_ref[...] = g[:, :4 * HIDDEN]
    gb_ref[...] = g[:, 4 * HIDDEN:]


def proj_input(x2d, w_in, b_cat):
    N, din = x2d.shape
    rt = min(PROJ_ROWS, N)
    grid = (pl.cdiv(N, rt),)
    return pl.pallas_call(
        _proj_in_kernel,
        out_shape=(jax.ShapeDtypeStruct((N, 4 * HIDDEN), jnp.float32),
                   jax.ShapeDtypeStruct((N, 4 * HIDDEN), jnp.float32)),
        grid=grid,
        in_specs=[pl.BlockSpec((rt, din), lambda i: (i, 0)),
                  pl.BlockSpec((din, 8 * HIDDEN), lambda i: (0, 0)),
                  pl.BlockSpec((1, 8 * HIDDEN), lambda i: (0, 0))],
        out_specs=(pl.BlockSpec((rt, 4 * HIDDEN), lambda i: (i, 0)),
                   pl.BlockSpec((rt, 4 * HIDDEN), lambda i: (i, 0))),
        compiler_params=_cparams(("parallel",)),
    )(x2d, w_in, b_cat)


def _proj_hidden_kernel(hf_ref, hb_ref, wt_ref, wb_ref, b_ref, gf_ref, gb_ref):
    # hf/hb: (rt, H) bf16; wt/wb: (H, 8H) bf16 (top/bottom halves of both directions' W_ih^T)
    g = (jnp.dot(hf_ref[...], wt_ref[...], preferred_element_type=jnp.float32)
         + jnp.dot(hb_ref[...], wb_ref[...], preferred_element_type=jnp.float32)
         + b_ref[...])
    gf_ref[...] = g[:, :4 * HIDDEN]
    gb_ref[...] = g[:, 4 * HIDDEN:]


def proj_hidden(hf2d, hb2d, w_top, w_bot, b_cat):
    N = hf2d.shape[0]
    rt = min(PROJ_ROWS, N)
    grid = (pl.cdiv(N, rt),)
    return pl.pallas_call(
        _proj_hidden_kernel,
        out_shape=(jax.ShapeDtypeStruct((N, 4 * HIDDEN), jnp.float32),
                   jax.ShapeDtypeStruct((N, 4 * HIDDEN), jnp.float32)),
        grid=grid,
        in_specs=[pl.BlockSpec((rt, HIDDEN), lambda i: (i, 0)),
                  pl.BlockSpec((rt, HIDDEN), lambda i: (i, 0)),
                  pl.BlockSpec((HIDDEN, 8 * HIDDEN), lambda i: (0, 0)),
                  pl.BlockSpec((HIDDEN, 8 * HIDDEN), lambda i: (0, 0)),
                  pl.BlockSpec((1, 8 * HIDDEN), lambda i: (0, 0))],
        out_specs=(pl.BlockSpec((rt, 4 * HIDDEN), lambda i: (i, 0)),
                   pl.BlockSpec((rt, 4 * HIDDEN), lambda i: (i, 0))),
        compiler_params=_cparams(("parallel",)),
    )(hf2d, hb2d, w_top, w_bot, b_cat)


# ---------------------------------------------------------------------------
# Bidirectional recurrence kernel: only h @ W_hh remains in the time loop.
# Gridded over T-chunks; fwd reads chunk i, bwd reads chunk nT-1-i (no jnp.flip).
# Gate order follows PyTorch: i, f, g, o.
# ---------------------------------------------------------------------------
def _bilstm_kernel(gf_ref, gb_ref, whhf_ref, whhb_ref, hf_out_ref, hb_out_ref,
                   h_f, c_f, h_b, c_b):
    tc = gf_ref.shape[0]
    H = h_f.shape[1]

    @pl.when(pl.program_id(0) == 0)
    def _():
        h_f[...] = jnp.zeros_like(h_f)
        c_f[...] = jnp.zeros_like(c_f)
        h_b[...] = jnp.zeros_like(h_b)
        c_b[...] = jnp.zeros_like(c_b)

    def cell(gates, c_prev):
        i = jax.nn.sigmoid(gates[:, 0 * H:1 * H])
        f = jax.nn.sigmoid(gates[:, 1 * H:2 * H])
        g = jnp.tanh(gates[:, 2 * H:3 * H])
        o = jax.nn.sigmoid(gates[:, 3 * H:4 * H])
        c_new = f * c_prev + i * g
        h_new = o * jnp.tanh(c_new)
        return h_new, c_new

    @pl.loop(0, tc)
    def _(t):
        # forward direction (global time increasing)
        gates_f = gf_ref[t] + jnp.dot(h_f[...].astype(jnp.bfloat16), whhf_ref[...],
                                      preferred_element_type=jnp.float32)
        hf_new, cf_new = cell(gates_f, c_f[...])
        h_f[...] = hf_new
        c_f[...] = cf_new
        hf_out_ref[t] = hf_new.astype(hf_out_ref.dtype)

        # backward direction (global time decreasing; chunk indexed in reverse)
        tb = tc - 1 - t
        gates_b = gb_ref[tb] + jnp.dot(h_b[...].astype(jnp.bfloat16), whhb_ref[...],
                                       preferred_element_type=jnp.float32)
        hb_new, cb_new = cell(gates_b, c_b[...])
        h_b[...] = hb_new
        c_b[...] = cb_new
        hb_out_ref[tb] = hb_new.astype(hb_out_ref.dtype)


def bilstm_recurrence(gf, gb, whh_f, whh_b):
    """gf/gb: (T, B, 4H) f32 precomputed gates. Returns h_fwd, h_bwd: (T, B, H) bf16."""
    T, B, G = gf.shape
    H = whh_f.shape[0]
    tc = _choose_time_chunk(T, B)
    nT = T // tc
    return pl.pallas_call(
        _bilstm_kernel,
        out_shape=(jax.ShapeDtypeStruct((T, B, H), jnp.bfloat16),
                   jax.ShapeDtypeStruct((T, B, H), jnp.bfloat16)),
        grid=(nT,),
        in_specs=[pl.BlockSpec((tc, B, G), lambda i: (i, 0, 0)),
                  pl.BlockSpec((tc, B, G), lambda i: (nT - 1 - i, 0, 0)),
                  pl.BlockSpec((H, G), lambda i: (0, 0)),
                  pl.BlockSpec((H, G), lambda i: (0, 0))],
        out_specs=(pl.BlockSpec((tc, B, H), lambda i: (i, 0, 0)),
                   pl.BlockSpec((tc, B, H), lambda i: (nT - 1 - i, 0, 0))),
        scratch_shapes=[pltpu.VMEM((B, H), jnp.float32),
                        pltpu.VMEM((B, H), jnp.float32),
                        pltpu.VMEM((B, H), jnp.float32),
                        pltpu.VMEM((B, H), jnp.float32)],
        compiler_params=_cparams(("arbitrary",)),
    )(gf, gb, whh_f, whh_b)
    # TODO(synk): on v7x the two directions could also be split across the 2 TensorCores
    # via pl.core_map for an extra ~2x on the recurrence.


# ---------------------------------------------------------------------------
# Fused MLP head: ReLU([hf|hb] @ W1^T + b1) @ W2^T + b2, lane-dense padded output.
# ---------------------------------------------------------------------------
def _mlp_kernel(hf_ref, hb_ref, w1t_ref, w1b_ref, b1_ref, w2_ref, b2_ref, o_ref):
    z1 = (jnp.dot(hf_ref[...], w1t_ref[...], preferred_element_type=jnp.float32)
          + jnp.dot(hb_ref[...], w1b_ref[...], preferred_element_type=jnp.float32)
          + b1_ref[...])
    a = jnp.maximum(z1, 0.0)
    o_ref[...] = (jnp.dot(a.astype(jnp.bfloat16), w2_ref[...],
                          preferred_element_type=jnp.float32) + b2_ref[...])


def mlp_head(hf2d, hb2d, w1_top, w1_bot, b1, w2_pad, b2_pad):
    N = hf2d.shape[0]
    rt = min(MLP_ROWS, N)
    grid = (pl.cdiv(N, rt),)
    return pl.pallas_call(
        _mlp_kernel,
        out_shape=jax.ShapeDtypeStruct((N, OUT_PAD), jnp.float32),
        grid=grid,
        in_specs=[pl.BlockSpec((rt, HIDDEN), lambda i: (i, 0)),
                  pl.BlockSpec((rt, HIDDEN), lambda i: (i, 0)),
                  pl.BlockSpec((HIDDEN, LIN1_OUT), lambda i: (0, 0)),
                  pl.BlockSpec((HIDDEN, LIN1_OUT), lambda i: (0, 0)),
                  pl.BlockSpec((1, LIN1_OUT), lambda i: (0, 0)),
                  pl.BlockSpec((LIN1_OUT, OUT_PAD), lambda i: (0, 0)),
                  pl.BlockSpec((1, OUT_PAD), lambda i: (0, 0))],
        out_specs=pl.BlockSpec((rt, OUT_PAD), lambda i: (i, 0)),
        compiler_params=_cparams(("parallel",)),
    )(hf2d, hb2d, w1_top, w1_bot, b1, w2_pad, b2_pad)


# ---------------------------------------------------------------------------
# Parameter construction (mirrors the PyTorch module, then packs for the kernels)
# ---------------------------------------------------------------------------
def init_params(key):
    def uni(k, shape, s):
        return jax.random.uniform(k, shape, jnp.float32, -s, s)

    params = {"lstm": []}
    k_lstm = HIDDEN ** -0.5

    for layer in range(NUM_LAYERS):
        din = INPUT_SIZE if layer == 0 else 2 * HIDDEN
        raw = {}
        for d in ("f", "b"):
            key, k1, k2, k3, k4 = jax.random.split(key, 5)
            w_ih = uni(k1, (4 * HIDDEN, din), k_lstm)     # PyTorch weight_ih_l{k}(_reverse)
            w_hh = uni(k2, (4 * HIDDEN, HIDDEN), k_lstm)  # weight_hh
            b_ih = uni(k3, (4 * HIDDEN,), k_lstm)
            b_hh = uni(k4, (4 * HIDDEN,), k_lstm)
            raw[d] = (w_ih, w_hh, b_ih, b_hh)
        wif, whf, bif, bhf = raw["f"]
        wib, whb, bib, bhb = raw["b"]
        layer_p = {
            "whh_f": whf.T.astype(jnp.bfloat16),                         # (H, 4H)
            "whh_b": whb.T.astype(jnp.bfloat16),                         # (H, 4H)
            "b_cat": jnp.concatenate([bif + bhf, bib + bhb]).reshape(1, 8 * HIDDEN),
        }
        if layer == 0:
            layer_p["w_in"] = jnp.concatenate([wif.T, wib.T], axis=1).astype(jnp.bfloat16)  # (514, 8H)
        else:
            wif_t, wib_t = wif.T, wib.T                                  # (2H, 4H) each
            layer_p["w_top"] = jnp.concatenate([wif_t[:HIDDEN], wib_t[:HIDDEN]],
                                               axis=1).astype(jnp.bfloat16)   # (H, 8H)
            layer_p["w_bot"] = jnp.concatenate([wif_t[HIDDEN:], wib_t[HIDDEN:]],
                                               axis=1).astype(jnp.bfloat16)   # (H, 8H)
        params["lstm"].append(layer_p)

    key, k1, k2, k3, k4 = jax.random.split(key, 5)
    s1 = (2 * HIDDEN) ** -0.5
    s2 = LIN1_OUT ** -0.5
    w1 = uni(k1, (LIN1_OUT, 2 * HIDDEN), s1)   # linear1.weight
    b1 = uni(k2, (LIN1_OUT,), s1)
    w2 = uni(k3, (LIN2_OUT, LIN1_OUT), s2)     # linear2.weight
    b2 = uni(k4, (LIN2_OUT,), s2)

    w1_t = w1.T                                 # (512, 256)
    params["w1_top"] = w1_t[:HIDDEN].astype(jnp.bfloat16)
    params["w1_bot"] = w1_t[HIDDEN:].astype(jnp.bfloat16)
    params["b1"] = b1.reshape(1, LIN1_OUT)
    w2_pad = jnp.zeros((LIN1_OUT, OUT_PAD), jnp.float32).at[:, :LIN2_OUT].set(w2.T)
    params["w2"] = w2_pad.astype(jnp.bfloat16)
    params["b2"] = jnp.zeros((1, OUT_PAD), jnp.float32).at[:, :LIN2_OUT].set(b2)
    return params


# ---------------------------------------------------------------------------
# Full forward pass: A0 (B, T, 514) -> Z2 (B, T, 25)
# ---------------------------------------------------------------------------
@jax.jit
def acoustic_estimator_forward(A0, params):
    B, T, _ = A0.shape
    N = T * B
    # single layout change: batch-first -> time-major, cast to bf16 for the MXU
    x2d = jnp.transpose(A0, (1, 0, 2)).astype(jnp.bfloat16).reshape(N, INPUT_SIZE)

    hf = hb = None
    for layer in range(NUM_LAYERS):
        p = params["lstm"][layer]
        if layer == 0:
            gf2d, gb2d = proj_input(x2d, p["w_in"], p["b_cat"])
        else:
            gf2d, gb2d = proj_hidden(hf.reshape(N, HIDDEN), hb.reshape(N, HIDDEN),
                                     p["w_top"], p["w_bot"], p["b_cat"])
        gf = gf2d.reshape(T, B, 4 * HIDDEN)
        gb = gb2d.reshape(T, B, 4 * HIDDEN)
        hf, hb = bilstm_recurrence(gf, gb, p["whh_f"], p["whh_b"])   # (T, B, H) bf16 each

    z2 = mlp_head(hf.reshape(N, HIDDEN), hb.reshape(N, HIDDEN),
                  params["w1_top"], params["w1_bot"], params["b1"],
                  params["w2"], params["b2"])                        # (N, 128) f32, lane-dense
    z2 = z2[:, :LIN2_OUT].reshape(T, B, LIN2_OUT)
    return jnp.transpose(z2, (1, 0, 2))                              # (B, T, 25)


if __name__ == "__main__":
    key = jax.random.PRNGKey(0)
    key, pkey, xkey = jax.random.split(key, 3)

    params = init_params(pkey)

    B, T = 2, 8
    A0 = jax.random.normal(xkey, (B, T, INPUT_SIZE), jnp.float32)

    out = acoustic_estimator_forward(A0, params)
    out = jax.block_until_ready(out)
    assert out.shape == (B, T, LIN2_OUT), out.shape
    assert out.dtype == jnp.float32, out.dtype
    assert bool(jnp.all(jnp.isfinite(out)))
    print("KERNEL_OK")
</pallas_src>

<mosaic_0001>
module attributes {stable_mosaic.version = 11 : i64} {
  func.func @_proj_in_kernel(%arg0: i32, %arg1: memref<16x514xbf16, #tpu.memory_space<vmem>>, %arg2: memref<514x2048xbf16, #tpu.memory_space<vmem>>, %arg3: memref<1x2048xf32, #tpu.memory_space<vmem>>, %arg4: memref<16x1024xf32, #tpu.memory_space<vmem>>, %arg5: memref<16x1024xf32, #tpu.memory_space<vmem>>) attributes {dimension_semantics = [#tpu.dimension_semantics<parallel>], iteration_bounds = array<i64: 1>, scalar_prefetch = 0 : i64, scratch_operands = 0 : i64, tpu.core_type = #tpu.core_type<tc>, window_params = [{transform_indices = @transform_0, window_bounds = array<i64: 16, 514>}, {pipeline_mode = #tpu.pipeline_mode<synchronous>, transform_indices = @transform_1, window_bounds = array<i64: 514, 2048>}, {pipeline_mode = #tpu.pipeline_mode<synchronous>, transform_indices = @transform_2, window_bounds = array<i64: 1, 2048>}, {transform_indices = @transform_3, window_bounds = array<i64: 16, 1024>}, {transform_indices = @transform_4, window_bounds = array<i64: 16, 1024>}]} {
    %c0 = arith.constant 0 : index
    %c0_0 = arith.constant 0 : index
    %0 = vector.load %arg1[%c0, %c0_0] : memref<16x514xbf16, #tpu.memory_space<vmem>>, vector<16x514xbf16>
    %c0_1 = arith.constant 0 : index
    %c0_2 = arith.constant 0 : index
    %1 = vector.load %arg2[%c0_1, %c0_2] : memref<514x2048xbf16, #tpu.memory_space<vmem>>, vector<514x2048xbf16>
    %cst = arith.constant dense<0.000000e+00> : vector<16x2048xf32>
    %2 = tpu.matmul %0, %1, %cst {dimension_numbers = #tpu.dot_dimension_numbers<[1], [0], [0], [1], [0, 0, 1, 1], [], []>} : vector<16x514xbf16>, vector<514x2048xbf16>, vector<16x2048xf32> -> vector<16x2048xf32>
    %c0_3 = arith.constant 0 : index
    %c0_4 = arith.constant 0 : index
    %3 = vector.load %arg3[%c0_3, %c0_4] : memref<1x2048xf32, #tpu.memory_space<vmem>>, vector<1x2048xf32>
    %4 = vector.broadcast %3 : vector<1x2048xf32> to vector<16x2048xf32>
    %5 = arith.addf %2, %4 : vector<16x2048xf32>
    %6 = vector.extract_strided_slice %5 {offsets = [0, 0], sizes = [16, 1024], strides = [1, 1]} : vector<16x2048xf32> to vector<16x1024xf32>
    %c0_5 = arith.constant 0 : index
    %c0_6 = arith.constant 0 : index
    %7 = vector.load %arg4[%c0_5, %c0_6] : memref<16x1024xf32, #tpu.memory_space<vmem>>, vector<16x1024xf32>
    tpu.vector_store %arg4[%c0_5, %c0_6], %6 {strides = array<i32>} : memref<16x1024xf32, #tpu.memory_space<vmem>>, vector<16x1024xf32>,
    %8 = vector.extract_strided_slice %5 {offsets = [0, 1024], sizes = [16, 1024], strides = [1, 1]} : vector<16x2048xf32> to vector<16x1024xf32>
    %c0_7 = arith.constant 0 : index
    %c0_8 = arith.constant 0 : index
    %9 = vector.load %arg5[%c0_7, %c0_8] : memref<16x1024xf32, #tpu.memory_space<vmem>>, vector<16x1024xf32>
    tpu.vector_store %arg5[%c0_7, %c0_8], %8 {strides = array<i32>} : memref<16x1024xf32, #tpu.memory_space<vmem>>, vector<16x1024xf32>,
    return
  }
  func.func @transform_0(%arg0: i32) -> (i32, i32) {
    %c0_i32 = arith.constant 0 : i32
    %c0_i32_0 = arith.constant 0 : i32
    return %arg0, %c0_i32 : i32, i32
  }
  func.func @transform_1(%arg0: i32) -> (i32, i32) {
    %c0_i32 = arith.constant 0 : i32
    %c0_i32_0 = arith.constant 0 : i32
    %c0_i32_1 = arith.constant 0 : i32
    return %c0_i32, %c0_i32_0 : i32, i32
  }
  func.func @transform_2(%arg0: i32) -> (i32, i32) {
    %c0_i32 = arith.constant 0 : i32
    %c0_i32_0 = arith.constant 0 : i32
    %c0_i32_1 = arith.constant 0 : i32
    return %c0_i32, %c0_i32_0 : i32, i32
  }
  func.func @transform_3(%arg0: i32) -> (i32, i32) {
    %c0_i32 = arith.constant 0 : i32
    %c0_i32_0 = arith.constant 0 : i32
    return %arg0, %c0_i32 : i32, i32
  }
  func.func @transform_4(%arg0: i32) -> (i32, i32) {
    %c0_i32 = arith.constant 0 : i32
    %c0_i32_0 = arith.constant 0 : i32
    return %arg0, %c0_i32 : i32, i32
  }
}

module attributes {stable_mosaic.version = 11 : i64} {
  func.func @_proj_hidden_kernel(%arg0: i32, %arg1: memref<16x256xbf16, #tpu.memory_space<vmem>>, %arg2: memref<16x256xbf16, #tpu.memory_space<vmem>>, %arg3: memref<256x2048xbf16, #tpu.memory_space<vmem>>, %arg4: memref<256x2048xbf16, #tpu.memory_space<vmem>>, %arg5: memref<1x2048xf32, #tpu.memory_space<vmem>>, %arg6: memref<16x1024xf32, #tpu.memory_space<vmem>>, %arg7: memref<16x1024xf32, #tpu.memory_space<vmem>>) attributes {dimension_semantics = [#tpu.dimension_semantics<parallel>], iteration_bounds = array<i64: 1>, scalar_prefetch = 0 : i64, scratch_operands = 0 : i64, tpu.core_type = #tpu.core_type<tc>, window_params = [{transform_indices = @transform_0, window_bounds = array<i64: 16, 256>}, {transform_indices = @transform_1, window_bounds = array<i64: 16, 256>}, {pipeline_mode = #tpu.pipeline_mode<synchronous>, transform_indices = @transform_2, window_bounds = array<i64: 256, 2048>}, {pipeline_mode = #tpu.pipeline_mode<synchronous>, transform_indices = @transform_3, window_bounds = array<i64: 256, 2048>}, {pipeline_mode = #tpu.pipeline_mode<synchronous>, transform_indices = @transform_4, window_bounds = array<i64: 1, 2048>}, {transform_indices = @transform_5, window_bounds = array<i64: 16, 1024>}, {transform_indices = @transform_6, window_bounds = array<i64: 16, 1024>}]} {
    %c0 = arith.constant 0 : index
    %c0_0 = arith.constant 0 : index
    %0 = vector.load %arg1[%c0, %c0_0] : memref<16x256xbf16, #tpu.memory_space<vmem>>, vector<16x256xbf16>
    %c0_1 = arith.constant 0 : index
    %c0_2 = arith.constant 0 : index
    %1 = vector.load %arg3[%c0_1, %c0_2] : memref<256x2048xbf16, #tpu.memory_space<vmem>>, vector<256x2048xbf16>
    %cst = arith.constant dense<0.000000e+00> : vector<16x2048xf32>
    %2 = tpu.matmul %0, %1, %cst {dimension_numbers = #tpu.dot_dimension_numbers<[1], [0], [0], [1], [0, 0, 1, 1], [], []>} : vector<16x256xbf16>, vector<256x2048xbf16>, vector<16x2048xf32> -> vector<16x2048xf32>
    %c0_3 = arith.constant 0 : index
    %c0_4 = arith.constant 0 : index
    %3 = vector.load %arg2[%c0_3, %c0_4] : memref<16x256xbf16, #tpu.memory_space<vmem>>, vector<16x256xbf16>
    %c0_5 = arith.constant 0 : index
    %c0_6 = arith.constant 0 : index
    %4 = vector.load %arg4[%c0_5, %c0_6] : memref<256x2048xbf16, #tpu.memory_space<vmem>>, vector<256x2048xbf16>
    %cst_7 = arith.constant dense<0.000000e+00> : vector<16x2048xf32>
    %5 = tpu.matmul %3, %4, %cst_7 {dimension_numbers = #tpu.dot_dimension_numbers<[1], [0], [0], [1], [0, 0, 1, 1], [], []>} : vector<16x256xbf16>, vector<256x2048xbf16>, vector<16x2048xf32> -> vector<16x2048xf32>
    %6 = arith.addf %2, %5 : vector<16x2048xf32>
    %c0_8 = arith.constant 0 : index
    %c0_9 = arith.constant 0 : index
    %7 = vector.load %arg5[%c0_8, %c0_9] : memref<1x2048xf32, #tpu.memory_space<vmem>>, vector<1x2048xf32>
    %8 = vector.broadcast %7 : vector<1x2048xf32> to vector<16x2048xf32>
    %9 = arith.addf %6, %8 : vector<16x2048xf32>
    %10 = vector.extract_strided_slice %9 {offsets = [0, 0], sizes = [16, 1024], strides = [1, 1]} : vector<16x2048xf32> to vector<16x1024xf32>
    %c0_10 = arith.constant 0 : index
    %c0_11 = arith.constant 0 : index
    %11 = vector.load %arg6[%c0_10, %c0_11] : memref<16x1024xf32, #tpu.memory_space<vmem>>, vector<16x1024xf32>
    tpu.vector_store %arg6[%c0_10, %c0_11], %10 {strides = array<i32>} : memref<16x1024xf32, #tpu.memory_space<vmem>>, vector<16x1024xf32>,
    %12 = vector.extract_strided_slice %9 {offsets = [0, 1024], sizes = [16, 1024], strides = [1, 1]} : vector<16x2048xf32> to vector<16x1024xf32>
    %c0_12 = arith.constant 0 : index
    %c0_13 = arith.constant 0 : index
    %13 = vector.load %arg7[%c0_12, %c0_13] : memref<16x1024xf32, #tpu.memory_space<vmem>>, vector<16x1024xf32>
    tpu.vector_store %arg7[%c0_12, %c0_13], %12 {strides = array<i32>} : memref<16x1024xf32, #tpu.memory_space<vmem>>, vector<16x1024xf32>,
    return
  }
  func.func @transform_0(%arg0: i32) -> (i32, i32) {
    %c0_i32 = arith.constant 0 : i32
    %c0_i32_0 = arith.constant 0 : i32
    return %arg0, %c0_i32 : i32, i32
  }
  func.func @transform_1(%arg0: i32) -> (i32, i32) {
    %c0_i32 = arith.constant 0 : i32
    %c0_i32_0 = arith.constant 0 : i32
    return %arg0, %c0_i32 : i32, i32
  }
  func.func @transform_2(%arg0: i32) -> (i32, i32) {
    %c0_i32 = arith.constant 0 : i32
    %c0_i32_0 = arith.constant 0 : i32
    %c0_i32_1 = arith.constant 0 : i32
    return %c0_i32, %c0_i32_0 : i32, i32
  }
  func.func @transform_3(%arg0: i32) -> (i32, i32) {
    %c0_i32 = arith.constant 0 : i32
    %c0_i32_0 = arith.constant 0 : i32
    %c0_i32_1 = arith.constant 0 : i32
    return %c0_i32, %c0_i32_0 : i32, i32
  }
  func.func @transform_4(%arg0: i32) -> (i32, i32) {
    %c0_i32 = arith.constant 0 : i32
    %c0_i32_0 = arith.constant 0 : i32
    %c0_i32_1 = arith.constant 0 : i32
    return %c0_i32, %c0_i32_0 : i32, i32
  }
  func.func @transform_5(%arg0: i32) -> (i32, i32) {
    %c0_i32 = arith.constant 0 : i32
    %c0_i32_0 = arith.constant 0 : i32
    return %arg0, %c0_i32 : i32, i32
  }
  func.func @transform_6(%arg0: i32) -> (i32, i32) {
    %c0_i32 = arith.constant 0 : i32
    %c0_i32_0 = arith.constant 0 : i32
    return %arg0, %c0_i32 : i32, i32
  }
}

module attributes {stable_mosaic.version = 11 : i64} {
  func.func @_bilstm_kernel(%arg0: i32, %arg1: memref<8x2x1024xf32, #tpu.memory_space<vmem>>, %arg2: memref<8x2x1024xf32, #tpu.memory_space<vmem>>, %arg3: memref<256x1024xbf16, #tpu.memory_space<vmem>>, %arg4: memref<256x1024xbf16, #tpu.memory_space<vmem>>, %arg5: memref<8x2x256xbf16, #tpu.memory_space<vmem>>, %arg6: memref<8x2x256xbf16, #tpu.memory_space<vmem>>, %arg7: memref<2x256xf32, #tpu.memory_space<vmem>>, %arg8: memref<2x256xf32, #tpu.memory_space<vmem>>, %arg9: memref<2x256xf32, #tpu.memory_space<vmem>>, %arg10: memref<2x256xf32, #tpu.memory_space<vmem>>) attributes {dimension_semantics = [#tpu.dimension_semantics<arbitrary>], iteration_bounds = array<i64: 1>, scalar_prefetch = 0 : i64, scratch_operands = 4 : i64, tpu.core_type = #tpu.core_type<tc>, window_params = [{transform_indices = @transform_0, window_bounds = array<i64: 8, 2, 1024>}, {transform_indices = @transform_1, window_bounds = array<i64: 8, 2, 1024>}, {pipeline_mode = #tpu.pipeline_mode<synchronous>, transform_indices = @transform_2, window_bounds = array<i64: 256, 1024>}, {pipeline_mode = #tpu.pipeline_mode<synchronous>, transform_indices = @transform_3, window_bounds = array<i64: 256, 1024>}, {transform_indices = @transform_4, window_bounds = array<i64: 8, 2, 256>}, {transform_indices = @transform_5, window_bounds = array<i64: 8, 2, 256>}]} {
    %c0_i32 = arith.constant 0 : i32
    %0 = arith.cmpi eq, %arg0, %c0_i32 : i32
    %1 = arith.extui %0 : i1 to i32
    %c0_i32_0 = arith.constant 0 : i32
    %2 = arith.cmpi ne, %1, %c0_i32_0 : i32
    scf.if %2 {
      %cst = arith.constant 0.000000e+00 : f32
      %4 = vector.broadcast %cst : f32 to vector<2x256xf32>
      %c0 = arith.constant 0 : index
      %c0_3 = arith.constant 0 : index
      %5 = vector.load %arg7[%c0, %c0_3] : memref<2x256xf32, #tpu.memory_space<vmem>>, vector<2x256xf32>
      tpu.vector_store %arg7[%c0, %c0_3], %4 {strides = array<i32>} : memref<2x256xf32, #tpu.memory_space<vmem>>, vector<2x256xf32>,
      %cst_4 = arith.constant 0.000000e+00 : f32
      %6 = vector.broadcast %cst_4 : f32 to vector<2x256xf32>
      %c0_5 = arith.constant 0 : index
      %c0_6 = arith.constant 0 : index
      %7 = vector.load %arg8[%c0_5, %c0_6] : memref<2x256xf32, #tpu.memory_space<vmem>>, vector<2x256xf32>
      tpu.vector_store %arg8[%c0_5, %c0_6], %6 {strides = array<i32>} : memref<2x256xf32, #tpu.memory_space<vmem>>, vector<2x256xf32>,
      %cst_7 = arith.constant 0.000000e+00 : f32
      %8 = vector.broadcast %cst_7 : f32 to vector<2x256xf32>
      %c0_8 = arith.constant 0 : index
      %c0_9 = arith.constant 0 : index
      %9 = vector.load %arg9[%c0_8, %c0_9] : memref<2x256xf32, #tpu.memory_space<vmem>>, vector<2x256xf32>
      tpu.vector_store %arg9[%c0_8, %c0_9], %8 {strides = array<i32>} : memref<2x256xf32, #tpu.memory_space<vmem>>, vector<2x256xf32>,
      %cst_10 = arith.constant 0.000000e+00 : f32
      %10 = vector.broadcast %cst_10 : f32 to vector<2x256xf32>
      %c0_11 = arith.constant 0 : index
      %c0_12 = arith.constant 0 : index
      %11 = vector.load %arg10[%c0_11, %c0_12] : memref<2x256xf32, #tpu.memory_space<vmem>>, vector<2x256xf32>
      tpu.vector_store %arg10[%c0_11, %c0_12], %10 {strides = array<i32>} : memref<2x256xf32, #tpu.memory_space<vmem>>, vector<2x256xf32>,
    } else {
    }
    %c0_i32_1 = arith.constant 0 : i32
    %c8_i32 = arith.constant 8 : i32
    %3 = arith.addi %c0_i32_1, %c8_i32 : i32
    %c1_i32 = arith.constant 1 : i32
    scf.for %arg11 = %c0_i32_1 to %3 step %c1_i32  : i32 {
      %c1_i32_3 = arith.constant 1 : i32
      %4 = arith.muli %arg11, %c1_i32_3 : i32
      %c0_i32_4 = arith.constant 0 : i32
      %5 = arith.addi %c0_i32_4, %4 : i32
      %6 = arith.index_cast %5 : i32 to index
      %c0 = arith.constant 0 : index
      %c0_5 = arith.constant 0 : index
      %7 = vector.load %arg1[%6, %c0, %c0_5] : memref<8x2x1024xf32, #tpu.memory_space<vmem>>, vector<1x2x1024xf32>
      %8 = vector.shape_cast %7 : vector<1x2x1024xf32> to vector<2x1024xf32>
      %c0_6 = arith.constant 0 : index
      %c0_7 = arith.constant 0 : index
      %9 = vector.load %arg7[%c0_6, %c0_7] : memref<2x256xf32, #tpu.memory_space<vmem>>, vector<2x256xf32>
      %10 = arith.truncf %9 : vector<2x256xf32> to vector<2x256xbf16>
      %c0_8 = arith.constant 0 : index
      %c0_9 = arith.constant 0 : index
      %11 = vector.load %arg3[%c0_8, %c0_9] : memref<256x1024xbf16, #tpu.memory_space<vmem>>, vector<256x1024xbf16>
      %cst = arith.constant dense<0.000000e+00> : vector<2x1024xf32>
      %12 = tpu.matmul %10, %11, %cst {dimension_numbers = #tpu.dot_dimension_numbers<[1], [0], [0], [1], [0, 0, 1, 1], [], []>} : vector<2x256xbf16>, vector<256x1024xbf16>, vector<2x1024xf32> -> vector<2x1024xf32>
      %13 = arith.addf %8, %12 : vector<2x1024xf32>
      %c0_10 = arith.constant 0 : index
      %c0_11 = arith.constant 0 : index
      %14 = vector.load %arg8[%c0_10, %c0_11] : memref<2x256xf32, #tpu.memory_space<vmem>>, vector<2x256xf32>
      %15 = vector.extract_strided_slice %13 {offsets = [0, 0], sizes = [2, 256], strides = [1, 1]} : vector<2x1024xf32> to vector<2x256xf32>
      %16 = arith.negf %15 : vector<2x256xf32>
      %17 = math.exp %16 : vector<2x256xf32>
      %cst_12 = arith.constant 1.000000e+00 : f32
      %18 = vector.broadcast %cst_12 : f32 to vector<2x256xf32>
      %19 = arith.addf %18, %17 : vector<2x256xf32>
      %20 = arith.divf %18, %19 : vector<2x256xf32>
      %21 = vector.extract_strided_slice %13 {offsets = [0, 256], sizes = [2, 256], strides = [1, 1]} : vector<2x1024xf32> to vector<2x256xf32>
      %22 = arith.negf %21 : vector<2x256xf32>
      %23 = math.exp %22 : vector<2x256xf32>
      %cst_13 = arith.constant 1.000000e+00 : f32
      %24 = vector.broadcast %cst_13 : f32 to vector<2x256xf32>
      %25 = arith.addf %24, %23 : vector<2x256xf32>
      %26 = arith.divf %24, %25 : vector<2x256xf32>
      %27 = vector.extract_strided_slice %13 {offsets = [0, 512], sizes = [2, 256], strides = [1, 1]} : vector<2x1024xf32> to vector<2x256xf32>
      %28 = math.tanh %27 : vector<2x256xf32>
      %29 = vector.extract_strided_slice %13 {offsets = [0, 768], sizes = [2, 256], strides = [1, 1]} : vector<2x1024xf32> to vector<2x256xf32>
      %30 = arith.negf %29 : vector<2x256xf32>
      %31 = math.exp %30 : vector<2x256xf32>
      %cst_14 = arith.constant 1.000000e+00 : f32
      %32 = vector.broadcast %cst_14 : f32 to vector<2x256xf32>
      %33 = arith.addf %32, %31 : vector<2x256xf32>
      %34 = arith.divf %32, %33 : vector<2x256xf32>
      %35 = arith.mulf %26, %14 : vector<2x256xf32>
      %36 = arith.mulf %20, %28 : vector<2x256xf32>
      %37 = arith.addf %35, %36 : vector<2x256xf32>
      %38 = math.tanh %37 : vector<2x256xf32>
      %39 = arith.mulf %34, %38 : vector<2x256xf32>
      %c0_15 = arith.constant 0 : index
      %c0_16 = arith.constant 0 : index
      %40 = vector.load %arg7[%c0_15, %c0_16] : memref<2x256xf32, #tpu.memory_space<vmem>>, vector<2x256xf32>
      tpu.vector_store %arg7[%c0_15, %c0_16], %39 {strides = array<i32>} : memref<2x256xf32, #tpu.memory_space<vmem>>, vector<2x256xf32>,
      %c0_17 = arith.constant 0 : index
      %c0_18 = arith.constant 0 : index
      %41 = vector.load %arg8[%c0_17, %c0_18] : memref<2x256xf32, #tpu.memory_space<vmem>>, vector<2x256xf32>
      tpu.vector_store %arg8[%c0_17, %c0_18], %37 {strides = array<i32>} : memref<2x256xf32, #tpu.memory_space<vmem>>, vector<2x256xf32>,
      %42 = arith.truncf %39 : vector<2x256xf32> to vector<2x256xbf16>
      %43 = arith.index_cast %5 : i32 to index
      %c0_19 = arith.constant 0 : index
      %c0_20 = arith.constant 0 : index
      %44 = vector.load %arg5[%43, %c0_19, %c0_20] : memref<8x2x256xbf16, #tpu.memory_space<vmem>>, vector<1x2x256xbf16>
      %45 = vector.shape_cast %44 : vector<1x2x256xbf16> to vector<2x256xbf16>
      %46 = vector.shape_cast %42 : vector<2x256xbf16> to vector<1x2x256xbf16>
      tpu.vector_store %arg5[%43, %c0_19, %c0_20], %46 {strides = array<i32>} : memref<8x2x256xbf16, #tpu.memory_space<vmem>>, vector<1x2x256xbf16>,
      %c7_i32 = arith.constant 7 : i32
      %47 = arith.subi %c7_i32, %5 : i32
      %48 = arith.index_cast %47 : i32 to index
      %c0_21 = arith.constant 0 : index
      %c0_22 = arith.constant 0 : index
      %49 = vector.load %arg2[%48, %c0_21, %c0_22] : memref<8x2x1024xf32, #tpu.memory_space<vmem>>, vector<1x2x1024xf32>
      %50 = vector.shape_cast %49 : vector<1x2x1024xf32> to vector<2x1024xf32>
      %c0_23 = arith.constant 0 : index
      %c0_24 = arith.constant 0 : index
      %51 = vector.load %arg9[%c0_23, %c0_24] : memref<2x256xf32, #tpu.memory_space<vmem>>, vector<2x256xf32>
      %52 = arith.truncf %51 : vector<2x256xf32> to vector<2x256xbf16>
      %c0_25 = arith.constant 0 : index
      %c0_26 = arith.constant 0 : index
      %53 = vector.load %arg4[%c0_25, %c0_26] : memref<256x1024xbf16, #tpu.memory_space<vmem>>, vector<256x1024xbf16>
      %cst_27 = arith.constant dense<0.000000e+00> : vector<2x1024xf32>
      %54 = tpu.matmul %52, %53, %cst_27 {dimension_numbers = #tpu.dot_dimension_numbers<[1], [0], [0], [1], [0, 0, 1, 1], [], []>} : vector<2x256xbf16>, vector<256x1024xbf16>, vector<2x1024xf32> -> vector<2x1024xf32>
      %55 = arith.addf %50, %54 : vector<2x1024xf32>
      %c0_28 = arith.constant 0 : index
      %c0_29 = arith.constant 0 : index
      %56 = vector.load %arg10[%c0_28, %c0_29] : memref<2x256xf32, #tpu.memory_space<vmem>>, vector<2x256xf32>
      %57 = vector.extract_strided_slice %55 {offsets = [0, 0], sizes = [2, 256], strides = [1, 1]} : vector<2x1024xf32> to vector<2x256xf32>
      %58 = arith.negf %57 : vector<2x256xf32>
      %59 = math.exp %58 : vector<2x256xf32>
      %cst_30 = arith.constant 1.000000e+00 : f32
      %60 = vector.broadcast %cst_30 : f32 to vector<2x256xf32>
      %61 = arith.addf %60, %59 : vector<2x256xf32>
      %62 = arith.divf %60, %61 : vector<2x256xf32>
      %63 = vector.extract_strided_slice %55 {offsets = [0, 256], sizes = [2, 256], strides = [1, 1]} : vector<2x1024xf32> to vector<2x256xf32>
      %64 = arith.negf %63 : vector<2x256xf32>
      %65 = math.exp %64 : vector<2x256xf32>
      %cst_31 = arith.constant 1.000000e+00 : f32
      %66 = vector.broadcast %cst_31 : f32 to vector<2x256xf32>
      %67 = arith.addf %66, %65 : vector<2x256xf32>
      %68 = arith.divf %66, %67 : vector<2x256xf32>
      %69 = vector.extract_strided_slice %55 {offsets = [0, 512], sizes = [2, 256], strides = [1, 1]} : vector<2x1024xf32> to vector<2x256xf32>
      %70 = math.tanh %69 : vector<2x256xf32>
      %71 = vector.extract_strided_slice %55 {offsets = [0, 768], sizes = [2, 256], strides = [1, 1]} : vector<2x1024xf32> to vector<2x256xf32>
      %72 = arith.negf %71 : vector<2x256xf32>
      %73 = math.exp %72 : vector<2x256xf32>
      %cst_32 = arith.constant 1.000000e+00 : f32
      %74 = vector.broadcast %cst_32 : f32 to vector<2x256xf32>
      %75 = arith.addf %74, %73 : vector<2x256xf32>
      %76 = arith.divf %74, %75 : vector<2x256xf32>
      %77 = arith.mulf %68, %56 : vector<2x256xf32>
      %78 = arith.mulf %62, %70 : vector<2x256xf32>
      %79 = arith.addf %77, %78 : vector<2x256xf32>
      %80 = math.tanh %79 : vector<2x256xf32>
      %81 = arith.mulf %76, %80 : vector<2x256xf32>
      %c0_33 = arith.constant 0 : index
      %c0_34 = arith.constant 0 : index
      %82 = vector.load %arg9[%c0_33, %c0_34] : memref<2x256xf32, #tpu.memory_space<vmem>>, vector<2x256xf32>
      tpu.vector_store %arg9[%c0_33, %c0_34], %81 {strides = array<i32>} : memref<2x256xf32, #tpu.memory_space<vmem>>, vector<2x256xf32>,
      %c0_35 = arith.constant 0 : index
      %c0_36 = arith.constant 0 : index
      %83 = vector.load %arg10[%c0_35, %c0_36] : memref<2x256xf32, #tpu.memory_space<vmem>>, vector<2x256xf32>
      tpu.vector_store %arg10[%c0_35, %c0_36], %79 {strides = array<i32>} : memref<2x256xf32, #tpu.memory_space<vmem>>, vector<2x256xf32>,
      %84 = arith.truncf %81 : vector<2x256xf32> to vector<2x256xbf16>
      %85 = arith.index_cast %47 : i32 to index
      %c0_37 = arith.constant 0 : index
      %c0_38 = arith.constant 0 : index
      %86 = vector.load %arg6[%85, %c0_37, %c0_38] : memref<8x2x256xbf16, #tpu.memory_space<vmem>>, vector<1x2x256xbf16>
      %87 = vector.shape_cast %86 : vector<1x2x256xbf16> to vector<2x256xbf16>
      %88 = vector.shape_cast %84 : vector<2x256xbf16> to vector<1x2x256xbf16>
      tpu.vector_store %arg6[%85, %c0_37, %c0_38], %88 {strides = array<i32>} : memref<8x2x256xbf16, #tpu.memory_space<vmem>>, vector<1x2x256xbf16>,
    }
    %c8_i32_2 = arith.constant 8 : i32
    return
  }
  func.func @transform_0(%arg0: i32) -> (i32, i32, i32) {
    %c0_i32 = arith.constant 0 : i32
    %c0_i32_0 = arith.constant 0 : i32
    %c0_i32_1 = arith.constant 0 : i32
    return %arg0, %c0_i32, %c0_i32_0 : i32, i32, i32
  }
  func.func @transform_1(%arg0: i32) -> (i32, i32, i32) {
    %c0_i32 = arith.constant 0 : i32
    %0 = arith.subi %c0_i32, %arg0 : i32
    %c0_i32_0 = arith.constant 0 : i32
    %c0_i32_1 = arith.constant 0 : i32
    %c0_i32_2 = arith.constant 0 : i32
    return %0, %c0_i32_0, %c0_i32_1 : i32, i32, i32
  }
  func.func @transform_2(%arg0: i32) -> (i32, i32) {
    %c0_i32 = arith.constant 0 : i32
    %c0_i32_0 = arith.constant 0 : i32
    %c0_i32_1 = arith.constant 0 : i32
    return %c0_i32, %c0_i32_0 : i32, i32
  }
  func.func @transform_3(%arg0: i32) -> (i32, i32) {
    %c0_i32 = arith.constant 0 : i32
    %c0_i32_0 = arith.constant 0 : i32
    %c0_i32_1 = arith.constant 0 : i32
    return %c0_i32, %c0_i32_0 : i32, i32
  }
  func.func @transform_4(%arg0: i32) -> (i32, i32, i32) {
    %c0_i32 = arith.constant 0 : i32
    %c0_i32_0 = arith.constant 0 : i32
    %c0_i32_1 = arith.constant 0 : i32
    return %arg0, %c0_i32, %c0_i32_0 : i32, i32, i32
  }
  func.func @transform_5(%arg0: i32) -> (i32, i32, i32) {
    %c0_i32 = arith.constant 0 : i32
    %0 = arith.subi %c0_i32, %arg0 : i32
    %c0_i32_0 = arith.constant 0 : i32
    %c0_i32_1 = arith.constant 0 : i32
    %c0_i32_2 = arith.constant 0 : i32
    return %0, %c0_i32_0, %c0_i32_1 : i32, i32, i32
  }
}

module attributes {stable_mosaic.version = 11 : i64} {
  func.func @_bilstm_kernel(%arg0: i32, %arg1: memref<8x2x1024xf32, #tpu.memory_space<vmem>>, %arg2: memref<8x2x1024xf32, #tpu.memory_space<vmem>>, %arg3: memref<256x1024xbf16, #tpu.memory_space<vmem>>, %arg4: memref<256x1024xbf16, #tpu.memory_space<vmem>>, %arg5: memref<8x2x256xbf16, #tpu.memory_space<vmem>>, %arg6: memref<8x2x256xbf16, #tpu.memory_space<vmem>>, %arg7: memref<2x256xf32, #tpu.memory_space<vmem>>, %arg8: memref<2x256xf32, #tpu.memory_space<vmem>>, %arg9: memref<2x256xf32, #tpu.memory_space<vmem>>, %arg10: memref<2x256xf32, #tpu.memory_space<vmem>>) attributes {dimension_semantics = [#tpu.dimension_semantics<arbitrary>], iteration_bounds = array<i64: 1>, scalar_prefetch = 0 : i64, scratch_operands = 4 : i64, tpu.core_type = #tpu.core_type<tc>, window_params = [{transform_indices = @transform_0, window_bounds = array<i64: 8, 2, 1024>}, {transform_indices = @transform_1, window_bounds = array<i64: 8, 2, 1024>}, {pipeline_mode = #tpu.pipeline_mode<synchronous>, transform_indices = @transform_2, window_bounds = array<i64: 256, 1024>}, {pipeline_mode = #tpu.pipeline_mode<synchronous>, transform_indices = @transform_3, window_bounds = array<i64: 256, 1024>}, {transform_indices = @transform_4, window_bounds = array<i64: 8, 2, 256>}, {transform_indices = @transform_5, window_bounds = array<i64: 8, 2, 256>}]} {
    %c0_i32 = arith.constant 0 : i32
    %0 = arith.cmpi eq, %arg0, %c0_i32 : i32
    %1 = arith.extui %0 : i1 to i32
    %c0_i32_0 = arith.constant 0 : i32
    %2 = arith.cmpi ne, %1, %c0_i32_0 : i32
    scf.if %2 {
      %cst = arith.constant 0.000000e+00 : f32
      %4 = vector.broadcast %cst : f32 to vector<2x256xf32>
      %c0 = arith.constant 0 : index
      %c0_3 = arith.constant 0 : index
      %5 = vector.load %arg7[%c0, %c0_3] : memref<2x256xf32, #tpu.memory_space<vmem>>, vector<2x256xf32>
      tpu.vector_store %arg7[%c0, %c0_3], %4 {strides = array<i32>} : memref<2x256xf32, #tpu.memory_space<vmem>>, vector<2x256xf32>,
      %cst_4 = arith.constant 0.000000e+00 : f32
      %6 = vector.broadcast %cst_4 : f32 to vector<2x256xf32>
      %c0_5 = arith.constant 0 : index
      %c0_6 = arith.constant 0 : index
      %7 = vector.load %arg8[%c0_5, %c0_6] : memref<2x256xf32, #tpu.memory_space<vmem>>, vector<2x256xf32>
      tpu.vector_store %arg8[%c0_5, %c0_6], %6 {strides = array<i32>} : memref<2x256xf32, #tpu.memory_space<vmem>>, vector<2x256xf32>,
      %cst_7 = arith.constant 0.000000e+00 : f32
      %8 = vector.broadcast %cst_7 : f32 to vector<2x256xf32>
      %c0_8 = arith.constant 0 : index
      %c0_9 = arith.constant 0 : index
      %9 = vector.load %arg9[%c0_8, %c0_9] : memref<2x256xf32, #tpu.memory_space<vmem>>, vector<2x256xf32>
      tpu.vector_store %arg9[%c0_8, %c0_9], %8 {strides = array<i32>} : memref<2x256xf32, #tpu.memory_space<vmem>>, vector<2x256xf32>,
      %cst_10 = arith.constant 0.000000e+00 : f32
      %10 = vector.broadcast %cst_10 : f32 to vector<2x256xf32>
      %c0_11 = arith.constant 0 : index
      %c0_12 = arith.constant 0 : index
      %11 = vector.load %arg10[%c0_11, %c0_12] : memref<2x256xf32, #tpu.memory_space<vmem>>, vector<2x256xf32>
      tpu.vector_store %arg10[%c0_11, %c0_12], %10 {strides = array<i32>} : memref<2x256xf32, #tpu.memory_space<vmem>>, vector<2x256xf32>,
    } else {
    }
    %c0_i32_1 = arith.constant 0 : i32
    %c8_i32 = arith.constant 8 : i32
    %3 = arith.addi %c0_i32_1, %c8_i32 : i32
    %c1_i32 = arith.constant 1 : i32
    scf.for %arg11 = %c0_i32_1 to %3 step %c1_i32  : i32 {
      %c1_i32_3 = arith.constant 1 : i32
      %4 = arith.muli %arg11, %c1_i32_3 : i32
      %c0_i32_4 = arith.constant 0 : i32
      %5 = arith.addi %c0_i32_4, %4 : i32
      %6 = arith.index_cast %5 : i32 to index
      %c0 = arith.constant 0 : index
      %c0_5 = arith.constant 0 : index
      %7 = vector.load %arg1[%6, %c0, %c0_5] : memref<8x2x1024xf32, #tpu.memory_space<vmem>>, vector<1x2x1024xf32>
      %8 = vector.shape_cast %7 : vector<1x2x1024xf32> to vector<2x1024xf32>
      %c0_6 = arith.constant 0 : index
      %c0_7 = arith.constant 0 : index
      %9 = vector.load %arg7[%c0_6, %c0_7] : memref<2x256xf32, #tpu.memory_space<vmem>>, vector<2x256xf32>
      %10 = arith.truncf %9 : vector<2x256xf32> to vector<2x256xbf16>
      %c0_8 = arith.constant 0 : index
      %c0_9 = arith.constant 0 : index
      %11 = vector.load %arg3[%c0_8, %c0_9] : memref<256x1024xbf16, #tpu.memory_space<vmem>>, vector<256x1024xbf16>
      %cst = arith.constant dense<0.000000e+00> : vector<2x1024xf32>
      %12 = tpu.matmul %10, %11, %cst {dimension_numbers = #tpu.dot_dimension_numbers<[1], [0], [0], [1], [0, 0, 1, 1], [], []>} : vector<2x256xbf16>, vector<256x1024xbf16>, vector<2x1024xf32> -> vector<2x1024xf32>
      %13 = arith.addf %8, %12 : vector<2x1024xf32>
      %c0_10 = arith.constant 0 : index
      %c0_11 = arith.constant 0 : index
      %14 = vector.load %arg8[%c0_10, %c0_11] : memref<2x256xf32, #tpu.memory_space<vmem>>, vector<2x256xf32>
      %15 = vector.extract_strided_slice %13 {offsets = [0, 0], sizes = [2, 256], strides = [1, 1]} : vector<2x1024xf32> to vector<2x256xf32>
      %16 = arith.negf %15 : vector<2x256xf32>
      %17 = math.exp %16 : vector<2x256xf32>
      %cst_12 = arith.constant 1.000000e+00 : f32
      %18 = vector.broadcast %cst_12 : f32 to vector<2x256xf32>
      %19 = arith.addf %18, %17 : vector<2x256xf32>
      %20 = arith.divf %18, %19 : vector<2x256xf32>
      %21 = vector.extract_strided_slice %13 {offsets = [0, 256], sizes = [2, 256], strides = [1, 1]} : vector<2x1024xf32> to vector<2x256xf32>
      %22 = arith.negf %21 : vector<2x256xf32>
      %23 = math.exp %22 : vector<2x256xf32>
      %cst_13 = arith.constant 1.000000e+00 : f32
      %24 = vector.broadcast %cst_13 : f32 to vector<2x256xf32>
      %25 = arith.addf %24, %23 : vector<2x256xf32>
      %26 = arith.divf %24, %25 : vector<2x256xf32>
      %27 = vector.extract_strided_slice %13 {offsets = [0, 512], sizes = [2, 256], strides = [1, 1]} : vector<2x1024xf32> to vector<2x256xf32>
      %28 = math.tanh %27 : vector<2x256xf32>
      %29 = vector.extract_strided_slice %13 {offsets = [0, 768], sizes = [2, 256], strides = [1, 1]} : vector<2x1024xf32> to vector<2x256xf32>
      %30 = arith.negf %29 : vector<2x256xf32>
      %31 = math.exp %30 : vector<2x256xf32>
      %cst_14 = arith.constant 1.000000e+00 : f32
      %32 = vector.broadcast %cst_14 : f32 to vector<2x256xf32>
      %33 = arith.addf %32, %31 : vector<2x256xf32>
      %34 = arith.divf %32, %33 : vector<2x256xf32>
      %35 = arith.mulf %26, %14 : vector<2x256xf32>
      %36 = arith.mulf %20, %28 : vector<2x256xf32>
      %37 = arith.addf %35, %36 : vector<2x256xf32>
      %38 = math.tanh %37 : vector<2x256xf32>
      %39 = arith.mulf %34, %38 : vector<2x256xf32>
      %c0_15 = arith.constant 0 : index
      %c0_16 = arith.constant 0 : index
      %40 = vector.load %arg7[%c0_15, %c0_16] : memref<2x256xf32, #tpu.memory_space<vmem>>, vector<2x256xf32>
      tpu.vector_store %arg7[%c0_15, %c0_16], %39 {strides = array<i32>} : memref<2x256xf32, #tpu.memory_space<vmem>>, vector<2x256xf32>,
      %c0_17 = arith.constant 0 : index
      %c0_18 = arith.constant 0 : index
      %41 = vector.load %arg8[%c0_17, %c0_18] : memref<2x256xf32, #tpu.memory_space<vmem>>, vector<2x256xf32>
      tpu.vector_store %arg8[%c0_17, %c0_18], %37 {strides = array<i32>} : memref<2x256xf32, #tpu.memory_space<vmem>>, vector<2x256xf32>,
      %42 = arith.truncf %39 : vector<2x256xf32> to vector<2x256xbf16>
      %43 = arith.index_cast %5 : i32 to index
      %c0_19 = arith.constant 0 : index
      %c0_20 = arith.constant 0 : index
      %44 = vector.load %arg5[%43, %c0_19, %c0_20] : memref<8x2x256xbf16, #tpu.memory_space<vmem>>, vector<1x2x256xbf16>
      %45 = vector.shape_cast %44 : vector<1x2x256xbf16> to vector<2x256xbf16>
      %46 = vector.shape_cast %42 : vector<2x256xbf16> to vector<1x2x256xbf16>
      tpu.vector_store %arg5[%43, %c0_19, %c0_20], %46 {strides = array<i32>} : memref<8x2x256xbf16, #tpu.memory_space<vmem>>, vector<1x2x256xbf16>,
      %c7_i32 = arith.constant 7 : i32
      %47 = arith.subi %c7_i32, %5 : i32
      %48 = arith.index_cast %47 : i32 to index
      %c0_21 = arith.constant 0 : index
      %c0_22 = arith.constant 0 : index
      %49 = vector.load %arg2[%48, %c0_21, %c0_22] : memref<8x2x1024xf32, #tpu.memory_space<vmem>>, vector<1x2x1024xf32>
      %50 = vector.shape_cast %49 : vector<1x2x1024xf32> to vector<2x1024xf32>
      %c0_23 = arith.constant 0 : index
      %c0_24 = arith.constant 0 : index
      %51 = vector.load %arg9[%c0_23, %c0_24] : memref<2x256xf32, #tpu.memory_space<vmem>>, vector<2x256xf32>
      %52 = arith.truncf %51 : vector<2x256xf32> to vector<2x256xbf16>
      %c0_25 = arith.constant 0 : index
      %c0_26 = arith.constant 0 : index
      %53 = vector.load %arg4[%c0_25, %c0_26] : memref<256x1024xbf16, #tpu.memory_space<vmem>>, vector<256x1024xbf16>
      %cst_27 = arith.constant dense<0.000000e+00> : vector<2x1024xf32>
      %54 = tpu.matmul %52, %53, %cst_27 {dimension_numbers = #tpu.dot_dimension_numbers<[1], [0], [0], [1], [0, 0, 1, 1], [], []>} : vector<2x256xbf16>, vector<256x1024xbf16>, vector<2x1024xf32> -> vector<2x1024xf32>
      %55 = arith.addf %50, %54 : vector<2x1024xf32>
      %c0_28 = arith.constant 0 : index
      %c0_29 = arith.constant 0 : index
      %56 = vector.load %arg10[%c0_28, %c0_29] : memref<2x256xf32, #tpu.memory_space<vmem>>, vector<2x256xf32>
      %57 = vector.extract_strided_slice %55 {offsets = [0, 0], sizes = [2, 256], strides = [1, 1]} : vector<2x1024xf32> to vector<2x256xf32>
      %58 = arith.negf %57 : vector<2x256xf32>
      %59 = math.exp %58 : vector<2x256xf32>
      %cst_30 = arith.constant 1.000000e+00 : f32
      %60 = vector.broadcast %cst_30 : f32 to vector<2x256xf32>
      %61 = arith.addf %60, %59 : vector<2x256xf32>
      %62 = arith.divf %60, %61 : vector<2x256xf32>
      %63 = vector.extract_strided_slice %55 {offsets = [0, 256], sizes = [2, 256], strides = [1, 1]} : vector<2x1024xf32> to vector<2x256xf32>
      %64 = arith.negf %63 : vector<2x256xf32>
      %65 = math.exp %64 : vector<2x256xf32>
      %cst_31 = arith.constant 1.000000e+00 : f32
      %66 = vector.broadcast %cst_31 : f32 to vector<2x256xf32>
      %67 = arith.addf %66, %65 : vector<2x256xf32>
      %68 = arith.divf %66, %67 : vector<2x256xf32>
      %69 = vector.extract_strided_slice %55 {offsets = [0, 512], sizes = [2, 256], strides = [1, 1]} : vector<2x1024xf32> to vector<2x256xf32>
      %70 = math.tanh %69 : vector<2x256xf32>
      %71 = vector.extract_strided_slice %55 {offsets = [0, 768], sizes = [2, 256], strides = [1, 1]} : vector<2x1024xf32> to vector<2x256xf32>
      %72 = arith.negf %71 : vector<2x256xf32>
      %73 = math.exp %72 : vector<2x256xf32>
      %cst_32 = arith.constant 1.000000e+00 : f32
      %74 = vector.broadcast %cst_32 : f32 to vector<2x256xf32>
      %75 = arith.addf %74, %73 : vector<2x256xf32>
      %76 = arith.divf %74, %75 : vector<2x256xf32>
      %77 = arith.mulf %68, %56 : vector<2x256xf32>
      %78 = arith.mulf %62, %70 : vector<2x256xf32>
      %79 = arith.addf %77, %78 : vector<2x256xf32>
      %80 = math.tanh %79 : vector<2x256xf32>
      %81 = arith.mulf %76, %80 : vector<2x256xf32>
      %c0_33 = arith.constant 0 : index
      %c0_34 = arith.constant 0 : index
      %82 = vector.load %arg9[%c0_33, %c0_34] : memref<2x256xf32, #tpu.memory_space<vmem>>, vector<2x256xf32>
      tpu.vector_store %arg9[%c0_33, %c0_34], %81 {strides = array<i32>} : memref<2x256xf32, #tpu.memory_space<vmem>>, vector<2x256xf32>,
      %c0_35 = arith.constant 0 : index
      %c0_36 = arith.constant 0 : index
      %83 = vector.load %arg10[%c0_35, %c0_36] : memref<2x256xf32, #tpu.memory_space<vmem>>, vector<2x256xf32>
      tpu.vector_store %arg10[%c0_35, %c0_36], %79 {strides = array<i32>} : memref<2x256xf32, #tpu.memory_space<vmem>>, vector<2x256xf32>,
      %84 = arith.truncf %81 : vector<2x256xf32> to vector<2x256xbf16>
      %85 = arith.index_cast %47 : i32 to index
      %c0_37 = arith.constant 0 : index
      %c0_38 = arith.constant 0 : index
      %86 = vector.load %arg6[%85, %c0_37, %c0_38] : memref<8x2x256xbf16, #tpu.memory_space<vmem>>, vector<1x2x256xbf16>
      %87 = vector.shape_cast %86 : vector<1x2x256xbf16> to vector<2x256xbf16>
      %88 = vector.shape_cast %84 : vector<2x256xbf16> to vector<1x2x256xbf16>
      tpu.vector_store %arg6[%85, %c0_37, %c0_38], %88 {strides = array<i32>} : memref<8x2x256xbf16, #tpu.memory_space<vmem>>, vector<1x2x256xbf16>,
    }
    %c8_i32_2 = arith.constant 8 : i32
    return
  }
  func.func @transform_0(%arg0: i32) -> (i32, i32, i32) {
    %c0_i32 = arith.constant 0 : i32
    %c0_i32_0 = arith.constant 0 : i32
    %c0_i32_1 = arith.constant 0 : i32
    return %arg0, %c0_i32, %c0_i32_0 : i32, i32, i32
  }
  func.func @transform_1(%arg0: i32) -> (i32, i32, i32) {
    %c0_i32 = arith.constant 0 : i32
    %0 = arith.subi %c0_i32, %arg0 : i32
    %c0_i32_0 = arith.constant 0 : i32
    %c0_i32_1 = arith.constant 0 : i32
    %c0_i32_2 = arith.constant 0 : i32
    return %0, %c0_i32_0, %c0_i32_1 : i32, i32, i32
  }
  func.func @transform_2(%arg0: i32) -> (i32, i32) {
    %c0_i32 = arith.constant 0 : i32
    %c0_i32_0 = arith.constant 0 : i32
    %c0_i32_1 = arith.constant 0 : i32
    return %c0_i32, %c0_i32_0 : i32, i32
  }
  func.func @transform_3(%arg0: i32) -> (i32, i32) {
    %c0_i32 = arith.constant 0 : i32
    %c0_i32_0 = arith.constant 0 : i32
    %c0_i32_1 = arith.constant 0 : i32
    return %c0_i32, %c0_i32_0 : i32, i32
  }
  func.func @transform_4(%arg0: i32) -> (i32, i32, i32) {
    %c0_i32 = arith.constant 0 : i32
    %c0_i32_0 = arith.constant 0 : i32
    %c0_i32_1 = arith.constant 0 : i32
    return %arg0, %c0_i32, %c0_i32_0 : i32, i32, i32
  }
  func.func @transform_5(%arg0: i32) -> (i32, i32, i32) {
    %c0_i32 = arith.constant 0 : i32
    %0 = arith.subi %c0_i32, %arg0 : i32
    %c0_i32_0 = arith.constant 0 : i32
    %c0_i32_1 = arith.constant 0 : i32
    %c0_i32_2 = arith.constant 0 : i32
    return %0, %c0_i32_0, %c0_i32_1 : i32, i32, i32
  }
}

module attributes {stable_mosaic.version = 11 : i64} {
  func.func @_mlp_kernel(%arg0: i32, %arg1: memref<16x256xbf16, #tpu.memory_space<vmem>>, %arg2: memref<16x256xbf16, #tpu.memory_space<vmem>>, %arg3: memref<256x256xbf16, #tpu.memory_space<vmem>>, %arg4: memref<256x256xbf16, #tpu.memory_space<vmem>>, %arg5: memref<1x256xf32, #tpu.memory_space<vmem>>, %arg6: memref<256x128xbf16, #tpu.memory_space<vmem>>, %arg7: memref<1x128xf32, #tpu.memory_space<vmem>>, %arg8: memref<16x128xf32, #tpu.memory_space<vmem>>) attributes {dimension_semantics = [#tpu.dimension_semantics<parallel>], iteration_bounds = array<i64: 1>, scalar_prefetch = 0 : i64, scratch_operands = 0 : i64, tpu.core_type = #tpu.core_type<tc>, window_params = [{transform_indices = @transform_0, window_bounds = array<i64: 16, 256>}, {transform_indices = @transform_1, window_bounds = array<i64: 16, 256>}, {pipeline_mode = #tpu.pipeline_mode<synchronous>, transform_indices = @transform_2, window_bounds = array<i64: 256, 256>}, {pipeline_mode = #tpu.pipeline_mode<synchronous>, transform_indices = @transform_3, window_bounds = array<i64: 256, 256>}, {pipeline_mode = #tpu.pipeline_mode<synchronous>, transform_indices = @transform_4, window_bounds = array<i64: 1, 256>}, {pipeline_mode = #tpu.pipeline_mode<synchronous>, transform_indices = @transform_5, window_bounds = array<i64: 256, 128>}, {pipeline_mode = #tpu.pipeline_mode<synchronous>, transform_indices = @transform_6, window_bounds = array<i64: 1, 128>}, {transform_indices = @transform_7, window_bounds = array<i64: 16, 128>}]} {
    %c0 = arith.constant 0 : index
    %c0_0 = arith.constant 0 : index
    %0 = vector.load %arg1[%c0, %c0_0] : memref<16x256xbf16, #tpu.memory_space<vmem>>, vector<16x256xbf16>
    %c0_1 = arith.constant 0 : index
    %c0_2 = arith.constant 0 : index
    %1 = vector.load %arg3[%c0_1, %c0_2] : memref<256x256xbf16, #tpu.memory_space<vmem>>, vector<256x256xbf16>
    %cst = arith.constant dense<0.000000e+00> : vector<16x256xf32>
    %2 = tpu.matmul %0, %1, %cst {dimension_numbers = #tpu.dot_dimension_numbers<[1], [0], [0], [1], [0, 0, 1, 1], [], []>} : vector<16x256xbf16>, vector<256x256xbf16>, vector<16x256xf32> -> vector<16x256xf32>
    %c0_3 = arith.constant 0 : index
    %c0_4 = arith.constant 0 : index
    %3 = vector.load %arg2[%c0_3, %c0_4] : memref<16x256xbf16, #tpu.memory_space<vmem>>, vector<16x256xbf16>
    %c0_5 = arith.constant 0 : index
    %c0_6 = arith.constant 0 : index
    %4 = vector.load %arg4[%c0_5, %c0_6] : memref<256x256xbf16, #tpu.memory_space<vmem>>, vector<256x256xbf16>
    %cst_7 = arith.constant dense<0.000000e+00> : vector<16x256xf32>
    %5 = tpu.matmul %3, %4, %cst_7 {dimension_numbers = #tpu.dot_dimension_numbers<[1], [0], [0], [1], [0, 0, 1, 1], [], []>} : vector<16x256xbf16>, vector<256x256xbf16>, vector<16x256xf32> -> vector<16x256xf32>
    %6 = arith.addf %2, %5 : vector<16x256xf32>
    %c0_8 = arith.constant 0 : index
    %c0_9 = arith.constant 0 : index
    %7 = vector.load %arg5[%c0_8, %c0_9] : memref<1x256xf32, #tpu.memory_space<vmem>>, vector<1x256xf32>
    %8 = vector.broadcast %7 : vector<1x256xf32> to vector<16x256xf32>
    %9 = arith.addf %6, %8 : vector<16x256xf32>
    %cst_10 = arith.constant 0.000000e+00 : f32
    %10 = vector.broadcast %cst_10 : f32 to vector<16x256xf32>
    %11 = arith.maximumf %9, %10 : vector<16x256xf32>
    %12 = arith.truncf %11 : vector<16x256xf32> to vector<16x256xbf16>
    %c0_11 = arith.constant 0 : index
    %c0_12 = arith.constant 0 : index
    %13 = vector.load %arg6[%c0_11, %c0_12] : memref<256x128xbf16, #tpu.memory_space<vmem>>, vector<256x128xbf16>
    %cst_13 = arith.constant dense<0.000000e+00> : vector<16x128xf32>
    %14 = tpu.matmul %12, %13, %cst_13 {dimension_numbers = #tpu.dot_dimension_numbers<[1], [0], [0], [1], [0, 0, 1, 1], [], []>} : vector<16x256xbf16>, vector<256x128xbf16>, vector<16x128xf32> -> vector<16x128xf32>
    %c0_14 = arith.constant 0 : index
    %c0_15 = arith.constant 0 : index
    %15 = vector.load %arg7[%c0_14, %c0_15] : memref<1x128xf32, #tpu.memory_space<vmem>>, vector<1x128xf32>
    %16 = vector.broadcast %15 : vector<1x128xf32> to vector<16x128xf32>
    %17 = arith.addf %14, %16 : vector<16x128xf32>
    %c0_16 = arith.constant 0 : index
    %c0_17 = arith.constant 0 : index
    %18 = vector.load %arg8[%c0_16, %c0_17] : memref<16x128xf32, #tpu.memory_space<vmem>>, vector<16x128xf32>
    tpu.vector_store %arg8[%c0_16, %c0_17], %17 {strides = array<i32>} : memref<16x128xf32, #tpu.memory_space<vmem>>, vector<16x128xf32>,
    return
  }
  func.func @transform_0(%arg0: i32) -> (i32, i32) {
    %c0_i32 = arith.constant 0 : i32
    %c0_i32_0 = arith.constant 0 : i32
    return %arg0, %c0_i32 : i32, i32
  }
  func.func @transform_1(%arg0: i32) -> (i32, i32) {
    %c0_i32 = arith.constant 0 : i32
    %c0_i32_0 = arith.constant 0 : i32
    return %arg0, %c0_i32 : i32, i32
  }
  func.func @transform_2(%arg0: i32) -> (i32, i32) {
    %c0_i32 = arith.constant 0 : i32
    %c0_i32_0 = arith.constant 0 : i32
    %c0_i32_1 = arith.constant 0 : i32
    return %c0_i32, %c0_i32_0 : i32, i32
  }
  func.func @transform_3(%arg0: i32) -> (i32, i32) {
    %c0_i32 = arith.constant 0 : i32
    %c0_i32_0 = arith.constant 0 : i32
    %c0_i32_1 = arith.constant 0 : i32
    return %c0_i32, %c0_i32_0 : i32, i32
  }
  func.func @transform_4(%arg0: i32) -> (i32, i32) {
    %c0_i32 = arith.constant 0 : i32
    %c0_i32_0 = arith.constant 0 : i32
    %c0_i32_1 = arith.constant 0 : i32
    return %c0_i32, %c0_i32_0 : i32, i32
  }
  func.func @transform_5(%arg0: i32) -> (i32, i32) {
    %c0_i32 = arith.constant 0 : i32
    %c0_i32_0 = arith.constant 0 : i32
    %c0_i32_1 = arith.constant 0 : i32
    return %c0_i32, %c0_i32_0 : i32, i32
  }
  func.func @transform_6(%arg0: i32) -> (i32, i32) {
    %c0_i32 = arith.constant 0 : i32
    %c0_i32_0 = arith.constant 0 : i32
    %c0_i32_1 = arith.constant 0 : i32
    return %c0_i32, %c0_i32_0 : i32, i32
  }
  func.func @transform_7(%arg0: i32) -> (i32, i32) {
    %c0_i32 = arith.constant 0 : i32
    %c0_i32_0 = arith.constant 0 : i32
    return %arg0, %c0_i32 : i32, i32
  }
}

</mosaic_0001>

<llo_original>
// kernel: acoustic_estimator_forward.8
$region0: #{acoustic_estimator_forward.8}
  #allocation0 [shape = 'u32[]', space=smem, size = 0x4, offset = 0x4, fixed_abs, tag = 'smem constant byte address 0x4 - core index']
  #allocation1 [shape = 'u32[144,128]{1,0:T(1,128)}', space=vmem, size = 0x12000, scoped, tag = 'internal scratch']
  #allocation2 [shape = 'f32[2,256]{1,0:T(2,128)}', space=vmem, size = 0x800, scoped, tag = 'scratch operand']
  #allocation3 [shape = 'f32[2,256]{1,0:T(2,128)}', space=vmem, size = 0x800, scoped, tag = 'scratch operand']
  #allocation4 [shape = 'f32[2,256]{1,0:T(2,128)}', space=vmem, size = 0x800, scoped, tag = 'scratch operand']
  #allocation5 [shape = 'f32[2,256]{1,0:T(2,128)}', space=vmem, size = 0x800, scoped, tag = 'scratch operand']
  %s0 = inlined_call_operand.vmem [shape: f32[8,2,1024], index: 0, kind: input, shape index: {}]
  %s1 = inlined_call_operand.vmem [shape: f32[8,2,1024], index: 1, kind: input, shape index: {}]
  %s2 = inlined_call_operand.hbm [shape: bf16[256,1024], index: 2, kind: input, shape index: {}]
  %s3 = inlined_call_operand.hbm [shape: bf16[256,1024], index: 3, kind: input, shape index: {}]
  %s4 = inlined_call_operand.vmem [shape: bf16[8,2,256], index: 4, kind: output, shape index: {0}]
  %s5 = inlined_call_operand.vmem [shape: bf16[8,2,256], index: 5, kind: output, shape index: {1}]
  %6 = xla_tuple %s4, %s5
  %s7 = sld [smem:[#allocation0]]
  $region53: #{acoustic_estimator_forward.8} parent=0
    _
  %s9 = ssub.s32 1, %s7
  %s10 = scalar_select 0, %s9, %s7
  $region1: #{acoustic_estimator_forward.8} parent=0
    #allocation6 [shape = 'u8[524288]{0}', space=vmem, size = 0x80000, scoped, tag = 'input window, operand 2, single buffered']
    #allocation7 [shape = 's32[1]{0}', space=sflag, size = 0x4, scoped, tag = 'scoped memory for acoustic_estimator_forward.8']
    #allocation8 [shape = 'u8[524288]{0}', space=vmem, size = 0x80000, scoped, tag = 'input window, operand 3, single buffered']
    #allocation9 [shape = 's32[1]{0}', space=sflag, size = 0x4, scoped, tag = 'scoped memory for acoustic_estimator_forward.8']
    %11 = vsyncpa [#allocation7], 0
    %12 = vsyncpa [#allocation9], 0
    // Predicated region
    $region2: #{acoustic_estimator_forward.8} parent=1 // pred_check
      _
    $region3: #{acoustic_estimator_forward.8} parent=1 // pred_check_branch
      %14 = sbr.rel (0) target = $region5
    $region4: #{acoustic_estimator_forward.8} parent=1 // pred_region
      _
    $region5: #{acoustic_estimator_forward.8} parent=1 // pred_fallthru
      _
    // Predicated region
    $region6: #{acoustic_estimator_forward.8} parent=1 // pred_check
      _
    $region7: #{acoustic_estimator_forward.8} parent=1 // pred_check_branch
      %16 = sbr.rel (0) target = $region9
    $region8: #{acoustic_estimator_forward.8} parent=1 // pred_region
      %s17 = ssub.s32 0, 0
      %s18 = smul.u32 8, %s17
      %p19 = scmp.lt.s32.totalorder %s18, 7
      %s20 = scalar_select %p19, %s18, 7
      %s21 = smul.addr %s20, 8
      %s22 = smul.addr %s21, 2
      %s23 = scalar_lea.vmem %s1, %s22
      %s24 = ssub.s32 0, 0
      %s25 = smul.u32 8, %s24
    $region9: #{acoustic_estimator_forward.8} parent=1 // pred_fallthru
      _
    // Predicated region
    $region10: #{acoustic_estimator_forward.8} parent=1 // pred_check
      _
    $region11: #{acoustic_estimator_forward.8} parent=1 // pred_check_branch
      %27 = sbr.rel (0) target = $region13
    $region12: #{acoustic_estimator_forward.8} parent=1 // pred_region
      %s29 = ssub.s32 16384, 16384
      %30 = vsyncadd [#allocation7], %s29
      %s31 = sshll.u32 [#allocation6], 4
      %s32 = int_to_ptr.vmem [resolvable:$true] %s31
      %37 = dma.hbm_to_vmem [thread:$0]  %s2, 16384, %s32, [#allocation7], 512, 512, 32
    $region13: #{acoustic_estimator_forward.8} parent=1 // pred_fallthru
      _
    // Predicated region
    $region14: #{acoustic_estimator_forward.8} parent=1 // pred_check
      _
    $region15: #{acoustic_estimator_forward.8} parent=1 // pred_check_branch
      %39 = sbr.rel (0) target = $region17
    $region16: #{acoustic_estimator_forward.8} parent=1 // pred_region
      %s41 = ssub.s32 16384, 16384
      %42 = vsyncadd [#allocation9], %s41
      %s43 = sshll.u32 [#allocation8], 4
      %s44 = int_to_ptr.vmem [resolvable:$true] %s43
      %49 = dma.hbm_to_vmem [thread:$0]  %s3, 16384, %s44, [#allocation9], 512, 512, 32
    $region17: #{acoustic_estimator_forward.8} parent=1 // pred_fallthru
      _
    // Predicated region
    $region18: #{acoustic_estimator_forward.8} parent=1 // pred_check
      _
    $region19: #{acoustic_estimator_forward.8} parent=1 // pred_check_branch
      %51 = sbr.rel (0) target = $region21
    $region20: #{acoustic_estimator_forward.8} parent=1 // pred_region
      %52 = dma.done [#allocation7], 16384
    $region21: #{acoustic_estimator_forward.8} parent=1 // pred_fallthru
      _
    // Predicated region
    $region22: #{acoustic_estimator_forward.8} parent=1 // pred_check
      _
    $region23: #{acoustic_estimator_forward.8} parent=1 // pred_check_branch
      %54 = sbr.rel (0) target = $region25
    $region24: #{acoustic_estimator_forward.8} parent=1 // pred_region
      %55 = dma.done [#allocation9], 16384
    $region25: #{acoustic_estimator_forward.8} parent=1 // pred_fallthru
      _
    %s56 = ssub.s32 0, 0
    %s57 = smul.u32 8, %s56
    %p58 = scmp.lt.s32.totalorder %s57, 7
    %s59 = scalar_select %p58, %s57, 7
    %s60 = smul.addr %s59, 8
    %s61 = smul.addr %s60, 2
    %s62 = scalar_lea.vmem %s1, %s61
    %s63 = ssub.s32 0, 0
    %s64 = smul.u32 8, %s63
    %p65 = scmp.lt.s32.totalorder %s64, 7
    %s66 = scalar_select %p65, %s64, 7
    %s67 = smul.addr %s66, 2
    %s68 = scalar_lea.vmem %s5, %s67
    %s69 = ssub.s32 0, 0
    %s70 = smul.u32 8, %s69
    %p71 = scmp.lt.s32.totalorder %s70, 7
    %s72 = scalar_select %p71, %s70, 7
    %s73 = smul.addr %s72, 8
    %s74 = smul.addr %s73, 2
    %s75 = scalar_lea.vmem %s1, %s74
    %s76 = ssub.s32 0, 0
    %s77 = smul.u32 8, %s76
    %s78 = ssub.s32 0, 0
    %s79 = smul.u32 8, %s78
    %p80 = scmp.lt.s32.totalorder %s79, 7
    %s81 = scalar_select %p80, %s79, 7
    %s82 = smul.addr %s81, 2
    %s83 = scalar_lea.vmem %s5, %s82
    %s84 = ssub.s32 0, 0
    %s85 = smul.u32 8, %s84
    %p86 = scmp.eq.s32.totalorder 0, 0
    // Predicated region
    $region26: #{acoustic_estimator_forward.8} parent=1 // pred_check
      %p87 = pneg %p86
    $region27: #{acoustic_estimator_forward.8} parent=1 // pred_check_branch
      %89 = sbr.rel (%p87) target = $region29
    $region28: #{acoustic_estimator_forward.8} parent=1 // pred_region
      %90 = vst [vmem:[#allocation2] sm:$0xf] 0.0
      %91 = vst [vmem:[#allocation3] sm:$0xf] 0.0
      %92 = vst [vmem:[#allocation4] sm:$0xf] 0.0
      %93 = vst [vmem:[#allocation5] sm:$0xf] 0.0
    $region29: #{acoustic_estimator_forward.8} parent=1 // pred_fallthru
      _
    loop: start=0, step=1, limit=8
    $region30: #{acoustic_estimator_forward.8} parent=1 // loop_pre_header
      _
    $region31: #{acoustic_estimator_forward.8} parent=1 // loop_header
      %s95 = sphi 0, %s99
      %p96 = scmp.ge.s32.totalorder %s95, 8
    $region32: #{acoustic_estimator_forward.8} parent=1 // loop_header_branch
      %98 = sbr.rel (%p96) target = $region36
    $region33: #{acoustic_estimator_forward.8} parent=1 // loop_body
      %s100 = smul.u32 %s95, 8
      %s101 = smul.addr %s100, 2
      %s102 = scalar_lea.vmem %s0, %s101
      %v103 = vld [vmem:[%s102] sm:$0xff]
      %v104 = vld [vmem:[%s102 + $0x8] sm:$0xff]
      %v105 = vld [vmem:[#allocation2] sm:$0xf]
      %v108 = vunpack.c.l.s4 1983009808
      %v109 = vunpack.c.0.s8 %v108
      %v110 = vlaneseq
      %v111 = vshrl.u32 %v110, 7
      %v112 = vsub.s32 %v109, %v111
      %v113 = vrot.slane %v105, %v112
      %v114 = vcombine.high %v113, %v113
      %v117 = vpack.c.bf16 %v113, %v113
      %v118 = vpack.c.bf16 %v114, %v114
      %v119 = vld [vmem:[#allocation6] sm:$0xff]
      %v120 = vld [vmem:[#allocation6 + $0x8] sm:$0xff]
      %v121 = vld [vmem:[#allocation6 + $0x10] sm:$0xff]
      %v122 = vld [vmem:[#allocation6 + $0x18] sm:$0xff]
      %v123 = vld [vmem:[#allocation6 + $0x20] sm:$0xff]
      %v124 = vld [vmem:[#allocation6 + $0x28] sm:$0xff]
      %v125 = vld [vmem:[#allocation6 + $0x30] sm:$0xff]
      %v126 = vld [vmem:[#allocation6 + $0x38] sm:$0xff]
      %v127 = vld [vmem:[#allocation6 + $0x40] sm:$0xff]
      %v128 = vld [vmem:[#allocation6 + $0x48] sm:$0xff]
      %v129 = vld [vmem:[#allocation6 + $0x50] sm:$0xff]
      %v130 = vld [vmem:[#allocation6 + $0x58] sm:$0xff]
      %v131 = vld [vmem:[#allocation6 + $0x60] sm:$0xff]
      %v132 = vld [vmem:[#allocation6 + $0x68] sm:$0xff]
      %v133 = vld [vmem:[#allocation6 + $0x70] sm:$0xff]
      %v134 = vld [vmem:[#allocation6 + $0x78] sm:$0xff]
      %v135 = vld [vmem:[#allocation6 + $0x80] sm:$0xff]
      %v136 = vld [vmem:[#allocation6 + $0x88] sm:$0xff]
      %v137 = vld [vmem:[#allocation6 + $0x90] sm:$0xff]
      %v138 = vld [vmem:[#allocation6 + $0x98] sm:$0xff]
      %v139 = vld [vmem:[#allocation6 + $0xa0] sm:$0xff]
      %v140 = vld [vmem:[#allocation6 + $0xa8] sm:$0xff]
      %v141 = vld [vmem:[#allocation6 + $0xb0] sm:$0xff]
      %v142 = vld [vmem:[#allocation6 + $0xb8] sm:$0xff]
      %v143 = vld [vmem:[#allocation6 + $0xc0] sm:$0xff]
      %v144 = vld [vmem:[#allocation6 + $0xc8] sm:$0xff]
      %v145 = vld [vmem:[#allocation6 + $0xd0] sm:$0xff]
      %v146 = vld [vmem:[#allocation6 + $0xd8] sm:$0xff]
      %v147 = vld [vmem:[#allocation6 + $0xe0] sm:$0xff]
      %v148 = vld [vmem:[#allocation6 + $0xe8] sm:$0xff]
      %v149 = vld [vmem:[#allocation6 + $0xf0] sm:$0xff]
      %v150 = vld [vmem:[#allocation6 + $0xf8] sm:$0xff]
      %v151 = vld [vmem:[#allocation6 + $0x100] sm:$0xff]
      %v152 = vld [vmem:[#allocation6 + $0x108] sm:$0xff]
      %v153 = vld [vmem:[#allocation6 + $0x110] sm:$0xff]
      %v154 = vld [vmem:[#allocation6 + $0x118] sm:$0xff]
      %v155 = vld [vmem:[#allocation6 + $0x120] sm:$0xff]
      %v156 = vld [vmem:[#allocation6 + $0x128] sm:$0xff]
      %v157 = vld [vmem:[#allocation6 + $0x130] sm:$0xff]
      %v158 = vld [vmem:[#allocation6 + $0x138] sm:$0xff]
      %v159 = vld [vmem:[#allocation6 + $0x140] sm:$0xff]
      %v160 = vld [vmem:[#allocation6 + $0x148] sm:$0xff]
      %v161 = vld [vmem:[#allocation6 + $0x150] sm:$0xff]
      %v162 = vld [vmem:[#allocation6 + $0x158] sm:$0xff]
      %v163 = vld [vmem:[#allocation6 + $0x160] sm:$0xff]
      %v164 = vld [vmem:[#allocation6 + $0x168] sm:$0xff]
      %v165 = vld [vmem:[#allocation6 + $0x170] sm:$0xff]
      %v166 = vld [vmem:[#allocation6 + $0x178] sm:$0xff]
      %v167 = vld [vmem:[#allocation6 + $0x180] sm:$0xff]
      %v168 = vld [vmem:[#allocation6 + $0x188] sm:$0xff]
      %v169 = vld [vmem:[#allocation6 + $0x190] sm:$0xff]
      %v170 = vld [vmem:[#allocation6 + $0x198] sm:$0xff]
      %v171 = vld [vmem:[#allocation6 + $0x1a0] sm:$0xff]
      %v172 = vld [vmem:[#allocation6 + $0x1a8] sm:$0xff]
      %v173 = vld [vmem:[#allocation6 + $0x1b0] sm:$0xff]
      %v174 = vld [vmem:[#allocation6 + $0x1b8] sm:$0xff]
      %v175 = vld [vmem:[#allocation6 + $0x1c0] sm:$0xff]
      %v176 = vld [vmem:[#allocation6 + $0x1c8] sm:$0xff]
      %v177 = vld [vmem:[#allocation6 + $0x1d0] sm:$0xff]
      %v178 = vld [vmem:[#allocation6 + $0x1d8] sm:$0xff]
      %v179 = vld [vmem:[#allocation6 + $0x1e0] sm:$0xff]
      %v180 = vld [vmem:[#allocation6 + $0x1e8] sm:$0xff]
      %v181 = vld [vmem:[#allocation6 + $0x1f0] sm:$0xff]
      %v182 = vld [vmem:[#allocation6 + $0x1f8] sm:$0xff]
      %v183 = vld [vmem:[#allocation6 + $0x200] sm:$0xff]
      %v184 = vld [vmem:[#allocation6 + $0x208] sm:$0xff]
      %v185 = vld [vmem:[#allocation6 + $0x210] sm:$0xff]
      %v186 = vld [vmem:[#allocation6 + $0x218] sm:$0xff]
      %v187 = vld [vmem:[#allocation6 + $0x220] sm:$0xff]
      %v188 = vld [vmem:[#allocation6 + $0x228] sm:$0xff]
      %v189 = vld [vmem:[#allocation6 + $0x230] sm:$0xff]
      %v190 = vld [vmem:[#allocation6 + $0x238] sm:$0xff]
      %v191 = vld [vmem:[#allocation6 + $0x240] sm:$0xff]
      %v192 = vld [vmem:[#allocation6 + $0x248] sm:$0xff]
      %v193 = vld [vmem:[#allocation6 + $0x250] sm:$0xff]
      %v194 = vld [vmem:[#allocation6 + $0x258] sm:$0xff]
      %v195 = vld [vmem:[#allocation6 + $0x260] sm:$0xff]
      %v196 = vld [vmem:[#allocation6 + $0x268] sm:$0xff]
      %v197 = vld [vmem:[#allocation6 + $0x270] sm:$0xff]
      %v198 = vld [vmem:[#allocation6 + $0x278] sm:$0xff]
      %v199 = vld [vmem:[#allocation6 + $0x280] sm:$0xff]
      %v200 = vld [vmem:[#allocation6 + $0x288] sm:$0xff]
      %v201 = vld [vmem:[#allocation6 + $0x290] sm:$0xff]
      %v202 = vld [vmem:[#allocation6 + $0x298] sm:$0xff]
      %v203 = vld [vmem:[#allocation6 + $0x2a0] sm:$0xff]
      %v204 = vld [vmem:[#allocation6 + $0x2a8] sm:$0xff]
      %v205 = vld [vmem:[#allocation6 + $0x2b0] sm:$0xff]
      %v206 = vld [vmem:[#allocation6 + $0x2b8] sm:$0xff]
      %v207 = vld [vmem:[#allocation6 + $0x2c0] sm:$0xff]
      %v208 = vld [vmem:[#allocation6 + $0x2c8] sm:$0xff]
      %v209 = vld [vmem:[#allocation6 + $0x2d0] sm:$0xff]
      %v210 = vld [vmem:[#allocation6 + $0x2d8] sm:$0xff]
      %v211 = vld [vmem:[#allocation6 + $0x2e0] sm:$0xff]
      %v212 = vld [vmem:[#allocation6 + $0x2e8] sm:$0xff]
      %v213 = vld [vmem:[#allocation6 + $0x2f0] sm:$0xff]
      %v214 = vld [vmem:[#allocation6 + $0x2f8] sm:$0xff]
      %v215 = vld [vmem:[#allocation6 + $0x300] sm:$0xff]
      %v216 = vld [vmem:[#allocation6 + $0x308] sm:$0xff]
      %v217 = vld [vmem:[#allocation6 + $0x310] sm:$0xff]
      %v218 = vld [vmem:[#allocation6 + $0x318] sm:$0xff]
      %v219 = vld [vmem:[#allocation6 + $0x320] sm:$0xff]
      %v220 = vld [vmem:[#allocation6 + $0x328] sm:$0xff]
      %v221 = vld [vmem:[#allocation6 + $0x330] sm:$0xff]
      %v222 = vld [vmem:[#allocation6 + $0x338] sm:$0xff]
      %v223 = vld [vmem:[#allocation6 + $0x340] sm:$0xff]
      %v224 = vld [vmem:[#allocation6 + $0x348] sm:$0xff]
      %v225 = vld [vmem:[#allocation6 + $0x350] sm:$0xff]
      %v226 = vld [vmem:[#allocation6 + $0x358] sm:$0xff]
      %v227 = vld [vmem:[#allocation6 + $0x360] sm:$0xff]
      %v228 = vld [vmem:[#allocation6 + $0x368] sm:$0xff]
      %v229 = vld [vmem:[#allocation6 + $0x370] sm:$0xff]
      %v230 = vld [vmem:[#allocation6 + $0x378] sm:$0xff]
      %v231 = vld [vmem:[#allocation6 + $0x380] sm:$0xff]
      %v232 = vld [vmem:[#allocation6 + $0x388] sm:$0xff]
      %v233 = vld [vmem:[#allocation6 + $0x390] sm:$0xff]
      %v234 = vld [vmem:[#allocation6 + $0x398] sm:$0xff]
      %v235 = vld [vmem:[#allocation6 + $0x3a0] sm:$0xff]
      %v236 = vld [vmem:[#allocation6 + $0x3a8] sm:$0xff]
      %v237 = vld [vmem:[#allocation6 + $0x3b0] sm:$0xff]
      %v238 = vld [vmem:[#allocation6 + $0x3b8] sm:$0xff]
      %v239 = vld [vmem:[#allocation6 + $0x3c0] sm:$0xff]
      %v240 = vld [vmem:[#allocation6 + $0x3c8] sm:$0xff]
      %v241 = vld [vmem:[#allocation6 + $0x3d0] sm:$0xff]
      %v242 = vld [vmem:[#allocation6 + $0x3d8] sm:$0xff]
      %v243 = vld [vmem:[#allocation6 + $0x3e0] sm:$0xff]
      %v244 = vld [vmem:[#allocation6 + $0x3e8] sm:$0xff]
      %v245 = vld [vmem:[#allocation6 + $0x3f0] sm:$0xff]
      %v246 = vld [vmem:[#allocation6 + $0x3f8] sm:$0xff]
      %v375 = vunpack.c.l.b16 %v119
      %v376 = vunpack.c.h.b16 %v119
      %v377 = vunpack.c.l.b16 %v120
      %v378 = vunpack.c.h.b16 %v120
      %v379 = vunpack.c.l.b16 %v121
      %v380 = vunpack.c.h.b16 %v121
      %v381 = vunpack.c.l.b16 %v122
      %v382 = vunpack.c.h.b16 %v122
      %v383 = vunpack.c.l.b16 %v123
      %v384 = vunpack.c.h.b16 %v123
      %v385 = vunpack.c.l.b16 %v124
      %v386 = vunpack.c.h.b16 %v124
      %v387 = vunpack.c.l.b16 %v125
      %v388 = vunpack.c.h.b16 %v125
      %v389 = vunpack.c.l.b16 %v126
      %v390 = vunpack.c.h.b16 %v126
      %v391 = vunpack.c.l.b16 %v127
      %v392 = vunpack.c.h.b16 %v127
      %v393 = vunpack.c.l.b16 %v128
      %v394 = vunpack.c.h.b16 %v128
      %v395 = vunpack.c.l.b16 %v129
      %v396 = vunpack.c.h.b16 %v129
      %v397 = vunpack.c.l.b16 %v130
      %v398 = vunpack.c.h.b16 %v130
      %v399 = vunpack.c.l.b16 %v131
      %v400 = vunpack.c.h.b16 %v131
      %v401 = vunpack.c.l.b16 %v132
      %v402 = vunpack.c.h.b16 %v132
      %v403 = vunpack.c.l.b16 %v133
      %v404 = vunpack.c.h.b16 %v133
      %v405 = vunpack.c.l.b16 %v134
      %v406 = vunpack.c.h.b16 %v134
      %v407 = vunpack.c.l.b16 %v135
      %v408 = vunpack.c.h.b16 %v135
      %v409 = vunpack.c.l.b16 %v136
      %v410 = vunpack.c.h.b16 %v136
      %v411 = vunpack.c.l.b16 %v137
      %v412 = vunpack.c.h.b16 %v137
      %v413 = vunpack.c.l.b16 %v138
      %v414 = vunpack.c.h.b16 %v138
      %v415 = vunpack.c.l.b16 %v139
      %v416 = vunpack.c.h.b16 %v139
      %v417 = vunpack.c.l.b16 %v140
      %v418 = vunpack.c.h.b16 %v140
      %v419 = vunpack.c.l.b16 %v141
      %v420 = vunpack.c.h.b16 %v141
      %v421 = vunpack.c.l.b16 %v142
      %v422 = vunpack.c.h.b16 %v142
      %v423 = vunpack.c.l.b16 %v143
      %v424 = vunpack.c.h.b16 %v143
      %v425 = vunpack.c.l.b16 %v144
      %v426 = vunpack.c.h.b16 %v144
      %v427 = vunpack.c.l.b16 %v145
      %v428 = vunpack.c.h.b16 %v145
      %v429 = vunpack.c.l.b16 %v146
      %v430 = vunpack.c.h.b16 %v146
      %v431 = vunpack.c.l.b16 %v147
      %v432 = vunpack.c.h.b16 %v147
      %v433 = vunpack.c.l.b16 %v148
      %v434 = vunpack.c.h.b16 %v148
      %v435 = vunpack.c.l.b16 %v149
      %v436 = vunpack.c.h.b16 %v149
      %v437 = vunpack.c.l.b16 %v150
      %v438 = vunpack.c.h.b16 %v150
      %v439 = vunpack.c.l.b16 %v151
      %v440 = vunpack.c.h.b16 %v151
      %v441 = vunpack.c.l.b16 %v152
      %v442 = vunpack.c.h.b16 %v152
      %v443 = vunpack.c.l.b16 %v153
      %v444 = vunpack.c.h.b16 %v153
      %v445 = vunpack.c.l.b16 %v154
      %v446 = vunpack.c.h.b16 %v154
      %v447 = vunpack.c.l.b16 %v155
      %v448 = vunpack.c.h.b16 %v155
      %v449 = vunpack.c.l.b16 %v156
      %v450 = vunpack.c.h.b16 %v156
      %v451 = vunpack.c.l.b16 %v157
      %v452 = vunpack.c.h.b16 %v157
      %v453 = vunpack.c.l.b16 %v158
      %v454 = vunpack.c.h.b16 %v158
      %v455 = vunpack.c.l.b16 %v159
      %v456 = vunpack.c.h.b16 %v159
      %v457 = vunpack.c.l.b16 %v160
      %v458 = vunpack.c.h.b16 %v160
      %v459 = vunpack.c.l.b16 %v161
      %v460 = vunpack.c.h.b16 %v161
      %v461 = vunpack.c.l.b16 %v162
      %v462 = vunpack.c.h.b16 %v162
      %v463 = vunpack.c.l.b16 %v163
      %v464 = vunpack.c.h.b16 %v163
      %v465 = vunpack.c.l.b16 %v164
      %v466 = vunpack.c.h.b16 %v164
      %v467 = vunpack.c.l.b16 %v165
      %v468 = vunpack.c.h.b16 %v165
      %v469 = vunpack.c.l.b16 %v166
      %v470 = vunpack.c.h.b16 %v166
      %v471 = vunpack.c.l.b16 %v167
      %v472 = vunpack.c.h.b16 %v167
      %v473 = vunpack.c.l.b16 %v168
      %v474 = vunpack.c.h.b16 %v168
      %v475 = vunpack.c.l.b16 %v169
      %v476 = vunpack.c.h.b16 %v169
      %v477 = vunpack.c.l.b16 %v170
      %v478 = vunpack.c.h.b16 %v170
      %v479 = vunpack.c.l.b16 %v171
      %v480 = vunpack.c.h.b16 %v171
      %v481 = vunpack.c.l.b16 %v172
      %v482 = vunpack.c.h.b16 %v172
      %v483 = vunpack.c.l.b16 %v173
      %v484 = vunpack.c.h.b16 %v173
      %v485 = vunpack.c.l.b16 %v174
      %v486 = vunpack.c.h.b16 %v174
      %v487 = vunpack.c.l.b16 %v175
      %v488 = vunpack.c.h.b16 %v175
      %v489 = vunpack.c.l.b16 %v176
      %v490 = vunpack.c.h.b16 %v176
      %v491 = vunpack.c.l.b16 %v177
      %v492 = vunpack.c.h.b16 %v177
      %v493 = vunpack.c.l.b16 %v178
      %v494 = vunpack.c.h.b16 %v178
      %v495 = vunpack.c.l.b16 %v179
      %v496 = vunpack.c.h.b16 %v179
      %v497 = vunpack.c.l.b16 %v180
      %v498 = vunpack.c.h.b16 %v180
      %v499 = vunpack.c.l.b16 %v181
      %v500 = vunpack.c.h.b16 %v181
      %v501 = vunpack.c.l.b16 %v182
      %v502 = vunpack.c.h.b16 %v182
      %v503 = vunpack.c.l.b16 %v183
      %v504 = vunpack.c.h.b16 %v183
      %v505 = vunpack.c.l.b16 %v184
      %v506 = vunpack.c.h.b16 %v184
      %v507 = vunpack.c.l.b16 %v185
      %v508 = vunpack.c.h.b16 %v185
      %v509 = vunpack.c.l.b16 %v186
      %v510 = vunpack.c.h.b16 %v186
      %v511 = vunpack.c.l.b16 %v187
      %v512 = vunpack.c.h.b16 %v187
      %v513 = vunpack.c.l.b16 %v188
      %v514 = vunpack.c.h.b16 %v188
      %v515 = vunpack.c.l.b16 %v189
      %v516 = vunpack.c.h.b16 %v189
      %v517 = vunpack.c.l.b16 %v190
      %v518 = vunpack.c.h.b16 %v190
      %v519 = vunpack.c.l.b16 %v191
      %v520 = vunpack.c.h.b16 %v191
      %v521 = vunpack.c.l.b16 %v192
      %v522 = vunpack.c.h.b16 %v192
      %v523 = vunpack.c.l.b16 %v193
      %v524 = vunpack.c.h.b16 %v193
      %v525 = vunpack.c.l.b16 %v194
      %v526 = vunpack.c.h.b16 %v194
      %v527 = vunpack.c.l.b16 %v195
      %v528 = vunpack.c.h.b16 %v195
      %v529 = vunpack.c.l.b16 %v196
      %v530 = vunpack.c.h.b16 %v196
      %v531 = vunpack.c.l.b16 %v197
      %v532 = vunpack.c.h.b16 %v197
      %v533 = vunpack.c.l.b16 %v198
      %v534 = vunpack.c.h.b16 %v198
      %v535 = vunpack.c.l.b16 %v199
      %v536 = vunpack.c.h.b16 %v199
      %v537 = vunpack.c.l.b16 %v200
      %v538 = vunpack.c.h.b16 %v200
      %v539 = vunpack.c.l.b16 %v201
      %v540 = vunpack.c.h.b16 %v201
      %v541 = vunpack.c.l.b16 %v202
      %v542 = vunpack.c.h.b16 %v202
      %v543 = vunpack.c.l.b16 %v203
      %v544 = vunpack.c.h.b16 %v203
      %v545 = vunpack.c.l.b16 %v204
      %v546 = vunpack.c.h.b16 %v204
      %v547 = vunpack.c.l.b16 %v205
      %v548 = vunpack.c.h.b16 %v205
      %v549 = vunpack.c.l.b16 %v206
      %v550 = vunpack.c.h.b16 %v206
      %v551 = vunpack.c.l.b16 %v207
      %v552 = vunpack.c.h.b16 %v207
      %v553 = vunpack.c.l.b16 %v208
      %v554 = vunpack.c.h.b16 %v208
      %v555 = vunpack.c.l.b16 %v209
      %v556 = vunpack.c.h.b16 %v209
      %v557 = vunpack.c.l.b16 %v210
      %v558 = vunpack.c.h.b16 %v210
      %v559 = vunpack.c.l.b16 %v211
      %v560 = vunpack.c.h.b16 %v211
      %v561 = vunpack.c.l.b16 %v212
      %v562 = vunpack.c.h.b16 %v212
      %v563 = vunpack.c.l.b16 %v213
      %v564 = vunpack.c.h.b16 %v213
      %v565 = vunpack.c.l.b16 %v214
      %v566 = vunpack.c.h.b16 %v214
      %v567 = vunpack.c.l.b16 %v215
      %v568 = vunpack.c.h.b16 %v215
      %v569 = vunpack.c.l.b16 %v216
      %v570 = vunpack.c.h.b16 %v216
      %v571 = vunpack.c.l.b16 %v217
      %v572 = vunpack.c.h.b16 %v217
      %v573 = vunpack.c.l.b16 %v218
      %v574 = vunpack.c.h.b16 %v218
      %v575 = vunpack.c.l.b16 %v219
      %v576 = vunpack.c.h.b16 %v219
      %v577 = vunpack.c.l.b16 %v220
      %v578 = vunpack.c.h.b16 %v220
      %v579 = vunpack.c.l.b16 %v221
      %v580 = vunpack.c.h.b16 %v221
      %v581 = vunpack.c.l.b16 %v222
      %v582 = vunpack.c.h.b16 %v222
      %v583 = vunpack.c.l.b16 %v223
      %v584 = vunpack.c.h.b16 %v223
      %v585 = vunpack.c.l.b16 %v224
      %v586 = vunpack.c.h.b16 %v224
      %v587 = vunpack.c.l.b16 %v225
      %v588 = vunpack.c.h.b16 %v225
      %v589 = vunpack.c.l.b16 %v226
      %v590 = vunpack.c.h.b16 %v226
      %v591 = vunpack.c.l.b16 %v227
      %v592 = vunpack.c.h.b16 %v227
      %v593 = vunpack.c.l.b16 %v228
      %v594 = vunpack.c.h.b16 %v228
      %v595 = vunpack.c.l.b16 %v229
      %v596 = vunpack.c.h.b16 %v229
      %v597 = vunpack.c.l.b16 %v230
      %v598 = vunpack.c.h.b16 %v230
      %v599 = vunpack.c.l.b16 %v231
      %v600 = vunpack.c.h.b16 %v231
      %v601 = vunpack.c.l.b16 %v232
      %v602 = vunpack.c.h.b16 %v232
      %v603 = vunpack.c.l.b16 %v233
      %v604 = vunpack.c.h.b16 %v233
      %v605 = vunpack.c.l.b16 %v234
      %v606 = vunpack.c.h.b16 %v234
      %v607 = vunpack.c.l.b16 %v235
      %v608 = vunpack.c.h.b16 %v235
      %v609 = vunpack.c.l.b16 %v236
      %v610 = vunpack.c.h.b16 %v236
      %v611 = vunpack.c.l.b16 %v237
      %v612 = vunpack.c.h.b16 %v237
      %v613 = vunpack.c.l.b16 %v238
      %v614 = vunpack.c.h.b16 %v238
      %v615 = vunpack.c.l.b16 %v239
      %v616 = vunpack.c.h.b16 %v239
      %v617 = vunpack.c.l.b16 %v240
      %v618 = vunpack.c.h.b16 %v240
      %v619 = vunpack.c.l.b16 %v241
      %v620 = vunpack.c.h.b16 %v241
      %v621 = vunpack.c.l.b16 %v242
      %v622 = vunpack.c.h.b16 %v242
      %v623 = vunpack.c.l.b16 %v243
      %v624 = vunpack.c.h.b16 %v243
      %v625 = vunpack.c.l.b16 %v244
      %v626 = vunpack.c.h.b16 %v244
      %v627 = vunpack.c.l.b16 %v245
      %v628 = vunpack.c.h.b16 %v245
      %v629 = vunpack.c.l.b16 %v246
      %v630 = vunpack.c.h.b16 %v246
      %v631 = vpack.c.b16 %v383, %v375
      %v632 = vpack.c.b16 %v384, %v376
      %v633 = vpack.c.b16 %v385, %v377
      %v634 = vpack.c.b16 %v386, %v378
      %v635 = vpack.c.b16 %v387, %v379
      %v636 = vpack.c.b16 %v388, %v380
      %v637 = vpack.c.b16 %v389, %v381
      %v638 = vpack.c.b16 %v390, %v382
      %v639 = vpack.c.b16 %v399, %v391
      %v640 = vpack.c.b16 %v400, %v392
      %v641 = vpack.c.b16 %v401, %v393
      %v642 = vpack.c.b16 %v402, %v394
      %v643 = vpack.c.b16 %v403, %v395
      %v644 = vpack.c.b16 %v404, %v396
      %v645 = vpack.c.b16 %v405, %v397
      %v646 = vpack.c.b16 %v406, %v398
      %v647 = vpack.c.b16 %v415, %v407
      %v648 = vpack.c.b16 %v416, %v408
      %v649 = vpack.c.b16 %v417, %v409
      %v650 = vpack.c.b16 %v418, %v410
      %v651 = vpack.c.b16 %v419, %v411
      %v652 = vpack.c.b16 %v420, %v412
      %v653 = vpack.c.b16 %v421, %v413
      %v654 = vpack.c.b16 %v422, %v414
      %v655 = vpack.c.b16 %v431, %v423
      %v656 = vpack.c.b16 %v432, %v424
      %v657 = vpack.c.b16 %v433, %v425
      %v658 = vpack.c.b16 %v434, %v426
      %v659 = vpack.c.b16 %v435, %v427
      %v660 = vpack.c.b16 %v436, %v428
      %v661 = vpack.c.b16 %v437, %v429
      %v662 = vpack.c.b16 %v438, %v430
      %v663 = vpack.c.b16 %v447, %v439
      %v664 = vpack.c.b16 %v448, %v440
      %v665 = vpack.c.b16 %v449, %v441
      %v666 = vpack.c.b16 %v450, %v442
      %v667 = vpack.c.b16 %v451, %v443
      %v668 = vpack.c.b16 %v452, %v444
      %v669 = vpack.c.b16 %v453, %v445
      %v670 = vpack.c.b16 %v454, %v446
      %v671 = vpack.c.b16 %v463, %v455
      %v672 = vpack.c.b16 %v464, %v456
      %v673 = vpack.c.b16 %v465, %v457
      %v674 = vpack.c.b16 %v466, %v458
      %v675 = vpack.c.b16 %v467, %v459
      %v676 = vpack.c.b16 %v468, %v460
      %v677 = vpack.c.b16 %v469, %v461
      %v678 = vpack.c.b16 %v470, %v462
      %v679 = vpack.c.b16 %v479, %v471
      %v680 = vpack.c.b16 %v480, %v472
      %v681 = vpack.c.b16 %v481, %v473
      %v682 = vpack.c.b16 %v482, %v474
      %v683 = vpack.c.b16 %v483, %v475
      %v684 = vpack.c.b16 %v484, %v476
      %v685 = vpack.c.b16 %v485, %v477
      %v686 = vpack.c.b16 %v486, %v478
      %v687 = vpack.c.b16 %v495, %v487
      %v688 = vpack.c.b16 %v496, %v488
      %v689 = vpack.c.b16 %v497, %v489
      %v690 = vpack.c.b16 %v498, %v490
      %v691 = vpack.c.b16 %v499, %v491
      %v692 = vpack.c.b16 %v500, %v492
      %v693 = vpack.c.b16 %v501, %v493
      %v694 = vpack.c.b16 %v502, %v494
      %v695 = vpack.c.b16 %v511, %v503
      %v696 = vpack.c.b16 %v512, %v504
      %v697 = vpack.c.b16 %v513, %v505
      %v698 = vpack.c.b16 %v514, %v506
      %v699 = vpack.c.b16 %v515, %v507
      %v700 = vpack.c.b16 %v516, %v508
      %v701 = vpack.c.b16 %v517, %v509
      %v702 = vpack.c.b16 %v518, %v510
      %v703 = vpack.c.b16 %v527, %v519
      %v704 = vpack.c.b16 %v528, %v520
      %v705 = vpack.c.b16 %v529, %v521
      %v706 = vpack.c.b16 %v530, %v522
      %v707 = vpack.c.b16 %v531, %v523
      %v708 = vpack.c.b16 %v532, %v524
      %v709 = vpack.c.b16 %v533, %v525
      %v710 = vpack.c.b16 %v534, %v526
      %v711 = vpack.c.b16 %v543, %v535
      %v712 = vpack.c.b16 %v544, %v536
      %v713 = vpack.c.b16 %v545, %v537
      %v714 = vpack.c.b16 %v546, %v538
      %v715 = vpack.c.b16 %v547, %v539
      %v716 = vpack.c.b16 %v548, %v540
      %v717 = vpack.c.b16 %v549, %v541
      %v718 = vpack.c.b16 %v550, %v542
      %v719 = vpack.c.b16 %v559, %v551
      %v720 = vpack.c.b16 %v560, %v552
      %v721 = vpack.c.b16 %v561, %v553
      %v722 = vpack.c.b16 %v562, %v554
      %v723 = vpack.c.b16 %v563, %v555
      %v724 = vpack.c.b16 %v564, %v556
      %v725 = vpack.c.b16 %v565, %v557
      %v726 = vpack.c.b16 %v566, %v558
      %v727 = vpack.c.b16 %v575, %v567
      %v728 = vpack.c.b16 %v576, %v568
      %v729 = vpack.c.b16 %v577, %v569
      %v730 = vpack.c.b16 %v578, %v570
      %v731 = vpack.c.b16 %v579, %v571
      %v732 = vpack.c.b16 %v580, %v572
      %v733 = vpack.c.b16 %v581, %v573
      %v734 = vpack.c.b16 %v582, %v574
      %v735 = vpack.c.b16 %v591, %v583
      %v736 = vpack.c.b16 %v592, %v584
      %v737 = vpack.c.b16 %v593, %v585
      %v738 = vpack.c.b16 %v594, %v586
      %v739 = vpack.c.b16 %v595, %v587
      %v740 = vpack.c.b16 %v596, %v588
      %v741 = vpack.c.b16 %v597, %v589
      %v742 = vpack.c.b16 %v598, %v590
      %v743 = vpack.c.b16 %v607, %v599
      %v744 = vpack.c.b16 %v608, %v600
      %v745 = vpack.c.b16 %v609, %v601
      %v746 = vpack.c.b16 %v610, %v602
      %v747 = vpack.c.b16 %v611, %v603
      %v748 = vpack.c.b16 %v612, %v604
      %v749 = vpack.c.b16 %v613, %v605
      %v750 = vpack.c.b16 %v614, %v606
      %v751 = vpack.c.b16 %v623, %v615
      %v752 = vpack.c.b16 %v624, %v616
      %v753 = vpack.c.b16 %v625, %v617
      %v754 = vpack.c.b16 %v626, %v618
      %v755 = vpack.c.b16 %v627, %v619
      %v756 = vpack.c.b16 %v628, %v620
      %v757 = vpack.c.b16 %v629, %v621
      %v758 = vpack.c.b16 %v630, %v622
      %887 = vmatprep.subr.bf16.mxu0 %v632
      %888 = vmatpush1.bf16.msra.mxu0 %v631
      %889 = vmatprep.subr.bf16.mxu0 %v640
      %890 = vmatpush1.bf16.msra.mxu0 %v639
      %891 = vmatprep.subr.bf16.mxu0 %v648
      %892 = vmatpush1.bf16.msra.mxu0 %v647
      %893 = vmatprep.subr.bf16.mxu0 %v656
      %894 = vmatpush1.bf16.msra.mxu0 %v655
      %895 = vmatprep.subr.bf16.mxu0 %v664
      %896 = vmatpush1.bf16.msra.mxu0 %v663
      %897 = vmatprep.subr.bf16.mxu0 %v672
      %898 = vmatpush1.bf16.msra.mxu0 %v671
      %899 = vmatprep.subr.bf16.mxu0 %v680
      %900 = vmatpush1.bf16.msra.mxu0 %v679
      %901 = vmatprep.subr.bf16.mxu0 %v688
      %902 = vmatpush1.bf16.msra.mxu0 %v687
      %903 = vmatprep.subr.bf16.mxu0 %v696
      %904 = vmatpush1.bf16.msra.mxu0 %v695
      %905 = vmatprep.subr.bf16.mxu0 %v704
      %906 = vmatpush1.bf16.msra.mxu0 %v703
      %907 = vmatprep.subr.bf16.mxu0 %v712
      %908 = vmatpush1.bf16.msra.mxu0 %v711
      %909 = vmatprep.subr.bf16.mxu0 %v720
      %910 = vmatpush1.bf16.msra.mxu0 %v719
      %911 = vmatprep.subr.bf16.mxu0 %v728
      %912 = vmatpush1.bf16.msra.mxu0 %v727
      %913 = vmatprep.subr.bf16.mxu0 %v736
      %914 = vmatpush1.bf16.msra.mxu0 %v735
      %915 = vmatprep.subr.bf16.mxu0 %v744
      %916 = vmatpush1.bf16.msra.mxu0 %v743
      %917 = vmatprep.subr.bf16.mxu0 %v752
      %918 = vmatpush1.bf16.msra.mxu0 %v751
      %919 = vmatprep.mubr.bf16.mxu0 %v118
      %920 = vmatmul.mubr.bf16.gmra.mrb[0].mxu0 %v117
      %v921 = vpop.f32.mrb[0].mxu0
      %v922 = vadd.f32 0.0, %v921
      %v923 = vpop.f32.mrb[0].mxu0
      %v924 = vadd.f32 0.0, %v923
      %v925 = vpop.f32.mrb[0].mxu0
      %v926 = vpop.f32.mrb[0].mxu0
      %927 = vdwg.mxu0
      %928 = vmatprep.subr.bf16.mxu0 %v634
      %929 = vmatpush1.bf16.msra.mxu0 %v633
      %930 = vmatprep.subr.bf16.mxu0 %v642
      %931 = vmatpush1.bf16.msra.mxu0 %v641
      %932 = vmatprep.subr.bf16.mxu0 %v650
      %933 = vmatpush1.bf16.msra.mxu0 %v649
      %934 = vmatprep.subr.bf16.mxu0 %v658
      %935 = vmatpush1.bf16.msra.mxu0 %v657
      %936 = vmatprep.subr.bf16.mxu0 %v666
      %937 = vmatpush1.bf16.msra.mxu0 %v665
      %938 = vmatprep.subr.bf16.mxu0 %v674
      %939 = vmatpush1.bf16.msra.mxu0 %v673
      %940 = vmatprep.subr.bf16.mxu0 %v682
      %941 = vmatpush1.bf16.msra.mxu0 %v681
      %942 = vmatprep.subr.bf16.mxu0 %v690
      %943 = vmatpush1.bf16.msra.mxu0 %v689
      %944 = vmatprep.subr.bf16.mxu0 %v698
      %945 = vmatpush1.bf16.msra.mxu0 %v697
      %946 = vmatprep.subr.bf16.mxu0 %v706
      %947 = vmatpush1.bf16.msra.mxu0 %v705
      %948 = vmatprep.subr.bf16.mxu0 %v714
      %949 = vmatpush1.bf16.msra.mxu0 %v713
      %950 = vmatprep.subr.bf16.mxu0 %v722
      %951 = vmatpush1.bf16.msra.mxu0 %v721
      %952 = vmatprep.subr.bf16.mxu0 %v730
      %953 = vmatpush1.bf16.msra.mxu0 %v729
      %954 = vmatprep.subr.bf16.mxu0 %v738
      %955 = vmatpush1.bf16.msra.mxu0 %v737
      %956 = vmatprep.subr.bf16.mxu0 %v746
      %957 = vmatpush1.bf16.msra.mxu0 %v745
      %958 = vmatprep.subr.bf16.mxu0 %v754
      %959 = vmatpush1.bf16.msra.mxu0 %v753
      %960 = vmatprep.mubr.bf16.mxu0 %v118
      %961 = vmatmul.mubr.bf16.gmra.mrb[0].mxu0 %v117
      %v962 = vpop.f32.mrb[0].mxu0
      %v963 = vadd.f32 0.0, %v962
      %v964 = vpop.f32.mrb[0].mxu0
      %v965 = vadd.f32 0.0, %v964
      %v966 = vpop.f32.mrb[0].mxu0
      %v967 = vpop.f32.mrb[0].mxu0
      %968 = vdwg.mxu0
      %969 = vmatprep.subr.bf16.mxu0 %v636
      %970 = vmatpush1.bf16.msra.mxu0 %v635
      %971 = vmatprep.subr.bf16.mxu0 %v644
      %972 = vmatpush1.bf16.msra.mxu0 %v643
      %973 = vmatprep.subr.bf16.mxu0 %v652
      %974 = vmatpush1.bf16.msra.mxu0 %v651
      %975 = vmatprep.subr.bf16.mxu0 %v660
      %976 = vmatpush1.bf16.msra.mxu0 %v659
      %977 = vmatprep.subr.bf16.mxu0 %v668
      %978 = vmatpush1.bf16.msra.mxu0 %v667
      %979 = vmatprep.subr.bf16.mxu0 %v676
      %980 = vmatpush1.bf16.msra.mxu0 %v675
      %981 = vmatprep.subr.bf16.mxu0 %v684
      %982 = vmatpush1.bf16.msra.mxu0 %v683
      %983 = vmatprep.subr.bf16.mxu0 %v692
      %984 = vmatpush1.bf16.msra.mxu0 %v691
      %985 = vmatprep.subr.bf16.mxu0 %v700
      %986 = vmatpush1.bf16.msra.mxu0 %v699
      %987 = vmatprep.subr.bf16.mxu0 %v708
      %988 = vmatpush1.bf16.msra.mxu0 %v707
      %989 = vmatprep.subr.bf16.mxu0 %v716
      %990 = vmatpush1.bf16.msra.mxu0 %v715
      %991 = vmatprep.subr.bf16.mxu0 %v724
      %992 = vmatpush1.bf16.msra.mxu0 %v723
      %993 = vmatprep.subr.bf16.mxu0 %v732
      %994 = vmatpush1.bf16.msra.mxu0 %v731
      %995 = vmatprep.subr.bf16.mxu0 %v740
      %996 = vmatpush1.bf16.msra.mxu0 %v739
      %997 = vmatprep.subr.bf16.mxu0 %v748
      %998 = vmatpush1.bf16.msra.mxu0 %v747
      %999 = vmatprep.subr.bf16.mxu0 %v756
      %1000 = vmatpush1.bf16.msra.mxu0 %v755
      %1001 = vmatprep.mubr.bf16.mxu0 %v118
      %1002 = vmatmul.mubr.bf16.gmra.mrb[0].mxu0 %v117
      %v1003 = vpop.f32.mrb[0].mxu0
      %v1004 = vadd.f32 0.0, %v1003
      %v1005 = vpop.f32.mrb[0].mxu0
      %v1006 = vadd.f32 0.0, %v1005
      %v1007 = vpop.f32.mrb[0].mxu0
      %v1008 = vpop.f32.mrb[0].mxu0
      %1009 = vdwg.mxu0
      %1010 = vmatprep.subr.bf16.mxu0 %v638
      %1011 = vmatpush1.bf16.msra.mxu0 %v637
      %1012 = vmatprep.subr.bf16.mxu0 %v646
      %1013 = vmatpush1.bf16.msra.mxu0 %v645
      %1014 = vmatprep.subr.bf16.mxu0 %v654
      %1015 = vmatpush1.bf16.msra.mxu0 %v653
      %1016 = vmatprep.subr.bf16.mxu0 %v662
      %1017 = vmatpush1.bf16.msra.mxu0 %v661
      %1018 = vmatprep.subr.bf16.mxu0 %v670
      %1019 = vmatpush1.bf16.msra.mxu0 %v669
      %1020 = vmatprep.subr.bf16.mxu0 %v678
      %1021 = vmatpush1.bf16.msra.mxu0 %v677
      %1022 = vmatprep.subr.bf16.mxu0 %v686
      %1023 = vmatpush1.bf16.msra.mxu0 %v685
      %1024 = vmatprep.subr.bf16.mxu0 %v694
      %1025 = vmatpush1.bf16.msra.mxu0 %v693
      %1026 = vmatprep.subr.bf16.mxu0 %v702
      %1027 = vmatpush1.bf16.msra.mxu0 %v701
      %1028 = vmatprep.subr.bf16.mxu0 %v710
      %1029 = vmatpush1.bf16.msra.mxu0 %v709
      %1030 = vmatprep.subr.bf16.mxu0 %v718
      %1031 = vmatpush1.bf16.msra.mxu0 %v717
      %1032 = vmatprep.subr.bf16.mxu0 %v726
      %1033 = vmatpush1.bf16.msra.mxu0 %v725
      %1034 = vmatprep.subr.bf16.mxu0 %v734
      %1035 = vmatpush1.bf16.msra.mxu0 %v733
      %1036 = vmatprep.subr.bf16.mxu0 %v742
      %1037 = vmatpush1.bf16.msra.mxu0 %v741
      %1038 = vmatprep.subr.bf16.mxu0 %v750
      %1039 = vmatpush1.bf16.msra.mxu0 %v749
      %1040 = vmatprep.subr.bf16.mxu0 %v758
      %1041 = vmatpush1.bf16.msra.mxu0 %v757
      %1042 = vmatprep.mubr.bf16.mxu0 %v118
      %1043 = vmatmul.mubr.bf16.gmra.mrb[0].mxu0 %v117
      %v1044 = vpop.f32.mrb[0].mxu0
      %v1045 = vadd.f32 0.0, %v1044
      %v1046 = vpop.f32.mrb[0].mxu0
      %v1047 = vadd.f32 0.0, %v1046
      %v1048 = vpop.f32.mrb[0].mxu0
      %v1049 = vpop.f32.mrb[0].mxu0
      %1050 = vdwg.mxu0
      %v1059 = vcombine.low %v922, %v924
      %v1060 = vcombine.low %v963, %v965
      %v1062 = vunpack.c.l.s4 1983009808
      %v1063 = vunpack.c.0.s8 %v1062
      %v1064 = vlaneseq
      %v1065 = vshrl.u32 %v1064, 7
      %v1066 = vsub.s32 %v1063, %v1065
      %v1067 = vrot.slane %v1059, %v1066
      %v1069 = vunpack.c.l.s4 1983009808
      %v1070 = vunpack.c.0.s8 %v1069
      %v1071 = vlaneseq
      %v1072 = vshrl.u32 %v1071, 7
      %v1073 = vsub.s32 %v1070, %v1072
      %v1074 = vrot.slane %v1060, %v1073
      %v1075 = vcombine.low %v1067, %v1074
      %v1076 = vcombine.low %v1004, %v1006
      %v1077 = vcombine.low %v1045, %v1047
      %v1079 = vunpack.c.l.s4 1983009808
      %v1080 = vunpack.c.0.s8 %v1079
      %v1081 = vlaneseq
      %v1082 = vshrl.u32 %v1081, 7
      %v1083 = vsub.s32 %v1080, %v1082
      %v1084 = vrot.slane %v1076, %v1083
      %v1086 = vunpack.c.l.s4 1983009808
      %v1087 = vunpack.c.0.s8 %v1086
      %v1088 = vlaneseq
      %v1089 = vshrl.u32 %v1088, 7
      %v1090 = vsub.s32 %v1087, %v1089
      %v1091 = vrot.slane %v1077, %v1090
      %v1092 = vcombine.low %v1084, %v1091
      %v1095 = vadd.f32 %v103, %v1075
      %v1096 = vadd.f32 %v104, %v1092
      %v1097 = vld [vmem:[#allocation3] sm:$0xf]
      %v1098 = vxor.u32 %v1095, 2147483648
      %v1099 = vmul.f32 %v1098, 1.442695
      %v1100 = vpow.pop %v1099
      %v1101 = vadd.f32 %v1100, 1.0
      %v1102 = vrcp.pop %v1101
      %v1103 = vmul.f32 1.0, %v1102
      %v1105 = vrot.slane %v1095, 4
      %v1107 = vxor.u32 %v1105, 2147483648
      %v1108 = vmul.f32 %v1107, 1.442695
      %v1109 = vpow.pop %v1108
      %v1110 = vadd.f32 %v1109, 1.0
      %v1111 = vrcp.pop %v1110
      %v1112 = vmul.f32 1.0, %v1111
      %v1113 = vtanh.pop %v1096
      %v1115 = vrot.slane %v1096, 4
      %v1117 = vxor.u32 %v1115, 2147483648
      %v1118 = vmul.f32 %v1117, 1.442695
      %v1119 = vpow.pop %v1118
      %v1120 = vadd.f32 %v1119, 1.0
      %v1121 = vrcp.pop %v1120
      %v1122 = vmul.f32 1.0, %v1121
      %v1123 = vmul.f32 %v1112, %v1097
      %v1124 = vmul.f32 %v1103, %v1113
      %v1125 = vadd.f32 %v1123, %v1124
      %v1126 = vtanh.pop %v1125
      %v1127 = vmul.f32 %v1122, %v1126
      %1128 = vst [vmem:[#allocation2] sm:$0xf] %v1127
      %1129 = vst [vmem:[#allocation3] sm:$0xf] %v1125
      %v1132 = vunpack.c.l.s4 1983009808
      %v1133 = vunpack.c.0.s8 %v1132
      %v1134 = vlaneseq
      %v1135 = vshrl.u32 %v1134, 7
      %v1136 = vsub.s32 %v1133, %v1135
      %v1137 = vrot.slane %v1127, %v1136
      %v1138 = vcombine.high %v1137, %v1137
      %v1141 = vpack.c.bf16 %v1137, %v1137
      %v1142 = vpack.c.bf16 %v1138, %v1138
      %v1145 = vcombine.low %v1141, %v1142
      %v1147 = vunpack.c.l.s4 1966171168
      %v1148 = vunpack.c.0.s8 %v1147
      %v1149 = vlaneseq
      %v1150 = vshrl.u32 %v1149, 7
      %v1151 = vsub.s32 %v1148, %v1150
      %v1152 = vrot.slane %v1145, %v1151
      %v1154 = vunpack.c.l.s4 1966171168
      %v1155 = vunpack.c.0.s8 %v1154
      %v1156 = vlaneseq
      %v1157 = vshrl.u32 %v1156, 7
      %v1158 = vsub.s32 %v1155, %v1157
      %v1159 = vrot.slane %v1152, %v1158
      %s1161 = smul.u32 %s95, 2
      %s1162 = scalar_lea.vmem %s4, %s1161
      %1163 = vst [vmem:[%s1162] sm:$0x3] %v1159
      %s1164 = ssub.s32 7, %s95
      %s1165 = smul.u32 %s1164, 8
      %s1166 = smul.addr %s1165, 2
      %s1167 = scalar_lea.vmem %s75, %s1166
      %v1168 = vld [vmem:[%s1167] sm:$0xff]
      %v1169 = vld [vmem:[%s1167 + $0x8] sm:$0xff]
      %v1170 = vld [vmem:[#allocation4] sm:$0xf]
      %v1173 = vunpack.c.l.s4 1983009808
      %v1174 = vunpack.c.0.s8 %v1173
      %v1175 = vlaneseq
      %v1176 = vshrl.u32 %v1175, 7
      %v1177 = vsub.s32 %v1174, %v1176
      %v1178 = vrot.slane %v1170, %v1177
      %v1179 = vcombine.high %v1178, %v1178
      %v1182 = vpack.c.bf16 %v1178, %v1178
      %v1183 = vpack.c.bf16 %v1179, %v1179
      %v1184 = vld [vmem:[#allocation8] sm:$0xff]
      %v1185 = vld [vmem:[#allocation8 + $0x8] sm:$0xff]
      %v1186 = vld [vmem:[#allocation8 + $0x10] sm:$0xff]
      %v1187 = vld [vmem:[#allocation8 + $0x18] sm:$0xff]
      %v1188 = vld [vmem:[#allocation8 + $0x20] sm:$0xff]
      %v1189 = vld [vmem:[#allocation8 + $0x28] sm:$0xff]
      %v1190 = vld [vmem:[#allocation8 + $0x30] sm:$0xff]
      %v1191 = vld [vmem:[#allocation8 + $0x38] sm:$0xff]
      %v1192 = vld [vmem:[#allocation8 + $0x40] sm:$0xff]
      %v1193 = vld [vmem:[#allocation8 + $0x48] sm:$0xff]
      %v1194 = vld [vmem:[#allocation8 + $0x50] sm:$0xff]
      %v1195 = vld [vmem:[#allocation8 + $0x58] sm:$0xff]
      %v1196 = vld [vmem:[#allocation8 + $0x60] sm:$0xff]
      %v1197 = vld [vmem:[#allocation8 + $0x68] sm:$0xff]
      %v1198 = vld [vmem:[#allocation8 + $0x70] sm:$0xff]
      %v1199 = vld [vmem:[#allocation8 + $0x78] sm:$0xff]
      %v1200 = vld [vmem:[#allocation8 + $0x80] sm:$0xff]
      %v1201 = vld [vmem:[#allocation8 + $0x88] sm:$0xff]
      %v1202 = vld [vmem:[#allocation8 + $0x90] sm:$0xff]
      %v1203 = vld [vmem:[#allocation8 + $0x98] sm:$0xff]
      %v1204 = vld [vmem:[#allocation8 + $0xa0] sm:$0xff]
      %v1205 = vld [vmem:[#allocation8 + $0xa8] sm:$0xff]
      %v1206 = vld [vmem:[#allocation8 + $0xb0] sm:$0xff]
      %v1207 = vld [vmem:[#allocation8 + $0xb8] sm:$0xff]
      %v1208 = vld [vmem:[#allocation8 + $0xc0] sm:$0xff]
      %v1209 = vld [vmem:[#allocation8 + $0xc8] sm:$0xff]
      %v1210 = vld [vmem:[#allocation8 + $0xd0] sm:$0xff]
      %v1211 = vld [vmem:[#allocation8 + $0xd8] sm:$0xff]
      %v1212 = vld [vmem:[#allocation8 + $0xe0] sm:$0xff]
      %v1213 = vld [vmem:[#allocation8 + $0xe8] sm:$0xff]
      %v1214 = vld [vmem:[#allocation8 + $0xf0] sm:$0xff]
      %v1215 = vld [vmem:[#allocation8 + $0xf8] sm:$0xff]
      %v1216 = vld [vmem:[#allocation8 + $0x100] sm:$0xff]
      %v1217 = vld [vmem:[#allocation8 + $0x108] sm:$0xff]
      %v1218 = vld [vmem:[#allocation8 + $0x110] sm:$0xff]
      %v1219 = vld [vmem:[#allocation8 + $0x118] sm:$0xff]
      %v1220 = vld [vmem:[#allocation8 + $0x120] sm:$0xff]
      %v1221 = vld [vmem:[#allocation8 + $0x128] sm:$0xff]
      %v1222 = vld [vmem:[#allocation8 + $0x130] sm:$0xff]
      %v1223 = vld [vmem:[#allocation8 + $0x138] sm:$0xff]
      %v1224 = vld [vmem:[#allocation8 + $0x140] sm:$0xff]
      %v1225 = vld [vmem:[#allocation8 + $0x148] sm:$0xff]
      %v1226 = vld [vmem:[#allocation8 + $0x150] sm:$0xff]
      %v1227 = vld [vmem:[#allocation8 + $0x158] sm:$0xff]
      %v1228 = vld [vmem:[#allocation8 + $0x160] sm:$0xff]
      %v1229 = vld [vmem:[#allocation8 + $0x168] sm:$0xff]
      %v1230 = vld [vmem:[#allocation8 + $0x170] sm:$0xff]
      %v1231 = vld [vmem:[#allocation8 + $0x178] sm:$0xff]
      %v1232 = vld [vmem:[#allocation8 + $0x180] sm:$0xff]
      %v1233 = vld [vmem:[#allocation8 + $0x188] sm:$0xff]
      %v1234 = vld [vmem:[#allocation8 + $0x190] sm:$0xff]
      %v1235 = vld [vmem:[#allocation8 + $0x198] sm:$0xff]
      %v1236 = vld [vmem:[#allocation8 + $0x1a0] sm:$0xff]
      %v1237 = vld [vmem:[#allocation8 + $0x1a8] sm:$0xff]
      %v1238 = vld [vmem:[#allocation8 + $0x1b0] sm:$0xff]
      %v1239 = vld [vmem:[#allocation8 + $0x1b8] sm:$0xff]
      %v1240 = vld [vmem:[#allocation8 + $0x1c0] sm:$0xff]
      %v1241 = vld [vmem:[#allocation8 + $0x1c8] sm:$0xff]
      %v1242 = vld [vmem:[#allocation8 + $0x1d0] sm:$0xff]
      %v1243 = vld [vmem:[#allocation8 + $0x1d8] sm:$0xff]
      %v1244 = vld [vmem:[#allocation8 + $0x1e0] sm:$0xff]
      %v1245 = vld [vmem:[#allocation8 + $0x1e8] sm:$0xff]
      %v1246 = vld [vmem:[#allocation8 + $0x1f0] sm:$0xff]
      %v1247 = vld [vmem:[#allocation8 + $0x1f8] sm:$0xff]
      %v1248 = vld [vmem:[#allocation8 + $0x200] sm:$0xff]
      %v1249 = vld [vmem:[#allocation8 + $0x208] sm:$0xff]
      %v1250 = vld [vmem:[#allocation8 + $0x210] sm:$0xff]
      %v1251 = vld [vmem:[#allocation8 + $0x218] sm:$0xff]
      %v1252 = vld [vmem:[#allocation8 + $0x220] sm:$0xff]
      %v1253 = vld [vmem:[#allocation8 + $0x228] sm:$0xff]
      %v1254 = vld [vmem:[#allocation8 + $0x230] sm:$0xff]
      %v1255 = vld [vmem:[#allocation8 + $0x238] sm:$0xff]
      %v1256 = vld [vmem:[#allocation8 + $0x240] sm:$0xff]
      %v1257 = vld [vmem:[#allocation8 + $0x248] sm:$0xff]
      %v1258 = vld [vmem:[#allocation8 + $0x250] sm:$0xff]
      %v1259 = vld [vmem:[#allocation8 + $0x258] sm:$0xff]
      %v1260 = vld [vmem:[#allocation8 + $0x260] sm:$0xff]
      %v1261 = vld [vmem:[#allocation8 + $0x268] sm:$0xff]
      %v1262 = vld [vmem:[#allocation8 + $0x270] sm:$0xff]
      %v1263 = vld [vmem:[#allocation8 + $0x278] sm:$0xff]
      %v1264 = vld [vmem:[#allocation8 + $0x280] sm:$0xff]
      %v1265 = vld [vmem:[#allocation8 + $0x288] sm:$0xff]
      %v1266 = vld [vmem:[#allocation8 + $0x290] sm:$0xff]
      %v1267 = vld [vmem:[#allocation8 + $0x298] sm:$0xff]
      %v1268 = vld [vmem:[#allocation8 + $0x2a0] sm:$0xff]
      %v1269 = vld [vmem:[#allocation8 + $0x2a8] sm:$0xff]
      %v1270 = vld [vmem:[#allocation8 + $0x2b0] sm:$0xff]
      %v1271 = vld [vmem:[#allocation8 + $0x2b8] sm:$0xff]
      %v1272 = vld [vmem:[#allocation8 + $0x2c0] sm:$0xff]
      %v1273 = vld [vmem:[#allocation8 + $0x2c8] sm:$0xff]
      %v1274 = vld [vmem:[#allocation8 + $0x2d0] sm:$0xff]
      %v1275 = vld [vmem:[#allocation8 + $0x2d8] sm:$0xff]
      %v1276 = vld [vmem:[#allocation8 + $0x2e0] sm:$0xff]
      %v1277 = vld [vmem:[#allocation8 + $0x2e8] sm:$0xff]
      %v1278 = vld [vmem:[#allocation8 + $0x2f0] sm:$0xff]
      %v1279 = vld [vmem:[#allocation8 + $0x2f8] sm:$0xff]
      %v1280 = vld [vmem:[#allocation8 + $0x300] sm:$0xff]
      %v1281 = vld [vmem:[#allocation8 + $0x308] sm:$0xff]
      %v1282 = vld [vmem:[#allocation8 + $0x310] sm:$0xff]
      %v1283 = vld [vmem:[#allocation8 + $0x318] sm:$0xff]
      %v1284 = vld [vmem:[#allocation8 + $0x320] sm:$0xff]
      %v1285 = vld [vmem:[#allocation8 + $0x328] sm:$0xff]
      %v1286 = vld [vmem:[#allocation8 + $0x330] sm:$0xff]
      %v1287 = vld [vmem:[#allocation8 + $0x338] sm:$0xff]
      %v1288 = vld [vmem:[#allocation8 + $0x340] sm:$0xff]
      %v1289 = vld [vmem:[#allocation8 + $0x348] sm:$0xff]
      %v1290 = vld [vmem:[#allocation8 + $0x350] sm:$0xff]
      %v1291 = vld [vmem:[#allocation8 + $0x358] sm:$0xff]
      %v1292 = vld [vmem:[#allocation8 + $0x360] sm:$0xff]
      %v1293 = vld [vmem:[#allocation8 + $0x368] sm:$0xff]
      %v1294 = vld [vmem:[#allocation8 + $0x370] sm:$0xff]
      %v1295 = vld [vmem:[#allocation8 + $0x378] sm:$0xff]
      %v1296 = vld [vmem:[#allocation8 + $0x380] sm:$0xff]
      %v1297 = vld [vmem:[#allocation8 + $0x388] sm:$0xff]
      %v1298 = vld [vmem:[#allocation8 + $0x390] sm:$0xff]
      %v1299 = vld [vmem:[#allocation8 + $0x398] sm:$0xff]
      %v1300 = vld [vmem:[#allocation8 + $0x3a0] sm:$0xff]
      %v1301 = vld [vmem:[#allocation8 + $0x3a8] sm:$0xff]
      %v1302 = vld [vmem:[#allocation8 + $0x3b0] sm:$0xff]
      %v1303 = vld [vmem:[#allocation8 + $0x3b8] sm:$0xff]
      %v1304 = vld [vmem:[#allocation8 + $0x3c0] sm:$0xff]
      %v1305 = vld [vmem:[#allocation8 + $0x3c8] sm:$0xff]
      %v1306 = vld [vmem:[#allocation8 + $0x3d0] sm:$0xff]
      %v1307 = vld [vmem:[#allocation8 + $0x3d8] sm:$0xff]
      %v1308 = vld [vmem:[#allocation8 + $0x3e0] sm:$0xff]
      %v1309 = vld [vmem:[#allocation8 + $0x3e8] sm:$0xff]
      %v1310 = vld [vmem:[#allocation8 + $0x3f0] sm:$0xff]
      %v1311 = vld [vmem:[#allocation8 + $0x3f8] sm:$0xff]
      %v1440 = vunpack.c.l.b16 %v1184
      %v1441 = vunpack.c.h.b16 %v1184
      %v1442 = vunpack.c.l.b16 %v1185
      %v1443 = vunpack.c.h.b16 %v1185
      %v1444 = vunpack.c.l.b16 %v1186
      %v1445 = vunpack.c.h.b16 %v1186
      %v1446 = vunpack.c.l.b16 %v1187
      %v1447 = vunpack.c.h.b16 %v1187
      %v1448 = vunpack.c.l.b16 %v1188
      %v1449 = vunpack.c.h.b16 %v1188
      %v1450 = vunpack.c.l.b16 %v1189
      %v1451 = vunpack.c.h.b16 %v1189
      %v1452 = vunpack.c.l.b16 %v1190
      %v1453 = vunpack.c.h.b16 %v1190
      %v1454 = vunpack.c.l.b16 %v1191
      %v1455 = vunpack.c.h.b16 %v1191
      %v1456 = vunpack.c.l.b16 %v1192
      %v1457 = vunpack.c.h.b16 %v1192
      %v1458 = vunpack.c.l.b16 %v1193
      %v1459 = vunpack.c.h.b16 %v1193
      %v1460 = vunpack.c.l.b16 %v1194
      %v1461 = vunpack.c.h.b16 %v1194
      %v1462 = vunpack.c.l.b16 %v1195
      %v1463 = vunpack.c.h.b16 %v1195
      %v1464 = vunpack.c.l.b16 %v1196
      %v1465 = vunpack.c.h.b16 %v1196
      %v1466 = vunpack.c.l.b16 %v1197
      %v1467 = vunpack.c.h.b16 %v1197
      %v1468 = vunpack.c.l.b16 %v1198
      %v1469 = vunpack.c.h.b16 %v1198
      %v1470 = vunpack.c.l.b16 %v1199
      %v1471 = vunpack.c.h.b16 %v1199
      %v1472 = vunpack.c.l.b16 %v1200
      %v1473 = vunpack.c.h.b16 %v1200
      %v1474 = vunpack.c.l.b16 %v1201
      %v1475 = vunpack.c.h.b16 %v1201
      %v1476 = vunpack.c.l.b16 %v1202
      %v1477 = vunpack.c.h.b16 %v1202
      %v1478 = vunpack.c.l.b16 %v1203
      %v1479 = vunpack.c.h.b16 %v1203
      %v1480 = vunpack.c.l.b16 %v1204
      %v1481 = vunpack.c.h.b16 %v1204
      %v1482 = vunpack.c.l.b16 %v1205
      %v1483 = vunpack.c.h.b16 %v1205
      %v1484 = vunpack.c.l.b16 %v1206
      %v1485 = vunpack.c.h.b16 %v1206
      %v1486 = vunpack.c.l.b16 %v1207
      %v1487 = vunpack.c.h.b16 %v1207
      %v1488 = vunpack.c.l.b16 %v1208
      %v1489 = vunpack.c.h.b16 %v1208
      %v1490 = vunpack.c.l.b16 %v1209
      %v1491 = vunpack.c.h.b16 %v1209
      %v1492 = vunpack.c.l.b16 %v1210
      %v1493 = vunpack.c.h.b16 %v1210
      %v1494 = vunpack.c.l.b16 %v1211
      %v1495 = vunpack.c.h.b16 %v1211
      %v1496 = vunpack.c.l.b16 %v1212
      %v1497 = vunpack.c.h.b16 %v1212
      %v1498 = vunpack.c.l.b16 %v1213
      %v1499 = vunpack.c.h.b16 %v1213
      %v1500 = vunpack.c.l.b16 %v1214
      %v1501 = vunpack.c.h.b16 %v1214
      %v1502 = vunpack.c.l.b16 %v1215
      %v1503 = vunpack.c.h.b16 %v1215
      %v1504 = vunpack.c.l.b16 %v1216
      %v1505 = vunpack.c.h.b16 %v1216
      %v1506 = vunpack.c.l.b16 %v1217
      %v1507 = vunpack.c.h.b16 %v1217
      %v1508 = vunpack.c.l.b16 %v1218
      %v1509 = vunpack.c.h.b16 %v1218
      %v1510 = vunpack.c.l.b16 %v1219
      %v1511 = vunpack.c.h.b16 %v1219
      %v1512 = vunpack.c.l.b16 %v1220
      %v1513 = vunpack.c.h.b16 %v1220
      %v1514 = vunpack.c.l.b16 %v1221
      %v1515 = vunpack.c.h.b16 %v1221
      %v1516 = vunpack.c.l.b16 %v1222
      %v1517 = vunpack.c.h.b16 %v1222
      %v1518 = vunpack.c.l.b16 %v1223
      %v1519 = vunpack.c.h.b16 %v1223
      %v1520 = vunpack.c.l.b16 %v1224
      %v1521 = vunpack.c.h.b16 %v1224
      %v1522 = vunpack.c.l.b16 %v1225
      %v1523 = vunpack.c.h.b16 %v1225
      %v1524 = vunpack.c.l.b16 %v1226
      %v1525 = vunpack.c.h.b16 %v1226
      %v1526 = vunpack.c.l.b16 %v1227
      %v1527 = vunpack.c.h.b16 %v1227
      %v1528 = vunpack.c.l.b16 %v1228
      %v1529 = vunpack.c.h.b16 %v1228
      %v1530 = vunpack.c.l.b16 %v1229
      %v1531 = vunpack.c.h.b16 %v1229
      %v1532 = vunpack.c.l.b16 %v1230
      %v1533 = vunpack.c.h.b16 %v1230
      %v1534 = vunpack.c.l.b16 %v1231
      %v1535 = vunpack.c.h.b16 %v1231
      %v1536 = vunpack.c.l.b16 %v1232
      %v1537 = vunpack.c.h.b16 %v1232
      %v1538 = vunpack.c.l.b16 %v1233
      %v1539 = vunpack.c.h.b16 %v1233
      %v1540 = vunpack.c.l.b16 %v1234
      %v1541 = vunpack.c.h.b16 %v1234
      %v1542 = vunpack.c.l.b16 %v1235
      %v1543 = vunpack.c.h.b16 %v1235
      %v1544 = vunpack.c.l.b16 %v1236
      %v1545 = vunpack.c.h.b16 %v1236
      %v1546 = vunpack.c.l.b16 %v1237
      %v1547 = vunpack.c.h.b16 %v1237
      %v1548 = vunpack.c.l.b16 %v1238
      %v1549 = vunpack.c.h.b16 %v1238
      %v1550 = vunpack.c.l.b16 %v1239
      %v1551 = vunpack.c.h.b16 %v1239
      %v1552 = vunpack.c.l.b16 %v1240
      %v1553 = vunpack.c.h.b16 %v1240
      %v1554 = vunpack.c.l.b16 %v1241
      %v1555 = vunpack.c.h.b16 %v1241
      %v1556 = vunpack.c.l.b16 %v1242
      %v1557 = vunpack.c.h.b16 %v1242
      %v1558 = vunpack.c.l.b16 %v1243
      %v1559 = vunpack.c.h.b16 %v1243
      %v1560 = vunpack.c.l.b16 %v1244
      %v1561 = vunpack.c.h.b16 %v1244
      %v1562 = vunpack.c.l.b16 %v1245
      %v1563 = vunpack.c.h.b16 %v1245
      %v1564 = vunpack.c.l.b16 %v1246
      %v1565 = vunpack.c.h.b16 %v1246
      %v1566 = vunpack.c.l.b16 %v1247
      %v1567 = vunpack.c.h.b16 %v1247
      %v1568 = vunpack.c.l.b16 %v1248
      %v1569 = vunpack.c.h.b16 %v1248
      %v1570 = vunpack.c.l.b16 %v1249
      %v1571 = vunpack.c.h.b16 %v1249
      %v1572 = vunpack.c.l.b16 %v1250
      %v1573 = vunpack.c.h.b16 %v1250
      %v1574 = vunpack.c.l.b16 %v1251
      %v1575 = vunpack.c.h.b16 %v1251
      %v1576 = vunpack.c.l.b16 %v1252
      %v1577 = vunpack.c.h.b16 %v1252
      %v1578 = vunpack.c.l.b16 %v1253
      %v1579 = vunpack.c.h.b16 %v1253
      %v1580 = vunpack.c.l.b16 %v1254
      %v1581 = vunpack.c.h.b16 %v1254
      %v1582 = vunpack.c.l.b16 %v1255
      %v1583 = vunpack.c.h.b16 %v1255
      %v1584 = vunpack.c.l.b16 %v1256
      %v1585 = vunpack.c.h.b16 %v1256
      %v1586 = vunpack.c.l.b16 %v1257
      %v1587 = vunpack.c.h.b16 %v1257
      %v1588 = vunpack.c.l.b16 %v1258
      %v1589 = vunpack.c.h.b16 %v1258
      %v1590 = vunpack.c.l.b16 %v1259
      %v1591 = vunpack.c.h.b16 %v1259
      %v1592 = vunpack.c.l.b16 %v1260
      %v1593 = vunpack.c.h.b16 %v1260
      %v1594 = vunpack.c.l.b16 %v1261
      %v1595 = vunpack.c.h.b16 %v1261
      %v1596 = vunpack.c.l.b16 %v1262
      %v1597 = vunpack.c.h.b16 %v1262
      %v1598 = vunpack.c.l.b16 %v1263
      %v1599 = vunpack.c.h.b16 %v1263
      %v1600 = vunpack.c.l.b16 %v1264
      %v1601 = vunpack.c.h.b16 %v1264
      %v1602 = vunpack.c.l.b16 %v1265
      %v1603 = vunpack.c.h.b16 %v1265
      %v1604 = vunpack.c.l.b16 %v1266
      %v1605 = vunpack.c.h.b16 %v1266
      %v1606 = vunpack.c.l.b16 %v1267
      %v1607 = vunpack.c.h.b16 %v1267
      %v1608 = vunpack.c.l.b16 %v1268
      %v1609 = vunpack.c.h.b16 %v1268
      %v1610 = vunpack.c.l.b16 %v1269
      %v1611 = vunpack.c.h.b16 %v1269
      %v1612 = vunpack.c.l.b16 %v1270
      %v1613 = vunpack.c.h.b16 %v1270
      %v1614 = vunpack.c.l.b16 %v1271
      %v1615 = vunpack.c.h.b16 %v1271
      %v1616 = vunpack.c.l.b16 %v1272
      %v1617 = vunpack.c.h.b16 %v1272
      %v1618 = vunpack.c.l.b16 %v1273
      %v1619 = vunpack.c.h.b16 %v1273
      %v1620 = vunpack.c.l.b16 %v1274
      %v1621 = vunpack.c.h.b16 %v1274
      %v1622 = vunpack.c.l.b16 %v1275
      %v1623 = vunpack.c.h.b16 %v1275
      %v1624 = vunpack.c.l.b16 %v1276
      %v1625 = vunpack.c.h.b16 %v1276
      %v1626 = vunpack.c.l.b16 %v1277
      %v1627 = vunpack.c.h.b16 %v1277
      %v1628 = vunpack.c.l.b16 %v1278
      %v1629 = vunpack.c.h.b16 %v1278
      %v1630 = vunpack.c.l.b16 %v1279
      %v1631 = vunpack.c.h.b16 %v1279
      %v1632 = vunpack.c.l.b16 %v1280
      %v1633 = vunpack.c.h.b16 %v1280
      %v1634 = vunpack.c.l.b16 %v1281
      %v1635 = vunpack.c.h.b16 %v1281
      %v1636 = vunpack.c.l.b16 %v1282
      %v1637 = vunpack.c.h.b16 %v1282
      %v1638 = vunpack.c.l.b16 %v1283
      %v1639 = vunpack.c.h.b16 %v1283
      %v1640 = vunpack.c.l.b16 %v1284
      %v1641 = vunpack.c.h.b16 %v1284
      %v1642 = vunpack.c.l.b16 %v1285
      %v1643 = vunpack.c.h.b16 %v1285
      %v1644 = vunpack.c.l.b16 %v1286
      %v1645 = vunpack.c.h.b16 %v1286
      %v1646 = vunpack.c.l.b16 %v1287
      %v1647 = vunpack.c.h.b16 %v1287
      %v1648 = vunpack.c.l.b16 %v1288
      %v1649 = vunpack.c.h.b16 %v1288
      %v1650 = vunpack.c.l.b16 %v1289
      %v1651 = vunpack.c.h.b16 %v1289
      %v1652 = vunpack.c.l.b16 %v1290
      %v1653 = vunpack.c.h.b16 %v1290
      %v1654 = vunpack.c.l.b16 %v1291
      %v1655 = vunpack.c.h.b16 %v1291
      %v1656 = vunpack.c.l.b16 %v1292
      %v1657 = vunpack.c.h.b16 %v1292
      %v1658 = vunpack.c.l.b16 %v1293
      %v1659 = vunpack.c.h.b16 %v1293
      %v1660 = vunpack.c.l.b16 %v1294
      %v1661 = vunpack.c.h.b16 %v1294
      %v1662 = vunpack.c.l.b16 %v1295
      %v1663 = vunpack.c.h.b16 %v1295
      %v1664 = vunpack.c.l.b16 %v1296
      %v1665 = vunpack.c.h.b16 %v1296
      %v1666 = vunpack.c.l.b16 %v1297
      %v1667 = vunpack.c.h.b16 %v1297
      %v1668 = vunpack.c.l.b16 %v1298
      %v1669 = vunpack.c.h.b16 %v1298
      %v1670 = vunpack.c.l.b16 %v1299
      %v1671 = vunpack.c.h.b16 %v1299
      %v1672 = vunpack.c.l.b16 %v1300
      %v1673 = vunpack.c.h.b16 %v1300
      %v1674 = vunpack.c.l.b16 %v1301
      %v1675 = vunpack.c.h.b16 %v1301
      %v1676 = vunpack.c.l.b16 %v1302
      %v1677 = vunpack.c.h.b16 %v1302
      %v1678 = vunpack.c.l.b16 %v1303
      %v1679 = vunpack.c.h.b16 %v1303
      %v1680 = vunpack.c.l.b16 %v1304
      %v1681 = vunpack.c.h.b16 %v1304
      %v1682 = vunpack.c.l.b16 %v1305
      %v1683 = vunpack.c.h.b16 %v1305
      %v1684 = vunpack.c.l.b16 %v1306
      %v1685 = vunpack.c.h.b16 %v1306
      %v1686 = vunpack.c.l.b16 %v1307
      %v1687 = vunpack.c.h.b16 %v1307
      %v1688 = vunpack.c.l.b16 %v1308
      %v1689 = vunpack.c.h.b16 %v1308
      %v1690 = vunpack.c.l.b16 %v1309
      %v1691 = vunpack.c.h.b16 %v1309
      %v1692 = vunpack.c.l.b16 %v1310
      %v1693 = vunpack.c.h.b16 %v1310
      %v1694 = vunpack.c.l.b16 %v1311
      %v1695 = vunpack.c.h.b16 %v1311
      %v1696 = vpack.c.b16 %v1448, %v1440
      %v1697 = vpack.c.b16 %v1449, %v1441
      %v1698 = vpack.c.b16 %v1450, %v1442
      %v1699 = vpack.c.b16 %v1451, %v1443
      %v1700 = vpack.c.b16 %v1452, %v1444
      %v1701 = vpack.c.b16 %v1453, %v1445
      %v1702 = vpack.c.b16 %v1454, %v1446
      %v1703 = vpack.c.b16 %v1455, %v1447
      %v1704 = vpack.c.b16 %v1464, %v1456
      %v1705 = vpack.c.b16 %v1465, %v1457
      %v1706 = vpack.c.b16 %v1466, %v1458
      %v1707 = vpack.c.b16 %v1467, %v1459
      %v1708 = vpack.c.b16 %v1468, %v1460
      %v1709 = vpack.c.b16 %v1469, %v1461
      %v1710 = vpack.c.b16 %v1470, %v1462
      %v1711 = vpack.c.b16 %v1471, %v1463
      %v1712 = vpack.c.b16 %v1480, %v1472
      %v1713 = vpack.c.b16 %v1481, %v1473
      %v1714 = vpack.c.b16 %v1482, %v1474
      %v1715 = vpack.c.b16 %v1483, %v1475
      %v1716 = vpack.c.b16 %v1484, %v1476
      %v1717 = vpack.c.b16 %v1485, %v1477
      %v1718 = vpack.c.b16 %v1486, %v1478
      %v1719 = vpack.c.b16 %v1487, %v1479
      %v1720 = vpack.c.b16 %v1496, %v1488
      %v1721 = vpack.c.b16 %v1497, %v1489
      %v1722 = vpack.c.b16 %v1498, %v1490
      %v1723 = vpack.c.b16 %v1499, %v1491
      %v1724 = vpack.c.b16 %v1500, %v1492
      %v1725 = vpack.c.b16 %v1501, %v1493
      %v1726 = vpack.c.b16 %v1502, %v1494
      %v1727 = vpack.c.b16 %v1503, %v1495
      %v1728 = vpack.c.b16 %v1512, %v1504
      %v1729 = vpack.c.b16 %v1513, %v1505
      %v1730 = vpack.c.b16 %v1514, %v1506
      %v1731 = vpack.c.b16 %v1515, %v1507
      %v1732 = vpack.c.b16 %v1516, %v1508
      %v1733 = vpack.c.b16 %v1517, %v1509
      %v1734 = vpack.c.b16 %v1518, %v1510
      %v1735 = vpack.c.b16 %v1519, %v1511
      %v1736 = vpack.c.b16 %v1528, %v1520
      %v1737 = vpack.c.b16 %v1529, %v1521
      %v1738 = vpack.c.b16 %v1530, %v1522
      %v1739 = vpack.c.b16 %v1531, %v1523
      %v1740 = vpack.c.b16 %v1532, %v1524
      %v1741 = vpack.c.b16 %v1533, %v1525
      %v1742 = vpack.c.b16 %v1534, %v1526
      %v1743 = vpack.c.b16 %v1535, %v1527
      %v1744 = vpack.c.b16 %v1544, %v1536
      %v1745 = vpack.c.b16 %v1545, %v1537
      %v1746 = vpack.c.b16 %v1546, %v1538
      %v1747 = vpack.c.b16 %v1547, %v1539
      %v1748 = vpack.c.b16 %v1548, %v1540
      %v1749 = vpack.c.b16 %v1549, %v1541
      %v1750 = vpack.c.b16 %v1550, %v1542
      %v1751 = vpack.c.b16 %v1551, %v1543
      %v1752 = vpack.c.b16 %v1560, %v1552
      %v1753 = vpack.c.b16 %v1561, %v1553
      %v1754 = vpack.c.b16 %v1562, %v1554
      %v1755 = vpack.c.b16 %v1563, %v1555
      %v1756 = vpack.c.b16 %v1564, %v1556
      %v1757 = vpack.c.b16 %v1565, %v1557
      %v1758 = vpack.c.b16 %v1566, %v1558
      %v1759 = vpack.c.b16 %v1567, %v1559
      %v1760 = vpack.c.b16 %v1576, %v1568
      %v1761 = vpack.c.b16 %v1577, %v1569
      %v1762 = vpack.c.b16 %v1578, %v1570
      %v1763 = vpack.c.b16 %v1579, %v1571
      %v1764 = vpack.c.b16 %v1580, %v1572
      %v1765 = vpack.c.b16 %v1581, %v1573
      %v1766 = vpack.c.b16 %v1582, %v1574
      %v1767 = vpack.c.b16 %v1583, %v1575
      %v1768 = vpack.c.b16 %v1592, %v1584
      %v1769 = vpack.c.b16 %v1593, %v1585
      %v1770 = vpack.c.b16 %v1594, %v1586
      %v1771 = vpack.c.b16 %v1595, %v1587
      %v1772 = vpack.c.b16 %v1596, %v1588
      %v1773 = vpack.c.b16 %v1597, %v1589
      %v1774 = vpack.c.b16 %v1598, %v1590
      %v1775 = vpack.c.b16 %v1599, %v1591
      %v1776 = vpack.c.b16 %v1608, %v1600
      %v1777 = vpack.c.b16 %v1609, %v1601
      %v1778 = vpack.c.b16 %v1610, %v1602
      %v1779 = vpack.c.b16 %v1611, %v1603
      %v1780 = vpack.c.b16 %v1612, %v1604
      %v1781 = vpack.c.b16 %v1613, %v1605
      %v1782 = vpack.c.b16 %v1614, %v1606
      %v1783 = vpack.c.b16 %v1615, %v1607
      %v1784 = vpack.c.b16 %v1624, %v1616
      %v1785 = vpack.c.b16 %v1625, %v1617
      %v1786 = vpack.c.b16 %v1626, %v1618
      %v1787 = vpack.c.b16 %v1627, %v1619
      %v1788 = vpack.c.b16 %v1628, %v1620
      %v1789 = vpack.c.b16 %v1629, %v1621
      %v1790 = vpack.c.b16 %v1630, %v1622
      %v1791 = vpack.c.b16 %v1631, %v1623
      %v1792 = vpack.c.b16 %v1640, %v1632
      %v1793 = vpack.c.b16 %v1641, %v1633
      %v1794 = vpack.c.b16 %v1642, %v1634
      %v1795 = vpack.c.b16 %v1643, %v1635
      %v1796 = vpack.c.b16 %v1644, %v1636
      %v1797 = vpack.c.b16 %v1645, %v1637
      %v1798 = vpack.c.b16 %v1646, %v1638
      %v1799 = vpack.c.b16 %v1647, %v1639
      %v1800 = vpack.c.b16 %v1656, %v1648
      %v1801 = vpack.c.b16 %v1657, %v1649
      %v1802 = vpack.c.b16 %v1658, %v1650
      %v1803 = vpack.c.b16 %v1659, %v1651
      %v1804 = vpack.c.b16 %v1660, %v1652
      %v1805 = vpack.c.b16 %v1661, %v1653
      %v1806 = vpack.c.b16 %v1662, %v1654
      %v1807 = vpack.c.b16 %v1663, %v1655
      %v1808 = vpack.c.b16 %v1672, %v1664
      %v1809 = vpack.c.b16 %v1673, %v1665
      %v1810 = vpack.c.b16 %v1674, %v1666
      %v1811 = vpack.c.b16 %v1675, %v1667
      %v1812 = vpack.c.b16 %v1676, %v1668
      %v1813 = vpack.c.b16 %v1677, %v1669
      %v1814 = vpack.c.b16 %v1678, %v1670
      %v1815 = vpack.c.b16 %v1679, %v1671
      %v1816 = vpack.c.b16 %v1688, %v1680
      %v1817 = vpack.c.b16 %v1689, %v1681
      %v1818 = vpack.c.b16 %v1690, %v1682
      %v1819 = vpack.c.b16 %v1691, %v1683
      %v1820 = vpack.c.b16 %v1692, %v1684
      %v1821 = vpack.c.b16 %v1693, %v1685
      %v1822 = vpack.c.b16 %v1694, %v1686
      %v1823 = vpack.c.b16 %v1695, %v1687
      %1952 = vmatprep.subr.bf16.mxu0 %v1697
      %1953 = vmatpush1.bf16.msra.mxu0 %v1696
      %1954 = vmatprep.subr.bf16.mxu0 %v1705
      %1955 = vmatpush1.bf16.msra.mxu0 %v1704
      %1956 = vmatprep.subr.bf16.mxu0 %v1713
      %1957 = vmatpush1.bf16.msra.mxu0 %v1712
      %1958 = vmatprep.subr.bf16.mxu0 %v1721
      %1959 = vmatpush1.bf16.msra.mxu0 %v1720
      %1960 = vmatprep.subr.bf16.mxu0 %v1729
      %1961 = vmatpush1.bf16.msra.mxu0 %v1728
      %1962 = vmatprep.subr.bf16.mxu0 %v1737
      %1963 = vmatpush1.bf16.msra.mxu0 %v1736
      %1964 = vmatprep.subr.bf16.mxu0 %v1745
      %1965 = vmatpush1.bf16.msra.mxu0 %v1744
      %1966 = vmatprep.subr.bf16.mxu0 %v1753
      %1967 = vmatpush1.bf16.msra.mxu0 %v1752
      %1968 = vmatprep.subr.bf16.mxu0 %v1761
      %1969 = vmatpush1.bf16.msra.mxu0 %v1760
      %1970 = vmatprep.subr.bf16.mxu0 %v1769
      %1971 = vmatpush1.bf16.msra.mxu0 %v1768
      %1972 = vmatprep.subr.bf16.mxu0 %v1777
      %1973 = vmatpush1.bf16.msra.mxu0 %v1776
      %1974 = vmatprep.subr.bf16.mxu0 %v1785
      %1975 = vmatpush1.bf16.msra.mxu0 %v1784
      %1976 = vmatprep.subr.bf16.mxu0 %v1793
      %1977 = vmatpush1.bf16.msra.mxu0 %v1792
      %1978 = vmatprep.subr.bf16.mxu0 %v1801
      %1979 = vmatpush1.bf16.msra.mxu0 %v1800
      %1980 = vmatprep.subr.bf16.mxu0 %v1809
      %1981 = vmatpush1.bf16.msra.mxu0 %v1808
      %1982 = vmatprep.subr.bf16.mxu0 %v1817
      %1983 = vmatpush1.bf16.msra.mxu0 %v1816
      %1984 = vmatprep.mubr.bf16.mxu0 %v1183
      %1985 = vmatmul.mubr.bf16.gmra.mrb[0].mxu0 %v1182
      %v1986 = vpop.f32.mrb[0].mxu0
      %v1987 = vadd.f32 0.0, %v1986
      %v1988 = vpop.f32.mrb[0].mxu0
      %v1989 = vadd.f32 0.0, %v1988
      %v1990 = vpop.f32.mrb[0].mxu0
      %v1991 = vpop.f32.mrb[0].mxu0
      %1992 = vdwg.mxu0
      %1993 = vmatprep.subr.bf16.mxu0 %v1699
      %1994 = vmatpush1.bf16.msra.mxu0 %v1698
      %1995 = vmatprep.subr.bf16.mxu0 %v1707
      %1996 = vmatpush1.bf16.msra.mxu0 %v1706
      %1997 = vmatprep.subr.bf16.mxu0 %v1715
      %1998 = vmatpush1.bf16.msra.mxu0 %v1714
      %1999 = vmatprep.subr.bf16.mxu0 %v1723
      %2000 = vmatpush1.bf16.msra.mxu0 %v1722
      %2001 = vmatprep.subr.bf16.mxu0 %v1731
      %2002 = vmatpush1.bf16.msra.mxu0 %v1730
      %2003 = vmatprep.subr.bf16.mxu0 %v1739
      %2004 = vmatpush1.bf16.msra.mxu0 %v1738
      %2005 = vmatprep.subr.bf16.mxu0 %v1747
      %2006 = vmatpush1.bf16.msra.mxu0 %v1746
      %2007 = vmatprep.subr.bf16.mxu0 %v1755
      %2008 = vmatpush1.bf16.msra.mxu0 %v1754
      %2009 = vmatprep.subr.bf16.mxu0 %v1763
      %2010 = vmatpush1.bf16.msra.mxu0 %v1762
      %2011 = vmatprep.subr.bf16.mxu0 %v1771
      %2012 = vmatpush1.bf16.msra.mxu0 %v1770
      %2013 = vmatprep.subr.bf16.mxu0 %v1779
      %2014 = vmatpush1.bf16.msra.mxu0 %v1778
      %2015 = vmatprep.subr.bf16.mxu0 %v1787
      %2016 = vmatpush1.bf16.msra.mxu0 %v1786
      %2017 = vmatprep.subr.bf16.mxu0 %v1795
      %2018 = vmatpush1.bf16.msra.mxu0 %v1794
      %2019 = vmatprep.subr.bf16.mxu0 %v1803
      %2020 = vmatpush1.bf16.msra.mxu0 %v1802
      %2021 = vmatprep.subr.bf16.mxu0 %v1811
      %2022 = vmatpush1.bf16.msra.mxu0 %v1810
      %2023 = vmatprep.subr.bf16.mxu0 %v1819
      %2024 = vmatpush1.bf16.msra.mxu0 %v1818
      %2025 = vmatprep.mubr.bf16.mxu0 %v1183
      %2026 = vmatmul.mubr.bf16.gmra.mrb[0].mxu0 %v1182
      %v2027 = vpop.f32.mrb[0].mxu0
      %v2028 = vadd.f32 0.0, %v2027
      %v2029 = vpop.f32.mrb[0].mxu0
      %v2030 = vadd.f32 0.0, %v2029
      %v2031 = vpop.f32.mrb[0].mxu0
      %v2032 = vpop.f32.mrb[0].mxu0
      %2033 = vdwg.mxu0
      %2034 = vmatprep.subr.bf16.mxu0 %v1701
      %2035 = vmatpush1.bf16.msra.mxu0 %v1700
      %2036 = vmatprep.subr.bf16.mxu0 %v1709
      %2037 = vmatpush1.bf16.msra.mxu0 %v1708
      %2038 = vmatprep.subr.bf16.mxu0 %v1717
      %2039 = vmatpush1.bf16.msra.mxu0 %v1716
      %2040 = vmatprep.subr.bf16.mxu0 %v1725
      %2041 = vmatpush1.bf16.msra.mxu0 %v1724
      %2042 = vmatprep.subr.bf16.mxu0 %v1733
      %2043 = vmatpush1.bf16.msra.mxu0 %v1732
      %2044 = vmatprep.subr.bf16.mxu0 %v1741
      %2045 = vmatpush1.bf16.msra.mxu0 %v1740
      %2046 = vmatprep.subr.bf16.mxu0 %v1749
      %2047 = vmatpush1.bf16.msra.mxu0 %v1748
      %2048 = vmatprep.subr.bf16.mxu0 %v1757
      %2049 = vmatpush1.bf16.msra.mxu0 %v1756
      %2050 = vmatprep.subr.bf16.mxu0 %v1765
      %2051 = vmatpush1.bf16.msra.mxu0 %v1764
      %2052 = vmatprep.subr.bf16.mxu0 %v1773
      %2053 = vmatpush1.bf16.msra.mxu0 %v1772
      %2054 = vmatprep.subr.bf16.mxu0 %v1781
      %2055 = vmatpush1.bf16.msra.mxu0 %v1780
      %2056 = vmatprep.subr.bf16.mxu0 %v1789
      %2057 = vmatpush1.bf16.msra.mxu0 %v1788
      %2058 = vmatprep.subr.bf16.mxu0 %v1797
      %2059 = vmatpush1.bf16.msra.mxu0 %v1796
      %2060 = vmatprep.subr.bf16.mxu0 %v1805
      %2061 = vmatpush1.bf16.msra.mxu0 %v1804
      %2062 = vmatprep.subr.bf16.mxu0 %v1813
      %2063 = vmatpush1.bf16.msra.mxu0 %v1812
      %2064 = vmatprep.subr.bf16.mxu0 %v1821
      %2065 = vmatpush1.bf16.msra.mxu0 %v1820
      %2066 = vmatprep.mubr.bf16.mxu0 %v1183
      %2067 = vmatmul.mubr.bf16.gmra.mrb[0].mxu0 %v1182
      %v2068 = vpop.f32.mrb[0].mxu0
      %v2069 = vadd.f32 0.0, %v2068
      %v2070 = vpop.f32.mrb[0].mxu0
      %v2071 = vadd.f32 0.0, %v2070
      %v2072 = vpop.f32.mrb[0].mxu0
      %v2073 = vpop.f32.mrb[0].mxu0
      %2074 = vdwg.mxu0
      %2075 = vmatprep.subr.bf16.mxu0 %v1703
      %2076 = vmatpush1.bf16.msra.mxu0 %v1702
      %2077 = vmatprep.subr.bf16.mxu0 %v1711
      %2078 = vmatpush1.bf16.msra.mxu0 %v1710
      %2079 = vmatprep.subr.bf16.mxu0 %v1719
      %2080 = vmatpush1.bf16.msra.mxu0 %v1718
      %2081 = vmatprep.subr.bf16.mxu0 %v1727
      %2082 = vmatpush1.bf16.msra.mxu0 %v1726
      %2083 = vmatprep.subr.bf16.mxu0 %v1735
      %2084 = vmatpush1.bf16.msra.mxu0 %v1734
      %2085 = vmatprep.subr.bf16.mxu0 %v1743
      %2086 = vmatpush1.bf16.msra.mxu0 %v1742
      %2087 = vmatprep.subr.bf16.mxu0 %v1751
      %2088 = vmatpush1.bf16.msra.mxu0 %v1750
      %2089 = vmatprep.subr.bf16.mxu0 %v1759
      %2090 = vmatpush1.bf16.msra.mxu0 %v1758
      %2091 = vmatprep.subr.bf16.mxu0 %v1767
      %2092 = vmatpush1.bf16.msra.mxu0 %v1766
      %2093 = vmatprep.subr.bf16.mxu0 %v1775
      %2094 = vmatpush1.bf16.msra.mxu0 %v1774
      %2095 = vmatprep.subr.bf16.mxu0 %v1783
      %2096 = vmatpush1.bf16.msra.mxu0 %v1782
      %2097 = vmatprep.subr.bf16.mxu0 %v1791
      %2098 = vmatpush1.bf16.msra.mxu0 %v1790
      %2099 = vmatprep.subr.bf16.mxu0 %v1799
      %2100 = vmatpush1.bf16.msra.mxu0 %v1798
      %2101 = vmatprep.subr.bf16.mxu0 %v1807
      %2102 = vmatpush1.bf16.msra.mxu0 %v1806
      %2103 = vmatprep.subr.bf16.mxu0 %v1815
      %2104 = vmatpush1.bf16.msra.mxu0 %v1814
      %2105 = vmatprep.subr.bf16.mxu0 %v1823
      %2106 = vmatpush1.bf16.msra.mxu0 %v1822
      %2107 = vmatprep.mubr.bf16.mxu0 %v1183
      %2108 = vmatmul.mubr.bf16.gmra.mrb[0].mxu0 %v1182
      %v2109 = vpop.f32.mrb[0].mxu0
      %v2110 = vadd.f32 0.0, %v2109
      %v2111 = vpop.f32.mrb[0].mxu0
      %v2112 = vadd.f32 0.0, %v2111
      %v2113 = vpop.f32.mrb[0].mxu0
      %v2114 = vpop.f32.mrb[0].mxu0
      %2115 = vdwg.mxu0
      %v2124 = vcombine.low %v1987, %v1989
      %v2125 = vcombine.low %v2028, %v2030
      %v2127 = vunpack.c.l.s4 1983009808
      %v2128 = vunpack.c.0.s8 %v2127
      %v2129 = vlaneseq
      %v2130 = vshrl.u32 %v2129, 7
      %v2131 = vsub.s32 %v2128, %v2130
      %v2132 = vrot.slane %v2124, %v2131
      %v2134 = vunpack.c.l.s4 1983009808
      %v2135 = vunpack.c.0.s8 %v2134
      %v2136 = vlaneseq
      %v2137 = vshrl.u32 %v2136, 7
      %v2138 = vsub.s32 %v2135, %v2137
      %v2139 = vrot.slane %v2125, %v2138
      %v2140 = vcombine.low %v2132, %v2139
      %v2141 = vcombine.low %v2069, %v2071
      %v2142 = vcombine.low %v2110, %v2112
      %v2144 = vunpack.c.l.s4 1983009808
      %v2145 = vunpack.c.0.s8 %v2144
      %v2146 = vlaneseq
      %v2147 = vshrl.u32 %v2146, 7
      %v2148 = vsub.s32 %v2145, %v2147
      %v2149 = vrot.slane %v2141, %v2148
      %v2151 = vunpack.c.l.s4 1983009808
      %v2152 = vunpack.c.0.s8 %v2151
      %v2153 = vlaneseq
      %v2154 = vshrl.u32 %v2153, 7
      %v2155 = vsub.s32 %v2152, %v2154
      %v2156 = vrot.slane %v2142, %v2155
      %v2157 = vcombine.low %v2149, %v2156
      %v2160 = vadd.f32 %v1168, %v2140
      %v2161 = vadd.f32 %v1169, %v2157
      %v2162 = vld [vmem:[#allocation5] sm:$0xf]
      %v2163 = vxor.u32 %v2160, 2147483648
      %v2164 = vmul.f32 %v2163, 1.442695
      %v2165 = vpow.pop %v2164
      %v2166 = vadd.f32 %v2165, 1.0
      %v2167 = vrcp.pop %v2166
      %v2168 = vmul.f32 1.0, %v2167
      %v2170 = vrot.slane %v2160, 4
      %v2172 = vxor.u32 %v2170, 2147483648
      %v2173 = vmul.f32 %v2172, 1.442695
      %v2174 = vpow.pop %v2173
      %v2175 = vadd.f32 %v2174, 1.0
      %v2176 = vrcp.pop %v2175
      %v2177 = vmul.f32 1.0, %v2176
      %v2178 = vtanh.pop %v2161
      %v2180 = vrot.slane %v2161, 4
      %v2182 = vxor.u32 %v2180, 2147483648
      %v2183 = vmul.f32 %v2182, 1.442695
      %v2184 = vpow.pop %v2183
      %v2185 = vadd.f32 %v2184, 1.0
      %v2186 = vrcp.pop %v2185
      %v2187 = vmul.f32 1.0, %v2186
      %v2188 = vmul.f32 %v2177, %v2162
      %v2189 = vmul.f32 %v2168, %v2178
      %v2190 = vadd.f32 %v2188, %v2189
      %v2191 = vtanh.pop %v2190
      %v2192 = vmul.f32 %v2187, %v2191
      %2193 = vst [vmem:[#allocation4] sm:$0xf] %v2192
      %2194 = vst [vmem:[#allocation5] sm:$0xf] %v2190
      %v2197 = vunpack.c.l.s4 1983009808
      %v2198 = vunpack.c.0.s8 %v2197
      %v2199 = vlaneseq
      %v2200 = vshrl.u32 %v2199, 7
      %v2201 = vsub.s32 %v2198, %v2200
      %v2202 = vrot.slane %v2192, %v2201
      %v2203 = vcombine.high %v2202, %v2202
      %v2206 = vpack.c.bf16 %v2202, %v2202
      %v2207 = vpack.c.bf16 %v2203, %v2203
      %v2210 = vcombine.low %v2206, %v2207
      %v2212 = vunpack.c.l.s4 1966171168
      %v2213 = vunpack.c.0.s8 %v2212
      %v2214 = vlaneseq
      %v2215 = vshrl.u32 %v2214, 7
      %v2216 = vsub.s32 %v2213, %v2215
      %v2217 = vrot.slane %v2210, %v2216
      %v2219 = vunpack.c.l.s4 1966171168
      %v2220 = vunpack.c.0.s8 %v2219
      %v2221 = vlaneseq
      %v2222 = vshrl.u32 %v2221, 7
      %v2223 = vsub.s32 %v2220, %v2222
      %v2224 = vrot.slane %v2217, %v2223
      %s2226 = smul.u32 %s1164, 2
      %s2227 = scalar_lea.vmem %s83, %s2226
      %2228 = vst [vmem:[%s2227] sm:$0x3] %v2224
    $region34: #{acoustic_estimator_forward.8} parent=1 // loop_footer
      %s99 = sadd.s32 1, %s95
    $region35: #{acoustic_estimator_forward.8} parent=1 // loop_footer_branch
      %94 = sbr.rel target = $region31
    $region36: #{acoustic_estimator_forward.8} parent=1 // loop_exit
      _
    %s2229 = ssub.s32 0, 0
    %s2230 = smul.u32 8, %s2229
    %p2231 = scmp.lt.s32.totalorder %s2230, 7
    %s2232 = scalar_select %p2231, %s2230, 7
    %s2233 = smul.addr %s2232, 2
    %s2234 = scalar_lea.vmem %s5, %s2233
    // Predicated region
    $region37: #{acoustic_estimator_forward.8} parent=1 // pred_check
      _
    $region38: #{acoustic_estimator_forward.8} parent=1 // pred_check_branch
      %2236 = sbr.rel (0) target = $region40
    $region39: #{acoustic_estimator_forward.8} parent=1 // pred_region
      _
    $region40: #{acoustic_estimator_forward.8} parent=1 // pred_fallthru
      _
    // Predicated region
    $region41: #{acoustic_estimator_forward.8} parent=1 // pred_check
      _
    $region42: #{acoustic_estimator_forward.8} parent=1 // pred_check_branch
      %2238 = sbr.rel (0) target = $region44
    $region43: #{acoustic_estimator_forward.8} parent=1 // pred_region
      %s2239 = ssub.s32 0, 0
      %s2240 = smul.u32 8, %s2239
    $region44: #{acoustic_estimator_forward.8} parent=1 // pred_fallthru
      _
    // Predicated region
    $region45: #{acoustic_estimator_forward.8} parent=1 // pred_check
      _
    $region46: #{acoustic_estimator_forward.8} parent=1 // pred_check_branch
      %2242 = sbr.rel (0) target = $region48
    $region47: #{acoustic_estimator_forward.8} parent=1 // pred_region
      _
    $region48: #{acoustic_estimator_forward.8} parent=1 // pred_fallthru
      _
    // Predicated region
    $region49: #{acoustic_estimator_forward.8} parent=1 // pred_check
      _
    $region50: #{acoustic_estimator_forward.8} parent=1 // pred_check_branch
      %2244 = sbr.rel (0) target = $region52
    $region51: #{acoustic_estimator_forward.8} parent=1 // pred_region
      %s2245 = ssub.s32 0, 0
      %s2246 = smul.u32 8, %s2245
      %p2247 = scmp.lt.s32.totalorder %s2246, 7
      %s2248 = scalar_select %p2247, %s2246, 7
      %s2249 = smul.addr %s2248, 2
      %s2250 = scalar_lea.vmem %s5, %s2249
    $region52: #{acoustic_estimator_forward.8} parent=1 // pred_fallthru
      _
    %2251 = vsyncpa [#allocation7], 1
    %2252 = vsyncpa [#allocation9], 1

// kernel: acoustic_estimator_forward.10
$region0: #{acoustic_estimator_forward.10}
  #allocation0 [shape = 'u32[]', space=smem, size = 0x4, offset = 0x4, fixed_abs, tag = 'smem constant byte address 0x4 - core index']
  #allocation1 [shape = 'u32[144,128]{1,0:T(1,128)}', space=vmem, size = 0x12000, scoped, tag = 'internal scratch']
  #allocation2 [shape = 'f32[2,256]{1,0:T(2,128)}', space=vmem, size = 0x800, scoped, tag = 'scratch operand']
  #allocation3 [shape = 'f32[2,256]{1,0:T(2,128)}', space=vmem, size = 0x800, scoped, tag = 'scratch operand']
  #allocation4 [shape = 'f32[2,256]{1,0:T(2,128)}', space=vmem, size = 0x800, scoped, tag = 'scratch operand']
  #allocation5 [shape = 'f32[2,256]{1,0:T(2,128)}', space=vmem, size = 0x800, scoped, tag = 'scratch operand']
  %s0 = inlined_call_operand.vmem [shape: f32[8,2,1024], index: 0, kind: input, shape index: {}]
  %s1 = inlined_call_operand.vmem [shape: f32[8,2,1024], index: 1, kind: input, shape index: {}]
  %s2 = inlined_call_operand.vmem [shape: bf16[256,1024], index: 2, kind: input, shape index: {}]
  %s3 = inlined_call_operand.vmem [shape: bf16[256,1024], index: 3, kind: input, shape index: {}]
  %s4 = inlined_call_operand.vmem [shape: bf16[8,2,256], index: 4, kind: output, shape index: {0}]
  %s5 = inlined_call_operand.vmem [shape: bf16[8,2,256], index: 5, kind: output, shape index: {1}]
  %6 = xla_tuple %s4, %s5
  %s7 = sld [smem:[#allocation0]]
  $region45: #{acoustic_estimator_forward.10} parent=0
    _
  %s9 = ssub.s32 1, %s7
  %s10 = scalar_select 0, %s9, %s7
  // Predicated region
  $region2: #{acoustic_estimator_forward.10} parent=0 // pred_check
    _
  $region3: #{acoustic_estimator_forward.10} parent=0 // pred_check_branch
    %12 = sbr.rel (0) target = $region5
  $region4: #{acoustic_estimator_forward.10} parent=0 // pred_region
    _
  $region5: #{acoustic_estimator_forward.10} parent=0 // pred_fallthru
    _
  // Predicated region
  $region6: #{acoustic_estimator_forward.10} parent=0 // pred_check
    _
  $region7: #{acoustic_estimator_forward.10} parent=0 // pred_check_branch
    %14 = sbr.rel (0) target = $region9
  $region8: #{acoustic_estimator_forward.10} parent=0 // pred_region
    %s15 = ssub.s32 0, 0
    %s16 = smul.u32 8, %s15
    %p17 = scmp.lt.s32.totalorder %s16, 7
    %s18 = scalar_select %p17, %s16, 7
    %s19 = smul.addr %s18, 8
    %s20 = smul.addr %s19, 2
    %s21 = scalar_lea.vmem %s1, %s20
    %s22 = ssub.s32 0, 0
    %s23 = smul.u32 8, %s22
  $region9: #{acoustic_estimator_forward.10} parent=0 // pred_fallthru
    _
  // Predicated region
  $region10: #{acoustic_estimator_forward.10} parent=0 // pred_check
    _
  $region11: #{acoustic_estimator_forward.10} parent=0 // pred_check_branch
    %25 = sbr.rel (0) target = $region13
  $region12: #{acoustic_estimator_forward.10} parent=0 // pred_region
    _
  $region13: #{acoustic_estimator_forward.10} parent=0 // pred_fallthru
    _
  // Predicated region
  $region14: #{acoustic_estimator_forward.10} parent=0 // pred_check
    _
  $region15: #{acoustic_estimator_forward.10} parent=0 // pred_check_branch
    %27 = sbr.rel (0) target = $region17
  $region16: #{acoustic_estimator_forward.10} parent=0 // pred_region
    _
  $region17: #{acoustic_estimator_forward.10} parent=0 // pred_fallthru
    _
  %s28 = ssub.s32 0, 0
  %s29 = smul.u32 8, %s28
  %p30 = scmp.lt.s32.totalorder %s29, 7
  %s31 = scalar_select %p30, %s29, 7
  %s32 = smul.addr %s31, 8
  %s33 = smul.addr %s32, 2
  %s34 = scalar_lea.vmem %s1, %s33
  %s35 = ssub.s32 0, 0
  %s36 = smul.u32 8, %s35
  %p37 = scmp.lt.s32.totalorder %s36, 7
  %s38 = scalar_select %p37, %s36, 7
  %s39 = smul.addr %s38, 2
  %s40 = scalar_lea.vmem %s5, %s39
  %s41 = ssub.s32 0, 0
  %s42 = smul.u32 8, %s41
  %p43 = scmp.lt.s32.totalorder %s42, 7
  %s44 = scalar_select %p43, %s42, 7
  %s45 = smul.addr %s44, 8
  %s46 = smul.addr %s45, 2
  %s47 = scalar_lea.vmem %s1, %s46
  %s48 = ssub.s32 0, 0
  %s49 = smul.u32 8, %s48
  %s50 = ssub.s32 0, 0
  %s51 = smul.u32 8, %s50
  %p52 = scmp.lt.s32.totalorder %s51, 7
  %s53 = scalar_select %p52, %s51, 7
  %s54 = smul.addr %s53, 2
  %s55 = scalar_lea.vmem %s5, %s54
  %s56 = ssub.s32 0, 0
  %s57 = smul.u32 8, %s56
  %p58 = scmp.eq.s32.totalorder 0, 0
  // Predicated region
  $region18: #{acoustic_estimator_forward.10} parent=0 // pred_check
    %p59 = pneg %p58
  $region19: #{acoustic_estimator_forward.10} parent=0 // pred_check_branch
    %61 = sbr.rel (%p59) target = $region21
  $region20: #{acoustic_estimator_forward.10} parent=0 // pred_region
    %62 = vst [vmem:[#allocation2] sm:$0xf] 0.0
    %63 = vst [vmem:[#allocation3] sm:$0xf] 0.0
    %64 = vst [vmem:[#allocation4] sm:$0xf] 0.0
    %65 = vst [vmem:[#allocation5] sm:$0xf] 0.0
  $region21: #{acoustic_estimator_forward.10} parent=0 // pred_fallthru
    _
  loop: start=0, step=1, limit=8
  $region22: #{acoustic_estimator_forward.10} parent=0 // loop_pre_header
    _
  $region23: #{acoustic_estimator_forward.10} parent=0 // loop_header
    %s67 = sphi 0, %s71
    %p68 = scmp.ge.s32.totalorder %s67, 8
  $region24: #{acoustic_estimator_forward.10} parent=0 // loop_header_branch
    %70 = sbr.rel (%p68) target = $region28
  $region25: #{acoustic_estimator_forward.10} parent=0 // loop_body
    %s72 = smul.u32 %s67, 8
    %s73 = smul.addr %s72, 2
    %s74 = scalar_lea.vmem %s0, %s73
    %v75 = vld [vmem:[%s74] sm:$0xff]
    %v76 = vld [vmem:[%s74 + $0x8] sm:$0xff]
    %v77 = vld [vmem:[#allocation2] sm:$0xf]
    %v80 = vunpack.c.l.s4 1983009808
    %v81 = vunpack.c.0.s8 %v80
    %v82 = vlaneseq
    %v83 = vshrl.u32 %v82, 7
    %v84 = vsub.s32 %v81, %v83
    %v85 = vrot.slane %v77, %v84
    %v86 = vcombine.high %v85, %v85
    %v89 = vpack.c.bf16 %v85, %v85
    %v90 = vpack.c.bf16 %v86, %v86
    %v91 = vld [vmem:[%s2] sm:$0xff]
    %v92 = vld [vmem:[%s2 + $0x8] sm:$0xff]
    %v93 = vld [vmem:[%s2 + $0x10] sm:$0xff]
    %v94 = vld [vmem:[%s2 + $0x18] sm:$0xff]
    %v95 = vld [vmem:[%s2 + $0x20] sm:$0xff]
    %v96 = vld [vmem:[%s2 + $0x28] sm:$0xff]
    %v97 = vld [vmem:[%s2 + $0x30] sm:$0xff]
    %v98 = vld [vmem:[%s2 + $0x38] sm:$0xff]
    %v99 = vld [vmem:[%s2 + $0x40] sm:$0xff]
    %v100 = vld [vmem:[%s2 + $0x48] sm:$0xff]
    %v101 = vld [vmem:[%s2 + $0x50] sm:$0xff]
    %v102 = vld [vmem:[%s2 + $0x58] sm:$0xff]
    %v103 = vld [vmem:[%s2 + $0x60] sm:$0xff]
    %v104 = vld [vmem:[%s2 + $0x68] sm:$0xff]
    %v105 = vld [vmem:[%s2 + $0x70] sm:$0xff]
    %v106 = vld [vmem:[%s2 + $0x78] sm:$0xff]
    %v107 = vld [vmem:[%s2 + $0x80] sm:$0xff]
    %v108 = vld [vmem:[%s2 + $0x88] sm:$0xff]
    %v109 = vld [vmem:[%s2 + $0x90] sm:$0xff]
    %v110 = vld [vmem:[%s2 + $0x98] sm:$0xff]
    %v111 = vld [vmem:[%s2 + $0xa0] sm:$0xff]
    %v112 = vld [vmem:[%s2 + $0xa8] sm:$0xff]
    %v113 = vld [vmem:[%s2 + $0xb0] sm:$0xff]
    %v114 = vld [vmem:[%s2 + $0xb8] sm:$0xff]
    %v115 = vld [vmem:[%s2 + $0xc0] sm:$0xff]
    %v116 = vld [vmem:[%s2 + $0xc8] sm:$0xff]
    %v117 = vld [vmem:[%s2 + $0xd0] sm:$0xff]
    %v118 = vld [vmem:[%s2 + $0xd8] sm:$0xff]
    %v119 = vld [vmem:[%s2 + $0xe0] sm:$0xff]
    %v120 = vld [vmem:[%s2 + $0xe8] sm:$0xff]
    %v121 = vld [vmem:[%s2 + $0xf0] sm:$0xff]
    %v122 = vld [vmem:[%s2 + $0xf8] sm:$0xff]
    %v123 = vld [vmem:[%s2 + $0x100] sm:$0xff]
    %v124 = vld [vmem:[%s2 + $0x108] sm:$0xff]
    %v125 = vld [vmem:[%s2 + $0x110] sm:$0xff]
    %v126 = vld [vmem:[%s2 + $0x118] sm:$0xff]
    %v127 = vld [vmem:[%s2 + $0x120] sm:$0xff]
    %v128 = vld [vmem:[%s2 + $0x128] sm:$0xff]
    %v129 = vld [vmem:[%s2 + $0x130] sm:$0xff]
    %v130 = vld [vmem:[%s2 + $0x138] sm:$0xff]
    %v131 = vld [vmem:[%s2 + $0x140] sm:$0xff]
    %v132 = vld [vmem:[%s2 + $0x148] sm:$0xff]
    %v133 = vld [vmem:[%s2 + $0x150] sm:$0xff]
    %v134 = vld [vmem:[%s2 + $0x158] sm:$0xff]
    %v135 = vld [vmem:[%s2 + $0x160] sm:$0xff]
    %v136 = vld [vmem:[%s2 + $0x168] sm:$0xff]
    %v137 = vld [vmem:[%s2 + $0x170] sm:$0xff]
    %v138 = vld [vmem:[%s2 + $0x178] sm:$0xff]
    %v139 = vld [vmem:[%s2 + $0x180] sm:$0xff]
    %v140 = vld [vmem:[%s2 + $0x188] sm:$0xff]
    %v141 = vld [vmem:[%s2 + $0x190] sm:$0xff]
    %v142 = vld [vmem:[%s2 + $0x198] sm:$0xff]
    %v143 = vld [vmem:[%s2 + $0x1a0] sm:$0xff]
    %v144 = vld [vmem:[%s2 + $0x1a8] sm:$0xff]
    %v145 = vld [vmem:[%s2 + $0x1b0] sm:$0xff]
    %v146 = vld [vmem:[%s2 + $0x1b8] sm:$0xff]
    %v147 = vld [vmem:[%s2 + $0x1c0] sm:$0xff]
    %v148 = vld [vmem:[%s2 + $0x1c8] sm:$0xff]
    %v149 = vld [vmem:[%s2 + $0x1d0] sm:$0xff]
    %v150 = vld [vmem:[%s2 + $0x1d8] sm:$0xff]
    %v151 = vld [vmem:[%s2 + $0x1e0] sm:$0xff]
    %v152 = vld [vmem:[%s2 + $0x1e8] sm:$0xff]
    %v153 = vld [vmem:[%s2 + $0x1f0] sm:$0xff]
    %v154 = vld [vmem:[%s2 + $0x1f8] sm:$0xff]
    %v155 = vld [vmem:[%s2 + $0x200] sm:$0xff]
    %v156 = vld [vmem:[%s2 + $0x208] sm:$0xff]
    %v157 = vld [vmem:[%s2 + $0x210] sm:$0xff]
    %v158 = vld [vmem:[%s2 + $0x218] sm:$0xff]
    %v159 = vld [vmem:[%s2 + $0x220] sm:$0xff]
    %v160 = vld [vmem:[%s2 + $0x228] sm:$0xff]
    %v161 = vld [vmem:[%s2 + $0x230] sm:$0xff]
    %v162 = vld [vmem:[%s2 + $0x238] sm:$0xff]
    %v163 = vld [vmem:[%s2 + $0x240] sm:$0xff]
    %v164 = vld [vmem:[%s2 + $0x248] sm:$0xff]
    %v165 = vld [vmem:[%s2 + $0x250] sm:$0xff]
    %v166 = vld [vmem:[%s2 + $0x258] sm:$0xff]
    %v167 = vld [vmem:[%s2 + $0x260] sm:$0xff]
    %v168 = vld [vmem:[%s2 + $0x268] sm:$0xff]
    %v169 = vld [vmem:[%s2 + $0x270] sm:$0xff]
    %v170 = vld [vmem:[%s2 + $0x278] sm:$0xff]
    %v171 = vld [vmem:[%s2 + $0x280] sm:$0xff]
    %v172 = vld [vmem:[%s2 + $0x288] sm:$0xff]
    %v173 = vld [vmem:[%s2 + $0x290] sm:$0xff]
    %v174 = vld [vmem:[%s2 + $0x298] sm:$0xff]
    %v175 = vld [vmem:[%s2 + $0x2a0] sm:$0xff]
    %v176 = vld [vmem:[%s2 + $0x2a8] sm:$0xff]
    %v177 = vld [vmem:[%s2 + $0x2b0] sm:$0xff]
    %v178 = vld [vmem:[%s2 + $0x2b8] sm:$0xff]
    %v179 = vld [vmem:[%s2 + $0x2c0] sm:$0xff]
    %v180 = vld [vmem:[%s2 + $0x2c8] sm:$0xff]
    %v181 = vld [vmem:[%s2 + $0x2d0] sm:$0xff]
    %v182 = vld [vmem:[%s2 + $0x2d8] sm:$0xff]
    %v183 = vld [vmem:[%s2 + $0x2e0] sm:$0xff]
    %v184 = vld [vmem:[%s2 + $0x2e8] sm:$0xff]
    %v185 = vld [vmem:[%s2 + $0x2f0] sm:$0xff]
    %v186 = vld [vmem:[%s2 + $0x2f8] sm:$0xff]
    %v187 = vld [vmem:[%s2 + $0x300] sm:$0xff]
    %v188 = vld [vmem:[%s2 + $0x308] sm:$0xff]
    %v189 = vld [vmem:[%s2 + $0x310] sm:$0xff]
    %v190 = vld [vmem:[%s2 + $0x318] sm:$0xff]
    %v191 = vld [vmem:[%s2 + $0x320] sm:$0xff]
    %v192 = vld [vmem:[%s2 + $0x328] sm:$0xff]
    %v193 = vld [vmem:[%s2 + $0x330] sm:$0xff]
    %v194 = vld [vmem:[%s2 + $0x338] sm:$0xff]
    %v195 = vld [vmem:[%s2 + $0x340] sm:$0xff]
    %v196 = vld [vmem:[%s2 + $0x348] sm:$0xff]
    %v197 = vld [vmem:[%s2 + $0x350] sm:$0xff]
    %v198 = vld [vmem:[%s2 + $0x358] sm:$0xff]
    %v199 = vld [vmem:[%s2 + $0x360] sm:$0xff]
    %v200 = vld [vmem:[%s2 + $0x368] sm:$0xff]
    %v201 = vld [vmem:[%s2 + $0x370] sm:$0xff]
    %v202 = vld [vmem:[%s2 + $0x378] sm:$0xff]
    %v203 = vld [vmem:[%s2 + $0x380] sm:$0xff]
    %v204 = vld [vmem:[%s2 + $0x388] sm:$0xff]
    %v205 = vld [vmem:[%s2 + $0x390] sm:$0xff]
    %v206 = vld [vmem:[%s2 + $0x398] sm:$0xff]
    %v207 = vld [vmem:[%s2 + $0x3a0] sm:$0xff]
    %v208 = vld [vmem:[%s2 + $0x3a8] sm:$0xff]
    %v209 = vld [vmem:[%s2 + $0x3b0] sm:$0xff]
    %v210 = vld [vmem:[%s2 + $0x3b8] sm:$0xff]
    %v211 = vld [vmem:[%s2 + $0x3c0] sm:$0xff]
    %v212 = vld [vmem:[%s2 + $0x3c8] sm:$0xff]
    %v213 = vld [vmem:[%s2 + $0x3d0] sm:$0xff]
    %v214 = vld [vmem:[%s2 + $0x3d8] sm:$0xff]
    %v215 = vld [vmem:[%s2 + $0x3e0] sm:$0xff]
    %v216 = vld [vmem:[%s2 + $0x3e8] sm:$0xff]
    %v217 = vld [vmem:[%s2 + $0x3f0] sm:$0xff]
    %v218 = vld [vmem:[%s2 + $0x3f8] sm:$0xff]
    %v347 = vunpack.c.l.b16 %v91
    %v348 = vunpack.c.h.b16 %v91
    %v349 = vunpack.c.l.b16 %v92
    %v350 = vunpack.c.h.b16 %v92
    %v351 = vunpack.c.l.b16 %v93
    %v352 = vunpack.c.h.b16 %v93
    %v353 = vunpack.c.l.b16 %v94
    %v354 = vunpack.c.h.b16 %v94
    %v355 = vunpack.c.l.b16 %v95
    %v356 = vunpack.c.h.b16 %v95
    %v357 = vunpack.c.l.b16 %v96
    %v358 = vunpack.c.h.b16 %v96
    %v359 = vunpack.c.l.b16 %v97
    %v360 = vunpack.c.h.b16 %v97
    %v361 = vunpack.c.l.b16 %v98
    %v362 = vunpack.c.h.b16 %v98
    %v363 = vunpack.c.l.b16 %v99
    %v364 = vunpack.c.h.b16 %v99
    %v365 = vunpack.c.l.b16 %v100
    %v366 = vunpack.c.h.b16 %v100
    %v367 = vunpack.c.l.b16 %v101
    %v368 = vunpack.c.h.b16 %v101
    %v369 = vunpack.c.l.b16 %v102
    %v370 = vunpack.c.h.b16 %v102
    %v371 = vunpack.c.l.b16 %v103
    %v372 = vunpack.c.h.b16 %v103
    %v373 = vunpack.c.l.b16 %v104
    %v374 = vunpack.c.h.b16 %v104
    %v375 = vunpack.c.l.b16 %v105
    %v376 = vunpack.c.h.b16 %v105
    %v377 = vunpack.c.l.b16 %v106
    %v378 = vunpack.c.h.b16 %v106
    %v379 = vunpack.c.l.b16 %v107
    %v380 = vunpack.c.h.b16 %v107
    %v381 = vunpack.c.l.b16 %v108
    %v382 = vunpack.c.h.b16 %v108
    %v383 = vunpack.c.l.b16 %v109
    %v384 = vunpack.c.h.b16 %v109
    %v385 = vunpack.c.l.b16 %v110
    %v386 = vunpack.c.h.b16 %v110
    %v387 = vunpack.c.l.b16 %v111
    %v388 = vunpack.c.h.b16 %v111
    %v389 = vunpack.c.l.b16 %v112
    %v390 = vunpack.c.h.b16 %v112
    %v391 = vunpack.c.l.b16 %v113
    %v392 = vunpack.c.h.b16 %v113
    %v393 = vunpack.c.l.b16 %v114
    %v394 = vunpack.c.h.b16 %v114
    %v395 = vunpack.c.l.b16 %v115
    %v396 = vunpack.c.h.b16 %v115
    %v397 = vunpack.c.l.b16 %v116
    %v398 = vunpack.c.h.b16 %v116
    %v399 = vunpack.c.l.b16 %v117
    %v400 = vunpack.c.h.b16 %v117
    %v401 = vunpack.c.l.b16 %v118
    %v402 = vunpack.c.h.b16 %v118
    %v403 = vunpack.c.l.b16 %v119
    %v404 = vunpack.c.h.b16 %v119
    %v405 = vunpack.c.l.b16 %v120
    %v406 = vunpack.c.h.b16 %v120
    %v407 = vunpack.c.l.b16 %v121
    %v408 = vunpack.c.h.b16 %v121
    %v409 = vunpack.c.l.b16 %v122
    %v410 = vunpack.c.h.b16 %v122
    %v411 = vunpack.c.l.b16 %v123
    %v412 = vunpack.c.h.b16 %v123
    %v413 = vunpack.c.l.b16 %v124
    %v414 = vunpack.c.h.b16 %v124
    %v415 = vunpack.c.l.b16 %v125
    %v416 = vunpack.c.h.b16 %v125
    %v417 = vunpack.c.l.b16 %v126
    %v418 = vunpack.c.h.b16 %v126
    %v419 = vunpack.c.l.b16 %v127
    %v420 = vunpack.c.h.b16 %v127
    %v421 = vunpack.c.l.b16 %v128
    %v422 = vunpack.c.h.b16 %v128
    %v423 = vunpack.c.l.b16 %v129
    %v424 = vunpack.c.h.b16 %v129
    %v425 = vunpack.c.l.b16 %v130
    %v426 = vunpack.c.h.b16 %v130
    %v427 = vunpack.c.l.b16 %v131
    %v428 = vunpack.c.h.b16 %v131
    %v429 = vunpack.c.l.b16 %v132
    %v430 = vunpack.c.h.b16 %v132
    %v431 = vunpack.c.l.b16 %v133
    %v432 = vunpack.c.h.b16 %v133
    %v433 = vunpack.c.l.b16 %v134
    %v434 = vunpack.c.h.b16 %v134
    %v435 = vunpack.c.l.b16 %v135
    %v436 = vunpack.c.h.b16 %v135
    %v437 = vunpack.c.l.b16 %v136
    %v438 = vunpack.c.h.b16 %v136
    %v439 = vunpack.c.l.b16 %v137
    %v440 = vunpack.c.h.b16 %v137
    %v441 = vunpack.c.l.b16 %v138
    %v442 = vunpack.c.h.b16 %v138
    %v443 = vunpack.c.l.b16 %v139
    %v444 = vunpack.c.h.b16 %v139
    %v445 = vunpack.c.l.b16 %v140
    %v446 = vunpack.c.h.b16 %v140
    %v447 = vunpack.c.l.b16 %v141
    %v448 = vunpack.c.h.b16 %v141
    %v449 = vunpack.c.l.b16 %v142
    %v450 = vunpack.c.h.b16 %v142
    %v451 = vunpack.c.l.b16 %v143
    %v452 = vunpack.c.h.b16 %v143
    %v453 = vunpack.c.l.b16 %v144
    %v454 = vunpack.c.h.b16 %v144
    %v455 = vunpack.c.l.b16 %v145
    %v456 = vunpack.c.h.b16 %v145
    %v457 = vunpack.c.l.b16 %v146
    %v458 = vunpack.c.h.b16 %v146
    %v459 = vunpack.c.l.b16 %v147
    %v460 = vunpack.c.h.b16 %v147
    %v461 = vunpack.c.l.b16 %v148
    %v462 = vunpack.c.h.b16 %v148
    %v463 = vunpack.c.l.b16 %v149
    %v464 = vunpack.c.h.b16 %v149
    %v465 = vunpack.c.l.b16 %v150
    %v466 = vunpack.c.h.b16 %v150
    %v467 = vunpack.c.l.b16 %v151
    %v468 = vunpack.c.h.b16 %v151
    %v469 = vunpack.c.l.b16 %v152
    %v470 = vunpack.c.h.b16 %v152
    %v471 = vunpack.c.l.b16 %v153
    %v472 = vunpack.c.h.b16 %v153
    %v473 = vunpack.c.l.b16 %v154
    %v474 = vunpack.c.h.b16 %v154
    %v475 = vunpack.c.l.b16 %v155
    %v476 = vunpack.c.h.b16 %v155
    %v477 = vunpack.c.l.b16 %v156
    %v478 = vunpack.c.h.b16 %v156
    %v479 = vunpack.c.l.b16 %v157
    %v480 = vunpack.c.h.b16 %v157
    %v481 = vunpack.c.l.b16 %v158
    %v482 = vunpack.c.h.b16 %v158
    %v483 = vunpack.c.l.b16 %v159
    %v484 = vunpack.c.h.b16 %v159
    %v485 = vunpack.c.l.b16 %v160
    %v486 = vunpack.c.h.b16 %v160
    %v487 = vunpack.c.l.b16 %v161
    %v488 = vunpack.c.h.b16 %v161
    %v489 = vunpack.c.l.b16 %v162
    %v490 = vunpack.c.h.b16 %v162
    %v491 = vunpack.c.l.b16 %v163
    %v492 = vunpack.c.h.b16 %v163
    %v493 = vunpack.c.l.b16 %v164
    %v494 = vunpack.c.h.b16 %v164
    %v495 = vunpack.c.l.b16 %v165
    %v496 = vunpack.c.h.b16 %v165
    %v497 = vunpack.c.l.b16 %v166
    %v498 = vunpack.c.h.b16 %v166
    %v499 = vunpack.c.l.b16 %v167
    %v500 = vunpack.c.h.b16 %v167
    %v501 = vunpack.c.l.b16 %v168
    %v502 = vunpack.c.h.b16 %v168
    %v503 = vunpack.c.l.b16 %v169
    %v504 = vunpack.c.h.b16 %v169
    %v505 = vunpack.c.l.b16 %v170
    %v506 = vunpack.c.h.b16 %v170
    %v507 = vunpack.c.l.b16 %v171
    %v508 = vunpack.c.h.b16 %v171
    %v509 = vunpack.c.l.b16 %v172
    %v510 = vunpack.c.h.b16 %v172
    %v511 = vunpack.c.l.b16 %v173
    %v512 = vunpack.c.h.b16 %v173
    %v513 = vunpack.c.l.b16 %v174
    %v514 = vunpack.c.h.b16 %v174
    %v515 = vunpack.c.l.b16 %v175
    %v516 = vunpack.c.h.b16 %v175
    %v517 = vunpack.c.l.b16 %v176
    %v518 = vunpack.c.h.b16 %v176
    %v519 = vunpack.c.l.b16 %v177
    %v520 = vunpack.c.h.b16 %v177
    %v521 = vunpack.c.l.b16 %v178
    %v522 = vunpack.c.h.b16 %v178
    %v523 = vunpack.c.l.b16 %v179
    %v524 = vunpack.c.h.b16 %v179
    %v525 = vunpack.c.l.b16 %v180
    %v526 = vunpack.c.h.b16 %v180
    %v527 = vunpack.c.l.b16 %v181
    %v528 = vunpack.c.h.b16 %v181
    %v529 = vunpack.c.l.b16 %v182
    %v530 = vunpack.c.h.b16 %v182
    %v531 = vunpack.c.l.b16 %v183
    %v532 = vunpack.c.h.b16 %v183
    %v533 = vunpack.c.l.b16 %v184
    %v534 = vunpack.c.h.b16 %v184
    %v535 = vunpack.c.l.b16 %v185
    %v536 = vunpack.c.h.b16 %v185
    %v537 = vunpack.c.l.b16 %v186
    %v538 = vunpack.c.h.b16 %v186
    %v539 = vunpack.c.l.b16 %v187
    %v540 = vunpack.c.h.b16 %v187
    %v541 = vunpack.c.l.b16 %v188
    %v542 = vunpack.c.h.b16 %v188
    %v543 = vunpack.c.l.b16 %v189
    %v544 = vunpack.c.h.b16 %v189
    %v545 = vunpack.c.l.b16 %v190
    %v546 = vunpack.c.h.b16 %v190
    %v547 = vunpack.c.l.b16 %v191
    %v548 = vunpack.c.h.b16 %v191
    %v549 = vunpack.c.l.b16 %v192
    %v550 = vunpack.c.h.b16 %v192
    %v551 = vunpack.c.l.b16 %v193
    %v552 = vunpack.c.h.b16 %v193
    %v553 = vunpack.c.l.b16 %v194
    %v554 = vunpack.c.h.b16 %v194
    %v555 = vunpack.c.l.b16 %v195
    %v556 = vunpack.c.h.b16 %v195
    %v557 = vunpack.c.l.b16 %v196
    %v558 = vunpack.c.h.b16 %v196
    %v559 = vunpack.c.l.b16 %v197
    %v560 = vunpack.c.h.b16 %v197
    %v561 = vunpack.c.l.b16 %v198
    %v562 = vunpack.c.h.b16 %v198
    %v563 = vunpack.c.l.b16 %v199
    %v564 = vunpack.c.h.b16 %v199
    %v565 = vunpack.c.l.b16 %v200
    %v566 = vunpack.c.h.b16 %v200
    %v567 = vunpack.c.l.b16 %v201
    %v568 = vunpack.c.h.b16 %v201
    %v569 = vunpack.c.l.b16 %v202
    %v570 = vunpack.c.h.b16 %v202
    %v571 = vunpack.c.l.b16 %v203
    %v572 = vunpack.c.h.b16 %v203
    %v573 = vunpack.c.l.b16 %v204
    %v574 = vunpack.c.h.b16 %v204
    %v575 = vunpack.c.l.b16 %v205
    %v576 = vunpack.c.h.b16 %v205
    %v577 = vunpack.c.l.b16 %v206
    %v578 = vunpack.c.h.b16 %v206
    %v579 = vunpack.c.l.b16 %v207
    %v580 = vunpack.c.h.b16 %v207
    %v581 = vunpack.c.l.b16 %v208
    %v582 = vunpack.c.h.b16 %v208
    %v583 = vunpack.c.l.b16 %v209
    %v584 = vunpack.c.h.b16 %v209
    %v585 = vunpack.c.l.b16 %v210
    %v586 = vunpack.c.h.b16 %v210
    %v587 = vunpack.c.l.b16 %v211
    %v588 = vunpack.c.h.b16 %v211
    %v589 = vunpack.c.l.b16 %v212
    %v590 = vunpack.c.h.b16 %v212
    %v591 = vunpack.c.l.b16 %v213
    %v592 = vunpack.c.h.b16 %v213
    %v593 = vunpack.c.l.b16 %v214
    %v594 = vunpack.c.h.b16 %v214
    %v595 = vunpack.c.l.b16 %v215
    %v596 = vunpack.c.h.b16 %v215
    %v597 = vunpack.c.l.b16 %v216
    %v598 = vunpack.c.h.b16 %v216
    %v599 = vunpack.c.l.b16 %v217
    %v600 = vunpack.c.h.b16 %v217
    %v601 = vunpack.c.l.b16 %v218
    %v602 = vunpack.c.h.b16 %v218
    %v603 = vpack.c.b16 %v355, %v347
    %v604 = vpack.c.b16 %v356, %v348
    %v605 = vpack.c.b16 %v357, %v349
    %v606 = vpack.c.b16 %v358, %v350
    %v607 = vpack.c.b16 %v359, %v351
    %v608 = vpack.c.b16 %v360, %v352
    %v609 = vpack.c.b16 %v361, %v353
    %v610 = vpack.c.b16 %v362, %v354
    %v611 = vpack.c.b16 %v371, %v363
    %v612 = vpack.c.b16 %v372, %v364
    %v613 = vpack.c.b16 %v373, %v365
    %v614 = vpack.c.b16 %v374, %v366
    %v615 = vpack.c.b16 %v375, %v367
    %v616 = vpack.c.b16 %v376, %v368
    %v617 = vpack.c.b16 %v377, %v369
    %v618 = vpack.c.b16 %v378, %v370
    %v619 = vpack.c.b16 %v387, %v379
    %v620 = vpack.c.b16 %v388, %v380
    %v621 = vpack.c.b16 %v389, %v381
    %v622 = vpack.c.b16 %v390, %v382
    %v623 = vpack.c.b16 %v391, %v383
    %v624 = vpack.c.b16 %v392, %v384
    %v625 = vpack.c.b16 %v393, %v385
    %v626 = vpack.c.b16 %v394, %v386
    %v627 = vpack.c.b16 %v403, %v395
    %v628 = vpack.c.b16 %v404, %v396
    %v629 = vpack.c.b16 %v405, %v397
    %v630 = vpack.c.b16 %v406, %v398
    %v631 = vpack.c.b16 %v407, %v399
    %v632 = vpack.c.b16 %v408, %v400
    %v633 = vpack.c.b16 %v409, %v401
    %v634 = vpack.c.b16 %v410, %v402
    %v635 = vpack.c.b16 %v419, %v411
    %v636 = vpack.c.b16 %v420, %v412
    %v637 = vpack.c.b16 %v421, %v413
    %v638 = vpack.c.b16 %v422, %v414
    %v639 = vpack.c.b16 %v423, %v415
    %v640 = vpack.c.b16 %v424, %v416
    %v641 = vpack.c.b16 %v425, %v417
    %v642 = vpack.c.b16 %v426, %v418
    %v643 = vpack.c.b16 %v435, %v427
    %v644 = vpack.c.b16 %v436, %v428
    %v645 = vpack.c.b16 %v437, %v429
    %v646 = vpack.c.b16 %v438, %v430
    %v647 = vpack.c.b16 %v439, %v431
    %v648 = vpack.c.b16 %v440, %v432
    %v649 = vpack.c.b16 %v441, %v433
    %v650 = vpack.c.b16 %v442, %v434
    %v651 = vpack.c.b16 %v451, %v443
    %v652 = vpack.c.b16 %v452, %v444
    %v653 = vpack.c.b16 %v453, %v445
    %v654 = vpack.c.b16 %v454, %v446
    %v655 = vpack.c.b16 %v455, %v447
    %v656 = vpack.c.b16 %v456, %v448
    %v657 = vpack.c.b16 %v457, %v449
    %v658 = vpack.c.b16 %v458, %v450
    %v659 = vpack.c.b16 %v467, %v459
    %v660 = vpack.c.b16 %v468, %v460
    %v661 = vpack.c.b16 %v469, %v461
    %v662 = vpack.c.b16 %v470, %v462
    %v663 = vpack.c.b16 %v471, %v463
    %v664 = vpack.c.b16 %v472, %v464
    %v665 = vpack.c.b16 %v473, %v465
    %v666 = vpack.c.b16 %v474, %v466
    %v667 = vpack.c.b16 %v483, %v475
    %v668 = vpack.c.b16 %v484, %v476
    %v669 = vpack.c.b16 %v485, %v477
    %v670 = vpack.c.b16 %v486, %v478
    %v671 = vpack.c.b16 %v487, %v479
    %v672 = vpack.c.b16 %v488, %v480
    %v673 = vpack.c.b16 %v489, %v481
    %v674 = vpack.c.b16 %v490, %v482
    %v675 = vpack.c.b16 %v499, %v491
    %v676 = vpack.c.b16 %v500, %v492
    %v677 = vpack.c.b16 %v501, %v493
    %v678 = vpack.c.b16 %v502, %v494
    %v679 = vpack.c.b16 %v503, %v495
    %v680 = vpack.c.b16 %v504, %v496
    %v681 = vpack.c.b16 %v505, %v497
    %v682 = vpack.c.b16 %v506, %v498
    %v683 = vpack.c.b16 %v515, %v507
    %v684 = vpack.c.b16 %v516, %v508
    %v685 = vpack.c.b16 %v517, %v509
    %v686 = vpack.c.b16 %v518, %v510
    %v687 = vpack.c.b16 %v519, %v511
    %v688 = vpack.c.b16 %v520, %v512
    %v689 = vpack.c.b16 %v521, %v513
    %v690 = vpack.c.b16 %v522, %v514
    %v691 = vpack.c.b16 %v531, %v523
    %v692 = vpack.c.b16 %v532, %v524
    %v693 = vpack.c.b16 %v533, %v525
    %v694 = vpack.c.b16 %v534, %v526
    %v695 = vpack.c.b16 %v535, %v527
    %v696 = vpack.c.b16 %v536, %v528
    %v697 = vpack.c.b16 %v537, %v529
    %v698 = vpack.c.b16 %v538, %v530
    %v699 = vpack.c.b16 %v547, %v539
    %v700 = vpack.c.b16 %v548, %v540
    %v701 = vpack.c.b16 %v549, %v541
    %v702 = vpack.c.b16 %v550, %v542
    %v703 = vpack.c.b16 %v551, %v543
    %v704 = vpack.c.b16 %v552, %v544
    %v705 = vpack.c.b16 %v553, %v545
    %v706 = vpack.c.b16 %v554, %v546
    %v707 = vpack.c.b16 %v563, %v555
    %v708 = vpack.c.b16 %v564, %v556
    %v709 = vpack.c.b16 %v565, %v557
    %v710 = vpack.c.b16 %v566, %v558
    %v711 = vpack.c.b16 %v567, %v559
    %v712 = vpack.c.b16 %v568, %v560
    %v713 = vpack.c.b16 %v569, %v561
    %v714 = vpack.c.b16 %v570, %v562
    %v715 = vpack.c.b16 %v579, %v571
    %v716 = vpack.c.b16 %v580, %v572
    %v717 = vpack.c.b16 %v581, %v573
    %v718 = vpack.c.b16 %v582, %v574
    %v719 = vpack.c.b16 %v583, %v575
    %v720 = vpack.c.b16 %v584, %v576
    %v721 = vpack.c.b16 %v585, %v577
    %v722 = vpack.c.b16 %v586, %v578
    %v723 = vpack.c.b16 %v595, %v587
    %v724 = vpack.c.b16 %v596, %v588
    %v725 = vpack.c.b16 %v597, %v589
    %v726 = vpack.c.b16 %v598, %v590
    %v727 = vpack.c.b16 %v599, %v591
    %v728 = vpack.c.b16 %v600, %v592
    %v729 = vpack.c.b16 %v601, %v593
    %v730 = vpack.c.b16 %v602, %v594
    %859 = vmatprep.subr.bf16.mxu0 %v604
    %860 = vmatpush1.bf16.msra.mxu0 %v603
    %861 = vmatprep.subr.bf16.mxu0 %v612
    %862 = vmatpush1.bf16.msra.mxu0 %v611
    %863 = vmatprep.subr.bf16.mxu0 %v620
    %864 = vmatpush1.bf16.msra.mxu0 %v619
    %865 = vmatprep.subr.bf16.mxu0 %v628
    %866 = vmatpush1.bf16.msra.mxu0 %v627
    %867 = vmatprep.subr.bf16.mxu0 %v636
    %868 = vmatpush1.bf16.msra.mxu0 %v635
    %869 = vmatprep.subr.bf16.mxu0 %v644
    %870 = vmatpush1.bf16.msra.mxu0 %v643
    %871 = vmatprep.subr.bf16.mxu0 %v652
    %872 = vmatpush1.bf16.msra.mxu0 %v651
    %873 = vmatprep.subr.bf16.mxu0 %v660
    %874 = vmatpush1.bf16.msra.mxu0 %v659
    %875 = vmatprep.subr.bf16.mxu0 %v668
    %876 = vmatpush1.bf16.msra.mxu0 %v667
    %877 = vmatprep.subr.bf16.mxu0 %v676
    %878 = vmatpush1.bf16.msra.mxu0 %v675
    %879 = vmatprep.subr.bf16.mxu0 %v684
    %880 = vmatpush1.bf16.msra.mxu0 %v683
    %881 = vmatprep.subr.bf16.mxu0 %v692
    %882 = vmatpush1.bf16.msra.mxu0 %v691
    %883 = vmatprep.subr.bf16.mxu0 %v700
    %884 = vmatpush1.bf16.msra.mxu0 %v699
    %885 = vmatprep.subr.bf16.mxu0 %v708
    %886 = vmatpush1.bf16.msra.mxu0 %v707
    %887 = vmatprep.subr.bf16.mxu0 %v716
    %888 = vmatpush1.bf16.msra.mxu0 %v715
    %889 = vmatprep.subr.bf16.mxu0 %v724
    %890 = vmatpush1.bf16.msra.mxu0 %v723
    %891 = vmatprep.mubr.bf16.mxu0 %v90
    %892 = vmatmul.mubr.bf16.gmra.mrb[0].mxu0 %v89
    %v893 = vpop.f32.mrb[0].mxu0
    %v894 = vadd.f32 0.0, %v893
    %v895 = vpop.f32.mrb[0].mxu0
    %v896 = vadd.f32 0.0, %v895
    %v897 = vpop.f32.mrb[0].mxu0
    %v898 = vpop.f32.mrb[0].mxu0
    %899 = vdwg.mxu0
    %900 = vmatprep.subr.bf16.mxu0 %v606
    %901 = vmatpush1.bf16.msra.mxu0 %v605
    %902 = vmatprep.subr.bf16.mxu0 %v614
    %903 = vmatpush1.bf16.msra.mxu0 %v613
    %904 = vmatprep.subr.bf16.mxu0 %v622
    %905 = vmatpush1.bf16.msra.mxu0 %v621
    %906 = vmatprep.subr.bf16.mxu0 %v630
    %907 = vmatpush1.bf16.msra.mxu0 %v629
    %908 = vmatprep.subr.bf16.mxu0 %v638
    %909 = vmatpush1.bf16.msra.mxu0 %v637
    %910 = vmatprep.subr.bf16.mxu0 %v646
    %911 = vmatpush1.bf16.msra.mxu0 %v645
    %912 = vmatprep.subr.bf16.mxu0 %v654
    %913 = vmatpush1.bf16.msra.mxu0 %v653
    %914 = vmatprep.subr.bf16.mxu0 %v662
    %915 = vmatpush1.bf16.msra.mxu0 %v661
    %916 = vmatprep.subr.bf16.mxu0 %v670
    %917 = vmatpush1.bf16.msra.mxu0 %v669
    %918 = vmatprep.subr.bf16.mxu0 %v678
    %919 = vmatpush1.bf16.msra.mxu0 %v677
    %920 = vmatprep.subr.bf16.mxu0 %v686
    %921 = vmatpush1.bf16.msra.mxu0 %v685
    %922 = vmatprep.subr.bf16.mxu0 %v694
    %923 = vmatpush1.bf16.msra.mxu0 %v693
    %924 = vmatprep.subr.bf16.mxu0 %v702
    %925 = vmatpush1.bf16.msra.mxu0 %v701
    %926 = vmatprep.subr.bf16.mxu0 %v710
    %927 = vmatpush1.bf16.msra.mxu0 %v709
    %928 = vmatprep.subr.bf16.mxu0 %v718
    %929 = vmatpush1.bf16.msra.mxu0 %v717
    %930 = vmatprep.subr.bf16.mxu0 %v726
    %931 = vmatpush1.bf16.msra.mxu0 %v725
    %932 = vmatprep.mubr.bf16.mxu0 %v90
    %933 = vmatmul.mubr.bf16.gmra.mrb[0].mxu0 %v89
    %v934 = vpop.f32.mrb[0].mxu0
    %v935 = vadd.f32 0.0, %v934
    %v936 = vpop.f32.mrb[0].mxu0
    %v937 = vadd.f32 0.0, %v936
    %v938 = vpop.f32.mrb[0].mxu0
    %v939 = vpop.f32.mrb[0].mxu0
    %940 = vdwg.mxu0
    %941 = vmatprep.subr.bf16.mxu0 %v608
    %942 = vmatpush1.bf16.msra.mxu0 %v607
    %943 = vmatprep.subr.bf16.mxu0 %v616
    %944 = vmatpush1.bf16.msra.mxu0 %v615
    %945 = vmatprep.subr.bf16.mxu0 %v624
    %946 = vmatpush1.bf16.msra.mxu0 %v623
    %947 = vmatprep.subr.bf16.mxu0 %v632
    %948 = vmatpush1.bf16.msra.mxu0 %v631
    %949 = vmatprep.subr.bf16.mxu0 %v640
    %950 = vmatpush1.bf16.msra.mxu0 %v639
    %951 = vmatprep.subr.bf16.mxu0 %v648
    %952 = vmatpush1.bf16.msra.mxu0 %v647
    %953 = vmatprep.subr.bf16.mxu0 %v656
    %954 = vmatpush1.bf16.msra.mxu0 %v655
    %955 = vmatprep.subr.bf16.mxu0 %v664
    %956 = vmatpush1.bf16.msra.mxu0 %v663
    %957 = vmatprep.subr.bf16.mxu0 %v672
    %958 = vmatpush1.bf16.msra.mxu0 %v671
    %959 = vmatprep.subr.bf16.mxu0 %v680
    %960 = vmatpush1.bf16.msra.mxu0 %v679
    %961 = vmatprep.subr.bf16.mxu0 %v688
    %962 = vmatpush1.bf16.msra.mxu0 %v687
    %963 = vmatprep.subr.bf16.mxu0 %v696
    %964 = vmatpush1.bf16.msra.mxu0 %v695
    %965 = vmatprep.subr.bf16.mxu0 %v704
    %966 = vmatpush1.bf16.msra.mxu0 %v703
    %967 = vmatprep.subr.bf16.mxu0 %v712
    %968 = vmatpush1.bf16.msra.mxu0 %v711
    %969 = vmatprep.subr.bf16.mxu0 %v720
    %970 = vmatpush1.bf16.msra.mxu0 %v719
    %971 = vmatprep.subr.bf16.mxu0 %v728
    %972 = vmatpush1.bf16.msra.mxu0 %v727
    %973 = vmatprep.mubr.bf16.mxu0 %v90
    %974 = vmatmul.mubr.bf16.gmra.mrb[0].mxu0 %v89
    %v975 = vpop.f32.mrb[0].mxu0
    %v976 = vadd.f32 0.0, %v975
    %v977 = vpop.f32.mrb[0].mxu0
    %v978 = vadd.f32 0.0, %v977
    %v979 = vpop.f32.mrb[0].mxu0
    %v980 = vpop.f32.mrb[0].mxu0
    %981 = vdwg.mxu0
    %982 = vmatprep.subr.bf16.mxu0 %v610
    %983 = vmatpush1.bf16.msra.mxu0 %v609
    %984 = vmatprep.subr.bf16.mxu0 %v618
    %985 = vmatpush1.bf16.msra.mxu0 %v617
    %986 = vmatprep.subr.bf16.mxu0 %v626
    %987 = vmatpush1.bf16.msra.mxu0 %v625
    %988 = vmatprep.subr.bf16.mxu0 %v634
    %989 = vmatpush1.bf16.msra.mxu0 %v633
    %990 = vmatprep.subr.bf16.mxu0 %v642
    %991 = vmatpush1.bf16.msra.mxu0 %v641
    %992 = vmatprep.subr.bf16.mxu0 %v650
    %993 = vmatpush1.bf16.msra.mxu0 %v649
    %994 = vmatprep.subr.bf16.mxu0 %v658
    %995 = vmatpush1.bf16.msra.mxu0 %v657
    %996 = vmatprep.subr.bf16.mxu0 %v666
    %997 = vmatpush1.bf16.msra.mxu0 %v665
    %998 = vmatprep.subr.bf16.mxu0 %v674
    %999 = vmatpush1.bf16.msra.mxu0 %v673
    %1000 = vmatprep.subr.bf16.mxu0 %v682
    %1001 = vmatpush1.bf16.msra.mxu0 %v681
    %1002 = vmatprep.subr.bf16.mxu0 %v690
    %1003 = vmatpush1.bf16.msra.mxu0 %v689
    %1004 = vmatprep.subr.bf16.mxu0 %v698
    %1005 = vmatpush1.bf16.msra.mxu0 %v697
    %1006 = vmatprep.subr.bf16.mxu0 %v706
    %1007 = vmatpush1.bf16.msra.mxu0 %v705
    %1008 = vmatprep.subr.bf16.mxu0 %v714
    %1009 = vmatpush1.bf16.msra.mxu0 %v713
    %1010 = vmatprep.subr.bf16.mxu0 %v722
    %1011 = vmatpush1.bf16.msra.mxu0 %v721
    %1012 = vmatprep.subr.bf16.mxu0 %v730
    %1013 = vmatpush1.bf16.msra.mxu0 %v729
    %1014 = vmatprep.mubr.bf16.mxu0 %v90
    %1015 = vmatmul.mubr.bf16.gmra.mrb[0].mxu0 %v89
    %v1016 = vpop.f32.mrb[0].mxu0
    %v1017 = vadd.f32 0.0, %v1016
    %v1018 = vpop.f32.mrb[0].mxu0
    %v1019 = vadd.f32 0.0, %v1018
    %v1020 = vpop.f32.mrb[0].mxu0
    %v1021 = vpop.f32.mrb[0].mxu0
    %1022 = vdwg.mxu0
    %v1031 = vcombine.low %v894, %v896
    %v1032 = vcombine.low %v935, %v937
    %v1034 = vunpack.c.l.s4 1983009808
    %v1035 = vunpack.c.0.s8 %v1034
    %v1036 = vlaneseq
    %v1037 = vshrl.u32 %v1036, 7
    %v1038 = vsub.s32 %v1035, %v1037
    %v1039 = vrot.slane %v1031, %v1038
    %v1041 = vunpack.c.l.s4 1983009808
    %v1042 = vunpack.c.0.s8 %v1041
    %v1043 = vlaneseq
    %v1044 = vshrl.u32 %v1043, 7
    %v1045 = vsub.s32 %v1042, %v1044
    %v1046 = vrot.slane %v1032, %v1045
    %v1047 = vcombine.low %v1039, %v1046
    %v1048 = vcombine.low %v976, %v978
    %v1049 = vcombine.low %v1017, %v1019
    %v1051 = vunpack.c.l.s4 1983009808
    %v1052 = vunpack.c.0.s8 %v1051
    %v1053 = vlaneseq
    %v1054 = vshrl.u32 %v1053, 7
    %v1055 = vsub.s32 %v1052, %v1054
    %v1056 = vrot.slane %v1048, %v1055
    %v1058 = vunpack.c.l.s4 1983009808
    %v1059 = vunpack.c.0.s8 %v1058
    %v1060 = vlaneseq
    %v1061 = vshrl.u32 %v1060, 7
    %v1062 = vsub.s32 %v1059, %v1061
    %v1063 = vrot.slane %v1049, %v1062
    %v1064 = vcombine.low %v1056, %v1063
    %v1067 = vadd.f32 %v75, %v1047
    %v1068 = vadd.f32 %v76, %v1064
    %v1069 = vld [vmem:[#allocation3] sm:$0xf]
    %v1070 = vxor.u32 %v1067, 2147483648
    %v1071 = vmul.f32 %v1070, 1.442695
    %v1072 = vpow.pop %v1071
    %v1073 = vadd.f32 %v1072, 1.0
    %v1074 = vrcp.pop %v1073
    %v1075 = vmul.f32 1.0, %v1074
    %v1077 = vrot.slane %v1067, 4
    %v1079 = vxor.u32 %v1077, 2147483648
    %v1080 = vmul.f32 %v1079, 1.442695
    %v1081 = vpow.pop %v1080
    %v1082 = vadd.f32 %v1081, 1.0
    %v1083 = vrcp.pop %v1082
    %v1084 = vmul.f32 1.0, %v1083
    %v1085 = vtanh.pop %v1068
    %v1087 = vrot.slane %v1068, 4
    %v1089 = vxor.u32 %v1087, 2147483648
    %v1090 = vmul.f32 %v1089, 1.442695
    %v1091 = vpow.pop %v1090
    %v1092 = vadd.f32 %v1091, 1.0
    %v1093 = vrcp.pop %v1092
    %v1094 = vmul.f32 1.0, %v1093
    %v1095 = vmul.f32 %v1084, %v1069
    %v1096 = vmul.f32 %v1075, %v1085
    %v1097 = vadd.f32 %v1095, %v1096
    %v1098 = vtanh.pop %v1097
    %v1099 = vmul.f32 %v1094, %v1098
    %1100 = vst [vmem:[#allocation2] sm:$0xf] %v1099
    %1101 = vst [vmem:[#allocation3] sm:$0xf] %v1097
    %v1104 = vunpack.c.l.s4 1983009808
    %v1105 = vunpack.c.0.s8 %v1104
    %v1106 = vlaneseq
    %v1107 = vshrl.u32 %v1106, 7
    %v1108 = vsub.s32 %v1105, %v1107
    %v1109 = vrot.slane %v1099, %v1108
    %v1110 = vcombine.high %v1109, %v1109
    %v1113 = vpack.c.bf16 %v1109, %v1109
    %v1114 = vpack.c.bf16 %v1110, %v1110
    %v1117 = vcombine.low %v1113, %v1114
    %v1119 = vunpack.c.l.s4 1966171168
    %v1120 = vunpack.c.0.s8 %v1119
    %v1121 = vlaneseq
    %v1122 = vshrl.u32 %v1121, 7
    %v1123 = vsub.s32 %v1120, %v1122
    %v1124 = vrot.slane %v1117, %v1123
    %v1126 = vunpack.c.l.s4 1966171168
    %v1127 = vunpack.c.0.s8 %v1126
    %v1128 = vlaneseq
    %v1129 = vshrl.u32 %v1128, 7
    %v1130 = vsub.s32 %v1127, %v1129
    %v1131 = vrot.slane %v1124, %v1130
    %s1133 = smul.u32 %s67, 2
    %s1134 = scalar_lea.vmem %s4, %s1133
    %1135 = vst [vmem:[%s1134] sm:$0x3] %v1131
    %s1136 = ssub.s32 7, %s67
    %s1137 = smul.u32 %s1136, 8
    %s1138 = smul.addr %s1137, 2
    %s1139 = scalar_lea.vmem %s47, %s1138
    %v1140 = vld [vmem:[%s1139] sm:$0xff]
    %v1141 = vld [vmem:[%s1139 + $0x8] sm:$0xff]
    %v1142 = vld [vmem:[#allocation4] sm:$0xf]
    %v1145 = vunpack.c.l.s4 1983009808
    %v1146 = vunpack.c.0.s8 %v1145
    %v1147 = vlaneseq
    %v1148 = vshrl.u32 %v1147, 7
    %v1149 = vsub.s32 %v1146, %v1148
    %v1150 = vrot.slane %v1142, %v1149
    %v1151 = vcombine.high %v1150, %v1150
    %v1154 = vpack.c.bf16 %v1150, %v1150
    %v1155 = vpack.c.bf16 %v1151, %v1151
    %v1156 = vld [vmem:[%s3] sm:$0xff]
    %v1157 = vld [vmem:[%s3 + $0x8] sm:$0xff]
    %v1158 = vld [vmem:[%s3 + $0x10] sm:$0xff]
    %v1159 = vld [vmem:[%s3 + $0x18] sm:$0xff]
    %v1160 = vld [vmem:[%s3 + $0x20] sm:$0xff]
    %v1161 = vld [vmem:[%s3 + $0x28] sm:$0xff]
    %v1162 = vld [vmem:[%s3 + $0x30] sm:$0xff]
    %v1163 = vld [vmem:[%s3 + $0x38] sm:$0xff]
    %v1164 = vld [vmem:[%s3 + $0x40] sm:$0xff]
    %v1165 = vld [vmem:[%s3 + $0x48] sm:$0xff]
    %v1166 = vld [vmem:[%s3 + $0x50] sm:$0xff]
    %v1167 = vld [vmem:[%s3 + $0x58] sm:$0xff]
    %v1168 = vld [vmem:[%s3 + $0x60] sm:$0xff]
    %v1169 = vld [vmem:[%s3 + $0x68] sm:$0xff]
    %v1170 = vld [vmem:[%s3 + $0x70] sm:$0xff]
    %v1171 = vld [vmem:[%s3 + $0x78] sm:$0xff]
    %v1172 = vld [vmem:[%s3 + $0x80] sm:$0xff]
    %v1173 = vld [vmem:[%s3 + $0x88] sm:$0xff]
    %v1174 = vld [vmem:[%s3 + $0x90] sm:$0xff]
    %v1175 = vld [vmem:[%s3 + $0x98] sm:$0xff]
    %v1176 = vld [vmem:[%s3 + $0xa0] sm:$0xff]
    %v1177 = vld [vmem:[%s3 + $0xa8] sm:$0xff]
    %v1178 = vld [vmem:[%s3 + $0xb0] sm:$0xff]
    %v1179 = vld [vmem:[%s3 + $0xb8] sm:$0xff]
    %v1180 = vld [vmem:[%s3 + $0xc0] sm:$0xff]
    %v1181 = vld [vmem:[%s3 + $0xc8] sm:$0xff]
    %v1182 = vld [vmem:[%s3 + $0xd0] sm:$0xff]
    %v1183 = vld [vmem:[%s3 + $0xd8] sm:$0xff]
    %v1184 = vld [vmem:[%s3 + $0xe0] sm:$0xff]
    %v1185 = vld [vmem:[%s3 + $0xe8] sm:$0xff]
    %v1186 = vld [vmem:[%s3 + $0xf0] sm:$0xff]
    %v1187 = vld [vmem:[%s3 + $0xf8] sm:$0xff]
    %v1188 = vld [vmem:[%s3 + $0x100] sm:$0xff]
    %v1189 = vld [vmem:[%s3 + $0x108] sm:$0xff]
    %v1190 = vld [vmem:[%s3 + $0x110] sm:$0xff]
    %v1191 = vld [vmem:[%s3 + $0x118] sm:$0xff]
    %v1192 = vld [vmem:[%s3 + $0x120] sm:$0xff]
    %v1193 = vld [vmem:[%s3 + $0x128] sm:$0xff]
    %v1194 = vld [vmem:[%s3 + $0x130] sm:$0xff]
    %v1195 = vld [vmem:[%s3 + $0x138] sm:$0xff]
    %v1196 = vld [vmem:[%s3 + $0x140] sm:$0xff]
    %v1197 = vld [vmem:[%s3 + $0x148] sm:$0xff]
    %v1198 = vld [vmem:[%s3 + $0x150] sm:$0xff]
    %v1199 = vld [vmem:[%s3 + $0x158] sm:$0xff]
    %v1200 = vld [vmem:[%s3 + $0x160] sm:$0xff]
    %v1201 = vld [vmem:[%s3 + $0x168] sm:$0xff]
    %v1202 = vld [vmem:[%s3 + $0x170] sm:$0xff]
    %v1203 = vld [vmem:[%s3 + $0x178] sm:$0xff]
    %v1204 = vld [vmem:[%s3 + $0x180] sm:$0xff]
    %v1205 = vld [vmem:[%s3 + $0x188] sm:$0xff]
    %v1206 = vld [vmem:[%s3 + $0x190] sm:$0xff]
    %v1207 = vld [vmem:[%s3 + $0x198] sm:$0xff]
    %v1208 = vld [vmem:[%s3 + $0x1a0] sm:$0xff]
    %v1209 = vld [vmem:[%s3 + $0x1a8] sm:$0xff]
    %v1210 = vld [vmem:[%s3 + $0x1b0] sm:$0xff]
    %v1211 = vld [vmem:[%s3 + $0x1b8] sm:$0xff]
    %v1212 = vld [vmem:[%s3 + $0x1c0] sm:$0xff]
    %v1213 = vld [vmem:[%s3 + $0x1c8] sm:$0xff]
    %v1214 = vld [vmem:[%s3 + $0x1d0] sm:$0xff]
    %v1215 = vld [vmem:[%s3 + $0x1d8] sm:$0xff]
    %v1216 = vld [vmem:[%s3 + $0x1e0] sm:$0xff]
    %v1217 = vld [vmem:[%s3 + $0x1e8] sm:$0xff]
    %v1218 = vld [vmem:[%s3 + $0x1f0] sm:$0xff]
    %v1219 = vld [vmem:[%s3 + $0x1f8] sm:$0xff]
    %v1220 = vld [vmem:[%s3 + $0x200] sm:$0xff]
    %v1221 = vld [vmem:[%s3 + $0x208] sm:$0xff]
    %v1222 = vld [vmem:[%s3 + $0x210] sm:$0xff]
    %v1223 = vld [vmem:[%s3 + $0x218] sm:$0xff]
    %v1224 = vld [vmem:[%s3 + $0x220] sm:$0xff]
    %v1225 = vld [vmem:[%s3 + $0x228] sm:$0xff]
    %v1226 = vld [vmem:[%s3 + $0x230] sm:$0xff]
    %v1227 = vld [vmem:[%s3 + $0x238] sm:$0xff]
    %v1228 = vld [vmem:[%s3 + $0x240] sm:$0xff]
    %v1229 = vld [vmem:[%s3 + $0x248] sm:$0xff]
    %v1230 = vld [vmem:[%s3 + $0x250] sm:$0xff]
    %v1231 = vld [vmem:[%s3 + $0x258] sm:$0xff]
    %v1232 = vld [vmem:[%s3 + $0x260] sm:$0xff]
    %v1233 = vld [vmem:[%s3 + $0x268] sm:$0xff]
    %v1234 = vld [vmem:[%s3 + $0x270] sm:$0xff]
    %v1235 = vld [vmem:[%s3 + $0x278] sm:$0xff]
    %v1236 = vld [vmem:[%s3 + $0x280] sm:$0xff]
    %v1237 = vld [vmem:[%s3 + $0x288] sm:$0xff]
    %v1238 = vld [vmem:[%s3 + $0x290] sm:$0xff]
    %v1239 = vld [vmem:[%s3 + $0x298] sm:$0xff]
    %v1240 = vld [vmem:[%s3 + $0x2a0] sm:$0xff]
    %v1241 = vld [vmem:[%s3 + $0x2a8] sm:$0xff]
    %v1242 = vld [vmem:[%s3 + $0x2b0] sm:$0xff]
    %v1243 = vld [vmem:[%s3 + $0x2b8] sm:$0xff]
    %v1244 = vld [vmem:[%s3 + $0x2c0] sm:$0xff]
    %v1245 = vld [vmem:[%s3 + $0x2c8] sm:$0xff]
    %v1246 = vld [vmem:[%s3 + $0x2d0] sm:$0xff]
    %v1247 = vld [vmem:[%s3 + $0x2d8] sm:$0xff]
    %v1248 = vld [vmem:[%s3 + $0x2e0] sm:$0xff]
    %v1249 = vld [vmem:[%s3 + $0x2e8] sm:$0xff]
    %v1250 = vld [vmem:[%s3 + $0x2f0] sm:$0xff]
    %v1251 = vld [vmem:[%s3 + $0x2f8] sm:$0xff]
    %v1252 = vld [vmem:[%s3 + $0x300] sm:$0xff]
    %v1253 = vld [vmem:[%s3 + $0x308] sm:$0xff]
    %v1254 = vld [vmem:[%s3 + $0x310] sm:$0xff]
    %v1255 = vld [vmem:[%s3 + $0x318] sm:$0xff]
    %v1256 = vld [vmem:[%s3 + $0x320] sm:$0xff]
    %v1257 = vld [vmem:[%s3 + $0x328] sm:$0xff]
    %v1258 = vld [vmem:[%s3 + $0x330] sm:$0xff]
    %v1259 = vld [vmem:[%s3 + $0x338] sm:$0xff]
    %v1260 = vld [vmem:[%s3 + $0x340] sm:$0xff]
    %v1261 = vld [vmem:[%s3 + $0x348] sm:$0xff]
    %v1262 = vld [vmem:[%s3 + $0x350] sm:$0xff]
    %v1263 = vld [vmem:[%s3 + $0x358] sm:$0xff]
    %v1264 = vld [vmem:[%s3 + $0x360] sm:$0xff]
    %v1265 = vld [vmem:[%s3 + $0x368] sm:$0xff]
    %v1266 = vld [vmem:[%s3 + $0x370] sm:$0xff]
    %v1267 = vld [vmem:[%s3 + $0x378] sm:$0xff]
    %v1268 = vld [vmem:[%s3 + $0x380] sm:$0xff]
    %v1269 = vld [vmem:[%s3 + $0x388] sm:$0xff]
    %v1270 = vld [vmem:[%s3 + $0x390] sm:$0xff]
    %v1271 = vld [vmem:[%s3 + $0x398] sm:$0xff]
    %v1272 = vld [vmem:[%s3 + $0x3a0] sm:$0xff]
    %v1273 = vld [vmem:[%s3 + $0x3a8] sm:$0xff]
    %v1274 = vld [vmem:[%s3 + $0x3b0] sm:$0xff]
    %v1275 = vld [vmem:[%s3 + $0x3b8] sm:$0xff]
    %v1276 = vld [vmem:[%s3 + $0x3c0] sm:$0xff]
    %v1277 = vld [vmem:[%s3 + $0x3c8] sm:$0xff]
    %v1278 = vld [vmem:[%s3 + $0x3d0] sm:$0xff]
    %v1279 = vld [vmem:[%s3 + $0x3d8] sm:$0xff]
    %v1280 = vld [vmem:[%s3 + $0x3e0] sm:$0xff]
    %v1281 = vld [vmem:[%s3 + $0x3e8] sm:$0xff]
    %v1282 = vld [vmem:[%s3 + $0x3f0] sm:$0xff]
    %v1283 = vld [vmem:[%s3 + $0x3f8] sm:$0xff]
    %v1412 = vunpack.c.l.b16 %v1156
    %v1413 = vunpack.c.h.b16 %v1156
    %v1414 = vunpack.c.l.b16 %v1157
    %v1415 = vunpack.c.h.b16 %v1157
    %v1416 = vunpack.c.l.b16 %v1158
    %v1417 = vunpack.c.h.b16 %v1158
    %v1418 = vunpack.c.l.b16 %v1159
    %v1419 = vunpack.c.h.b16 %v1159
    %v1420 = vunpack.c.l.b16 %v1160
    %v1421 = vunpack.c.h.b16 %v1160
    %v1422 = vunpack.c.l.b16 %v1161
    %v1423 = vunpack.c.h.b16 %v1161
    %v1424 = vunpack.c.l.b16 %v1162
    %v1425 = vunpack.c.h.b16 %v1162
    %v1426 = vunpack.c.l.b16 %v1163
    %v1427 = vunpack.c.h.b16 %v1163
    %v1428 = vunpack.c.l.b16 %v1164
    %v1429 = vunpack.c.h.b16 %v1164
    %v1430 = vunpack.c.l.b16 %v1165
    %v1431 = vunpack.c.h.b16 %v1165
    %v1432 = vunpack.c.l.b16 %v1166
    %v1433 = vunpack.c.h.b16 %v1166
    %v1434 = vunpack.c.l.b16 %v1167
    %v1435 = vunpack.c.h.b16 %v1167
    %v1436 = vunpack.c.l.b16 %v1168
    %v1437 = vunpack.c.h.b16 %v1168
    %v1438 = vunpack.c.l.b16 %v1169
    %v1439 = vunpack.c.h.b16 %v1169
    %v1440 = vunpack.c.l.b16 %v1170
    %v1441 = vunpack.c.h.b16 %v1170
    %v1442 = vunpack.c.l.b16 %v1171
    %v1443 = vunpack.c.h.b16 %v1171
    %v1444 = vunpack.c.l.b16 %v1172
    %v1445 = vunpack.c.h.b16 %v1172
    %v1446 = vunpack.c.l.b16 %v1173
    %v1447 = vunpack.c.h.b16 %v1173
    %v1448 = vunpack.c.l.b16 %v1174
    %v1449 = vunpack.c.h.b16 %v1174
    %v1450 = vunpack.c.l.b16 %v1175
    %v1451 = vunpack.c.h.b16 %v1175
    %v1452 = vunpack.c.l.b16 %v1176
    %v1453 = vunpack.c.h.b16 %v1176
    %v1454 = vunpack.c.l.b16 %v1177
    %v1455 = vunpack.c.h.b16 %v1177
    %v1456 = vunpack.c.l.b16 %v1178
    %v1457 = vunpack.c.h.b16 %v1178
    %v1458 = vunpack.c.l.b16 %v1179
    %v1459 = vunpack.c.h.b16 %v1179
    %v1460 = vunpack.c.l.b16 %v1180
    %v1461 = vunpack.c.h.b16 %v1180
    %v1462 = vunpack.c.l.b16 %v1181
    %v1463 = vunpack.c.h.b16 %v1181
    %v1464 = vunpack.c.l.b16 %v1182
    %v1465 = vunpack.c.h.b16 %v1182
    %v1466 = vunpack.c.l.b16 %v1183
    %v1467 = vunpack.c.h.b16 %v1183
    %v1468 = vunpack.c.l.b16 %v1184
    %v1469 = vunpack.c.h.b16 %v1184
    %v1470 = vunpack.c.l.b16 %v1185
    %v1471 = vunpack.c.h.b16 %v1185
    %v1472 = vunpack.c.l.b16 %v1186
    %v1473 = vunpack.c.h.b16 %v1186
    %v1474 = vunpack.c.l.b16 %v1187
    %v1475 = vunpack.c.h.b16 %v1187
    %v1476 = vunpack.c.l.b16 %v1188
    %v1477 = vunpack.c.h.b16 %v1188
    %v1478 = vunpack.c.l.b16 %v1189
    %v1479 = vunpack.c.h.b16 %v1189
    %v1480 = vunpack.c.l.b16 %v1190
    %v1481 = vunpack.c.h.b16 %v1190
    %v1482 = vunpack.c.l.b16 %v1191
    %v1483 = vunpack.c.h.b16 %v1191
    %v1484 = vunpack.c.l.b16 %v1192
    %v1485 = vunpack.c.h.b16 %v1192
    %v1486 = vunpack.c.l.b16 %v1193
    %v1487 = vunpack.c.h.b16 %v1193
    %v1488 = vunpack.c.l.b16 %v1194
    %v1489 = vunpack.c.h.b16 %v1194
    %v1490 = vunpack.c.l.b16 %v1195
    %v1491 = vunpack.c.h.b16 %v1195
    %v1492 = vunpack.c.l.b16 %v1196
    %v1493 = vunpack.c.h.b16 %v1196
    %v1494 = vunpack.c.l.b16 %v1197
    %v1495 = vunpack.c.h.b16 %v1197
    %v1496 = vunpack.c.l.b16 %v1198
    %v1497 = vunpack.c.h.b16 %v1198
    %v1498 = vunpack.c.l.b16 %v1199
    %v1499 = vunpack.c.h.b16 %v1199
    %v1500 = vunpack.c.l.b16 %v1200
    %v1501 = vunpack.c.h.b16 %v1200
    %v1502 = vunpack.c.l.b16 %v1201
    %v1503 = vunpack.c.h.b16 %v1201
    %v1504 = vunpack.c.l.b16 %v1202
    %v1505 = vunpack.c.h.b16 %v1202
    %v1506 = vunpack.c.l.b16 %v1203
    %v1507 = vunpack.c.h.b16 %v1203
    %v1508 = vunpack.c.l.b16 %v1204
    %v1509 = vunpack.c.h.b16 %v1204
    %v1510 = vunpack.c.l.b16 %v1205
    %v1511 = vunpack.c.h.b16 %v1205
    %v1512 = vunpack.c.l.b16 %v1206
    %v1513 = vunpack.c.h.b16 %v1206
    %v1514 = vunpack.c.l.b16 %v1207
    %v1515 = vunpack.c.h.b16 %v1207
    %v1516 = vunpack.c.l.b16 %v1208
    %v1517 = vunpack.c.h.b16 %v1208
    %v1518 = vunpack.c.l.b16 %v1209
    %v1519 = vunpack.c.h.b16 %v1209
    %v1520 = vunpack.c.l.b16 %v1210
    %v1521 = vunpack.c.h.b16 %v1210
    %v1522 = vunpack.c.l.b16 %v1211
    %v1523 = vunpack.c.h.b16 %v1211
    %v1524 = vunpack.c.l.b16 %v1212
    %v1525 = vunpack.c.h.b16 %v1212
    %v1526 = vunpack.c.l.b16 %v1213
    %v1527 = vunpack.c.h.b16 %v1213
    %v1528 = vunpack.c.l.b16 %v1214
    %v1529 = vunpack.c.h.b16 %v1214
    %v1530 = vunpack.c.l.b16 %v1215
    %v1531 = vunpack.c.h.b16 %v1215
    %v1532 = vunpack.c.l.b16 %v1216
    %v1533 = vunpack.c.h.b16 %v1216
    %v1534 = vunpack.c.l.b16 %v1217
    %v1535 = vunpack.c.h.b16 %v1217
    %v1536 = vunpack.c.l.b16 %v1218
    %v1537 = vunpack.c.h.b16 %v1218
    %v1538 = vunpack.c.l.b16 %v1219
    %v1539 = vunpack.c.h.b16 %v1219
    %v1540 = vunpack.c.l.b16 %v1220
    %v1541 = vunpack.c.h.b16 %v1220
    %v1542 = vunpack.c.l.b16 %v1221
    %v1543 = vunpack.c.h.b16 %v1221
    %v1544 = vunpack.c.l.b16 %v1222
    %v1545 = vunpack.c.h.b16 %v1222
    %v1546 = vunpack.c.l.b16 %v1223
    %v1547 = vunpack.c.h.b16 %v1223
    %v1548 = vunpack.c.l.b16 %v1224
    %v1549 = vunpack.c.h.b16 %v1224
    %v1550 = vunpack.c.l.b16 %v1225
    %v1551 = vunpack.c.h.b16 %v1225
    %v1552 = vunpack.c.l.b16 %v1226
    %v1553 = vunpack.c.h.b16 %v1226
    %v1554 = vunpack.c.l.b16 %v1227
    %v1555 = vunpack.c.h.b16 %v1227
    %v1556 = vunpack.c.l.b16 %v1228
    %v1557 = vunpack.c.h.b16 %v1228
    %v1558 = vunpack.c.l.b16 %v1229
    %v1559 = vunpack.c.h.b16 %v1229
    %v1560 = vunpack.c.l.b16 %v1230
    %v1561 = vunpack.c.h.b16 %v1230
    %v1562 = vunpack.c.l.b16 %v1231
    %v1563 = vunpack.c.h.b16 %v1231
    %v1564 = vunpack.c.l.b16 %v1232
    %v1565 = vunpack.c.h.b16 %v1232
    %v1566 = vunpack.c.l.b16 %v1233
    %v1567 = vunpack.c.h.b16 %v1233
    %v1568 = vunpack.c.l.b16 %v1234
    %v1569 = vunpack.c.h.b16 %v1234
    %v1570 = vunpack.c.l.b16 %v1235
    %v1571 = vunpack.c.h.b16 %v1235
    %v1572 = vunpack.c.l.b16 %v1236
    %v1573 = vunpack.c.h.b16 %v1236
    %v1574 = vunpack.c.l.b16 %v1237
    %v1575 = vunpack.c.h.b16 %v1237
    %v1576 = vunpack.c.l.b16 %v1238
    %v1577 = vunpack.c.h.b16 %v1238
    %v1578 = vunpack.c.l.b16 %v1239
    %v1579 = vunpack.c.h.b16 %v1239
    %v1580 = vunpack.c.l.b16 %v1240
    %v1581 = vunpack.c.h.b16 %v1240
    %v1582 = vunpack.c.l.b16 %v1241
    %v1583 = vunpack.c.h.b16 %v1241
    %v1584 = vunpack.c.l.b16 %v1242
    %v1585 = vunpack.c.h.b16 %v1242
    %v1586 = vunpack.c.l.b16 %v1243
    %v1587 = vunpack.c.h.b16 %v1243
    %v1588 = vunpack.c.l.b16 %v1244
    %v1589 = vunpack.c.h.b16 %v1244
    %v1590 = vunpack.c.l.b16 %v1245
    %v1591 = vunpack.c.h.b16 %v1245
    %v1592 = vunpack.c.l.b16 %v1246
    %v1593 = vunpack.c.h.b16 %v1246
    %v1594 = vunpack.c.l.b16 %v1247
    %v1595 = vunpack.c.h.b16 %v1247
    %v1596 = vunpack.c.l.b16 %v1248
    %v1597 = vunpack.c.h.b16 %v1248
    %v1598 = vunpack.c.l.b16 %v1249
    %v1599 = vunpack.c.h.b16 %v1249
    %v1600 = vunpack.c.l.b16 %v1250
    %v1601 = vunpack.c.h.b16 %v1250
    %v1602 = vunpack.c.l.b16 %v1251
    %v1603 = vunpack.c.h.b16 %v1251
    %v1604 = vunpack.c.l.b16 %v1252
    %v1605 = vunpack.c.h.b16 %v1252
    %v1606 = vunpack.c.l.b16 %v1253
    %v1607 = vunpack.c.h.b16 %v1253
    %v1608 = vunpack.c.l.b16 %v1254
    %v1609 = vunpack.c.h.b16 %v1254
    %v1610 = vunpack.c.l.b16 %v1255
    %v1611 = vunpack.c.h.b16 %v1255
    %v1612 = vunpack.c.l.b16 %v1256
    %v1613 = vunpack.c.h.b16 %v1256
    %v1614 = vunpack.c.l.b16 %v1257
    %v1615 = vunpack.c.h.b16 %v1257
    %v1616 = vunpack.c.l.b16 %v1258
    %v1617 = vunpack.c.h.b16 %v1258
    %v1618 = vunpack.c.l.b16 %v1259
    %v1619 = vunpack.c.h.b16 %v1259
    %v1620 = vunpack.c.l.b16 %v1260
    %v1621 = vunpack.c.h.b16 %v1260
    %v1622 = vunpack.c.l.b16 %v1261
    %v1623 = vunpack.c.h.b16 %v1261
    %v1624 = vunpack.c.l.b16 %v1262
    %v1625 = vunpack.c.h.b16 %v1262
    %v1626 = vunpack.c.l.b16 %v1263
    %v1627 = vunpack.c.h.b16 %v1263
    %v1628 = vunpack.c.l.b16 %v1264
    %v1629 = vunpack.c.h.b16 %v1264
    %v1630 = vunpack.c.l.b16 %v1265
    %v1631 = vunpack.c.h.b16 %v1265
    %v1632 = vunpack.c.l.b16 %v1266
    %v1633 = vunpack.c.h.b16 %v1266
    %v1634 = vunpack.c.l.b16 %v1267
    %v1635 = vunpack.c.h.b16 %v1267
    %v1636 = vunpack.c.l.b16 %v1268
    %v1637 = vunpack.c.h.b16 %v1268
    %v1638 = vunpack.c.l.b16 %v1269
    %v1639 = vunpack.c.h.b16 %v1269
    %v1640 = vunpack.c.l.b16 %v1270
    %v1641 = vunpack.c.h.b16 %v1270
    %v1642 = vunpack.c.l.b16 %v1271
    %v1643 = vunpack.c.h.b16 %v1271
    %v1644 = vunpack.c.l.b16 %v1272
    %v1645 = vunpack.c.h.b16 %v1272
    %v1646 = vunpack.c.l.b16 %v1273
    %v1647 = vunpack.c.h.b16 %v1273
    %v1648 = vunpack.c.l.b16 %v1274
    %v1649 = vunpack.c.h.b16 %v1274
    %v1650 = vunpack.c.l.b16 %v1275
    %v1651 = vunpack.c.h.b16 %v1275
    %v1652 = vunpack.c.l.b16 %v1276
    %v1653 = vunpack.c.h.b16 %v1276
    %v1654 = vunpack.c.l.b16 %v1277
    %v1655 = vunpack.c.h.b16 %v1277
    %v1656 = vunpack.c.l.b16 %v1278
    %v1657 = vunpack.c.h.b16 %v1278
    %v1658 = vunpack.c.l.b16 %v1279
    %v1659 = vunpack.c.h.b16 %v1279
    %v1660 = vunpack.c.l.b16 %v1280
    %v1661 = vunpack.c.h.b16 %v1280
    %v1662 = vunpack.c.l.b16 %v1281
    %v1663 = vunpack.c.h.b16 %v1281
    %v1664 = vunpack.c.l.b16 %v1282
    %v1665 = vunpack.c.h.b16 %v1282
    %v1666 = vunpack.c.l.b16 %v1283
    %v1667 = vunpack.c.h.b16 %v1283
    %v1668 = vpack.c.b16 %v1420, %v1412
    %v1669 = vpack.c.b16 %v1421, %v1413
    %v1670 = vpack.c.b16 %v1422, %v1414
    %v1671 = vpack.c.b16 %v1423, %v1415
    %v1672 = vpack.c.b16 %v1424, %v1416
    %v1673 = vpack.c.b16 %v1425, %v1417
    %v1674 = vpack.c.b16 %v1426, %v1418
    %v1675 = vpack.c.b16 %v1427, %v1419
    %v1676 = vpack.c.b16 %v1436, %v1428
    %v1677 = vpack.c.b16 %v1437, %v1429
    %v1678 = vpack.c.b16 %v1438, %v1430
    %v1679 = vpack.c.b16 %v1439, %v1431
    %v1680 = vpack.c.b16 %v1440, %v1432
    %v1681 = vpack.c.b16 %v1441, %v1433
    %v1682 = vpack.c.b16 %v1442, %v1434
    %v1683 = vpack.c.b16 %v1443, %v1435
    %v1684 = vpack.c.b16 %v1452, %v1444
    %v1685 = vpack.c.b16 %v1453, %v1445
    %v1686 = vpack.c.b16 %v1454, %v1446
    %v1687 = vpack.c.b16 %v1455, %v1447
    %v1688 = vpack.c.b16 %v1456, %v1448
    %v1689 = vpack.c.b16 %v1457, %v1449
    %v1690 = vpack.c.b16 %v1458, %v1450
    %v1691 = vpack.c.b16 %v1459, %v1451
    %v1692 = vpack.c.b16 %v1468, %v1460
    %v1693 = vpack.c.b16 %v1469, %v1461
    %v1694 = vpack.c.b16 %v1470, %v1462
    %v1695 = vpack.c.b16 %v1471, %v1463
    %v1696 = vpack.c.b16 %v1472, %v1464
    %v1697 = vpack.c.b16 %v1473, %v1465
    %v1698 = vpack.c.b16 %v1474, %v1466
    %v1699 = vpack.c.b16 %v1475, %v1467
    %v1700 = vpack.c.b16 %v1484, %v1476
    %v1701 = vpack.c.b16 %v1485, %v1477
    %v1702 = vpack.c.b16 %v1486, %v1478
    %v1703 = vpack.c.b16 %v1487, %v1479
    %v1704 = vpack.c.b16 %v1488, %v1480
    %v1705 = vpack.c.b16 %v1489, %v1481
    %v1706 = vpack.c.b16 %v1490, %v1482
    %v1707 = vpack.c.b16 %v1491, %v1483
    %v1708 = vpack.c.b16 %v1500, %v1492
    %v1709 = vpack.c.b16 %v1501, %v1493
    %v1710 = vpack.c.b16 %v1502, %v1494
    %v1711 = vpack.c.b16 %v1503, %v1495
    %v1712 = vpack.c.b16 %v1504, %v1496
    %v1713 = vpack.c.b16 %v1505, %v1497
    %v1714 = vpack.c.b16 %v1506, %v1498
    %v1715 = vpack.c.b16 %v1507, %v1499
    %v1716 = vpack.c.b16 %v1516, %v1508
    %v1717 = vpack.c.b16 %v1517, %v1509
    %v1718 = vpack.c.b16 %v1518, %v1510
    %v1719 = vpack.c.b16 %v1519, %v1511
    %v1720 = vpack.c.b16 %v1520, %v1512
    %v1721 = vpack.c.b16 %v1521, %v1513
    %v1722 = vpack.c.b16 %v1522, %v1514
    %v1723 = vpack.c.b16 %v1523, %v1515
    %v1724 = vpack.c.b16 %v1532, %v1524
    %v1725 = vpack.c.b16 %v1533, %v1525
    %v1726 = vpack.c.b16 %v1534, %v1526
    %v1727 = vpack.c.b16 %v1535, %v1527
    %v1728 = vpack.c.b16 %v1536, %v1528
    %v1729 = vpack.c.b16 %v1537, %v1529
    %v1730 = vpack.c.b16 %v1538, %v1530
    %v1731 = vpack.c.b16 %v1539, %v1531
    %v1732 = vpack.c.b16 %v1548, %v1540
    %v1733 = vpack.c.b16 %v1549, %v1541
    %v1734 = vpack.c.b16 %v1550, %v1542
    %v1735 = vpack.c.b16 %v1551, %v1543
    %v1736 = vpack.c.b16 %v1552, %v1544
    %v1737 = vpack.c.b16 %v1553, %v1545
    %v1738 = vpack.c.b16 %v1554, %v1546
    %v1739 = vpack.c.b16 %v1555, %v1547
    %v1740 = vpack.c.b16 %v1564, %v1556
    %v1741 = vpack.c.b16 %v1565, %v1557
    %v1742 = vpack.c.b16 %v1566, %v1558
    %v1743 = vpack.c.b16 %v1567, %v1559
    %v1744 = vpack.c.b16 %v1568, %v1560
    %v1745 = vpack.c.b16 %v1569, %v1561
    %v1746 = vpack.c.b16 %v1570, %v1562
    %v1747 = vpack.c.b16 %v1571, %v1563
    %v1748 = vpack.c.b16 %v1580, %v1572
    %v1749 = vpack.c.b16 %v1581, %v1573
    %v1750 = vpack.c.b16 %v1582, %v1574
    %v1751 = vpack.c.b16 %v1583, %v1575
    %v1752 = vpack.c.b16 %v1584, %v1576
    %v1753 = vpack.c.b16 %v1585, %v1577
    %v1754 = vpack.c.b16 %v1586, %v1578
    %v1755 = vpack.c.b16 %v1587, %v1579
    %v1756 = vpack.c.b16 %v1596, %v1588
    %v1757 = vpack.c.b16 %v1597, %v1589
    %v1758 = vpack.c.b16 %v1598, %v1590
    %v1759 = vpack.c.b16 %v1599, %v1591
    %v1760 = vpack.c.b16 %v1600, %v1592
    %v1761 = vpack.c.b16 %v1601, %v1593
    %v1762 = vpack.c.b16 %v1602, %v1594
    %v1763 = vpack.c.b16 %v1603, %v1595
    %v1764 = vpack.c.b16 %v1612, %v1604
    %v1765 = vpack.c.b16 %v1613, %v1605
    %v1766 = vpack.c.b16 %v1614, %v1606
    %v1767 = vpack.c.b16 %v1615, %v1607
    %v1768 = vpack.c.b16 %v1616, %v1608
    %v1769 = vpack.c.b16 %v1617, %v1609
    %v1770 = vpack.c.b16 %v1618, %v1610
    %v1771 = vpack.c.b16 %v1619, %v1611
    %v1772 = vpack.c.b16 %v1628, %v1620
    %v1773 = vpack.c.b16 %v1629, %v1621
    %v1774 = vpack.c.b16 %v1630, %v1622
    %v1775 = vpack.c.b16 %v1631, %v1623
    %v1776 = vpack.c.b16 %v1632, %v1624
    %v1777 = vpack.c.b16 %v1633, %v1625
    %v1778 = vpack.c.b16 %v1634, %v1626
    %v1779 = vpack.c.b16 %v1635, %v1627
    %v1780 = vpack.c.b16 %v1644, %v1636
    %v1781 = vpack.c.b16 %v1645, %v1637
    %v1782 = vpack.c.b16 %v1646, %v1638
    %v1783 = vpack.c.b16 %v1647, %v1639
    %v1784 = vpack.c.b16 %v1648, %v1640
    %v1785 = vpack.c.b16 %v1649, %v1641
    %v1786 = vpack.c.b16 %v1650, %v1642
    %v1787 = vpack.c.b16 %v1651, %v1643
    %v1788 = vpack.c.b16 %v1660, %v1652
    %v1789 = vpack.c.b16 %v1661, %v1653
    %v1790 = vpack.c.b16 %v1662, %v1654
    %v1791 = vpack.c.b16 %v1663, %v1655
    %v1792 = vpack.c.b16 %v1664, %v1656
    %v1793 = vpack.c.b16 %v1665, %v1657
    %v1794 = vpack.c.b16 %v1666, %v1658
    %v1795 = vpack.c.b16 %v1667, %v1659
    %1924 = vmatprep.subr.bf16.mxu0 %v1669
    %1925 = vmatpush1.bf16.msra.mxu0 %v1668
    %1926 = vmatprep.subr.bf16.mxu0 %v1677
    %1927 = vmatpush1.bf16.msra.mxu0 %v1676
    %1928 = vmatprep.subr.bf16.mxu0 %v1685
    %1929 = vmatpush1.bf16.msra.mxu0 %v1684
    %1930 = vmatprep.subr.bf16.mxu0 %v1693
    %1931 = vmatpush1.bf16.msra.mxu0 %v1692
    %1932 = vmatprep.subr.bf16.mxu0 %v1701
    %1933 = vmatpush1.bf16.msra.mxu0 %v1700
    %1934 = vmatprep.subr.bf16.mxu0 %v1709
    %1935 = vmatpush1.bf16.msra.mxu0 %v1708
    %1936 = vmatprep.subr.bf16.mxu0 %v1717
    %1937 = vmatpush1.bf16.msra.mxu0 %v1716
    %1938 = vmatprep.subr.bf16.mxu0 %v1725
    %1939 = vmatpush1.bf16.msra.mxu0 %v1724
    %1940 = vmatprep.subr.bf16.mxu0 %v1733
    %1941 = vmatpush1.bf16.msra.mxu0 %v1732
    %1942 = vmatprep.subr.bf16.mxu0 %v1741
    %1943 = vmatpush1.bf16.msra.mxu0 %v1740
    %1944 = vmatprep.subr.bf16.mxu0 %v1749
    %1945 = vmatpush1.bf16.msra.mxu0 %v1748
    %1946 = vmatprep.subr.bf16.mxu0 %v1757
    %1947 = vmatpush1.bf16.msra.mxu0 %v1756
    %1948 = vmatprep.subr.bf16.mxu0 %v1765
    %1949 = vmatpush1.bf16.msra.mxu0 %v1764
    %1950 = vmatprep.subr.bf16.mxu0 %v1773
    %1951 = vmatpush1.bf16.msra.mxu0 %v1772
    %1952 = vmatprep.subr.bf16.mxu0 %v1781
    %1953 = vmatpush1.bf16.msra.mxu0 %v1780
    %1954 = vmatprep.subr.bf16.mxu0 %v1789
    %1955 = vmatpush1.bf16.msra.mxu0 %v1788
    %1956 = vmatprep.mubr.bf16.mxu0 %v1155
    %1957 = vmatmul.mubr.bf16.gmra.mrb[0].mxu0 %v1154
    %v1958 = vpop.f32.mrb[0].mxu0
    %v1959 = vadd.f32 0.0, %v1958
    %v1960 = vpop.f32.mrb[0].mxu0
    %v1961 = vadd.f32 0.0, %v1960
    %v1962 = vpop.f32.mrb[0].mxu0
    %v1963 = vpop.f32.mrb[0].mxu0
    %1964 = vdwg.mxu0
    %1965 = vmatprep.subr.bf16.mxu0 %v1671
    %1966 = vmatpush1.bf16.msra.mxu0 %v1670
    %1967 = vmatprep.subr.bf16.mxu0 %v1679
    %1968 = vmatpush1.bf16.msra.mxu0 %v1678
    %1969 = vmatprep.subr.bf16.mxu0 %v1687
    %1970 = vmatpush1.bf16.msra.mxu0 %v1686
    %1971 = vmatprep.subr.bf16.mxu0 %v1695
    %1972 = vmatpush1.bf16.msra.mxu0 %v1694
    %1973 = vmatprep.subr.bf16.mxu0 %v1703
    %1974 = vmatpush1.bf16.msra.mxu0 %v1702
    %1975 = vmatprep.subr.bf16.mxu0 %v1711
    %1976 = vmatpush1.bf16.msra.mxu0 %v1710
    %1977 = vmatprep.subr.bf16.mxu0 %v1719
    %1978 = vmatpush1.bf16.msra.mxu0 %v1718
    %1979 = vmatprep.subr.bf16.mxu0 %v1727
    %1980 = vmatpush1.bf16.msra.mxu0 %v1726
    %1981 = vmatprep.subr.bf16.mxu0 %v1735
    %1982 = vmatpush1.bf16.msra.mxu0 %v1734
    %1983 = vmatprep.subr.bf16.mxu0 %v1743
    %1984 = vmatpush1.bf16.msra.mxu0 %v1742
    %1985 = vmatprep.subr.bf16.mxu0 %v1751
    %1986 = vmatpush1.bf16.msra.mxu0 %v1750
    %1987 = vmatprep.subr.bf16.mxu0 %v1759
    %1988 = vmatpush1.bf16.msra.mxu0 %v1758
    %1989 = vmatprep.subr.bf16.mxu0 %v1767
    %1990 = vmatpush1.bf16.msra.mxu0 %v1766
    %1991 = vmatprep.subr.bf16.mxu0 %v1775
    %1992 = vmatpush1.bf16.msra.mxu0 %v1774
    %1993 = vmatprep.subr.bf16.mxu0 %v1783
    %1994 = vmatpush1.bf16.msra.mxu0 %v1782
    %1995 = vmatprep.subr.bf16.mxu0 %v1791
    %1996 = vmatpush1.bf16.msra.mxu0 %v1790
    %1997 = vmatprep.mubr.bf16.mxu0 %v1155
    %1998 = vmatmul.mubr.bf16.gmra.mrb[0].mxu0 %v1154
    %v1999 = vpop.f32.mrb[0].mxu0
    %v2000 = vadd.f32 0.0, %v1999
    %v2001 = vpop.f32.mrb[0].mxu0
    %v2002 = vadd.f32 0.0, %v2001
    %v2003 = vpop.f32.mrb[0].mxu0
    %v2004 = vpop.f32.mrb[0].mxu0
    %2005 = vdwg.mxu0
    %2006 = vmatprep.subr.bf16.mxu0 %v1673
    %2007 = vmatpush1.bf16.msra.mxu0 %v1672
    %2008 = vmatprep.subr.bf16.mxu0 %v1681
    %2009 = vmatpush1.bf16.msra.mxu0 %v1680
    %2010 = vmatprep.subr.bf16.mxu0 %v1689
    %2011 = vmatpush1.bf16.msra.mxu0 %v1688
    %2012 = vmatprep.subr.bf16.mxu0 %v1697
    %2013 = vmatpush1.bf16.msra.mxu0 %v1696
    %2014 = vmatprep.subr.bf16.mxu0 %v1705
    %2015 = vmatpush1.bf16.msra.mxu0 %v1704
    %2016 = vmatprep.subr.bf16.mxu0 %v1713
    %2017 = vmatpush1.bf16.msra.mxu0 %v1712
    %2018 = vmatprep.subr.bf16.mxu0 %v1721
    %2019 = vmatpush1.bf16.msra.mxu0 %v1720
    %2020 = vmatprep.subr.bf16.mxu0 %v1729
    %2021 = vmatpush1.bf16.msra.mxu0 %v1728
    %2022 = vmatprep.subr.bf16.mxu0 %v1737
    %2023 = vmatpush1.bf16.msra.mxu0 %v1736
    %2024 = vmatprep.subr.bf16.mxu0 %v1745
    %2025 = vmatpush1.bf16.msra.mxu0 %v1744
    %2026 = vmatprep.subr.bf16.mxu0 %v1753
    %2027 = vmatpush1.bf16.msra.mxu0 %v1752
    %2028 = vmatprep.subr.bf16.mxu0 %v1761
    %2029 = vmatpush1.bf16.msra.mxu0 %v1760
    %2030 = vmatprep.subr.bf16.mxu0 %v1769
    %2031 = vmatpush1.bf16.msra.mxu0 %v1768
    %2032 = vmatprep.subr.bf16.mxu0 %v1777
    %2033 = vmatpush1.bf16.msra.mxu0 %v1776
    %2034 = vmatprep.subr.bf16.mxu0 %v1785
    %2035 = vmatpush1.bf16.msra.mxu0 %v1784
    %2036 = vmatprep.subr.bf16.mxu0 %v1793
    %2037 = vmatpush1.bf16.msra.mxu0 %v1792
    %2038 = vmatprep.mubr.bf16.mxu0 %v1155
    %2039 = vmatmul.mubr.bf16.gmra.mrb[0].mxu0 %v1154
    %v2040 = vpop.f32.mrb[0].mxu0
    %v2041 = vadd.f32 0.0, %v2040
    %v2042 = vpop.f32.mrb[0].mxu0
    %v2043 = vadd.f32 0.0, %v2042
    %v2044 = vpop.f32.mrb[0].mxu0
    %v2045 = vpop.f32.mrb[0].mxu0
    %2046 = vdwg.mxu0
    %2047 = vmatprep.subr.bf16.mxu0 %v1675
    %2048 = vmatpush1.bf16.msra.mxu0 %v1674
    %2049 = vmatprep.subr.bf16.mxu0 %v1683
    %2050 = vmatpush1.bf16.msra.mxu0 %v1682
    %2051 = vmatprep.subr.bf16.mxu0 %v1691
    %2052 = vmatpush1.bf16.msra.mxu0 %v1690
    %2053 = vmatprep.subr.bf16.mxu0 %v1699
    %2054 = vmatpush1.bf16.msra.mxu0 %v1698
    %2055 = vmatprep.subr.bf16.mxu0 %v1707
    %2056 = vmatpush1.bf16.msra.mxu0 %v1706
    %2057 = vmatprep.subr.bf16.mxu0 %v1715
    %2058 = vmatpush1.bf16.msra.mxu0 %v1714
    %2059 = vmatprep.subr.bf16.mxu0 %v1723
    %2060 = vmatpush1.bf16.msra.mxu0 %v1722
    %2061 = vmatprep.subr.bf16.mxu0 %v1731
    %2062 = vmatpush1.bf16.msra.mxu0 %v1730
    %2063 = vmatprep.subr.bf16.mxu0 %v1739
    %2064 = vmatpush1.bf16.msra.mxu0 %v1738
    %2065 = vmatprep.subr.bf16.mxu0 %v1747
    %2066 = vmatpush1.bf16.msra.mxu0 %v1746
    %2067 = vmatprep.subr.bf16.mxu0 %v1755
    %2068 = vmatpush1.bf16.msra.mxu0 %v1754
    %2069 = vmatprep.subr.bf16.mxu0 %v1763
    %2070 = vmatpush1.bf16.msra.mxu0 %v1762
    %2071 = vmatprep.subr.bf16.mxu0 %v1771
    %2072 = vmatpush1.bf16.msra.mxu0 %v1770
    %2073 = vmatprep.subr.bf16.mxu0 %v1779
    %2074 = vmatpush1.bf16.msra.mxu0 %v1778
    %2075 = vmatprep.subr.bf16.mxu0 %v1787
    %2076 = vmatpush1.bf16.msra.mxu0 %v1786
    %2077 = vmatprep.subr.bf16.mxu0 %v1795
    %2078 = vmatpush1.bf16.msra.mxu0 %v1794
    %2079 = vmatprep.mubr.bf16.mxu0 %v1155
    %2080 = vmatmul.mubr.bf16.gmra.mrb[0].mxu0 %v1154
    %v2081 = vpop.f32.mrb[0].mxu0
    %v2082 = vadd.f32 0.0, %v2081
    %v2083 = vpop.f32.mrb[0].mxu0
    %v2084 = vadd.f32 0.0, %v2083
    %v2085 = vpop.f32.mrb[0].mxu0
    %v2086 = vpop.f32.mrb[0].mxu0
    %2087 = vdwg.mxu0
    %v2096 = vcombine.low %v1959, %v1961
    %v2097 = vcombine.low %v2000, %v2002
    %v2099 = vunpack.c.l.s4 1983009808
    %v2100 = vunpack.c.0.s8 %v2099
    %v2101 = vlaneseq
    %v2102 = vshrl.u32 %v2101, 7
    %v2103 = vsub.s32 %v2100, %v2102
    %v2104 = vrot.slane %v2096, %v2103
    %v2106 = vunpack.c.l.s4 1983009808
    %v2107 = vunpack.c.0.s8 %v2106
    %v2108 = vlaneseq
    %v2109 = vshrl.u32 %v2108, 7
    %v2110 = vsub.s32 %v2107, %v2109
    %v2111 = vrot.slane %v2097, %v2110
    %v2112 = vcombine.low %v2104, %v2111
    %v2113 = vcombine.low %v2041, %v2043
    %v2114 = vcombine.low %v2082, %v2084
    %v2116 = vunpack.c.l.s4 1983009808
    %v2117 = vunpack.c.0.s8 %v2116
    %v2118 = vlaneseq
    %v2119 = vshrl.u32 %v2118, 7
    %v2120 = vsub.s32 %v2117, %v2119
    %v2121 = vrot.slane %v2113, %v2120
    %v2123 = vunpack.c.l.s4 1983009808
    %v2124 = vunpack.c.0.s8 %v2123
    %v2125 = vlaneseq
    %v2126 = vshrl.u32 %v2125, 7
    %v2127 = vsub.s32 %v2124, %v2126
    %v2128 = vrot.slane %v2114, %v2127
    %v2129 = vcombine.low %v2121, %v2128
    %v2132 = vadd.f32 %v1140, %v2112
    %v2133 = vadd.f32 %v1141, %v2129
    %v2134 = vld [vmem:[#allocation5] sm:$0xf]
    %v2135 = vxor.u32 %v2132, 2147483648
    %v2136 = vmul.f32 %v2135, 1.442695
    %v2137 = vpow.pop %v2136
    %v2138 = vadd.f32 %v2137, 1.0
    %v2139 = vrcp.pop %v2138
    %v2140 = vmul.f32 1.0, %v2139
    %v2142 = vrot.slane %v2132, 4
    %v2144 = vxor.u32 %v2142, 2147483648
    %v2145 = vmul.f32 %v2144, 1.442695
    %v2146 = vpow.pop %v2145
    %v2147 = vadd.f32 %v2146, 1.0
    %v2148 = vrcp.pop %v2147
    %v2149 = vmul.f32 1.0, %v2148
    %v2150 = vtanh.pop %v2133
    %v2152 = vrot.slane %v2133, 4
    %v2154 = vxor.u32 %v2152, 2147483648
    %v2155 = vmul.f32 %v2154, 1.442695
    %v2156 = vpow.pop %v2155
    %v2157 = vadd.f32 %v2156, 1.0
    %v2158 = vrcp.pop %v2157
    %v2159 = vmul.f32 1.0, %v2158
    %v2160 = vmul.f32 %v2149, %v2134
    %v2161 = vmul.f32 %v2140, %v2150
    %v2162 = vadd.f32 %v2160, %v2161
    %v2163 = vtanh.pop %v2162
    %v2164 = vmul.f32 %v2159, %v2163
    %2165 = vst [vmem:[#allocation4] sm:$0xf] %v2164
    %2166 = vst [vmem:[#allocation5] sm:$0xf] %v2162
    %v2169 = vunpack.c.l.s4 1983009808
    %v2170 = vunpack.c.0.s8 %v2169
    %v2171 = vlaneseq
    %v2172 = vshrl.u32 %v2171, 7
    %v2173 = vsub.s32 %v2170, %v2172
    %v2174 = vrot.slane %v2164, %v2173
    %v2175 = vcombine.high %v2174, %v2174
    %v2178 = vpack.c.bf16 %v2174, %v2174
    %v2179 = vpack.c.bf16 %v2175, %v2175
    %v2182 = vcombine.low %v2178, %v2179
    %v2184 = vunpack.c.l.s4 1966171168
    %v2185 = vunpack.c.0.s8 %v2184
    %v2186 = vlaneseq
    %v2187 = vshrl.u32 %v2186, 7
    %v2188 = vsub.s32 %v2185, %v2187
    %v2189 = vrot.slane %v2182, %v2188
    %v2191 = vunpack.c.l.s4 1966171168
    %v2192 = vunpack.c.0.s8 %v2191
    %v2193 = vlaneseq
    %v2194 = vshrl.u32 %v2193, 7
    %v2195 = vsub.s32 %v2192, %v2194
    %v2196 = vrot.slane %v2189, %v2195
    %s2198 = smul.u32 %s1136, 2
    %s2199 = scalar_lea.vmem %s55, %s2198
    %2200 = vst [vmem:[%s2199] sm:$0x3] %v2196
  $region26: #{acoustic_estimator_forward.10} parent=0 // loop_footer
    %s71 = sadd.s32 1, %s67
  $region27: #{acoustic_estimator_forward.10} parent=0 // loop_footer_branch
    %66 = sbr.rel target = $region23
  $region28: #{acoustic_estimator_forward.10} parent=0 // loop_exit
    _
  %s2201 = ssub.s32 0, 0
  %s2202 = smul.u32 8, %s2201
  %p2203 = scmp.lt.s32.totalorder %s2202, 7
  %s2204 = scalar_select %p2203, %s2202, 7
  %s2205 = smul.addr %s2204, 2
  %s2206 = scalar_lea.vmem %s5, %s2205
  // Predicated region
  $region29: #{acoustic_estimator_forward.10} parent=0 // pred_check
    _
  $region30: #{acoustic_estimator_forward.10} parent=0 // pred_check_branch
    %2208 = sbr.rel (0) target = $region32
  $region31: #{acoustic_estimator_forward.10} parent=0 // pred_region
    _
  $region32: #{acoustic_estimator_forward.10} parent=0 // pred_fallthru
    _
  // Predicated region
  $region33: #{acoustic_estimator_forward.10} parent=0 // pred_check
    _
  $region34: #{acoustic_estimator_forward.10} parent=0 // pred_check_branch
    %2210 = sbr.rel (0) target = $region36
  $region35: #{acoustic_estimator_forward.10} parent=0 // pred_region
    %s2211 = ssub.s32 0, 0
    %s2212 = smul.u32 8, %s2211
  $region36: #{acoustic_estimator_forward.10} parent=0 // pred_fallthru
    _
  // Predicated region
  $region37: #{acoustic_estimator_forward.10} parent=0 // pred_check
    _
  $region38: #{acoustic_estimator_forward.10} parent=0 // pred_check_branch
    %2214 = sbr.rel (0) target = $region40
  $region39: #{acoustic_estimator_forward.10} parent=0 // pred_region
    _
  $region40: #{acoustic_estimator_forward.10} parent=0 // pred_fallthru
    _
  // Predicated region
  $region41: #{acoustic_estimator_forward.10} parent=0 // pred_check
    _
  $region42: #{acoustic_estimator_forward.10} parent=0 // pred_check_branch
    %2216 = sbr.rel (0) target = $region44
  $region43: #{acoustic_estimator_forward.10} parent=0 // pred_region
    %s2217 = ssub.s32 0, 0
    %s2218 = smul.u32 8, %s2217
    %p2219 = scmp.lt.s32.totalorder %s2218, 7
    %s2220 = scalar_select %p2219, %s2218, 7
    %s2221 = smul.addr %s2220, 2
    %s2222 = scalar_lea.vmem %s5, %s2221
  $region44: #{acoustic_estimator_forward.10} parent=0 // pred_fallthru
    _

// kernel: acoustic_estimator_forward.9
$region0: #{acoustic_estimator_forward.9}
  #allocation0 [shape = 'u32[]', space=smem, size = 0x4, offset = 0x4, fixed_abs, tag = 'smem constant byte address 0x4 - core index']
  #allocation1 [shape = 'u32[144,128]{1,0:T(1,128)}', space=vmem, size = 0x12000, scoped, tag = 'internal scratch']
  %s0 = inlined_call_operand.vmem [shape: bf16[16,256], index: 0, kind: input, shape index: {}]
  %s1 = inlined_call_operand.vmem [shape: bf16[16,256], index: 1, kind: input, shape index: {}]
  %s2 = inlined_call_operand.vmem [shape: bf16[256,2048], index: 2, kind: input, shape index: {}]
  %s3 = inlined_call_operand.vmem [shape: bf16[256,2048], index: 3, kind: input, shape index: {}]
  %s4 = inlined_call_operand.vmem [shape: f32[1,2048], index: 4, kind: input, shape index: {}]
  %s5 = inlined_call_operand.vmem [shape: f32[16,1024], index: 5, kind: output, shape index: {0}]
  %s6 = inlined_call_operand.vmem [shape: f32[16,1024], index: 6, kind: output, shape index: {1}]
  %7 = xla_tuple %s5, %s6
  %s8 = sld [smem:[#allocation0]]
  $region38: #{acoustic_estimator_forward.9} parent=0
    _
  %s10 = ssub.s32 1, %s8
  %s11 = scalar_select 0, %s10, %s8
  // Predicated region
  $region2: #{acoustic_estimator_forward.9} parent=0 // pred_check
    _
  $region3: #{acoustic_estimator_forward.9} parent=0 // pred_check_branch
    %13 = sbr.rel (0) target = $region5
  $region4: #{acoustic_estimator_forward.9} parent=0 // pred_region
    _
  $region5: #{acoustic_estimator_forward.9} parent=0 // pred_fallthru
    _
  // Predicated region
  $region6: #{acoustic_estimator_forward.9} parent=0 // pred_check
    _
  $region7: #{acoustic_estimator_forward.9} parent=0 // pred_check_branch
    %15 = sbr.rel (0) target = $region9
  $region8: #{acoustic_estimator_forward.9} parent=0 // pred_region
    _
  $region9: #{acoustic_estimator_forward.9} parent=0 // pred_fallthru
    _
  // Predicated region
  $region10: #{acoustic_estimator_forward.9} parent=0 // pred_check
    _
  $region11: #{acoustic_estimator_forward.9} parent=0 // pred_check_branch
    %17 = sbr.rel (0) target = $region13
  $region12: #{acoustic_estimator_forward.9} parent=0 // pred_region
    _
  $region13: #{acoustic_estimator_forward.9} parent=0 // pred_fallthru
    _
  // Predicated region
  $region14: #{acoustic_estimator_forward.9} parent=0 // pred_check
    _
  $region15: #{acoustic_estimator_forward.9} parent=0 // pred_check_branch
    %19 = sbr.rel (0) target = $region17
  $region16: #{acoustic_estimator_forward.9} parent=0 // pred_region
    _
  $region17: #{acoustic_estimator_forward.9} parent=0 // pred_fallthru
    _
  // Predicated region
  $region18: #{acoustic_estimator_forward.9} parent=0 // pred_check
    _
  $region19: #{acoustic_estimator_forward.9} parent=0 // pred_check_branch
    %21 = sbr.rel (0) target = $region21
  $region20: #{acoustic_estimator_forward.9} parent=0 // pred_region
    _
  $region21: #{acoustic_estimator_forward.9} parent=0 // pred_fallthru
    _
  %v22 = vld [vmem:[%s0] sm:$0xff]
  %v23 = vld [vmem:[%s0 + $0x8] sm:$0xff]
  %v24 = vld [vmem:[%s2] sm:$0xff]
  %v25 = vld [vmem:[%s2 + $0x8] sm:$0xff]
  %v26 = vld [vmem:[%s2 + $0x10] sm:$0xff]
  %v27 = vld [vmem:[%s2 + $0x18] sm:$0xff]
  %v28 = vld [vmem:[%s2 + $0x20] sm:$0xff]
  %v29 = vld [vmem:[%s2 + $0x28] sm:$0xff]
  %v30 = vld [vmem:[%s2 + $0x30] sm:$0xff]
  %v31 = vld [vmem:[%s2 + $0x38] sm:$0xff]
  %v32 = vld [vmem:[%s2 + $0x40] sm:$0xff]
  %v33 = vld [vmem:[%s2 + $0x48] sm:$0xff]
  %v34 = vld [vmem:[%s2 + $0x50] sm:$0xff]
  %v35 = vld [vmem:[%s2 + $0x58] sm:$0xff]
  %v36 = vld [vmem:[%s2 + $0x60] sm:$0xff]
  %v37 = vld [vmem:[%s2 + $0x68] sm:$0xff]
  %v38 = vld [vmem:[%s2 + $0x70] sm:$0xff]
  %v39 = vld [vmem:[%s2 + $0x78] sm:$0xff]
  %v40 = vld [vmem:[%s2 + $0x80] sm:$0xff]
  %v41 = vld [vmem:[%s2 + $0x88] sm:$0xff]
  %v42 = vld [vmem:[%s2 + $0x90] sm:$0xff]
  %v43 = vld [vmem:[%s2 + $0x98] sm:$0xff]
  %v44 = vld [vmem:[%s2 + $0xa0] sm:$0xff]
  %v45 = vld [vmem:[%s2 + $0xa8] sm:$0xff]
  %v46 = vld [vmem:[%s2 + $0xb0] sm:$0xff]
  %v47 = vld [vmem:[%s2 + $0xb8] sm:$0xff]
  %v48 = vld [vmem:[%s2 + $0xc0] sm:$0xff]
  %v49 = vld [vmem:[%s2 + $0xc8] sm:$0xff]
  %v50 = vld [vmem:[%s2 + $0xd0] sm:$0xff]
  %v51 = vld [vmem:[%s2 + $0xd8] sm:$0xff]
  %v52 = vld [vmem:[%s2 + $0xe0] sm:$0xff]
  %v53 = vld [vmem:[%s2 + $0xe8] sm:$0xff]
  %v54 = vld [vmem:[%s2 + $0xf0] sm:$0xff]
  %v55 = vld [vmem:[%s2 + $0xf8] sm:$0xff]
  %v56 = vld [vmem:[%s2 + $0x100] sm:$0xff]
  %v57 = vld [vmem:[%s2 + $0x108] sm:$0xff]
  %v58 = vld [vmem:[%s2 + $0x110] sm:$0xff]
  %v59 = vld [vmem:[%s2 + $0x118] sm:$0xff]
  %v60 = vld [vmem:[%s2 + $0x120] sm:$0xff]
  %v61 = vld [vmem:[%s2 + $0x128] sm:$0xff]
  %v62 = vld [vmem:[%s2 + $0x130] sm:$0xff]
  %v63 = vld [vmem:[%s2 + $0x138] sm:$0xff]
  %v64 = vld [vmem:[%s2 + $0x140] sm:$0xff]
  %v65 = vld [vmem:[%s2 + $0x148] sm:$0xff]
  %v66 = vld [vmem:[%s2 + $0x150] sm:$0xff]
  %v67 = vld [vmem:[%s2 + $0x158] sm:$0xff]
  %v68 = vld [vmem:[%s2 + $0x160] sm:$0xff]
  %v69 = vld [vmem:[%s2 + $0x168] sm:$0xff]
  %v70 = vld [vmem:[%s2 + $0x170] sm:$0xff]
  %v71 = vld [vmem:[%s2 + $0x178] sm:$0xff]
  %v72 = vld [vmem:[%s2 + $0x180] sm:$0xff]
  %v73 = vld [vmem:[%s2 + $0x188] sm:$0xff]
  %v74 = vld [vmem:[%s2 + $0x190] sm:$0xff]
  %v75 = vld [vmem:[%s2 + $0x198] sm:$0xff]
  %v76 = vld [vmem:[%s2 + $0x1a0] sm:$0xff]
  %v77 = vld [vmem:[%s2 + $0x1a8] sm:$0xff]
  %v78 = vld [vmem:[%s2 + $0x1b0] sm:$0xff]
  %v79 = vld [vmem:[%s2 + $0x1b8] sm:$0xff]
  %v80 = vld [vmem:[%s2 + $0x1c0] sm:$0xff]
  %v81 = vld [vmem:[%s2 + $0x1c8] sm:$0xff]
  %v82 = vld [vmem:[%s2 + $0x1d0] sm:$0xff]
  %v83 = vld [vmem:[%s2 + $0x1d8] sm:$0xff]
  %v84 = vld [vmem:[%s2 + $0x1e0] sm:$0xff]
  %v85 = vld [vmem:[%s2 + $0x1e8] sm:$0xff]
  %v86 = vld [vmem:[%s2 + $0x1f0] sm:$0xff]
  %v87 = vld [vmem:[%s2 + $0x1f8] sm:$0xff]
  %v88 = vld [vmem:[%s2 + $0x200] sm:$0xff]
  %v89 = vld [vmem:[%s2 + $0x208] sm:$0xff]
  %v90 = vld [vmem:[%s2 + $0x210] sm:$0xff]
  %v91 = vld [vmem:[%s2 + $0x218] sm:$0xff]
  %v92 = vld [vmem:[%s2 + $0x220] sm:$0xff]
  %v93 = vld [vmem:[%s2 + $0x228] sm:$0xff]
  %v94 = vld [vmem:[%s2 + $0x230] sm:$0xff]
  %v95 = vld [vmem:[%s2 + $0x238] sm:$0xff]
  %v96 = vld [vmem:[%s2 + $0x240] sm:$0xff]
  %v97 = vld [vmem:[%s2 + $0x248] sm:$0xff]
  %v98 = vld [vmem:[%s2 + $0x250] sm:$0xff]
  %v99 = vld [vmem:[%s2 + $0x258] sm:$0xff]
  %v100 = vld [vmem:[%s2 + $0x260] sm:$0xff]
  %v101 = vld [vmem:[%s2 + $0x268] sm:$0xff]
  %v102 = vld [vmem:[%s2 + $0x270] sm:$0xff]
  %v103 = vld [vmem:[%s2 + $0x278] sm:$0xff]
  %v104 = vld [vmem:[%s2 + $0x280] sm:$0xff]
  %v105 = vld [vmem:[%s2 + $0x288] sm:$0xff]
  %v106 = vld [vmem:[%s2 + $0x290] sm:$0xff]
  %v107 = vld [vmem:[%s2 + $0x298] sm:$0xff]
  %v108 = vld [vmem:[%s2 + $0x2a0] sm:$0xff]
  %v109 = vld [vmem:[%s2 + $0x2a8] sm:$0xff]
  %v110 = vld [vmem:[%s2 + $0x2b0] sm:$0xff]
  %v111 = vld [vmem:[%s2 + $0x2b8] sm:$0xff]
  %v112 = vld [vmem:[%s2 + $0x2c0] sm:$0xff]
  %v113 = vld [vmem:[%s2 + $0x2c8] sm:$0xff]
  %v114 = vld [vmem:[%s2 + $0x2d0] sm:$0xff]
  %v115 = vld [vmem:[%s2 + $0x2d8] sm:$0xff]
  %v116 = vld [vmem:[%s2 + $0x2e0] sm:$0xff]
  %v117 = vld [vmem:[%s2 + $0x2e8] sm:$0xff]
  %v118 = vld [vmem:[%s2 + $0x2f0] sm:$0xff]
  %v119 = vld [vmem:[%s2 + $0x2f8] sm:$0xff]
  %v120 = vld [vmem:[%s2 + $0x300] sm:$0xff]
  %v121 = vld [vmem:[%s2 + $0x308] sm:$0xff]
  %v122 = vld [vmem:[%s2 + $0x310] sm:$0xff]
  %v123 = vld [vmem:[%s2 + $0x318] sm:$0xff]
  %v124 = vld [vmem:[%s2 + $0x320] sm:$0xff]
  %v125 = vld [vmem:[%s2 + $0x328] sm:$0xff]
  %v126 = vld [vmem:[%s2 + $0x330] sm:$0xff]
  %v127 = vld [vmem:[%s2 + $0x338] sm:$0xff]
  %v128 = vld [vmem:[%s2 + $0x340] sm:$0xff]
  %v129 = vld [vmem:[%s2 + $0x348] sm:$0xff]
  %v130 = vld [vmem:[%s2 + $0x350] sm:$0xff]
  %v131 = vld [vmem:[%s2 + $0x358] sm:$0xff]
  %v132 = vld [vmem:[%s2 + $0x360] sm:$0xff]
  %v133 = vld [vmem:[%s2 + $0x368] sm:$0xff]
  %v134 = vld [vmem:[%s2 + $0x370] sm:$0xff]
  %v135 = vld [vmem:[%s2 + $0x378] sm:$0xff]
  %v136 = vld [vmem:[%s2 + $0x380] sm:$0xff]
  %v137 = vld [vmem:[%s2 + $0x388] sm:$0xff]
  %v138 = vld [vmem:[%s2 + $0x390] sm:$0xff]
  %v139 = vld [vmem:[%s2 + $0x398] sm:$0xff]
  %v140 = vld [vmem:[%s2 + $0x3a0] sm:$0xff]
  %v141 = vld [vmem:[%s2 + $0x3a8] sm:$0xff]
  %v142 = vld [vmem:[%s2 + $0x3b0] sm:$0xff]
  %v143 = vld [vmem:[%s2 + $0x3b8] sm:$0xff]
  %v144 = vld [vmem:[%s2 + $0x3c0] sm:$0xff]
  %v145 = vld [vmem:[%s2 + $0x3c8] sm:$0xff]
  %v146 = vld [vmem:[%s2 + $0x3d0] sm:$0xff]
  %v147 = vld [vmem:[%s2 + $0x3d8] sm:$0xff]
  %v148 = vld [vmem:[%s2 + $0x3e0] sm:$0xff]
  %v149 = vld [vmem:[%s2 + $0x3e8] sm:$0xff]
  %v150 = vld [vmem:[%s2 + $0x3f0] sm:$0xff]
  %v151 = vld [vmem:[%s2 + $0x3f8] sm:$0xff]
  %v152 = vld [vmem:[%s2 + $0x400] sm:$0xff]
  %v153 = vld [vmem:[%s2 + $0x408] sm:$0xff]
  %v154 = vld [vmem:[%s2 + $0x410] sm:$0xff]
  %v155 = vld [vmem:[%s2 + $0x418] sm:$0xff]
  %v156 = vld [vmem:[%s2 + $0x420] sm:$0xff]
  %v157 = vld [vmem:[%s2 + $0x428] sm:$0xff]
  %v158 = vld [vmem:[%s2 + $0x430] sm:$0xff]
  %v159 = vld [vmem:[%s2 + $0x438] sm:$0xff]
  %v160 = vld [vmem:[%s2 + $0x440] sm:$0xff]
  %v161 = vld [vmem:[%s2 + $0x448] sm:$0xff]
  %v162 = vld [vmem:[%s2 + $0x450] sm:$0xff]
  %v163 = vld [vmem:[%s2 + $0x458] sm:$0xff]
  %v164 = vld [vmem:[%s2 + $0x460] sm:$0xff]
  %v165 = vld [vmem:[%s2 + $0x468] sm:$0xff]
  %v166 = vld [vmem:[%s2 + $0x470] sm:$0xff]
  %v167 = vld [vmem:[%s2 + $0x478] sm:$0xff]
  %v168 = vld [vmem:[%s2 + $0x480] sm:$0xff]
  %v169 = vld [vmem:[%s2 + $0x488] sm:$0xff]
  %v170 = vld [vmem:[%s2 + $0x490] sm:$0xff]
  %v171 = vld [vmem:[%s2 + $0x498] sm:$0xff]
  %v172 = vld [vmem:[%s2 + $0x4a0] sm:$0xff]
  %v173 = vld [vmem:[%s2 + $0x4a8] sm:$0xff]
  %v174 = vld [vmem:[%s2 + $0x4b0] sm:$0xff]
  %v175 = vld [vmem:[%s2 + $0x4b8] sm:$0xff]
  %v176 = vld [vmem:[%s2 + $0x4c0] sm:$0xff]
  %v177 = vld [vmem:[%s2 + $0x4c8] sm:$0xff]
  %v178 = vld [vmem:[%s2 + $0x4d0] sm:$0xff]
  %v179 = vld [vmem:[%s2 + $0x4d8] sm:$0xff]
  %v180 = vld [vmem:[%s2 + $0x4e0] sm:$0xff]
  %v181 = vld [vmem:[%s2 + $0x4e8] sm:$0xff]
  %v182 = vld [vmem:[%s2 + $0x4f0] sm:$0xff]
  %v183 = vld [vmem:[%s2 + $0x4f8] sm:$0xff]
  %v184 = vld [vmem:[%s2 + $0x500] sm:$0xff]
  %v185 = vld [vmem:[%s2 + $0x508] sm:$0xff]
  %v186 = vld [vmem:[%s2 + $0x510] sm:$0xff]
  %v187 = vld [vmem:[%s2 + $0x518] sm:$0xff]
  %v188 = vld [vmem:[%s2 + $0x520] sm:$0xff]
  %v189 = vld [vmem:[%s2 + $0x528] sm:$0xff]
  %v190 = vld [vmem:[%s2 + $0x530] sm:$0xff]
  %v191 = vld [vmem:[%s2 + $0x538] sm:$0xff]
  %v192 = vld [vmem:[%s2 + $0x540] sm:$0xff]
  %v193 = vld [vmem:[%s2 + $0x548] sm:$0xff]
  %v194 = vld [vmem:[%s2 + $0x550] sm:$0xff]
  %v195 = vld [vmem:[%s2 + $0x558] sm:$0xff]
  %v196 = vld [vmem:[%s2 + $0x560] sm:$0xff]
  %v197 = vld [vmem:[%s2 + $0x568] sm:$0xff]
  %v198 = vld [vmem:[%s2 + $0x570] sm:$0xff]
  %v199 = vld [vmem:[%s2 + $0x578] sm:$0xff]
  %v200 = vld [vmem:[%s2 + $0x580] sm:$0xff]
  %v201 = vld [vmem:[%s2 + $0x588] sm:$0xff]
  %v202 = vld [vmem:[%s2 + $0x590] sm:$0xff]
  %v203 = vld [vmem:[%s2 + $0x598] sm:$0xff]
  %v204 = vld [vmem:[%s2 + $0x5a0] sm:$0xff]
  %v205 = vld [vmem:[%s2 + $0x5a8] sm:$0xff]
  %v206 = vld [vmem:[%s2 + $0x5b0] sm:$0xff]
  %v207 = vld [vmem:[%s2 + $0x5b8] sm:$0xff]
  %v208 = vld [vmem:[%s2 + $0x5c0] sm:$0xff]
  %v209 = vld [vmem:[%s2 + $0x5c8] sm:$0xff]
  %v210 = vld [vmem:[%s2 + $0x5d0] sm:$0xff]
  %v211 = vld [vmem:[%s2 + $0x5d8] sm:$0xff]
  %v212 = vld [vmem:[%s2 + $0x5e0] sm:$0xff]
  %v213 = vld [vmem:[%s2 + $0x5e8] sm:$0xff]
  %v214 = vld [vmem:[%s2 + $0x5f0] sm:$0xff]
  %v215 = vld [vmem:[%s2 + $0x5f8] sm:$0xff]
  %v216 = vld [vmem:[%s2 + $0x600] sm:$0xff]
  %v217 = vld [vmem:[%s2 + $0x608] sm:$0xff]
  %v218 = vld [vmem:[%s2 + $0x610] sm:$0xff]
  %v219 = vld [vmem:[%s2 + $0x618] sm:$0xff]
  %v220 = vld [vmem:[%s2 + $0x620] sm:$0xff]
  %v221 = vld [vmem:[%s2 + $0x628] sm:$0xff]
  %v222 = vld [vmem:[%s2 + $0x630] sm:$0xff]
  %v223 = vld [vmem:[%s2 + $0x638] sm:$0xff]
  %v224 = vld [vmem:[%s2 + $0x640] sm:$0xff]
  %v225 = vld [vmem:[%s2 + $0x648] sm:$0xff]
  %v226 = vld [vmem:[%s2 + $0x650] sm:$0xff]
  %v227 = vld [vmem:[%s2 + $0x658] sm:$0xff]
  %v228 = vld [vmem:[%s2 + $0x660] sm:$0xff]
  %v229 = vld [vmem:[%s2 + $0x668] sm:$0xff]
  %v230 = vld [vmem:[%s2 + $0x670] sm:$0xff]
  %v231 = vld [vmem:[%s2 + $0x678] sm:$0xff]
  %v232 = vld [vmem:[%s2 + $0x680] sm:$0xff]
  %v233 = vld [vmem:[%s2 + $0x688] sm:$0xff]
  %v234 = vld [vmem:[%s2 + $0x690] sm:$0xff]
  %v235 = vld [vmem:[%s2 + $0x698] sm:$0xff]
  %v236 = vld [vmem:[%s2 + $0x6a0] sm:$0xff]
  %v237 = vld [vmem:[%s2 + $0x6a8] sm:$0xff]
  %v238 = vld [vmem:[%s2 + $0x6b0] sm:$0xff]
  %v239 = vld [vmem:[%s2 + $0x6b8] sm:$0xff]
  %v240 = vld [vmem:[%s2 + $0x6c0] sm:$0xff]
  %v241 = vld [vmem:[%s2 + $0x6c8] sm:$0xff]
  %v242 = vld [vmem:[%s2 + $0x6d0] sm:$0xff]
  %v243 = vld [vmem:[%s2 + $0x6d8] sm:$0xff]
  %v244 = vld [vmem:[%s2 + $0x6e0] sm:$0xff]
  %v245 = vld [vmem:[%s2 + $0x6e8] sm:$0xff]
  %v246 = vld [vmem:[%s2 + $0x6f0] sm:$0xff]
  %v247 = vld [vmem:[%s2 + $0x6f8] sm:$0xff]
  %v248 = vld [vmem:[%s2 + $0x700] sm:$0xff]
  %v249 = vld [vmem:[%s2 + $0x708] sm:$0xff]
  %v250 = vld [vmem:[%s2 + $0x710] sm:$0xff]
  %v251 = vld [vmem:[%s2 + $0x718] sm:$0xff]
  %v252 = vld [vmem:[%s2 + $0x720] sm:$0xff]
  %v253 = vld [vmem:[%s2 + $0x728] sm:$0xff]
  %v254 = vld [vmem:[%s2 + $0x730] sm:$0xff]
  %v255 = vld [vmem:[%s2 + $0x738] sm:$0xff]
  %v256 = vld [vmem:[%s2 + $0x740] sm:$0xff]
  %v257 = vld [vmem:[%s2 + $0x748] sm:$0xff]
  %v258 = vld [vmem:[%s2 + $0x750] sm:$0xff]
  %v259 = vld [vmem:[%s2 + $0x758] sm:$0xff]
  %v260 = vld [vmem:[%s2 + $0x760] sm:$0xff]
  %v261 = vld [vmem:[%s2 + $0x768] sm:$0xff]
  %v262 = vld [vmem:[%s2 + $0x770] sm:$0xff]
  %v263 = vld [vmem:[%s2 + $0x778] sm:$0xff]
  %v264 = vld [vmem:[%s2 + $0x780] sm:$0xff]
  %v265 = vld [vmem:[%s2 + $0x788] sm:$0xff]
  %v266 = vld [vmem:[%s2 + $0x790] sm:$0xff]
  %v267 = vld [vmem:[%s2 + $0x798] sm:$0xff]
  %v268 = vld [vmem:[%s2 + $0x7a0] sm:$0xff]
  %v269 = vld [vmem:[%s2 + $0x7a8] sm:$0xff]
  %v270 = vld [vmem:[%s2 + $0x7b0] sm:$0xff]
  %v271 = vld [vmem:[%s2 + $0x7b8] sm:$0xff]
  %v272 = vld [vmem:[%s2 + $0x7c0] sm:$0xff]
  %v273 = vld [vmem:[%s2 + $0x7c8] sm:$0xff]
  %v274 = vld [vmem:[%s2 + $0x7d0] sm:$0xff]
  %v275 = vld [vmem:[%s2 + $0x7d8] sm:$0xff]
  %v276 = vld [vmem:[%s2 + $0x7e0] sm:$0xff]
  %v277 = vld [vmem:[%s2 + $0x7e8] sm:$0xff]
  %v278 = vld [vmem:[%s2 + $0x7f0] sm:$0xff]
  %v279 = vld [vmem:[%s2 + $0x7f8] sm:$0xff]
  %v280 = vld [vmem:[%s1] sm:$0xff]
  %v281 = vld [vmem:[%s1 + $0x8] sm:$0xff]
  %v282 = vld [vmem:[%s3] sm:$0xff]
  %v283 = vld [vmem:[%s3 + $0x8] sm:$0xff]
  %v284 = vld [vmem:[%s3 + $0x10] sm:$0xff]
  %v285 = vld [vmem:[%s3 + $0x18] sm:$0xff]
  %v286 = vld [vmem:[%s3 + $0x20] sm:$0xff]
  %v287 = vld [vmem:[%s3 + $0x28] sm:$0xff]
  %v288 = vld [vmem:[%s3 + $0x30] sm:$0xff]
  %v289 = vld [vmem:[%s3 + $0x38] sm:$0xff]
  %v290 = vld [vmem:[%s3 + $0x40] sm:$0xff]
  %v291 = vld [vmem:[%s3 + $0x48] sm:$0xff]
  %v292 = vld [vmem:[%s3 + $0x50] sm:$0xff]
  %v293 = vld [vmem:[%s3 + $0x58] sm:$0xff]
  %v294 = vld [vmem:[%s3 + $0x60] sm:$0xff]
  %v295 = vld [vmem:[%s3 + $0x68] sm:$0xff]
  %v296 = vld [vmem:[%s3 + $0x70] sm:$0xff]
  %v297 = vld [vmem:[%s3 + $0x78] sm:$0xff]
  %v298 = vld [vmem:[%s3 + $0x80] sm:$0xff]
  %v299 = vld [vmem:[%s3 + $0x88] sm:$0xff]
  %v300 = vld [vmem:[%s3 + $0x90] sm:$0xff]
  %v301 = vld [vmem:[%s3 + $0x98] sm:$0xff]
  %v302 = vld [vmem:[%s3 + $0xa0] sm:$0xff]
  %v303 = vld [vmem:[%s3 + $0xa8] sm:$0xff]
  %v304 = vld [vmem:[%s3 + $0xb0] sm:$0xff]
  %v305 = vld [vmem:[%s3 + $0xb8] sm:$0xff]
  %v306 = vld [vmem:[%s3 + $0xc0] sm:$0xff]
  %v307 = vld [vmem:[%s3 + $0xc8] sm:$0xff]
  %v308 = vld [vmem:[%s3 + $0xd0] sm:$0xff]
  %v309 = vld [vmem:[%s3 + $0xd8] sm:$0xff]
  %v310 = vld [vmem:[%s3 + $0xe0] sm:$0xff]
  %v311 = vld [vmem:[%s3 + $0xe8] sm:$0xff]
  %v312 = vld [vmem:[%s3 + $0xf0] sm:$0xff]
  %v313 = vld [vmem:[%s3 + $0xf8] sm:$0xff]
  %v314 = vld [vmem:[%s3 + $0x100] sm:$0xff]
  %v315 = vld [vmem:[%s3 + $0x108] sm:$0xff]
  %v316 = vld [vmem:[%s3 + $0x110] sm:$0xff]
  %v317 = vld [vmem:[%s3 + $0x118] sm:$0xff]
  %v318 = vld [vmem:[%s3 + $0x120] sm:$0xff]
  %v319 = vld [vmem:[%s3 + $0x128] sm:$0xff]
  %v320 = vld [vmem:[%s3 + $0x130] sm:$0xff]
  %v321 = vld [vmem:[%s3 + $0x138] sm:$0xff]
  %v322 = vld [vmem:[%s3 + $0x140] sm:$0xff]
  %v323 = vld [vmem:[%s3 + $0x148] sm:$0xff]
  %v324 = vld [vmem:[%s3 + $0x150] sm:$0xff]
  %v325 = vld [vmem:[%s3 + $0x158] sm:$0xff]
  %v326 = vld [vmem:[%s3 + $0x160] sm:$0xff]
  %v327 = vld [vmem:[%s3 + $0x168] sm:$0xff]
  %v328 = vld [vmem:[%s3 + $0x170] sm:$0xff]
  %v329 = vld [vmem:[%s3 + $0x178] sm:$0xff]
  %v330 = vld [vmem:[%s3 + $0x180] sm:$0xff]
  %v331 = vld [vmem:[%s3 + $0x188] sm:$0xff]
  %v332 = vld [vmem:[%s3 + $0x190] sm:$0xff]
  %v333 = vld [vmem:[%s3 + $0x198] sm:$0xff]
  %v334 = vld [vmem:[%s3 + $0x1a0] sm:$0xff]
  %v335 = vld [vmem:[%s3 + $0x1a8] sm:$0xff]
  %v336 = vld [vmem:[%s3 + $0x1b0] sm:$0xff]
  %v337 = vld [vmem:[%s3 + $0x1b8] sm:$0xff]
  %v338 = vld [vmem:[%s3 + $0x1c0] sm:$0xff]
  %v339 = vld [vmem:[%s3 + $0x1c8] sm:$0xff]
  %v340 = vld [vmem:[%s3 + $0x1d0] sm:$0xff]
  %v341 = vld [vmem:[%s3 + $0x1d8] sm:$0xff]
  %v342 = vld [vmem:[%s3 + $0x1e0] sm:$0xff]
  %v343 = vld [vmem:[%s3 + $0x1e8] sm:$0xff]
  %v344 = vld [vmem:[%s3 + $0x1f0] sm:$0xff]
  %v345 = vld [vmem:[%s3 + $0x1f8] sm:$0xff]
  %v346 = vld [vmem:[%s3 + $0x200] sm:$0xff]
  %v347 = vld [vmem:[%s3 + $0x208] sm:$0xff]
  %v348 = vld [vmem:[%s3 + $0x210] sm:$0xff]
  %v349 = vld [vmem:[%s3 + $0x218] sm:$0xff]
  %v350 = vld [vmem:[%s3 + $0x220] sm:$0xff]
  %v351 = vld [vmem:[%s3 + $0x228] sm:$0xff]
  %v352 = vld [vmem:[%s3 + $0x230] sm:$0xff]
  %v353 = vld [vmem:[%s3 + $0x238] sm:$0xff]
  %v354 = vld [vmem:[%s3 + $0x240] sm:$0xff]
  %v355 = vld [vmem:[%s3 + $0x248] sm:$0xff]
  %v356 = vld [vmem:[%s3 + $0x250] sm:$0xff]
  %v357 = vld [vmem:[%s3 + $0x258] sm:$0xff]
  %v358 = vld [vmem:[%s3 + $0x260] sm:$0xff]
  %v359 = vld [vmem:[%s3 + $0x268] sm:$0xff]
  %v360 = vld [vmem:[%s3 + $0x270] sm:$0xff]
  %v361 = vld [vmem:[%s3 + $0x278] sm:$0xff]
  %v362 = vld [vmem:[%s3 + $0x280] sm:$0xff]
  %v363 = vld [vmem:[%s3 + $0x288] sm:$0xff]
  %v364 = vld [vmem:[%s3 + $0x290] sm:$0xff]
  %v365 = vld [vmem:[%s3 + $0x298] sm:$0xff]
  %v366 = vld [vmem:[%s3 + $0x2a0] sm:$0xff]
  %v367 = vld [vmem:[%s3 + $0x2a8] sm:$0xff]
  %v368 = vld [vmem:[%s3 + $0x2b0] sm:$0xff]
  %v369 = vld [vmem:[%s3 + $0x2b8] sm:$0xff]
  %v370 = vld [vmem:[%s3 + $0x2c0] sm:$0xff]
  %v371 = vld [vmem:[%s3 + $0x2c8] sm:$0xff]
  %v372 = vld [vmem:[%s3 + $0x2d0] sm:$0xff]
  %v373 = vld [vmem:[%s3 + $0x2d8] sm:$0xff]
  %v374 = vld [vmem:[%s3 + $0x2e0] sm:$0xff]
  %v375 = vld [vmem:[%s3 + $0x2e8] sm:$0xff]
  %v376 = vld [vmem:[%s3 + $0x2f0] sm:$0xff]
  %v377 = vld [vmem:[%s3 + $0x2f8] sm:$0xff]
  %v378 = vld [vmem:[%s3 + $0x300] sm:$0xff]
  %v379 = vld [vmem:[%s3 + $0x308] sm:$0xff]
  %v380 = vld [vmem:[%s3 + $0x310] sm:$0xff]
  %v381 = vld [vmem:[%s3 + $0x318] sm:$0xff]
  %v382 = vld [vmem:[%s3 + $0x320] sm:$0xff]
  %v383 = vld [vmem:[%s3 + $0x328] sm:$0xff]
  %v384 = vld [vmem:[%s3 + $0x330] sm:$0xff]
  %v385 = vld [vmem:[%s3 + $0x338] sm:$0xff]
  %v386 = vld [vmem:[%s3 + $0x340] sm:$0xff]
  %v387 = vld [vmem:[%s3 + $0x348] sm:$0xff]
  %v388 = vld [vmem:[%s3 + $0x350] sm:$0xff]
  %v389 = vld [vmem:[%s3 + $0x358] sm:$0xff]
  %v390 = vld [vmem:[%s3 + $0x360] sm:$0xff]
  %v391 = vld [vmem:[%s3 + $0x368] sm:$0xff]
  %v392 = vld [vmem:[%s3 + $0x370] sm:$0xff]
  %v393 = vld [vmem:[%s3 + $0x378] sm:$0xff]
  %v394 = vld [vmem:[%s3 + $0x380] sm:$0xff]
  %v395 = vld [vmem:[%s3 + $0x388] sm:$0xff]
  %v396 = vld [vmem:[%s3 + $0x390] sm:$0xff]
  %v397 = vld [vmem:[%s3 + $0x398] sm:$0xff]
  %v398 = vld [vmem:[%s3 + $0x3a0] sm:$0xff]
  %v399 = vld [vmem:[%s3 + $0x3a8] sm:$0xff]
  %v400 = vld [vmem:[%s3 + $0x3b0] sm:$0xff]
  %v401 = vld [vmem:[%s3 + $0x3b8] sm:$0xff]
  %v402 = vld [vmem:[%s3 + $0x3c0] sm:$0xff]
  %v403 = vld [vmem:[%s3 + $0x3c8] sm:$0xff]
  %v404 = vld [vmem:[%s3 + $0x3d0] sm:$0xff]
  %v405 = vld [vmem:[%s3 + $0x3d8] sm:$0xff]
  %v406 = vld [vmem:[%s3 + $0x3e0] sm:$0xff]
  %v407 = vld [vmem:[%s3 + $0x3e8] sm:$0xff]
  %v408 = vld [vmem:[%s3 + $0x3f0] sm:$0xff]
  %v409 = vld [vmem:[%s3 + $0x3f8] sm:$0xff]
  %v410 = vld [vmem:[%s3 + $0x400] sm:$0xff]
  %v411 = vld [vmem:[%s3 + $0x408] sm:$0xff]
  %v412 = vld [vmem:[%s3 + $0x410] sm:$0xff]
  %v413 = vld [vmem:[%s3 + $0x418] sm:$0xff]
  %v414 = vld [vmem:[%s3 + $0x420] sm:$0xff]
  %v415 = vld [vmem:[%s3 + $0x428] sm:$0xff]
  %v416 = vld [vmem:[%s3 + $0x430] sm:$0xff]
  %v417 = vld [vmem:[%s3 + $0x438] sm:$0xff]
  %v418 = vld [vmem:[%s3 + $0x440] sm:$0xff]
  %v419 = vld [vmem:[%s3 + $0x448] sm:$0xff]
  %v420 = vld [vmem:[%s3 + $0x450] sm:$0xff]
  %v421 = vld [vmem:[%s3 + $0x458] sm:$0xff]
  %v422 = vld [vmem:[%s3 + $0x460] sm:$0xff]
  %v423 = vld [vmem:[%s3 + $0x468] sm:$0xff]
  %v424 = vld [vmem:[%s3 + $0x470] sm:$0xff]
  %v425 = vld [vmem:[%s3 + $0x478] sm:$0xff]
  %v426 = vld [vmem:[%s3 + $0x480] sm:$0xff]
  %v427 = vld [vmem:[%s3 + $0x488] sm:$0xff]
  %v428 = vld [vmem:[%s3 + $0x490] sm:$0xff]
  %v429 = vld [vmem:[%s3 + $0x498] sm:$0xff]
  %v430 = vld [vmem:[%s3 + $0x4a0] sm:$0xff]
  %v431 = vld [vmem:[%s3 + $0x4a8] sm:$0xff]
  %v432 = vld [vmem:[%s3 + $0x4b0] sm:$0xff]
  %v433 = vld [vmem:[%s3 + $0x4b8] sm:$0xff]
  %v434 = vld [vmem:[%s3 + $0x4c0] sm:$0xff]
  %v435 = vld [vmem:[%s3 + $0x4c8] sm:$0xff]
  %v436 = vld [vmem:[%s3 + $0x4d0] sm:$0xff]
  %v437 = vld [vmem:[%s3 + $0x4d8] sm:$0xff]
  %v438 = vld [vmem:[%s3 + $0x4e0] sm:$0xff]
  %v439 = vld [vmem:[%s3 + $0x4e8] sm:$0xff]
  %v440 = vld [vmem:[%s3 + $0x4f0] sm:$0xff]
  %v441 = vld [vmem:[%s3 + $0x4f8] sm:$0xff]
  %v442 = vld [vmem:[%s3 + $0x500] sm:$0xff]
  %v443 = vld [vmem:[%s3 + $0x508] sm:$0xff]
  %v444 = vld [vmem:[%s3 + $0x510] sm:$0xff]
  %v445 = vld [vmem:[%s3 + $0x518] sm:$0xff]
  %v446 = vld [vmem:[%s3 + $0x520] sm:$0xff]
  %v447 = vld [vmem:[%s3 + $0x528] sm:$0xff]
  %v448 = vld [vmem:[%s3 + $0x530] sm:$0xff]
  %v449 = vld [vmem:[%s3 + $0x538] sm:$0xff]
  %v450 = vld [vmem:[%s3 + $0x540] sm:$0xff]
  %v451 = vld [vmem:[%s3 + $0x548] sm:$0xff]
  %v452 = vld [vmem:[%s3 + $0x550] sm:$0xff]
  %v453 = vld [vmem:[%s3 + $0x558] sm:$0xff]
  %v454 = vld [vmem:[%s3 + $0x560] sm:$0xff]
  %v455 = vld [vmem:[%s3 + $0x568] sm:$0xff]
  %v456 = vld [vmem:[%s3 + $0x570] sm:$0xff]
  %v457 = vld [vmem:[%s3 + $0x578] sm:$0xff]
  %v458 = vld [vmem:[%s3 + $0x580] sm:$0xff]
  %v459 = vld [vmem:[%s3 + $0x588] sm:$0xff]
  %v460 = vld [vmem:[%s3 + $0x590] sm:$0xff]
  %v461 = vld [vmem:[%s3 + $0x598] sm:$0xff]
  %v462 = vld [vmem:[%s3 + $0x5a0] sm:$0xff]
  %v463 = vld [vmem:[%s3 + $0x5a8] sm:$0xff]
  %v464 = vld [vmem:[%s3 + $0x5b0] sm:$0xff]
  %v465 = vld [vmem:[%s3 + $0x5b8] sm:$0xff]
  %v466 = vld [vmem:[%s3 + $0x5c0] sm:$0xff]
  %v467 = vld [vmem:[%s3 + $0x5c8] sm:$0xff]
  %v468 = vld [vmem:[%s3 + $0x5d0] sm:$0xff]
  %v469 = vld [vmem:[%s3 + $0x5d8] sm:$0xff]
  %v470 = vld [vmem:[%s3 + $0x5e0] sm:$0xff]
  %v471 = vld [vmem:[%s3 + $0x5e8] sm:$0xff]
  %v472 = vld [vmem:[%s3 + $0x5f0] sm:$0xff]
  %v473 = vld [vmem:[%s3 + $0x5f8] sm:$0xff]
  %v474 = vld [vmem:[%s3 + $0x600] sm:$0xff]
  %v475 = vld [vmem:[%s3 + $0x608] sm:$0xff]
  %v476 = vld [vmem:[%s3 + $0x610] sm:$0xff]
  %v477 = vld [vmem:[%s3 + $0x618] sm:$0xff]
  %v478 = vld [vmem:[%s3 + $0x620] sm:$0xff]
  %v479 = vld [vmem:[%s3 + $0x628] sm:$0xff]
  %v480 = vld [vmem:[%s3 + $0x630] sm:$0xff]
  %v481 = vld [vmem:[%s3 + $0x638] sm:$0xff]
  %v482 = vld [vmem:[%s3 + $0x640] sm:$0xff]
  %v483 = vld [vmem:[%s3 + $0x648] sm:$0xff]
  %v484 = vld [vmem:[%s3 + $0x650] sm:$0xff]
  %v485 = vld [vmem:[%s3 + $0x658] sm:$0xff]
  %v486 = vld [vmem:[%s3 + $0x660] sm:$0xff]
  %v487 = vld [vmem:[%s3 + $0x668] sm:$0xff]
  %v488 = vld [vmem:[%s3 + $0x670] sm:$0xff]
  %v489 = vld [vmem:[%s3 + $0x678] sm:$0xff]
  %v490 = vld [vmem:[%s3 + $0x680] sm:$0xff]
  %v491 = vld [vmem:[%s3 + $0x688] sm:$0xff]
  %v492 = vld [vmem:[%s3 + $0x690] sm:$0xff]
  %v493 = vld [vmem:[%s3 + $0x698] sm:$0xff]
  %v494 = vld [vmem:[%s3 + $0x6a0] sm:$0xff]
  %v495 = vld [vmem:[%s3 + $0x6a8] sm:$0xff]
  %v496 = vld [vmem:[%s3 + $0x6b0] sm:$0xff]
  %v497 = vld [vmem:[%s3 + $0x6b8] sm:$0xff]
  %v498 = vld [vmem:[%s3 + $0x6c0] sm:$0xff]
  %v499 = vld [vmem:[%s3 + $0x6c8] sm:$0xff]
  %v500 = vld [vmem:[%s3 + $0x6d0] sm:$0xff]
  %v501 = vld [vmem:[%s3 + $0x6d8] sm:$0xff]
  %v502 = vld [vmem:[%s3 + $0x6e0] sm:$0xff]
  %v503 = vld [vmem:[%s3 + $0x6e8] sm:$0xff]
  %v504 = vld [vmem:[%s3 + $0x6f0] sm:$0xff]
  %v505 = vld [vmem:[%s3 + $0x6f8] sm:$0xff]
  %v506 = vld [vmem:[%s3 + $0x700] sm:$0xff]
  %v507 = vld [vmem:[%s3 + $0x708] sm:$0xff]
  %v508 = vld [vmem:[%s3 + $0x710] sm:$0xff]
  %v509 = vld [vmem:[%s3 + $0x718] sm:$0xff]
  %v510 = vld [vmem:[%s3 + $0x720] sm:$0xff]
  %v511 = vld [vmem:[%s3 + $0x728] sm:$0xff]
  %v512 = vld [vmem:[%s3 + $0x730] sm:$0xff]
  %v513 = vld [vmem:[%s3 + $0x738] sm:$0xff]
  %v514 = vld [vmem:[%s3 + $0x740] sm:$0xff]
  %v515 = vld [vmem:[%s3 + $0x748] sm:$0xff]
  %v516 = vld [vmem:[%s3 + $0x750] sm:$0xff]
  %v517 = vld [vmem:[%s3 + $0x758] sm:$0xff]
  %v518 = vld [vmem:[%s3 + $0x760] sm:$0xff]
  %v519 = vld [vmem:[%s3 + $0x768] sm:$0xff]
  %v520 = vld [vmem:[%s3 + $0x770] sm:$0xff]
  %v521 = vld [vmem:[%s3 + $0x778] sm:$0xff]
  %v522 = vld [vmem:[%s3 + $0x780] sm:$0xff]
  %v523 = vld [vmem:[%s3 + $0x788] sm:$0xff]
  %v524 = vld [vmem:[%s3 + $0x790] sm:$0xff]
  %v525 = vld [vmem:[%s3 + $0x798] sm:$0xff]
  %v526 = vld [vmem:[%s3 + $0x7a0] sm:$0xff]
  %v527 = vld [vmem:[%s3 + $0x7a8] sm:$0xff]
  %v528 = vld [vmem:[%s3 + $0x7b0] sm:$0xff]
  %v529 = vld [vmem:[%s3 + $0x7b8] sm:$0xff]
  %v530 = vld [vmem:[%s3 + $0x7c0] sm:$0xff]
  %v531 = vld [vmem:[%s3 + $0x7c8] sm:$0xff]
  %v532 = vld [vmem:[%s3 + $0x7d0] sm:$0xff]
  %v533 = vld [vmem:[%s3 + $0x7d8] sm:$0xff]
  %v534 = vld [vmem:[%s3 + $0x7e0] sm:$0xff]
  %v535 = vld [vmem:[%s3 + $0x7e8] sm:$0xff]
  %v536 = vld [vmem:[%s3 + $0x7f0] sm:$0xff]
  %v537 = vld [vmem:[%s3 + $0x7f8] sm:$0xff]
  %v540 = vunpack.c.l.b16 %v280
  %v541 = vunpack.c.h.b16 %v280
  %v542 = vunpack.c.l.b16 %v281
  %v543 = vunpack.c.h.b16 %v281
  %v544 = vpack.c.b16 %v542, %v540
  %v545 = vpack.c.b16 %v543, %v541
  %v804 = vunpack.c.l.b16 %v282
  %v805 = vunpack.c.h.b16 %v282
  %v806 = vunpack.c.l.b16 %v283
  %v807 = vunpack.c.h.b16 %v283
  %v808 = vunpack.c.l.b16 %v284
  %v809 = vunpack.c.h.b16 %v284
  %v810 = vunpack.c.l.b16 %v285
  %v811 = vunpack.c.h.b16 %v285
  %v812 = vunpack.c.l.b16 %v286
  %v813 = vunpack.c.h.b16 %v286
  %v814 = vunpack.c.l.b16 %v287
  %v815 = vunpack.c.h.b16 %v287
  %v816 = vunpack.c.l.b16 %v288
  %v817 = vunpack.c.h.b16 %v288
  %v818 = vunpack.c.l.b16 %v289
  %v819 = vunpack.c.h.b16 %v289
  %v820 = vunpack.c.l.b16 %v290
  %v821 = vunpack.c.h.b16 %v290
  %v822 = vunpack.c.l.b16 %v291
  %v823 = vunpack.c.h.b16 %v291
  %v824 = vunpack.c.l.b16 %v292
  %v825 = vunpack.c.h.b16 %v292
  %v826 = vunpack.c.l.b16 %v293
  %v827 = vunpack.c.h.b16 %v293
  %v828 = vunpack.c.l.b16 %v294
  %v829 = vunpack.c.h.b16 %v294
  %v830 = vunpack.c.l.b16 %v295
  %v831 = vunpack.c.h.b16 %v295
  %v832 = vunpack.c.l.b16 %v296
  %v833 = vunpack.c.h.b16 %v296
  %v834 = vunpack.c.l.b16 %v297
  %v835 = vunpack.c.h.b16 %v297
  %v836 = vunpack.c.l.b16 %v298
  %v837 = vunpack.c.h.b16 %v298
  %v838 = vunpack.c.l.b16 %v299
  %v839 = vunpack.c.h.b16 %v299
  %v840 = vunpack.c.l.b16 %v300
  %v841 = vunpack.c.h.b16 %v300
  %v842 = vunpack.c.l.b16 %v301
  %v843 = vunpack.c.h.b16 %v301
  %v844 = vunpack.c.l.b16 %v302
  %v845 = vunpack.c.h.b16 %v302
  %v846 = vunpack.c.l.b16 %v303
  %v847 = vunpack.c.h.b16 %v303
  %v848 = vunpack.c.l.b16 %v304
  %v849 = vunpack.c.h.b16 %v304
  %v850 = vunpack.c.l.b16 %v305
  %v851 = vunpack.c.h.b16 %v305
  %v852 = vunpack.c.l.b16 %v306
  %v853 = vunpack.c.h.b16 %v306
  %v854 = vunpack.c.l.b16 %v307
  %v855 = vunpack.c.h.b16 %v307
  %v856 = vunpack.c.l.b16 %v308
  %v857 = vunpack.c.h.b16 %v308
  %v858 = vunpack.c.l.b16 %v309
  %v859 = vunpack.c.h.b16 %v309
  %v860 = vunpack.c.l.b16 %v310
  %v861 = vunpack.c.h.b16 %v310
  %v862 = vunpack.c.l.b16 %v311
  %v863 = vunpack.c.h.b16 %v311
  %v864 = vunpack.c.l.b16 %v312
  %v865 = vunpack.c.h.b16 %v312
  %v866 = vunpack.c.l.b16 %v313
  %v867 = vunpack.c.h.b16 %v313
  %v868 = vunpack.c.l.b16 %v314
  %v869 = vunpack.c.h.b16 %v314
  %v870 = vunpack.c.l.b16 %v315
  %v871 = vunpack.c.h.b16 %v315
  %v872 = vunpack.c.l.b16 %v316
  %v873 = vunpack.c.h.b16 %v316
  %v874 = vunpack.c.l.b16 %v317
  %v875 = vunpack.c.h.b16 %v317
  %v876 = vunpack.c.l.b16 %v318
  %v877 = vunpack.c.h.b16 %v318
  %v878 = vunpack.c.l.b16 %v319
  %v879 = vunpack.c.h.b16 %v319
  %v880 = vunpack.c.l.b16 %v320
  %v881 = vunpack.c.h.b16 %v320
  %v882 = vunpack.c.l.b16 %v321
  %v883 = vunpack.c.h.b16 %v321
  %v884 = vunpack.c.l.b16 %v322
  %v885 = vunpack.c.h.b16 %v322
  %v886 = vunpack.c.l.b16 %v323
  %v887 = vunpack.c.h.b16 %v323
  %v888 = vunpack.c.l.b16 %v324
  %v889 = vunpack.c.h.b16 %v324
  %v890 = vunpack.c.l.b16 %v325
  %v891 = vunpack.c.h.b16 %v325
  %v892 = vunpack.c.l.b16 %v326
  %v893 = vunpack.c.h.b16 %v326
  %v894 = vunpack.c.l.b16 %v327
  %v895 = vunpack.c.h.b16 %v327
  %v896 = vunpack.c.l.b16 %v328
  %v897 = vunpack.c.h.b16 %v328
  %v898 = vunpack.c.l.b16 %v329
  %v899 = vunpack.c.h.b16 %v329
  %v900 = vunpack.c.l.b16 %v330
  %v901 = vunpack.c.h.b16 %v330
  %v902 = vunpack.c.l.b16 %v331
  %v903 = vunpack.c.h.b16 %v331
  %v904 = vunpack.c.l.b16 %v332
  %v905 = vunpack.c.h.b16 %v332
  %v906 = vunpack.c.l.b16 %v333
  %v907 = vunpack.c.h.b16 %v333
  %v908 = vunpack.c.l.b16 %v334
  %v909 = vunpack.c.h.b16 %v334
  %v910 = vunpack.c.l.b16 %v335
  %v911 = vunpack.c.h.b16 %v335
  %v912 = vunpack.c.l.b16 %v336
  %v913 = vunpack.c.h.b16 %v336
  %v914 = vunpack.c.l.b16 %v337
  %v915 = vunpack.c.h.b16 %v337
  %v916 = vunpack.c.l.b16 %v338
  %v917 = vunpack.c.h.b16 %v338
  %v918 = vunpack.c.l.b16 %v339
  %v919 = vunpack.c.h.b16 %v339
  %v920 = vunpack.c.l.b16 %v340
  %v921 = vunpack.c.h.b16 %v340
  %v922 = vunpack.c.l.b16 %v341
  %v923 = vunpack.c.h.b16 %v341
  %v924 = vunpack.c.l.b16 %v342
  %v925 = vunpack.c.h.b16 %v342
  %v926 = vunpack.c.l.b16 %v343
  %v927 = vunpack.c.h.b16 %v343
  %v928 = vunpack.c.l.b16 %v344
  %v929 = vunpack.c.h.b16 %v344
  %v930 = vunpack.c.l.b16 %v345
  %v931 = vunpack.c.h.b16 %v345
  %v932 = vunpack.c.l.b16 %v346
  %v933 = vunpack.c.h.b16 %v346
  %v934 = vunpack.c.l.b16 %v347
  %v935 = vunpack.c.h.b16 %v347
  %v936 = vunpack.c.l.b16 %v348
  %v937 = vunpack.c.h.b16 %v348
  %v938 = vunpack.c.l.b16 %v349
  %v939 = vunpack.c.h.b16 %v349
  %v940 = vunpack.c.l.b16 %v350
  %v941 = vunpack.c.h.b16 %v350
  %v942 = vunpack.c.l.b16 %v351
  %v943 = vunpack.c.h.b16 %v351
  %v944 = vunpack.c.l.b16 %v352
  %v945 = vunpack.c.h.b16 %v352
  %v946 = vunpack.c.l.b16 %v353
  %v947 = vunpack.c.h.b16 %v353
  %v948 = vunpack.c.l.b16 %v354
  %v949 = vunpack.c.h.b16 %v354
  %v950 = vunpack.c.l.b16 %v355
  %v951 = vunpack.c.h.b16 %v355
  %v952 = vunpack.c.l.b16 %v356
  %v953 = vunpack.c.h.b16 %v356
  %v954 = vunpack.c.l.b16 %v357
  %v955 = vunpack.c.h.b16 %v357
  %v956 = vunpack.c.l.b16 %v358
  %v957 = vunpack.c.h.b16 %v358
  %v958 = vunpack.c.l.b16 %v359
  %v959 = vunpack.c.h.b16 %v359
  %v960 = vunpack.c.l.b16 %v360
  %v961 = vunpack.c.h.b16 %v360
  %v962 = vunpack.c.l.b16 %v361
  %v963 = vunpack.c.h.b16 %v361
  %v964 = vunpack.c.l.b16 %v362
  %v965 = vunpack.c.h.b16 %v362
  %v966 = vunpack.c.l.b16 %v363
  %v967 = vunpack.c.h.b16 %v363
  %v968 = vunpack.c.l.b16 %v364
  %v969 = vunpack.c.h.b16 %v364
  %v970 = vunpack.c.l.b16 %v365
  %v971 = vunpack.c.h.b16 %v365
  %v972 = vunpack.c.l.b16 %v366
  %v973 = vunpack.c.h.b16 %v366
  %v974 = vunpack.c.l.b16 %v367
  %v975 = vunpack.c.h.b16 %v367
  %v976 = vunpack.c.l.b16 %v368
  %v977 = vunpack.c.h.b16 %v368
  %v978 = vunpack.c.l.b16 %v369
  %v979 = vunpack.c.h.b16 %v369
  %v980 = vunpack.c.l.b16 %v370
  %v981 = vunpack.c.h.b16 %v370
  %v982 = vunpack.c.l.b16 %v371
  %v983 = vunpack.c.h.b16 %v371
  %v984 = vunpack.c.l.b16 %v372
  %v985 = vunpack.c.h.b16 %v372
  %v986 = vunpack.c.l.b16 %v373
  %v987 = vunpack.c.h.b16 %v373
  %v988 = vunpack.c.l.b16 %v374
  %v989 = vunpack.c.h.b16 %v374
  %v990 = vunpack.c.l.b16 %v375
  %v991 = vunpack.c.h.b16 %v375
  %v992 = vunpack.c.l.b16 %v376
  %v993 = vunpack.c.h.b16 %v376
  %v994 = vunpack.c.l.b16 %v377
  %v995 = vunpack.c.h.b16 %v377
  %v996 = vunpack.c.l.b16 %v378
  %v997 = vunpack.c.h.b16 %v378
  %v998 = vunpack.c.l.b16 %v379
  %v999 = vunpack.c.h.b16 %v379
  %v1000 = vunpack.c.l.b16 %v380
  %v1001 = vunpack.c.h.b16 %v380
  %v1002 = vunpack.c.l.b16 %v381
  %v1003 = vunpack.c.h.b16 %v381
  %v1004 = vunpack.c.l.b16 %v382
  %v1005 = vunpack.c.h.b16 %v382
  %v1006 = vunpack.c.l.b16 %v383
  %v1007 = vunpack.c.h.b16 %v383
  %v1008 = vunpack.c.l.b16 %v384
  %v1009 = vunpack.c.h.b16 %v384
  %v1010 = vunpack.c.l.b16 %v385
  %v1011 = vunpack.c.h.b16 %v385
  %v1012 = vunpack.c.l.b16 %v386
  %v1013 = vunpack.c.h.b16 %v386
  %v1014 = vunpack.c.l.b16 %v387
  %v1015 = vunpack.c.h.b16 %v387
  %v1016 = vunpack.c.l.b16 %v388
  %v1017 = vunpack.c.h.b16 %v388
  %v1018 = vunpack.c.l.b16 %v389
  %v1019 = vunpack.c.h.b16 %v389
  %v1020 = vunpack.c.l.b16 %v390
  %v1021 = vunpack.c.h.b16 %v390
  %v1022 = vunpack.c.l.b16 %v391
  %v1023 = vunpack.c.h.b16 %v391
  %v1024 = vunpack.c.l.b16 %v392
  %v1025 = vunpack.c.h.b16 %v392
  %v1026 = vunpack.c.l.b16 %v393
  %v1027 = vunpack.c.h.b16 %v393
  %v1028 = vunpack.c.l.b16 %v394
  %v1029 = vunpack.c.h.b16 %v394
  %v1030 = vunpack.c.l.b16 %v395
  %v1031 = vunpack.c.h.b16 %v395
  %v1032 = vunpack.c.l.b16 %v396
  %v1033 = vunpack.c.h.b16 %v396
  %v1034 = vunpack.c.l.b16 %v397
  %v1035 = vunpack.c.h.b16 %v397
  %v1036 = vunpack.c.l.b16 %v398
  %v1037 = vunpack.c.h.b16 %v398
  %v1038 = vunpack.c.l.b16 %v399
  %v1039 = vunpack.c.h.b16 %v399
  %v1040 = vunpack.c.l.b16 %v400
  %v1041 = vunpack.c.h.b16 %v400
  %v1042 = vunpack.c.l.b16 %v401
  %v1043 = vunpack.c.h.b16 %v401
  %v1044 = vunpack.c.l.b16 %v402
  %v1045 = vunpack.c.h.b16 %v402
  %v1046 = vunpack.c.l.b16 %v403
  %v1047 = vunpack.c.h.b16 %v403
  %v1048 = vunpack.c.l.b16 %v404
  %v1049 = vunpack.c.h.b16 %v404
  %v1050 = vunpack.c.l.b16 %v405
  %v1051 = vunpack.c.h.b16 %v405
  %v1052 = vunpack.c.l.b16 %v406
  %v1053 = vunpack.c.h.b16 %v406
  %v1054 = vunpack.c.l.b16 %v407
  %v1055 = vunpack.c.h.b16 %v407
  %v1056 = vunpack.c.l.b16 %v408
  %v1057 = vunpack.c.h.b16 %v408
  %v1058 = vunpack.c.l.b16 %v409
  %v1059 = vunpack.c.h.b16 %v409
  %v1060 = vunpack.c.l.b16 %v410
  %v1061 = vunpack.c.h.b16 %v410
  %v1062 = vunpack.c.l.b16 %v411
  %v1063 = vunpack.c.h.b16 %v411
  %v1064 = vunpack.c.l.b16 %v412
  %v1065 = vunpack.c.h.b16 %v412
  %v1066 = vunpack.c.l.b16 %v413
  %v1067 = vunpack.c.h.b16 %v413
  %v1068 = vunpack.c.l.b16 %v414
  %v1069 = vunpack.c.h.b16 %v414
  %v1070 = vunpack.c.l.b16 %v415
  %v1071 = vunpack.c.h.b16 %v415
  %v1072 = vunpack.c.l.b16 %v416
  %v1073 = vunpack.c.h.b16 %v416
  %v1074 = vunpack.c.l.b16 %v417
  %v1075 = vunpack.c.h.b16 %v417
  %v1076 = vunpack.c.l.b16 %v418
  %v1077 = vunpack.c.h.b16 %v418
  %v1078 = vunpack.c.l.b16 %v419
  %v1079 = vunpack.c.h.b16 %v419
  %v1080 = vunpack.c.l.b16 %v420
  %v1081 = vunpack.c.h.b16 %v420
  %v1082 = vunpack.c.l.b16 %v421
  %v1083 = vunpack.c.h.b16 %v421
  %v1084 = vunpack.c.l.b16 %v422
  %v1085 = vunpack.c.h.b16 %v422
  %v1086 = vunpack.c.l.b16 %v423
  %v1087 = vunpack.c.h.b16 %v423
  %v1088 = vunpack.c.l.b16 %v424
  %v1089 = vunpack.c.h.b16 %v424
  %v1090 = vunpack.c.l.b16 %v425
  %v1091 = vunpack.c.h.b16 %v425
  %v1092 = vunpack.c.l.b16 %v426
  %v1093 = vunpack.c.h.b16 %v426
  %v1094 = vunpack.c.l.b16 %v427
  %v1095 = vunpack.c.h.b16 %v427
  %v1096 = vunpack.c.l.b16 %v428
  %v1097 = vunpack.c.h.b16 %v428
  %v1098 = vunpack.c.l.b16 %v429
  %v1099 = vunpack.c.h.b16 %v429
  %v1100 = vunpack.c.l.b16 %v430
  %v1101 = vunpack.c.h.b16 %v430
  %v1102 = vunpack.c.l.b16 %v431
  %v1103 = vunpack.c.h.b16 %v431
  %v1104 = vunpack.c.l.b16 %v432
  %v1105 = vunpack.c.h.b16 %v432
  %v1106 = vunpack.c.l.b16 %v433
  %v1107 = vunpack.c.h.b16 %v433
  %v1108 = vunpack.c.l.b16 %v434
  %v1109 = vunpack.c.h.b16 %v434
  %v1110 = vunpack.c.l.b16 %v435
  %v1111 = vunpack.c.h.b16 %v435
  %v1112 = vunpack.c.l.b16 %v436
  %v1113 = vunpack.c.h.b16 %v436
  %v1114 = vunpack.c.l.b16 %v437
  %v1115 = vunpack.c.h.b16 %v437
  %v1116 = vunpack.c.l.b16 %v438
  %v1117 = vunpack.c.h.b16 %v438
  %v1118 = vunpack.c.l.b16 %v439
  %v1119 = vunpack.c.h.b16 %v439
  %v1120 = vunpack.c.l.b16 %v440
  %v1121 = vunpack.c.h.b16 %v440
  %v1122 = vunpack.c.l.b16 %v441
  %v1123 = vunpack.c.h.b16 %v441
  %v1124 = vunpack.c.l.b16 %v442
  %v1125 = vunpack.c.h.b16 %v442
  %v1126 = vunpack.c.l.b16 %v443
  %v1127 = vunpack.c.h.b16 %v443
  %v1128 = vunpack.c.l.b16 %v444
  %v1129 = vunpack.c.h.b16 %v444
  %v1130 = vunpack.c.l.b16 %v445
  %v1131 = vunpack.c.h.b16 %v445
  %v1132 = vunpack.c.l.b16 %v446
  %v1133 = vunpack.c.h.b16 %v446
  %v1134 = vunpack.c.l.b16 %v447
  %v1135 = vunpack.c.h.b16 %v447
  %v1136 = vunpack.c.l.b16 %v448
  %v1137 = vunpack.c.h.b16 %v448
  %v1138 = vunpack.c.l.b16 %v449
  %v1139 = vunpack.c.h.b16 %v449
  %v1140 = vunpack.c.l.b16 %v450
  %v1141 = vunpack.c.h.b16 %v450
  %v1142 = vunpack.c.l.b16 %v451
  %v1143 = vunpack.c.h.b16 %v451
  %v1144 = vunpack.c.l.b16 %v452
  %v1145 = vunpack.c.h.b16 %v452
  %v1146 = vunpack.c.l.b16 %v453
  %v1147 = vunpack.c.h.b16 %v453
  %v1148 = vunpack.c.l.b16 %v454
  %v1149 = vunpack.c.h.b16 %v454
  %v1150 = vunpack.c.l.b16 %v455
  %v1151 = vunpack.c.h.b16 %v455
  %v1152 = vunpack.c.l.b16 %v456
  %v1153 = vunpack.c.h.b16 %v456
  %v1154 = vunpack.c.l.b16 %v457
  %v1155 = vunpack.c.h.b16 %v457
  %v1156 = vunpack.c.l.b16 %v458
  %v1157 = vunpack.c.h.b16 %v458
  %v1158 = vunpack.c.l.b16 %v459
  %v1159 = vunpack.c.h.b16 %v459
  %v1160 = vunpack.c.l.b16 %v460
  %v1161 = vunpack.c.h.b16 %v460
  %v1162 = vunpack.c.l.b16 %v461
  %v1163 = vunpack.c.h.b16 %v461
  %v1164 = vunpack.c.l.b16 %v462
  %v1165 = vunpack.c.h.b16 %v462
  %v1166 = vunpack.c.l.b16 %v463
  %v1167 = vunpack.c.h.b16 %v463
  %v1168 = vunpack.c.l.b16 %v464
  %v1169 = vunpack.c.h.b16 %v464
  %v1170 = vunpack.c.l.b16 %v465
  %v1171 = vunpack.c.h.b16 %v465
  %v1172 = vunpack.c.l.b16 %v466
  %v1173 = vunpack.c.h.b16 %v466
  %v1174 = vunpack.c.l.b16 %v467
  %v1175 = vunpack.c.h.b16 %v467
  %v1176 = vunpack.c.l.b16 %v468
  %v1177 = vunpack.c.h.b16 %v468
  %v1178 = vunpack.c.l.b16 %v469
  %v1179 = vunpack.c.h.b16 %v469
  %v1180 = vunpack.c.l.b16 %v470
  %v1181 = vunpack.c.h.b16 %v470
  %v1182 = vunpack.c.l.b16 %v471
  %v1183 = vunpack.c.h.b16 %v471
  %v1184 = vunpack.c.l.b16 %v472
  %v1185 = vunpack.c.h.b16 %v472
  %v1186 = vunpack.c.l.b16 %v473
  %v1187 = vunpack.c.h.b16 %v473
  %v1188 = vunpack.c.l.b16 %v474
  %v1189 = vunpack.c.h.b16 %v474
  %v1190 = vunpack.c.l.b16 %v475
  %v1191 = vunpack.c.h.b16 %v475
  %v1192 = vunpack.c.l.b16 %v476
  %v1193 = vunpack.c.h.b16 %v476
  %v1194 = vunpack.c.l.b16 %v477
  %v1195 = vunpack.c.h.b16 %v477
  %v1196 = vunpack.c.l.b16 %v478
  %v1197 = vunpack.c.h.b16 %v478
  %v1198 = vunpack.c.l.b16 %v479
  %v1199 = vunpack.c.h.b16 %v479
  %v1200 = vunpack.c.l.b16 %v480
  %v1201 = vunpack.c.h.b16 %v480
  %v1202 = vunpack.c.l.b16 %v481
  %v1203 = vunpack.c.h.b16 %v481
  %v1204 = vunpack.c.l.b16 %v482
  %v1205 = vunpack.c.h.b16 %v482
  %v1206 = vunpack.c.l.b16 %v483
  %v1207 = vunpack.c.h.b16 %v483
  %v1208 = vunpack.c.l.b16 %v484
  %v1209 = vunpack.c.h.b16 %v484
  %v1210 = vunpack.c.l.b16 %v485
  %v1211 = vunpack.c.h.b16 %v485
  %v1212 = vunpack.c.l.b16 %v486
  %v1213 = vunpack.c.h.b16 %v486
  %v1214 = vunpack.c.l.b16 %v487
  %v1215 = vunpack.c.h.b16 %v487
  %v1216 = vunpack.c.l.b16 %v488
  %v1217 = vunpack.c.h.b16 %v488
  %v1218 = vunpack.c.l.b16 %v489
  %v1219 = vunpack.c.h.b16 %v489
  %v1220 = vunpack.c.l.b16 %v490
  %v1221 = vunpack.c.h.b16 %v490
  %v1222 = vunpack.c.l.b16 %v491
  %v1223 = vunpack.c.h.b16 %v491
  %v1224 = vunpack.c.l.b16 %v492
  %v1225 = vunpack.c.h.b16 %v492
  %v1226 = vunpack.c.l.b16 %v493
  %v1227 = vunpack.c.h.b16 %v493
  %v1228 = vunpack.c.l.b16 %v494
  %v1229 = vunpack.c.h.b16 %v494
  %v1230 = vunpack.c.l.b16 %v495
  %v1231 = vunpack.c.h.b16 %v495
  %v1232 = vunpack.c.l.b16 %v496
  %v1233 = vunpack.c.h.b16 %v496
  %v1234 = vunpack.c.l.b16 %v497
  %v1235 = vunpack.c.h.b16 %v497
  %v1236 = vunpack.c.l.b16 %v498
  %v1237 = vunpack.c.h.b16 %v498
  %v1238 = vunpack.c.l.b16 %v499
  %v1239 = vunpack.c.h.b16 %v499
  %v1240 = vunpack.c.l.b16 %v500
  %v1241 = vunpack.c.h.b16 %v500
  %v1242 = vunpack.c.l.b16 %v501
  %v1243 = vunpack.c.h.b16 %v501
  %v1244 = vunpack.c.l.b16 %v502
  %v1245 = vunpack.c.h.b16 %v502
  %v1246 = vunpack.c.l.b16 %v503
  %v1247 = vunpack.c.h.b16 %v503
  %v1248 = vunpack.c.l.b16 %v504
  %v1249 = vunpack.c.h.b16 %v504
  %v1250 = vunpack.c.l.b16 %v505
  %v1251 = vunpack.c.h.b16 %v505
  %v1252 = vunpack.c.l.b16 %v506
  %v1253 = vunpack.c.h.b16 %v506
  %v1254 = vunpack.c.l.b16 %v507
  %v1255 = vunpack.c.h.b16 %v507
  %v1256 = vunpack.c.l.b16 %v508
  %v1257 = vunpack.c.h.b16 %v508
  %v1258 = vunpack.c.l.b16 %v509
  %v1259 = vunpack.c.h.b16 %v509
  %v1260 = vunpack.c.l.b16 %v510
  %v1261 = vunpack.c.h.b16 %v510
  %v1262 = vunpack.c.l.b16 %v511
  %v1263 = vunpack.c.h.b16 %v511
  %v1264 = vunpack.c.l.b16 %v512
  %v1265 = vunpack.c.h.b16 %v512
  %v1266 = vunpack.c.l.b16 %v513
  %v1267 = vunpack.c.h.b16 %v513
  %v1268 = vunpack.c.l.b16 %v514
  %v1269 = vunpack.c.h.b16 %v514
  %v1270 = vunpack.c.l.b16 %v515
  %v1271 = vunpack.c.h.b16 %v515
  %v1272 = vunpack.c.l.b16 %v516
  %v1273 = vunpack.c.h.b16 %v516
  %v1274 = vunpack.c.l.b16 %v517
  %v1275 = vunpack.c.h.b16 %v517
  %v1276 = vunpack.c.l.b16 %v518
  %v1277 = vunpack.c.h.b16 %v518
  %v1278 = vunpack.c.l.b16 %v519
  %v1279 = vunpack.c.h.b16 %v519
  %v1280 = vunpack.c.l.b16 %v520
  %v1281 = vunpack.c.h.b16 %v520
  %v1282 = vunpack.c.l.b16 %v521
  %v1283 = vunpack.c.h.b16 %v521
  %v1284 = vunpack.c.l.b16 %v522
  %v1285 = vunpack.c.h.b16 %v522
  %v1286 = vunpack.c.l.b16 %v523
  %v1287 = vunpack.c.h.b16 %v523
  %v1288 = vunpack.c.l.b16 %v524
  %v1289 = vunpack.c.h.b16 %v524
  %v1290 = vunpack.c.l.b16 %v525
  %v1291 = vunpack.c.h.b16 %v525
  %v1292 = vunpack.c.l.b16 %v526
  %v1293 = vunpack.c.h.b16 %v526
  %v1294 = vunpack.c.l.b16 %v527
  %v1295 = vunpack.c.h.b16 %v527
  %v1296 = vunpack.c.l.b16 %v528
  %v1297 = vunpack.c.h.b16 %v528
  %v1298 = vunpack.c.l.b16 %v529
  %v1299 = vunpack.c.h.b16 %v529
  %v1300 = vunpack.c.l.b16 %v530
  %v1301 = vunpack.c.h.b16 %v530
  %v1302 = vunpack.c.l.b16 %v531
  %v1303 = vunpack.c.h.b16 %v531
  %v1304 = vunpack.c.l.b16 %v532
  %v1305 = vunpack.c.h.b16 %v532
  %v1306 = vunpack.c.l.b16 %v533
  %v1307 = vunpack.c.h.b16 %v533
  %v1308 = vunpack.c.l.b16 %v534
  %v1309 = vunpack.c.h.b16 %v534
  %v1310 = vunpack.c.l.b16 %v535
  %v1311 = vunpack.c.h.b16 %v535
  %v1312 = vunpack.c.l.b16 %v536
  %v1313 = vunpack.c.h.b16 %v536
  %v1314 = vunpack.c.l.b16 %v537
  %v1315 = vunpack.c.h.b16 %v537
  %v1316 = vpack.c.b16 %v820, %v804
  %v1317 = vpack.c.b16 %v821, %v805
  %v1318 = vpack.c.b16 %v822, %v806
  %v1319 = vpack.c.b16 %v823, %v807
  %v1320 = vpack.c.b16 %v824, %v808
  %v1321 = vpack.c.b16 %v825, %v809
  %v1322 = vpack.c.b16 %v826, %v810
  %v1323 = vpack.c.b16 %v827, %v811
  %v1324 = vpack.c.b16 %v828, %v812
  %v1325 = vpack.c.b16 %v829, %v813
  %v1326 = vpack.c.b16 %v830, %v814
  %v1327 = vpack.c.b16 %v831, %v815
  %v1328 = vpack.c.b16 %v832, %v816
  %v1329 = vpack.c.b16 %v833, %v817
  %v1330 = vpack.c.b16 %v834, %v818
  %v1331 = vpack.c.b16 %v835, %v819
  %v1332 = vpack.c.b16 %v852, %v836
  %v1333 = vpack.c.b16 %v853, %v837
  %v1334 = vpack.c.b16 %v854, %v838
  %v1335 = vpack.c.b16 %v855, %v839
  %v1336 = vpack.c.b16 %v856, %v840
  %v1337 = vpack.c.b16 %v857, %v841
  %v1338 = vpack.c.b16 %v858, %v842
  %v1339 = vpack.c.b16 %v859, %v843
  %v1340 = vpack.c.b16 %v860, %v844
  %v1341 = vpack.c.b16 %v861, %v845
  %v1342 = vpack.c.b16 %v862, %v846
  %v1343 = vpack.c.b16 %v863, %v847
  %v1344 = vpack.c.b16 %v864, %v848
  %v1345 = vpack.c.b16 %v865, %v849
  %v1346 = vpack.c.b16 %v866, %v850
  %v1347 = vpack.c.b16 %v867, %v851
  %v1348 = vpack.c.b16 %v884, %v868
  %v1349 = vpack.c.b16 %v885, %v869
  %v1350 = vpack.c.b16 %v886, %v870
  %v1351 = vpack.c.b16 %v887, %v871
  %v1352 = vpack.c.b16 %v888, %v872
  %v1353 = vpack.c.b16 %v889, %v873
  %v1354 = vpack.c.b16 %v890, %v874
  %v1355 = vpack.c.b16 %v891, %v875
  %v1356 = vpack.c.b16 %v892, %v876
  %v1357 = vpack.c.b16 %v893, %v877
  %v1358 = vpack.c.b16 %v894, %v878
  %v1359 = vpack.c.b16 %v895, %v879
  %v1360 = vpack.c.b16 %v896, %v880
  %v1361 = vpack.c.b16 %v897, %v881
  %v1362 = vpack.c.b16 %v898, %v882
  %v1363 = vpack.c.b16 %v899, %v883
  %v1364 = vpack.c.b16 %v916, %v900
  %v1365 = vpack.c.b16 %v917, %v901
  %v1366 = vpack.c.b16 %v918, %v902
  %v1367 = vpack.c.b16 %v919, %v903
  %v1368 = vpack.c.b16 %v920, %v904
  %v1369 = vpack.c.b16 %v921, %v905
  %v1370 = vpack.c.b16 %v922, %v906
  %v1371 = vpack.c.b16 %v923, %v907
  %v1372 = vpack.c.b16 %v924, %v908
  %v1373 = vpack.c.b16 %v925, %v909
  %v1374 = vpack.c.b16 %v926, %v910
  %v1375 = vpack.c.b16 %v927, %v911
  %v1376 = vpack.c.b16 %v928, %v912
  %v1377 = vpack.c.b16 %v929, %v913
  %v1378 = vpack.c.b16 %v930, %v914
  %v1379 = vpack.c.b16 %v931, %v915
  %v1380 = vpack.c.b16 %v948, %v932
  %v1381 = vpack.c.b16 %v949, %v933
  %v1382 = vpack.c.b16 %v950, %v934
  %v1383 = vpack.c.b16 %v951, %v935
  %v1384 = vpack.c.b16 %v952, %v936
  %v1385 = vpack.c.b16 %v953, %v937
  %v1386 = vpack.c.b16 %v954, %v938
  %v1387 = vpack.c.b16 %v955, %v939
  %v1388 = vpack.c.b16 %v956, %v940
  %v1389 = vpack.c.b16 %v957, %v941
  %v1390 = vpack.c.b16 %v958, %v942
  %v1391 = vpack.c.b16 %v959, %v943
  %v1392 = vpack.c.b16 %v960, %v944
  %v1393 = vpack.c.b16 %v961, %v945
  %v1394 = vpack.c.b16 %v962, %v946
  %v1395 = vpack.c.b16 %v963, %v947
  %v1396 = vpack.c.b16 %v980, %v964
  %v1397 = vpack.c.b16 %v981, %v965
  %v1398 = vpack.c.b16 %v982, %v966
  %v1399 = vpack.c.b16 %v983, %v967
  %v1400 = vpack.c.b16 %v984, %v968
  %v1401 = vpack.c.b16 %v985, %v969
  %v1402 = vpack.c.b16 %v986, %v970
  %v1403 = vpack.c.b16 %v987, %v971
  %v1404 = vpack.c.b16 %v988, %v972
  %v1405 = vpack.c.b16 %v989, %v973
  %v1406 = vpack.c.b16 %v990, %v974
  %v1407 = vpack.c.b16 %v991, %v975
  %v1408 = vpack.c.b16 %v992, %v976
  %v1409 = vpack.c.b16 %v993, %v977
  %v1410 = vpack.c.b16 %v994, %v978
  %v1411 = vpack.c.b16 %v995, %v979
  %v1412 = vpack.c.b16 %v1012, %v996
  %v1413 = vpack.c.b16 %v1013, %v997
  %v1414 = vpack.c.b16 %v1014, %v998
  %v1415 = vpack.c.b16 %v1015, %v999
  %v1416 = vpack.c.b16 %v1016, %v1000
  %v1417 = vpack.c.b16 %v1017, %v1001
  %v1418 = vpack.c.b16 %v1018, %v1002
  %v1419 = vpack.c.b16 %v1019, %v1003
  %v1420 = vpack.c.b16 %v1020, %v1004
  %v1421 = vpack.c.b16 %v1021, %v1005
  %v1422 = vpack.c.b16 %v1022, %v1006
  %v1423 = vpack.c.b16 %v1023, %v1007
  %v1424 = vpack.c.b16 %v1024, %v1008
  %v1425 = vpack.c.b16 %v1025, %v1009
  %v1426 = vpack.c.b16 %v1026, %v1010
  %v1427 = vpack.c.b16 %v1027, %v1011
  %v1428 = vpack.c.b16 %v1044, %v1028
  %v1429 = vpack.c.b16 %v1045, %v1029
  %v1430 = vpack.c.b16 %v1046, %v1030
  %v1431 = vpack.c.b16 %v1047, %v1031
  %v1432 = vpack.c.b16 %v1048, %v1032
  %v1433 = vpack.c.b16 %v1049, %v1033
  %v1434 = vpack.c.b16 %v1050, %v1034
  %v1435 = vpack.c.b16 %v1051, %v1035
  %v1436 = vpack.c.b16 %v1052, %v1036
  %v1437 = vpack.c.b16 %v1053, %v1037
  %v1438 = vpack.c.b16 %v1054, %v1038
  %v1439 = vpack.c.b16 %v1055, %v1039
  %v1440 = vpack.c.b16 %v1056, %v1040
  %v1441 = vpack.c.b16 %v1057, %v1041
  %v1442 = vpack.c.b16 %v1058, %v1042
  %v1443 = vpack.c.b16 %v1059, %v1043
  %v1444 = vpack.c.b16 %v1076, %v1060
  %v1445 = vpack.c.b16 %v1077, %v1061
  %v1446 = vpack.c.b16 %v1078, %v1062
  %v1447 = vpack.c.b16 %v1079, %v1063
  %v1448 = vpack.c.b16 %v1080, %v1064
  %v1449 = vpack.c.b16 %v1081, %v1065
  %v1450 = vpack.c.b16 %v1082, %v1066
  %v1451 = vpack.c.b16 %v1083, %v1067
  %v1452 = vpack.c.b16 %v1084, %v1068
  %v1453 = vpack.c.b16 %v1085, %v1069
  %v1454 = vpack.c.b16 %v1086, %v1070
  %v1455 = vpack.c.b16 %v1087, %v1071
  %v1456 = vpack.c.b16 %v1088, %v1072
  %v1457 = vpack.c.b16 %v1089, %v1073
  %v1458 = vpack.c.b16 %v1090, %v1074
  %v1459 = vpack.c.b16 %v1091, %v1075
  %v1460 = vpack.c.b16 %v1108, %v1092
  %v1461 = vpack.c.b16 %v1109, %v1093
  %v1462 = vpack.c.b16 %v1110, %v1094
  %v1463 = vpack.c.b16 %v1111, %v1095
  %v1464 = vpack.c.b16 %v1112, %v1096
  %v1465 = vpack.c.b16 %v1113, %v1097
  %v1466 = vpack.c.b16 %v1114, %v1098
  %v1467 = vpack.c.b16 %v1115, %v1099
  %v1468 = vpack.c.b16 %v1116, %v1100
  %v1469 = vpack.c.b16 %v1117, %v1101
  %v1470 = vpack.c.b16 %v1118, %v1102
  %v1471 = vpack.c.b16 %v1119, %v1103
  %v1472 = vpack.c.b16 %v1120, %v1104
  %v1473 = vpack.c.b16 %v1121, %v1105
  %v1474 = vpack.c.b16 %v1122, %v1106
  %v1475 = vpack.c.b16 %v1123, %v1107
  %v1476 = vpack.c.b16 %v1140, %v1124
  %v1477 = vpack.c.b16 %v1141, %v1125
  %v1478 = vpack.c.b16 %v1142, %v1126
  %v1479 = vpack.c.b16 %v1143, %v1127
  %v1480 = vpack.c.b16 %v1144, %v1128
  %v1481 = vpack.c.b16 %v1145, %v1129
  %v1482 = vpack.c.b16 %v1146, %v1130
  %v1483 = vpack.c.b16 %v1147, %v1131
  %v1484 = vpack.c.b16 %v1148, %v1132
  %v1485 = vpack.c.b16 %v1149, %v1133
  %v1486 = vpack.c.b16 %v1150, %v1134
  %v1487 = vpack.c.b16 %v1151, %v1135
  %v1488 = vpack.c.b16 %v1152, %v1136
  %v1489 = vpack.c.b16 %v1153, %v1137
  %v1490 = vpack.c.b16 %v1154, %v1138
  %v1491 = vpack.c.b16 %v1155, %v1139
  %v1492 = vpack.c.b16 %v1172, %v1156
  %v1493 = vpack.c.b16 %v1173, %v1157
  %v1494 = vpack.c.b16 %v1174, %v1158
  %v1495 = vpack.c.b16 %v1175, %v1159
  %v1496 = vpack.c.b16 %v1176, %v1160
  %v1497 = vpack.c.b16 %v1177, %v1161
  %v1498 = vpack.c.b16 %v1178, %v1162
  %v1499 = vpack.c.b16 %v1179, %v1163
  %v1500 = vpack.c.b16 %v1180, %v1164
  %v1501 = vpack.c.b16 %v1181, %v1165
  %v1502 = vpack.c.b16 %v1182, %v1166
  %v1503 = vpack.c.b16 %v1183, %v1167
  %v1504 = vpack.c.b16 %v1184, %v1168
  %v1505 = vpack.c.b16 %v1185, %v1169
  %v1506 = vpack.c.b16 %v1186, %v1170
  %v1507 = vpack.c.b16 %v1187, %v1171
  %v1508 = vpack.c.b16 %v1204, %v1188
  %v1509 = vpack.c.b16 %v1205, %v1189
  %v1510 = vpack.c.b16 %v1206, %v1190
  %v1511 = vpack.c.b16 %v1207, %v1191
  %v1512 = vpack.c.b16 %v1208, %v1192
  %v1513 = vpack.c.b16 %v1209, %v1193
  %v1514 = vpack.c.b16 %v1210, %v1194
  %v1515 = vpack.c.b16 %v1211, %v1195
  %v1516 = vpack.c.b16 %v1212, %v1196
  %v1517 = vpack.c.b16 %v1213, %v1197
  %v1518 = vpack.c.b16 %v1214, %v1198
  %v1519 = vpack.c.b16 %v1215, %v1199
  %v1520 = vpack.c.b16 %v1216, %v1200
  %v1521 = vpack.c.b16 %v1217, %v1201
  %v1522 = vpack.c.b16 %v1218, %v1202
  %v1523 = vpack.c.b16 %v1219, %v1203
  %v1524 = vpack.c.b16 %v1236, %v1220
  %v1525 = vpack.c.b16 %v1237, %v1221
  %v1526 = vpack.c.b16 %v1238, %v1222
  %v1527 = vpack.c.b16 %v1239, %v1223
  %v1528 = vpack.c.b16 %v1240, %v1224
  %v1529 = vpack.c.b16 %v1241, %v1225
  %v1530 = vpack.c.b16 %v1242, %v1226
  %v1531 = vpack.c.b16 %v1243, %v1227
  %v1532 = vpack.c.b16 %v1244, %v1228
  %v1533 = vpack.c.b16 %v1245, %v1229
  %v1534 = vpack.c.b16 %v1246, %v1230
  %v1535 = vpack.c.b16 %v1247, %v1231
  %v1536 = vpack.c.b16 %v1248, %v1232
  %v1537 = vpack.c.b16 %v1249, %v1233
  %v1538 = vpack.c.b16 %v1250, %v1234
  %v1539 = vpack.c.b16 %v1251, %v1235
  %v1540 = vpack.c.b16 %v1268, %v1252
  %v1541 = vpack.c.b16 %v1269, %v1253
  %v1542 = vpack.c.b16 %v1270, %v1254
  %v1543 = vpack.c.b16 %v1271, %v1255
  %v1544 = vpack.c.b16 %v1272, %v1256
  %v1545 = vpack.c.b16 %v1273, %v1257
  %v1546 = vpack.c.b16 %v1274, %v1258
  %v1547 = vpack.c.b16 %v1275, %v1259
  %v1548 = vpack.c.b16 %v1276, %v1260
  %v1549 = vpack.c.b16 %v1277, %v1261
  %v1550 = vpack.c.b16 %v1278, %v1262
  %v1551 = vpack.c.b16 %v1279, %v1263
  %v1552 = vpack.c.b16 %v1280, %v1264
  %v1553 = vpack.c.b16 %v1281, %v1265
  %v1554 = vpack.c.b16 %v1282, %v1266
  %v1555 = vpack.c.b16 %v1283, %v1267
  %v1556 = vpack.c.b16 %v1300, %v1284
  %v1557 = vpack.c.b16 %v1301, %v1285
  %v1558 = vpack.c.b16 %v1302, %v1286
  %v1559 = vpack.c.b16 %v1303, %v1287
  %v1560 = vpack.c.b16 %v1304, %v1288
  %v1561 = vpack.c.b16 %v1305, %v1289
  %v1562 = vpack.c.b16 %v1306, %v1290
  %v1563 = vpack.c.b16 %v1307, %v1291
  %v1564 = vpack.c.b16 %v1308, %v1292
  %v1565 = vpack.c.b16 %v1309, %v1293
  %v1566 = vpack.c.b16 %v1310, %v1294
  %v1567 = vpack.c.b16 %v1311, %v1295
  %v1568 = vpack.c.b16 %v1312, %v1296
  %v1569 = vpack.c.b16 %v1313, %v1297
  %v1570 = vpack.c.b16 %v1314, %v1298
  %v1571 = vpack.c.b16 %v1315, %v1299
  %1828 = vmatprep.subr.bf16.mxu0 %v1317
  %1829 = vmatpush1.bf16.msra.mxu0 %v1316
  %1830 = vmatprep.subr.bf16.mxu0 %v1333
  %1831 = vmatpush1.bf16.msra.mxu0 %v1332
  %1832 = vmatprep.subr.bf16.mxu0 %v1349
  %1833 = vmatpush1.bf16.msra.mxu0 %v1348
  %1834 = vmatprep.subr.bf16.mxu0 %v1365
  %1835 = vmatpush1.bf16.msra.mxu0 %v1364
  %1836 = vmatprep.subr.bf16.mxu0 %v1381
  %1837 = vmatpush1.bf16.msra.mxu0 %v1380
  %1838 = vmatprep.subr.bf16.mxu0 %v1397
  %1839 = vmatpush1.bf16.msra.mxu0 %v1396
  %1840 = vmatprep.subr.bf16.mxu0 %v1413
  %1841 = vmatpush1.bf16.msra.mxu0 %v1412
  %1842 = vmatprep.subr.bf16.mxu0 %v1429
  %1843 = vmatpush1.bf16.msra.mxu0 %v1428
  %1844 = vmatprep.subr.bf16.mxu0 %v1445
  %1845 = vmatpush1.bf16.msra.mxu0 %v1444
  %1846 = vmatprep.subr.bf16.mxu0 %v1461
  %1847 = vmatpush1.bf16.msra.mxu0 %v1460
  %1848 = vmatprep.subr.bf16.mxu0 %v1477
  %1849 = vmatpush1.bf16.msra.mxu0 %v1476
  %1850 = vmatprep.subr.bf16.mxu0 %v1493
  %1851 = vmatpush1.bf16.msra.mxu0 %v1492
  %1852 = vmatprep.subr.bf16.mxu0 %v1509
  %1853 = vmatpush1.bf16.msra.mxu0 %v1508
  %1854 = vmatprep.subr.bf16.mxu0 %v1525
  %1855 = vmatpush1.bf16.msra.mxu0 %v1524
  %1856 = vmatprep.subr.bf16.mxu0 %v1541
  %1857 = vmatpush1.bf16.msra.mxu0 %v1540
  %1858 = vmatprep.subr.bf16.mxu0 %v1557
  %1859 = vmatpush1.bf16.msra.mxu0 %v1556
  %1860 = vmatprep.mubr.bf16.mxu0 %v545
  %1861 = vmatmul.mubr.bf16.gmra.mrb[0].mxu0 %v544
  %v1862 = vpop.f32.mrb[0].mxu0
  %v1863 = vadd.f32 0.0, %v1862
  %v1864 = vpop.f32.mrb[0].mxu0
  %v1865 = vadd.f32 0.0, %v1864
  %v1866 = vpop.f32.mrb[0].mxu0
  %v1867 = vadd.f32 0.0, %v1866
  %v1868 = vpop.f32.mrb[0].mxu0
  %v1869 = vadd.f32 0.0, %v1868
  %1870 = vdwg.mxu0
  %1871 = vmatprep.subr.bf16.mxu0 %v1319
  %1872 = vmatpush1.bf16.msra.mxu0 %v1318
  %1873 = vmatprep.subr.bf16.mxu0 %v1335
  %1874 = vmatpush1.bf16.msra.mxu0 %v1334
  %1875 = vmatprep.subr.bf16.mxu0 %v1351
  %1876 = vmatpush1.bf16.msra.mxu0 %v1350
  %1877 = vmatprep.subr.bf16.mxu0 %v1367
  %1878 = vmatpush1.bf16.msra.mxu0 %v1366
  %1879 = vmatprep.subr.bf16.mxu0 %v1383
  %1880 = vmatpush1.bf16.msra.mxu0 %v1382
  %1881 = vmatprep.subr.bf16.mxu0 %v1399
  %1882 = vmatpush1.bf16.msra.mxu0 %v1398
  %1883 = vmatprep.subr.bf16.mxu0 %v1415
  %1884 = vmatpush1.bf16.msra.mxu0 %v1414
  %1885 = vmatprep.subr.bf16.mxu0 %v1431
  %1886 = vmatpush1.bf16.msra.mxu0 %v1430
  %1887 = vmatprep.subr.bf16.mxu0 %v1447
  %1888 = vmatpush1.bf16.msra.mxu0 %v1446
  %1889 = vmatprep.subr.bf16.mxu0 %v1463
  %1890 = vmatpush1.bf16.msra.mxu0 %v1462
  %1891 = vmatprep.subr.bf16.mxu0 %v1479
  %1892 = vmatpush1.bf16.msra.mxu0 %v1478
  %1893 = vmatprep.subr.bf16.mxu0 %v1495
  %1894 = vmatpush1.bf16.msra.mxu0 %v1494
  %1895 = vmatprep.subr.bf16.mxu0 %v1511
  %1896 = vmatpush1.bf16.msra.mxu0 %v1510
  %1897 = vmatprep.subr.bf16.mxu0 %v1527
  %1898 = vmatpush1.bf16.msra.mxu0 %v1526
  %1899 = vmatprep.subr.bf16.mxu0 %v1543
  %1900 = vmatpush1.bf16.msra.mxu0 %v1542
  %1901 = vmatprep.subr.bf16.mxu0 %v1559
  %1902 = vmatpush1.bf16.msra.mxu0 %v1558
  %1903 = vmatprep.mubr.bf16.mxu0 %v545
  %1904 = vmatmul.mubr.bf16.gmra.mrb[0].mxu0 %v544
  %v1905 = vpop.f32.mrb[0].mxu0
  %v1906 = vadd.f32 0.0, %v1905
  %v1907 = vpop.f32.mrb[0].mxu0
  %v1908 = vadd.f32 0.0, %v1907
  %v1909 = vpop.f32.mrb[0].mxu0
  %v1910 = vadd.f32 0.0, %v1909
  %v1911 = vpop.f32.mrb[0].mxu0
  %v1912 = vadd.f32 0.0, %v1911
  %1913 = vdwg.mxu0
  %1914 = vmatprep.subr.bf16.mxu0 %v1321
  %1915 = vmatpush1.bf16.msra.mxu0 %v1320
  %1916 = vmatprep.subr.bf16.mxu0 %v1337
  %1917 = vmatpush1.bf16.msra.mxu0 %v1336
  %1918 = vmatprep.subr.bf16.mxu0 %v1353
  %1919 = vmatpush1.bf16.msra.mxu0 %v1352
  %1920 = vmatprep.subr.bf16.mxu0 %v1369
  %1921 = vmatpush1.bf16.msra.mxu0 %v1368
  %1922 = vmatprep.subr.bf16.mxu0 %v1385
  %1923 = vmatpush1.bf16.msra.mxu0 %v1384
  %1924 = vmatprep.subr.bf16.mxu0 %v1401
  %1925 = vmatpush1.bf16.msra.mxu0 %v1400
  %1926 = vmatprep.subr.bf16.mxu0 %v1417
  %1927 = vmatpush1.bf16.msra.mxu0 %v1416
  %1928 = vmatprep.subr.bf16.mxu0 %v1433
  %1929 = vmatpush1.bf16.msra.mxu0 %v1432
  %1930 = vmatprep.subr.bf16.mxu0 %v1449
  %1931 = vmatpush1.bf16.msra.mxu0 %v1448
  %1932 = vmatprep.subr.bf16.mxu0 %v1465
  %1933 = vmatpush1.bf16.msra.mxu0 %v1464
  %1934 = vmatprep.subr.bf16.mxu0 %v1481
  %1935 = vmatpush1.bf16.msra.mxu0 %v1480
  %1936 = vmatprep.subr.bf16.mxu0 %v1497
  %1937 = vmatpush1.bf16.msra.mxu0 %v1496
  %1938 = vmatprep.subr.bf16.mxu0 %v1513
  %1939 = vmatpush1.bf16.msra.mxu0 %v1512
  %1940 = vmatprep.subr.bf16.mxu0 %v1529
  %1941 = vmatpush1.bf16.msra.mxu0 %v1528
  %1942 = vmatprep.subr.bf16.mxu0 %v1545
  %1943 = vmatpush1.bf16.msra.mxu0 %v1544
  %1944 = vmatprep.subr.bf16.mxu0 %v1561
  %1945 = vmatpush1.bf16.msra.mxu0 %v1560
  %1946 = vmatprep.mubr.bf16.mxu0 %v545
  %1947 = vmatmul.mubr.bf16.gmra.mrb[0].mxu0 %v544
  %v1948 = vpop.f32.mrb[0].mxu0
  %v1949 = vadd.f32 0.0, %v1948
  %v1950 = vpop.f32.mrb[0].mxu0
  %v1951 = vadd.f32 0.0, %v1950
  %v1952 = vpop.f32.mrb[0].mxu0
  %v1953 = vadd.f32 0.0, %v1952
  %v1954 = vpop.f32.mrb[0].mxu0
  %v1955 = vadd.f32 0.0, %v1954
  %1956 = vdwg.mxu0
  %1957 = vmatprep.subr.bf16.mxu0 %v1323
  %1958 = vmatpush1.bf16.msra.mxu0 %v1322
  %1959 = vmatprep.subr.bf16.mxu0 %v1339
  %1960 = vmatpush1.bf16.msra.mxu0 %v1338
  %1961 = vmatprep.subr.bf16.mxu0 %v1355
  %1962 = vmatpush1.bf16.msra.mxu0 %v1354
  %1963 = vmatprep.subr.bf16.mxu0 %v1371
  %1964 = vmatpush1.bf16.msra.mxu0 %v1370
  %1965 = vmatprep.subr.bf16.mxu0 %v1387
  %1966 = vmatpush1.bf16.msra.mxu0 %v1386
  %1967 = vmatprep.subr.bf16.mxu0 %v1403
  %1968 = vmatpush1.bf16.msra.mxu0 %v1402
  %1969 = vmatprep.subr.bf16.mxu0 %v1419
  %1970 = vmatpush1.bf16.msra.mxu0 %v1418
  %1971 = vmatprep.subr.bf16.mxu0 %v1435
  %1972 = vmatpush1.bf16.msra.mxu0 %v1434
  %1973 = vmatprep.subr.bf16.mxu0 %v1451
  %1974 = vmatpush1.bf16.msra.mxu0 %v1450
  %1975 = vmatprep.subr.bf16.mxu0 %v1467
  %1976 = vmatpush1.bf16.msra.mxu0 %v1466
  %1977 = vmatprep.subr.bf16.mxu0 %v1483
  %1978 = vmatpush1.bf16.msra.mxu0 %v1482
  %1979 = vmatprep.subr.bf16.mxu0 %v1499
  %1980 = vmatpush1.bf16.msra.mxu0 %v1498
  %1981 = vmatprep.subr.bf16.mxu0 %v1515
  %1982 = vmatpush1.bf16.msra.mxu0 %v1514
  %1983 = vmatprep.subr.bf16.mxu0 %v1531
  %1984 = vmatpush1.bf16.msra.mxu0 %v1530
  %1985 = vmatprep.subr.bf16.mxu0 %v1547
  %1986 = vmatpush1.bf16.msra.mxu0 %v1546
  %1987 = vmatprep.subr.bf16.mxu0 %v1563
  %1988 = vmatpush1.bf16.msra.mxu0 %v1562
  %1989 = vmatprep.mubr.bf16.mxu0 %v545
  %1990 = vmatmul.mubr.bf16.gmra.mrb[0].mxu0 %v544
  %v1991 = vpop.f32.mrb[0].mxu0
  %v1992 = vadd.f32 0.0, %v1991
  %v1993 = vpop.f32.mrb[0].mxu0
  %v1994 = vadd.f32 0.0, %v1993
  %v1995 = vpop.f32.mrb[0].mxu0
  %v1996 = vadd.f32 0.0, %v1995
  %v1997 = vpop.f32.mrb[0].mxu0
  %v1998 = vadd.f32 0.0, %v1997
  %1999 = vdwg.mxu0
  %2000 = vmatprep.subr.bf16.mxu0 %v1325
  %2001 = vmatpush1.bf16.msra.mxu0 %v1324
  %2002 = vmatprep.subr.bf16.mxu0 %v1341
  %2003 = vmatpush1.bf16.msra.mxu0 %v1340
  %2004 = vmatprep.subr.bf16.mxu0 %v1357
  %2005 = vmatpush1.bf16.msra.mxu0 %v1356
  %2006 = vmatprep.subr.bf16.mxu0 %v1373
  %2007 = vmatpush1.bf16.msra.mxu0 %v1372
  %2008 = vmatprep.subr.bf16.mxu0 %v1389
  %2009 = vmatpush1.bf16.msra.mxu0 %v1388
  %2010 = vmatprep.subr.bf16.mxu0 %v1405
  %2011 = vmatpush1.bf16.msra.mxu0 %v1404
  %2012 = vmatprep.subr.bf16.mxu0 %v1421
  %2013 = vmatpush1.bf16.msra.mxu0 %v1420
  %2014 = vmatprep.subr.bf16.mxu0 %v1437
  %2015 = vmatpush1.bf16.msra.mxu0 %v1436
  %2016 = vmatprep.subr.bf16.mxu0 %v1453
  %2017 = vmatpush1.bf16.msra.mxu0 %v1452
  %2018 = vmatprep.subr.bf16.mxu0 %v1469
  %2019 = vmatpush1.bf16.msra.mxu0 %v1468
  %2020 = vmatprep.subr.bf16.mxu0 %v1485
  %2021 = vmatpush1.bf16.msra.mxu0 %v1484
  %2022 = vmatprep.subr.bf16.mxu0 %v1501
  %2023 = vmatpush1.bf16.msra.mxu0 %v1500
  %2024 = vmatprep.subr.bf16.mxu0 %v1517
  %2025 = vmatpush1.bf16.msra.mxu0 %v1516
  %2026 = vmatprep.subr.bf16.mxu0 %v1533
  %2027 = vmatpush1.bf16.msra.mxu0 %v1532
  %2028 = vmatprep.subr.bf16.mxu0 %v1549
  %2029 = vmatpush1.bf16.msra.mxu0 %v1548
  %2030 = vmatprep.subr.bf16.mxu0 %v1565
  %2031 = vmatpush1.bf16.msra.mxu0 %v1564
  %2032 = vmatprep.mubr.bf16.mxu0 %v545
  %2033 = vmatmul.mubr.bf16.gmra.mrb[0].mxu0 %v544
  %v2034 = vpop.f32.mrb[0].mxu0
  %v2035 = vadd.f32 0.0, %v2034
  %v2036 = vpop.f32.mrb[0].mxu0
  %v2037 = vadd.f32 0.0, %v2036
  %v2038 = vpop.f32.mrb[0].mxu0
  %v2039 = vadd.f32 0.0, %v2038
  %v2040 = vpop.f32.mrb[0].mxu0
  %v2041 = vadd.f32 0.0, %v2040
  %2042 = vdwg.mxu0
  %2043 = vmatprep.subr.bf16.mxu0 %v1327
  %2044 = vmatpush1.bf16.msra.mxu0 %v1326
  %2045 = vmatprep.subr.bf16.mxu0 %v1343
  %2046 = vmatpush1.bf16.msra.mxu0 %v1342
  %2047 = vmatprep.subr.bf16.mxu0 %v1359
  %2048 = vmatpush1.bf16.msra.mxu0 %v1358
  %2049 = vmatprep.subr.bf16.mxu0 %v1375
  %2050 = vmatpush1.bf16.msra.mxu0 %v1374
  %2051 = vmatprep.subr.bf16.mxu0 %v1391
  %2052 = vmatpush1.bf16.msra.mxu0 %v1390
  %2053 = vmatprep.subr.bf16.mxu0 %v1407
  %2054 = vmatpush1.bf16.msra.mxu0 %v1406
  %2055 = vmatprep.subr.bf16.mxu0 %v1423
  %2056 = vmatpush1.bf16.msra.mxu0 %v1422
  %2057 = vmatprep.subr.bf16.mxu0 %v1439
  %2058 = vmatpush1.bf16.msra.mxu0 %v1438
  %2059 = vmatprep.subr.bf16.mxu0 %v1455
  %2060 = vmatpush1.bf16.msra.mxu0 %v1454
  %2061 = vmatprep.subr.bf16.mxu0 %v1471
  %2062 = vmatpush1.bf16.msra.mxu0 %v1470
  %2063 = vmatprep.subr.bf16.mxu0 %v1487
  %2064 = vmatpush1.bf16.msra.mxu0 %v1486
  %2065 = vmatprep.subr.bf16.mxu0 %v1503
  %2066 = vmatpush1.bf16.msra.mxu0 %v1502
  %2067 = vmatprep.subr.bf16.mxu0 %v1519
  %2068 = vmatpush1.bf16.msra.mxu0 %v1518
  %2069 = vmatprep.subr.bf16.mxu0 %v1535
  %2070 = vmatpush1.bf16.msra.mxu0 %v1534
  %2071 = vmatprep.subr.bf16.mxu0 %v1551
  %2072 = vmatpush1.bf16.msra.mxu0 %v1550
  %2073 = vmatprep.subr.bf16.mxu0 %v1567
  %2074 = vmatpush1.bf16.msra.mxu0 %v1566
  %2075 = vmatprep.mubr.bf16.mxu0 %v545
  %2076 = vmatmul.mubr.bf16.gmra.mrb[0].mxu0 %v544
  %v2077 = vpop.f32.mrb[0].mxu0
  %v2078 = vadd.f32 0.0, %v2077
  %v2079 = vpop.f32.mrb[0].mxu0
  %v2080 = vadd.f32 0.0, %v2079
  %v2081 = vpop.f32.mrb[0].mxu0
  %v2082 = vadd.f32 0.0, %v2081
  %v2083 = vpop.f32.mrb[0].mxu0
  %v2084 = vadd.f32 0.0, %v2083
  %2085 = vdwg.mxu0
  %2086 = vmatprep.subr.bf16.mxu0 %v1329
  %2087 = vmatpush1.bf16.msra.mxu0 %v1328
  %2088 = vmatprep.subr.bf16.mxu0 %v1345
  %2089 = vmatpush1.bf16.msra.mxu0 %v1344
  %2090 = vmatprep.subr.bf16.mxu0 %v1361
  %2091 = vmatpush1.bf16.msra.mxu0 %v1360
  %2092 = vmatprep.subr.bf16.mxu0 %v1377
  %2093 = vmatpush1.bf16.msra.mxu0 %v1376
  %2094 = vmatprep.subr.bf16.mxu0 %v1393
  %2095 = vmatpush1.bf16.msra.mxu0 %v1392
  %2096 = vmatprep.subr.bf16.mxu0 %v1409
  %2097 = vmatpush1.bf16.msra.mxu0 %v1408
  %2098 = vmatprep.subr.bf16.mxu0 %v1425
  %2099 = vmatpush1.bf16.msra.mxu0 %v1424
  %2100 = vmatprep.subr.bf16.mxu0 %v1441
  %2101 = vmatpush1.bf16.msra.mxu0 %v1440
  %2102 = vmatprep.subr.bf16.mxu0 %v1457
  %2103 = vmatpush1.bf16.msra.mxu0 %v1456
  %2104 = vmatprep.subr.bf16.mxu0 %v1473
  %2105 = vmatpush1.bf16.msra.mxu0 %v1472
  %2106 = vmatprep.subr.bf16.mxu0 %v1489
  %2107 = vmatpush1.bf16.msra.mxu0 %v1488
  %2108 = vmatprep.subr.bf16.mxu0 %v1505
  %2109 = vmatpush1.bf16.msra.mxu0 %v1504
  %2110 = vmatprep.subr.bf16.mxu0 %v1521
  %2111 = vmatpush1.bf16.msra.mxu0 %v1520
  %2112 = vmatprep.subr.bf16.mxu0 %v1537
  %2113 = vmatpush1.bf16.msra.mxu0 %v1536
  %2114 = vmatprep.subr.bf16.mxu0 %v1553
  %2115 = vmatpush1.bf16.msra.mxu0 %v1552
  %2116 = vmatprep.subr.bf16.mxu0 %v1569
  %2117 = vmatpush1.bf16.msra.mxu0 %v1568
  %2118 = vmatprep.mubr.bf16.mxu0 %v545
  %2119 = vmatmul.mubr.bf16.gmra.mrb[0].mxu0 %v544
  %v2120 = vpop.f32.mrb[0].mxu0
  %v2121 = vadd.f32 0.0, %v2120
  %v2122 = vpop.f32.mrb[0].mxu0
  %v2123 = vadd.f32 0.0, %v2122
  %v2124 = vpop.f32.mrb[0].mxu0
  %v2125 = vadd.f32 0.0, %v2124
  %v2126 = vpop.f32.mrb[0].mxu0
  %v2127 = vadd.f32 0.0, %v2126
  %2128 = vdwg.mxu0
  %2129 = vmatprep.subr.bf16.mxu0 %v1331
  %2130 = vmatpush1.bf16.msra.mxu0 %v1330
  %2131 = vmatprep.subr.bf16.mxu0 %v1347
  %2132 = vmatpush1.bf16.msra.mxu0 %v1346
  %2133 = vmatprep.subr.bf16.mxu0 %v1363
  %2134 = vmatpush1.bf16.msra.mxu0 %v1362
  %2135 = vmatprep.subr.bf16.mxu0 %v1379
  %2136 = vmatpush1.bf16.msra.mxu0 %v1378
  %2137 = vmatprep.subr.bf16.mxu0 %v1395
  %2138 = vmatpush1.bf16.msra.mxu0 %v1394
  %2139 = vmatprep.subr.bf16.mxu0 %v1411
  %2140 = vmatpush1.bf16.msra.mxu0 %v1410
  %2141 = vmatprep.subr.bf16.mxu0 %v1427
  %2142 = vmatpush1.bf16.msra.mxu0 %v1426
  %2143 = vmatprep.subr.bf16.mxu0 %v1443
  %2144 = vmatpush1.bf16.msra.mxu0 %v1442
  %2145 = vmatprep.subr.bf16.mxu0 %v1459
  %2146 = vmatpush1.bf16.msra.mxu0 %v1458
  %2147 = vmatprep.subr.bf16.mxu0 %v1475
  %2148 = vmatpush1.bf16.msra.mxu0 %v1474
  %2149 = vmatprep.subr.bf16.mxu0 %v1491
  %2150 = vmatpush1.bf16.msra.mxu0 %v1490
  %2151 = vmatprep.subr.bf16.mxu0 %v1507
  %2152 = vmatpush1.bf16.msra.mxu0 %v1506
  %2153 = vmatprep.subr.bf16.mxu0 %v1523
  %2154 = vmatpush1.bf16.msra.mxu0 %v1522
  %2155 = vmatprep.subr.bf16.mxu0 %v1539
  %2156 = vmatpush1.bf16.msra.mxu0 %v1538
  %2157 = vmatprep.subr.bf16.mxu0 %v1555
  %2158 = vmatpush1.bf16.msra.mxu0 %v1554
  %2159 = vmatprep.subr.bf16.mxu0 %v1571
  %2160 = vmatpush1.bf16.msra.mxu0 %v1570
  %2161 = vmatprep.mubr.bf16.mxu0 %v545
  %2162 = vmatmul.mubr.bf16.gmra.mrb[0].mxu0 %v544
  %v2163 = vpop.f32.mrb[0].mxu0
  %v2164 = vadd.f32 0.0, %v2163
  %v2165 = vpop.f32.mrb[0].mxu0
  %v2166 = vadd.f32 0.0, %v2165
  %v2167 = vpop.f32.mrb[0].mxu0
  %v2168 = vadd.f32 0.0, %v2167
  %v2169 = vpop.f32.mrb[0].mxu0
  %v2170 = vadd.f32 0.0, %v2169
  %2171 = vdwg.mxu0
  %v2174 = vunpack.c.l.b16 %v22
  %v2175 = vunpack.c.h.b16 %v22
  %v2176 = vunpack.c.l.b16 %v23
  %v2177 = vunpack.c.h.b16 %v23
  %v2178 = vpack.c.b16 %v2176, %v2174
  %v2179 = vpack.c.b16 %v2177, %v2175
  %v2438 = vunpack.c.l.b16 %v24
  %v2439 = vunpack.c.h.b16 %v24
  %v2440 = vunpack.c.l.b16 %v25
  %v2441 = vunpack.c.h.b16 %v25
  %v2442 = vunpack.c.l.b16 %v26
  %v2443 = vunpack.c.h.b16 %v26
  %v2444 = vunpack.c.l.b16 %v27
  %v2445 = vunpack.c.h.b16 %v27
  %v2446 = vunpack.c.l.b16 %v28
  %v2447 = vunpack.c.h.b16 %v28
  %v2448 = vunpack.c.l.b16 %v29
  %v2449 = vunpack.c.h.b16 %v29
  %v2450 = vunpack.c.l.b16 %v30
  %v2451 = vunpack.c.h.b16 %v30
  %v2452 = vunpack.c.l.b16 %v31
  %v2453 = vunpack.c.h.b16 %v31
  %v2454 = vunpack.c.l.b16 %v32
  %v2455 = vunpack.c.h.b16 %v32
  %v2456 = vunpack.c.l.b16 %v33
  %v2457 = vunpack.c.h.b16 %v33
  %v2458 = vunpack.c.l.b16 %v34
  %v2459 = vunpack.c.h.b16 %v34
  %v2460 = vunpack.c.l.b16 %v35
  %v2461 = vunpack.c.h.b16 %v35
  %v2462 = vunpack.c.l.b16 %v36
  %v2463 = vunpack.c.h.b16 %v36
  %v2464 = vunpack.c.l.b16 %v37
  %v2465 = vunpack.c.h.b16 %v37
  %v2466 = vunpack.c.l.b16 %v38
  %v2467 = vunpack.c.h.b16 %v38
  %v2468 = vunpack.c.l.b16 %v39
  %v2469 = vunpack.c.h.b16 %v39
  %v2470 = vunpack.c.l.b16 %v40
  %v2471 = vunpack.c.h.b16 %v40
  %v2472 = vunpack.c.l.b16 %v41
  %v2473 = vunpack.c.h.b16 %v41
  %v2474 = vunpack.c.l.b16 %v42
  %v2475 = vunpack.c.h.b16 %v42
  %v2476 = vunpack.c.l.b16 %v43
  %v2477 = vunpack.c.h.b16 %v43
  %v2478 = vunpack.c.l.b16 %v44
  %v2479 = vunpack.c.h.b16 %v44
  %v2480 = vunpack.c.l.b16 %v45
  %v2481 = vunpack.c.h.b16 %v45
  %v2482 = vunpack.c.l.b16 %v46
  %v2483 = vunpack.c.h.b16 %v46
  %v2484 = vunpack.c.l.b16 %v47
  %v2485 = vunpack.c.h.b16 %v47
  %v2486 = vunpack.c.l.b16 %v48
  %v2487 = vunpack.c.h.b16 %v48
  %v2488 = vunpack.c.l.b16 %v49
  %v2489 = vunpack.c.h.b16 %v49
  %v2490 = vunpack.c.l.b16 %v50
  %v2491 = vunpack.c.h.b16 %v50
  %v2492 = vunpack.c.l.b16 %v51
  %v2493 = vunpack.c.h.b16 %v51
  %v2494 = vunpack.c.l.b16 %v52
  %v2495 = vunpack.c.h.b16 %v52
  %v2496 = vunpack.c.l.b16 %v53
  %v2497 = vunpack.c.h.b16 %v53
  %v2498 = vunpack.c.l.b16 %v54
  %v2499 = vunpack.c.h.b16 %v54
  %v2500 = vunpack.c.l.b16 %v55
  %v2501 = vunpack.c.h.b16 %v55
  %v2502 = vunpack.c.l.b16 %v56
  %v2503 = vunpack.c.h.b16 %v56
  %v2504 = vunpack.c.l.b16 %v57
  %v2505 = vunpack.c.h.b16 %v57
  %v2506 = vunpack.c.l.b16 %v58
  %v2507 = vunpack.c.h.b16 %v58
  %v2508 = vunpack.c.l.b16 %v59
  %v2509 = vunpack.c.h.b16 %v59
  %v2510 = vunpack.c.l.b16 %v60
  %v2511 = vunpack.c.h.b16 %v60
  %v2512 = vunpack.c.l.b16 %v61
  %v2513 = vunpack.c.h.b16 %v61
  %v2514 = vunpack.c.l.b16 %v62
  %v2515 = vunpack.c.h.b16 %v62
  %v2516 = vunpack.c.l.b16 %v63
  %v2517 = vunpack.c.h.b16 %v63
  %v2518 = vunpack.c.l.b16 %v64
  %v2519 = vunpack.c.h.b16 %v64
  %v2520 = vunpack.c.l.b16 %v65
  %v2521 = vunpack.c.h.b16 %v65
  %v2522 = vunpack.c.l.b16 %v66
  %v2523 = vunpack.c.h.b16 %v66
  %v2524 = vunpack.c.l.b16 %v67
  %v2525 = vunpack.c.h.b16 %v67
  %v2526 = vunpack.c.l.b16 %v68
  %v2527 = vunpack.c.h.b16 %v68
  %v2528 = vunpack.c.l.b16 %v69
  %v2529 = vunpack.c.h.b16 %v69
  %v2530 = vunpack.c.l.b16 %v70
  %v2531 = vunpack.c.h.b16 %v70
  %v2532 = vunpack.c.l.b16 %v71
  %v2533 = vunpack.c.h.b16 %v71
  %v2534 = vunpack.c.l.b16 %v72
  %v2535 = vunpack.c.h.b16 %v72
  %v2536 = vunpack.c.l.b16 %v73
  %v2537 = vunpack.c.h.b16 %v73
  %v2538 = vunpack.c.l.b16 %v74
  %v2539 = vunpack.c.h.b16 %v74
  %v2540 = vunpack.c.l.b16 %v75
  %v2541 = vunpack.c.h.b16 %v75
  %v2542 = vunpack.c.l.b16 %v76
  %v2543 = vunpack.c.h.b16 %v76
  %v2544 = vunpack.c.l.b16 %v77
  %v2545 = vunpack.c.h.b16 %v77
  %v2546 = vunpack.c.l.b16 %v78
  %v2547 = vunpack.c.h.b16 %v78
  %v2548 = vunpack.c.l.b16 %v79
  %v2549 = vunpack.c.h.b16 %v79
  %v2550 = vunpack.c.l.b16 %v80
  %v2551 = vunpack.c.h.b16 %v80
  %v2552 = vunpack.c.l.b16 %v81
  %v2553 = vunpack.c.h.b16 %v81
  %v2554 = vunpack.c.l.b16 %v82
  %v2555 = vunpack.c.h.b16 %v82
  %v2556 = vunpack.c.l.b16 %v83
  %v2557 = vunpack.c.h.b16 %v83
  %v2558 = vunpack.c.l.b16 %v84
  %v2559 = vunpack.c.h.b16 %v84
  %v2560 = vunpack.c.l.b16 %v85
  %v2561 = vunpack.c.h.b16 %v85
  %v2562 = vunpack.c.l.b16 %v86
  %v2563 = vunpack.c.h.b16 %v86
  %v2564 = vunpack.c.l.b16 %v87
  %v2565 = vunpack.c.h.b16 %v87
  %v2566 = vunpack.c.l.b16 %v88
  %v2567 = vunpack.c.h.b16 %v88
  %v2568 = vunpack.c.l.b16 %v89
  %v2569 = vunpack.c.h.b16 %v89
  %v2570 = vunpack.c.l.b16 %v90
  %v2571 = vunpack.c.h.b16 %v90
  %v2572 = vunpack.c.l.b16 %v91
  %v2573 = vunpack.c.h.b16 %v91
  %v2574 = vunpack.c.l.b16 %v92
  %v2575 = vunpack.c.h.b16 %v92
  %v2576 = vunpack.c.l.b16 %v93
  %v2577 = vunpack.c.h.b16 %v93
  %v2578 = vunpack.c.l.b16 %v94
  %v2579 = vunpack.c.h.b16 %v94
  %v2580 = vunpack.c.l.b16 %v95
  %v2581 = vunpack.c.h.b16 %v95
  %v2582 = vunpack.c.l.b16 %v96
  %v2583 = vunpack.c.h.b16 %v96
  %v2584 = vunpack.c.l.b16 %v97
  %v2585 = vunpack.c.h.b16 %v97
  %v2586 = vunpack.c.l.b16 %v98
  %v2587 = vunpack.c.h.b16 %v98
  %v2588 = vunpack.c.l.b16 %v99
  %v2589 = vunpack.c.h.b16 %v99
  %v2590 = vunpack.c.l.b16 %v100
  %v2591 = vunpack.c.h.b16 %v100
  %v2592 = vunpack.c.l.b16 %v101
  %v2593 = vunpack.c.h.b16 %v101
  %v2594 = vunpack.c.l.b16 %v102
  %v2595 = vunpack.c.h.b16 %v102
  %v2596 = vunpack.c.l.b16 %v103
  %v2597 = vunpack.c.h.b16 %v103
  %v2598 = vunpack.c.l.b16 %v104
  %v2599 = vunpack.c.h.b16 %v104
  %v2600 = vunpack.c.l.b16 %v105
  %v2601 = vunpack.c.h.b16 %v105
  %v2602 = vunpack.c.l.b16 %v106
  %v2603 = vunpack.c.h.b16 %v106
  %v2604 = vunpack.c.l.b16 %v107
  %v2605 = vunpack.c.h.b16 %v107
  %v2606 = vunpack.c.l.b16 %v108
  %v2607 = vunpack.c.h.b16 %v108
  %v2608 = vunpack.c.l.b16 %v109
  %v2609 = vunpack.c.h.b16 %v109
  %v2610 = vunpack.c.l.b16 %v110
  %v2611 = vunpack.c.h.b16 %v110
  %v2612 = vunpack.c.l.b16 %v111
  %v2613 = vunpack.c.h.b16 %v111
  %v2614 = vunpack.c.l.b16 %v112
  %v2615 = vunpack.c.h.b16 %v112
  %v2616 = vunpack.c.l.b16 %v113
  %v2617 = vunpack.c.h.b16 %v113
  %v2618 = vunpack.c.l.b16 %v114
  %v2619 = vunpack.c.h.b16 %v114
  %v2620 = vunpack.c.l.b16 %v115
  %v2621 = vunpack.c.h.b16 %v115
  %v2622 = vunpack.c.l.b16 %v116
  %v2623 = vunpack.c.h.b16 %v116
  %v2624 = vunpack.c.l.b16 %v117
  %v2625 = vunpack.c.h.b16 %v117
  %v2626 = vunpack.c.l.b16 %v118
  %v2627 = vunpack.c.h.b16 %v118
  %v2628 = vunpack.c.l.b16 %v119
  %v2629 = vunpack.c.h.b16 %v119
  %v2630 = vunpack.c.l.b16 %v120
  %v2631 = vunpack.c.h.b16 %v120
  %v2632 = vunpack.c.l.b16 %v121
  %v2633 = vunpack.c.h.b16 %v121
  %v2634 = vunpack.c.l.b16 %v122
  %v2635 = vunpack.c.h.b16 %v122
  %v2636 = vunpack.c.l.b16 %v123
  %v2637 = vunpack.c.h.b16 %v123
  %v2638 = vunpack.c.l.b16 %v124
  %v2639 = vunpack.c.h.b16 %v124
  %v2640 = vunpack.c.l.b16 %v125
  %v2641 = vunpack.c.h.b16 %v125
  %v2642 = vunpack.c.l.b16 %v126
  %v2643 = vunpack.c.h.b16 %v126
  %v2644 = vunpack.c.l.b16 %v127
  %v2645 = vunpack.c.h.b16 %v127
  %v2646 = vunpack.c.l.b16 %v128
  %v2647 = vunpack.c.h.b16 %v128
  %v2648 = vunpack.c.l.b16 %v129
  %v2649 = vunpack.c.h.b16 %v129
  %v2650 = vunpack.c.l.b16 %v130
  %v2651 = vunpack.c.h.b16 %v130
  %v2652 = vunpack.c.l.b16 %v131
  %v2653 = vunpack.c.h.b16 %v131
  %v2654 = vunpack.c.l.b16 %v132
  %v2655 = vunpack.c.h.b16 %v132
  %v2656 = vunpack.c.l.b16 %v133
  %v2657 = vunpack.c.h.b16 %v133
  %v2658 = vunpack.c.l.b16 %v134
  %v2659 = vunpack.c.h.b16 %v134
  %v2660 = vunpack.c.l.b16 %v135
  %v2661 = vunpack.c.h.b16 %v135
  %v2662 = vunpack.c.l.b16 %v136
  %v2663 = vunpack.c.h.b16 %v136
  %v2664 = vunpack.c.l.b16 %v137
  %v2665 = vunpack.c.h.b16 %v137
  %v2666 = vunpack.c.l.b16 %v138
  %v2667 = vunpack.c.h.b16 %v138
  %v2668 = vunpack.c.l.b16 %v139
  %v2669 = vunpack.c.h.b16 %v139
  %v2670 = vunpack.c.l.b16 %v140
  %v2671 = vunpack.c.h.b16 %v140
  %v2672 = vunpack.c.l.b16 %v141
  %v2673 = vunpack.c.h.b16 %v141
  %v2674 = vunpack.c.l.b16 %v142
  %v2675 = vunpack.c.h.b16 %v142
  %v2676 = vunpack.c.l.b16 %v143
  %v2677 = vunpack.c.h.b16 %v143
  %v2678 = vunpack.c.l.b16 %v144
  %v2679 = vunpack.c.h.b16 %v144
  %v2680 = vunpack.c.l.b16 %v145
  %v2681 = vunpack.c.h.b16 %v145
  %v2682 = vunpack.c.l.b16 %v146
  %v2683 = vunpack.c.h.b16 %v146
  %v2684 = vunpack.c.l.b16 %v147
  %v2685 = vunpack.c.h.b16 %v147
  %v2686 = vunpack.c.l.b16 %v148
  %v2687 = vunpack.c.h.b16 %v148
  %v2688 = vunpack.c.l.b16 %v149
  %v2689 = vunpack.c.h.b16 %v149
  %v2690 = vunpack.c.l.b16 %v150
  %v2691 = vunpack.c.h.b16 %v150
  %v2692 = vunpack.c.l.b16 %v151
  %v2693 = vunpack.c.h.b16 %v151
  %v2694 = vunpack.c.l.b16 %v152
  %v2695 = vunpack.c.h.b16 %v152
  %v2696 = vunpack.c.l.b16 %v153
  %v2697 = vunpack.c.h.b16 %v153
  %v2698 = vunpack.c.l.b16 %v154
  %v2699 = vunpack.c.h.b16 %v154
  %v2700 = vunpack.c.l.b16 %v155
  %v2701 = vunpack.c.h.b16 %v155
  %v2702 = vunpack.c.l.b16 %v156
  %v2703 = vunpack.c.h.b16 %v156
  %v2704 = vunpack.c.l.b16 %v157
  %v2705 = vunpack.c.h.b16 %v157
  %v2706 = vunpack.c.l.b16 %v158
  %v2707 = vunpack.c.h.b16 %v158
  %v2708 = vunpack.c.l.b16 %v159
  %v2709 = vunpack.c.h.b16 %v159
  %v2710 = vunpack.c.l.b16 %v160
  %v2711 = vunpack.c.h.b16 %v160
  %v2712 = vunpack.c.l.b16 %v161
  %v2713 = vunpack.c.h.b16 %v161
  %v2714 = vunpack.c.l.b16 %v162
  %v2715 = vunpack.c.h.b16 %v162
  %v2716 = vunpack.c.l.b16 %v163
  %v2717 = vunpack.c.h.b16 %v163
  %v2718 = vunpack.c.l.b16 %v164
  %v2719 = vunpack.c.h.b16 %v164
  %v2720 = vunpack.c.l.b16 %v165
  %v2721 = vunpack.c.h.b16 %v165
  %v2722 = vunpack.c.l.b16 %v166
  %v2723 = vunpack.c.h.b16 %v166
  %v2724 = vunpack.c.l.b16 %v167
  %v2725 = vunpack.c.h.b16 %v167
  %v2726 = vunpack.c.l.b16 %v168
  %v2727 = vunpack.c.h.b16 %v168
  %v2728 = vunpack.c.l.b16 %v169
  %v2729 = vunpack.c.h.b16 %v169
  %v2730 = vunpack.c.l.b16 %v170
  %v2731 = vunpack.c.h.b16 %v170
  %v2732 = vunpack.c.l.b16 %v171
  %v2733 = vunpack.c.h.b16 %v171
  %v2734 = vunpack.c.l.b16 %v172
  %v2735 = vunpack.c.h.b16 %v172
  %v2736 = vunpack.c.l.b16 %v173
  %v2737 = vunpack.c.h.b16 %v173
  %v2738 = vunpack.c.l.b16 %v174
  %v2739 = vunpack.c.h.b16 %v174
  %v2740 = vunpack.c.l.b16 %v175
  %v2741 = vunpack.c.h.b16 %v175
  %v2742 = vunpack.c.l.b16 %v176
  %v2743 = vunpack.c.h.b16 %v176
  %v2744 = vunpack.c.l.b16 %v177
  %v2745 = vunpack.c.h.b16 %v177
  %v2746 = vunpack.c.l.b16 %v178
  %v2747 = vunpack.c.h.b16 %v178
  %v2748 = vunpack.c.l.b16 %v179
  %v2749 = vunpack.c.h.b16 %v179
  %v2750 = vunpack.c.l.b16 %v180
  %v2751 = vunpack.c.h.b16 %v180
  %v2752 = vunpack.c.l.b16 %v181
  %v2753 = vunpack.c.h.b16 %v181
  %v2754 = vunpack.c.l.b16 %v182
  %v2755 = vunpack.c.h.b16 %v182
  %v2756 = vunpack.c.l.b16 %v183
  %v2757 = vunpack.c.h.b16 %v183
  %v2758 = vunpack.c.l.b16 %v184
  %v2759 = vunpack.c.h.b16 %v184
  %v2760 = vunpack.c.l.b16 %v185
  %v2761 = vunpack.c.h.b16 %v185
  %v2762 = vunpack.c.l.b16 %v186
  %v2763 = vunpack.c.h.b16 %v186
  %v2764 = vunpack.c.l.b16 %v187
  %v2765 = vunpack.c.h.b16 %v187
  %v2766 = vunpack.c.l.b16 %v188
  %v2767 = vunpack.c.h.b16 %v188
  %v2768 = vunpack.c.l.b16 %v189
  %v2769 = vunpack.c.h.b16 %v189
  %v2770 = vunpack.c.l.b16 %v190
  %v2771 = vunpack.c.h.b16 %v190
  %v2772 = vunpack.c.l.b16 %v191
  %v2773 = vunpack.c.h.b16 %v191
  %v2774 = vunpack.c.l.b16 %v192
  %v2775 = vunpack.c.h.b16 %v192
  %v2776 = vunpack.c.l.b16 %v193
  %v2777 = vunpack.c.h.b16 %v193
  %v2778 = vunpack.c.l.b16 %v194
  %v2779 = vunpack.c.h.b16 %v194
  %v2780 = vunpack.c.l.b16 %v195
  %v2781 = vunpack.c.h.b16 %v195
  %v2782 = vunpack.c.l.b16 %v196
  %v2783 = vunpack.c.h.b16 %v196
  %v2784 = vunpack.c.l.b16 %v197
  %v2785 = vunpack.c.h.b16 %v197
  %v2786 = vunpack.c.l.b16 %v198
  %v2787 = vunpack.c.h.b16 %v198
  %v2788 = vunpack.c.l.b16 %v199
  %v2789 = vunpack.c.h.b16 %v199
  %v2790 = vunpack.c.l.b16 %v200
  %v2791 = vunpack.c.h.b16 %v200
  %v2792 = vunpack.c.l.b16 %v201
  %v2793 = vunpack.c.h.b16 %v201
  %v2794 = vunpack.c.l.b16 %v202
  %v2795 = vunpack.c.h.b16 %v202
  %v2796 = vunpack.c.l.b16 %v203
  %v2797 = vunpack.c.h.b16 %v203
  %v2798 = vunpack.c.l.b16 %v204
  %v2799 = vunpack.c.h.b16 %v204
  %v2800 = vunpack.c.l.b16 %v205
  %v2801 = vunpack.c.h.b16 %v205
  %v2802 = vunpack.c.l.b16 %v206
  %v2803 = vunpack.c.h.b16 %v206
  %v2804 = vunpack.c.l.b16 %v207
  %v2805 = vunpack.c.h.b16 %v207
  %v2806 = vunpack.c.l.b16 %v208
  %v2807 = vunpack.c.h.b16 %v208
  %v2808 = vunpack.c.l.b16 %v209
  %v2809 = vunpack.c.h.b16 %v209
  %v2810 = vunpack.c.l.b16 %v210
  %v2811 = vunpack.c.h.b16 %v210
  %v2812 = vunpack.c.l.b16 %v211
  %v2813 = vunpack.c.h.b16 %v211
  %v2814 = vunpack.c.l.b16 %v212
  %v2815 = vunpack.c.h.b16 %v212
  %v2816 = vunpack.c.l.b16 %v213
  %v2817 = vunpack.c.h.b16 %v213
  %v2818 = vunpack.c.l.b16 %v214
  %v2819 = vunpack.c.h.b16 %v214
  %v2820 = vunpack.c.l.b16 %v215
  %v2821 = vunpack.c.h.b16 %v215
  %v2822 = vunpack.c.l.b16 %v216
  %v2823 = vunpack.c.h.b16 %v216
  %v2824 = vunpack.c.l.b16 %v217
  %v2825 = vunpack.c.h.b16 %v217
  %v2826 = vunpack.c.l.b16 %v218
  %v2827 = vunpack.c.h.b16 %v218
  %v2828 = vunpack.c.l.b16 %v219
  %v2829 = vunpack.c.h.b16 %v219
  %v2830 = vunpack.c.l.b16 %v220
  %v2831 = vunpack.c.h.b16 %v220
  %v2832 = vunpack.c.l.b16 %v221
  %v2833 = vunpack.c.h.b16 %v221
  %v2834 = vunpack.c.l.b16 %v222
  %v2835 = vunpack.c.h.b16 %v222
  %v2836 = vunpack.c.l.b16 %v223
  %v2837 = vunpack.c.h.b16 %v223
  %v2838 = vunpack.c.l.b16 %v224
  %v2839 = vunpack.c.h.b16 %v224
  %v2840 = vunpack.c.l.b16 %v225
  %v2841 = vunpack.c.h.b16 %v225
  %v2842 = vunpack.c.l.b16 %v226
  %v2843 = vunpack.c.h.b16 %v226
  %v2844 = vunpack.c.l.b16 %v227
  %v2845 = vunpack.c.h.b16 %v227
  %v2846 = vunpack.c.l.b16 %v228
  %v2847 = vunpack.c.h.b16 %v228
  %v2848 = vunpack.c.l.b16 %v229
  %v2849 = vunpack.c.h.b16 %v229
  %v2850 = vunpack.c.l.b16 %v230
  %v2851 = vunpack.c.h.b16 %v230
  %v2852 = vunpack.c.l.b16 %v231
  %v2853 = vunpack.c.h.b16 %v231
  %v2854 = vunpack.c.l.b16 %v232
  %v2855 = vunpack.c.h.b16 %v232
  %v2856 = vunpack.c.l.b16 %v233
  %v2857 = vunpack.c.h.b16 %v233
  %v2858 = vunpack.c.l.b16 %v234
  %v2859 = vunpack.c.h.b16 %v234
  %v2860 = vunpack.c.l.b16 %v235
  %v2861 = vunpack.c.h.b16 %v235
  %v2862 = vunpack.c.l.b16 %v236
  %v2863 = vunpack.c.h.b16 %v236
  %v2864 = vunpack.c.l.b16 %v237
  %v2865 = vunpack.c.h.b16 %v237
  %v2866 = vunpack.c.l.b16 %v238
  %v2867 = vunpack.c.h.b16 %v238
  %v2868 = vunpack.c.l.b16 %v239
  %v2869 = vunpack.c.h.b16 %v239
  %v2870 = vunpack.c.l.b16 %v240
  %v2871 = vunpack.c.h.b16 %v240
  %v2872 = vunpack.c.l.b16 %v241
  %v2873 = vunpack.c.h.b16 %v241
  %v2874 = vunpack.c.l.b16 %v242
  %v2875 = vunpack.c.h.b16 %v242
  %v2876 = vunpack.c.l.b16 %v243
  %v2877 = vunpack.c.h.b16 %v243
  %v2878 = vunpack.c.l.b16 %v244
  %v2879 = vunpack.c.h.b16 %v244
  %v2880 = vunpack.c.l.b16 %v245
  %v2881 = vunpack.c.h.b16 %v245
  %v2882 = vunpack.c.l.b16 %v246
  %v2883 = vunpack.c.h.b16 %v246
  %v2884 = vunpack.c.l.b16 %v247
  %v2885 = vunpack.c.h.b16 %v247
  %v2886 = vunpack.c.l.b16 %v248
  %v2887 = vunpack.c.h.b16 %v248
  %v2888 = vunpack.c.l.b16 %v249
  %v2889 = vunpack.c.h.b16 %v249
  %v2890 = vunpack.c.l.b16 %v250
  %v2891 = vunpack.c.h.b16 %v250
  %v2892 = vunpack.c.l.b16 %v251
  %v2893 = vunpack.c.h.b16 %v251
  %v2894 = vunpack.c.l.b16 %v252
  %v2895 = vunpack.c.h.b16 %v252
  %v2896 = vunpack.c.l.b16 %v253
  %v2897 = vunpack.c.h.b16 %v253
  %v2898 = vunpack.c.l.b16 %v254
  %v2899 = vunpack.c.h.b16 %v254
  %v2900 = vunpack.c.l.b16 %v255
  %v2901 = vunpack.c.h.b16 %v255
  %v2902 = vunpack.c.l.b16 %v256
  %v2903 = vunpack.c.h.b16 %v256
  %v2904 = vunpack.c.l.b16 %v257
  %v2905 = vunpack.c.h.b16 %v257
  %v2906 = vunpack.c.l.b16 %v258
  %v2907 = vunpack.c.h.b16 %v258
  %v2908 = vunpack.c.l.b16 %v259
  %v2909 = vunpack.c.h.b16 %v259
  %v2910 = vunpack.c.l.b16 %v260
  %v2911 = vunpack.c.h.b16 %v260
  %v2912 = vunpack.c.l.b16 %v261
  %v2913 = vunpack.c.h.b16 %v261
  %v2914 = vunpack.c.l.b16 %v262
  %v2915 = vunpack.c.h.b16 %v262
  %v2916 = vunpack.c.l.b16 %v263
  %v2917 = vunpack.c.h.b16 %v263
  %v2918 = vunpack.c.l.b16 %v264
  %v2919 = vunpack.c.h.b16 %v264
  %v2920 = vunpack.c.l.b16 %v265
  %v2921 = vunpack.c.h.b16 %v265
  %v2922 = vunpack.c.l.b16 %v266
  %v2923 = vunpack.c.h.b16 %v266
  %v2924 = vunpack.c.l.b16 %v267
  %v2925 = vunpack.c.h.b16 %v267
  %v2926 = vunpack.c.l.b16 %v268
  %v2927 = vunpack.c.h.b16 %v268
  %v2928 = vunpack.c.l.b16 %v269
  %v2929 = vunpack.c.h.b16 %v269
  %v2930 = vunpack.c.l.b16 %v270
  %v2931 = vunpack.c.h.b16 %v270
  %v2932 = vunpack.c.l.b16 %v271
  %v2933 = vunpack.c.h.b16 %v271
  %v2934 = vunpack.c.l.b16 %v272
  %v2935 = vunpack.c.h.b16 %v272
  %v2936 = vunpack.c.l.b16 %v273
  %v2937 = vunpack.c.h.b16 %v273
  %v2938 = vunpack.c.l.b16 %v274
  %v2939 = vunpack.c.h.b16 %v274
  %v2940 = vunpack.c.l.b16 %v275
  %v2941 = vunpack.c.h.b16 %v275
  %v2942 = vunpack.c.l.b16 %v276
  %v2943 = vunpack.c.h.b16 %v276
  %v2944 = vunpack.c.l.b16 %v277
  %v2945 = vunpack.c.h.b16 %v277
  %v2946 = vunpack.c.l.b16 %v278
  %v2947 = vunpack.c.h.b16 %v278
  %v2948 = vunpack.c.l.b16 %v279
  %v2949 = vunpack.c.h.b16 %v279
  %v2950 = vpack.c.b16 %v2454, %v2438
  %v2951 = vpack.c.b16 %v2455, %v2439
  %v2952 = vpack.c.b16 %v2456, %v2440
  %v2953 = vpack.c.b16 %v2457, %v2441
  %v2954 = vpack.c.b16 %v2458, %v2442
  %v2955 = vpack.c.b16 %v2459, %v2443
  %v2956 = vpack.c.b16 %v2460, %v2444
  %v2957 = vpack.c.b16 %v2461, %v2445
  %v2958 = vpack.c.b16 %v2462, %v2446
  %v2959 = vpack.c.b16 %v2463, %v2447
  %v2960 = vpack.c.b16 %v2464, %v2448
  %v2961 = vpack.c.b16 %v2465, %v2449
  %v2962 = vpack.c.b16 %v2466, %v2450
  %v2963 = vpack.c.b16 %v2467, %v2451
  %v2964 = vpack.c.b16 %v2468, %v2452
  %v2965 = vpack.c.b16 %v2469, %v2453
  %v2966 = vpack.c.b16 %v2486, %v2470
  %v2967 = vpack.c.b16 %v2487, %v2471
  %v2968 = vpack.c.b16 %v2488, %v2472
  %v2969 = vpack.c.b16 %v2489, %v2473
  %v2970 = vpack.c.b16 %v2490, %v2474
  %v2971 = vpack.c.b16 %v2491, %v2475
  %v2972 = vpack.c.b16 %v2492, %v2476
  %v2973 = vpack.c.b16 %v2493, %v2477
  %v2974 = vpack.c.b16 %v2494, %v2478
  %v2975 = vpack.c.b16 %v2495, %v2479
  %v2976 = vpack.c.b16 %v2496, %v2480
  %v2977 = vpack.c.b16 %v2497, %v2481
  %v2978 = vpack.c.b16 %v2498, %v2482
  %v2979 = vpack.c.b16 %v2499, %v2483
  %v2980 = vpack.c.b16 %v2500, %v2484
  %v2981 = vpack.c.b16 %v2501, %v2485
  %v2982 = vpack.c.b16 %v2518, %v2502
  %v2983 = vpack.c.b16 %v2519, %v2503
  %v2984 = vpack.c.b16 %v2520, %v2504
  %v2985 = vpack.c.b16 %v2521, %v2505
  %v2986 = vpack.c.b16 %v2522, %v2506
  %v2987 = vpack.c.b16 %v2523, %v2507
  %v2988 = vpack.c.b16 %v2524, %v2508
  %v2989 = vpack.c.b16 %v2525, %v2509
  %v2990 = vpack.c.b16 %v2526, %v2510
  %v2991 = vpack.c.b16 %v2527, %v2511
  %v2992 = vpack.c.b16 %v2528, %v2512
  %v2993 = vpack.c.b16 %v2529, %v2513
  %v2994 = vpack.c.b16 %v2530, %v2514
  %v2995 = vpack.c.b16 %v2531, %v2515
  %v2996 = vpack.c.b16 %v2532, %v2516
  %v2997 = vpack.c.b16 %v2533, %v2517
  %v2998 = vpack.c.b16 %v2550, %v2534
  %v2999 = vpack.c.b16 %v2551, %v2535
  %v3000 = vpack.c.b16 %v2552, %v2536
  %v3001 = vpack.c.b16 %v2553, %v2537
  %v3002 = vpack.c.b16 %v2554, %v2538
  %v3003 = vpack.c.b16 %v2555, %v2539
  %v3004 = vpack.c.b16 %v2556, %v2540
  %v3005 = vpack.c.b16 %v2557, %v2541
  %v3006 = vpack.c.b16 %v2558, %v2542
  %v3007 = vpack.c.b16 %v2559, %v2543
  %v3008 = vpack.c.b16 %v2560, %v2544
  %v3009 = vpack.c.b16 %v2561, %v2545
  %v3010 = vpack.c.b16 %v2562, %v2546
  %v3011 = vpack.c.b16 %v2563, %v2547
  %v3012 = vpack.c.b16 %v2564, %v2548
  %v3013 = vpack.c.b16 %v2565, %v2549
  %v3014 = vpack.c.b16 %v2582, %v2566
  %v3015 = vpack.c.b16 %v2583, %v2567
  %v3016 = vpack.c.b16 %v2584, %v2568
  %v3017 = vpack.c.b16 %v2585, %v2569
  %v3018 = vpack.c.b16 %v2586, %v2570
  %v3019 = vpack.c.b16 %v2587, %v2571
  %v3020 = vpack.c.b16 %v2588, %v2572
  %v3021 = vpack.c.b16 %v2589, %v2573
  %v3022 = vpack.c.b16 %v2590, %v2574
  %v3023 = vpack.c.b16 %v2591, %v2575
  %v3024 = vpack.c.b16 %v2592, %v2576
  %v3025 = vpack.c.b16 %v2593, %v2577
  %v3026 = vpack.c.b16 %v2594, %v2578
  %v3027 = vpack.c.b16 %v2595, %v2579
  %v3028 = vpack.c.b16 %v2596, %v2580
  %v3029 = vpack.c.b16 %v2597, %v2581
  %v3030 = vpack.c.b16 %v2614, %v2598
  %v3031 = vpack.c.b16 %v2615, %v2599
  %v3032 = vpack.c.b16 %v2616, %v2600
  %v3033 = vpack.c.b16 %v2617, %v2601
  %v3034 = vpack.c.b16 %v2618, %v2602
  %v3035 = vpack.c.b16 %v2619, %v2603
  %v3036 = vpack.c.b16 %v2620, %v2604
  %v3037 = vpack.c.b16 %v2621, %v2605
  %v3038 = vpack.c.b16 %v2622, %v2606
  %v3039 = vpack.c.b16 %v2623, %v2607
  %v3040 = vpack.c.b16 %v2624, %v2608
  %v3041 = vpack.c.b16 %v2625, %v2609
  %v3042 = vpack.c.b16 %v2626, %v2610
  %v3043 = vpack.c.b16 %v2627, %v2611
  %v3044 = vpack.c.b16 %v2628, %v2612
  %v3045 = vpack.c.b16 %v2629, %v2613
  %v3046 = vpack.c.b16 %v2646, %v2630
  %v3047 = vpack.c.b16 %v2647, %v2631
  %v3048 = vpack.c.b16 %v2648, %v2632
  %v3049 = vpack.c.b16 %v2649, %v2633
  %v3050 = vpack.c.b16 %v2650, %v2634
  %v3051 = vpack.c.b16 %v2651, %v2635
  %v3052 = vpack.c.b16 %v2652, %v2636
  %v3053 = vpack.c.b16 %v2653, %v2637
  %v3054 = vpack.c.b16 %v2654, %v2638
  %v3055 = vpack.c.b16 %v2655, %v2639
  %v3056 = vpack.c.b16 %v2656, %v2640
  %v3057 = vpack.c.b16 %v2657, %v2641
  %v3058 = vpack.c.b16 %v2658, %v2642
  %v3059 = vpack.c.b16 %v2659, %v2643
  %v3060 = vpack.c.b16 %v2660, %v2644
  %v3061 = vpack.c.b16 %v2661, %v2645
  %v3062 = vpack.c.b16 %v2678, %v2662
  %v3063 = vpack.c.b16 %v2679, %v2663
  %v3064 = vpack.c.b16 %v2680, %v2664
  %v3065 = vpack.c.b16 %v2681, %v2665
  %v3066 = vpack.c.b16 %v2682, %v2666
  %v3067 = vpack.c.b16 %v2683, %v2667
  %v3068 = vpack.c.b16 %v2684, %v2668
  %v3069 = vpack.c.b16 %v2685, %v2669
  %v3070 = vpack.c.b16 %v2686, %v2670
  %v3071 = vpack.c.b16 %v2687, %v2671
  %v3072 = vpack.c.b16 %v2688, %v2672
  %v3073 = vpack.c.b16 %v2689, %v2673
  %v3074 = vpack.c.b16 %v2690, %v2674
  %v3075 = vpack.c.b16 %v2691, %v2675
  %v3076 = vpack.c.b16 %v2692, %v2676
  %v3077 = vpack.c.b16 %v2693, %v2677
  %v3078 = vpack.c.b16 %v2710, %v2694
  %v3079 = vpack.c.b16 %v2711, %v2695
  %v3080 = vpack.c.b16 %v2712, %v2696
  %v3081 = vpack.c.b16 %v2713, %v2697
  %v3082 = vpack.c.b16 %v2714, %v2698
  %v3083 = vpack.c.b16 %v2715, %v2699
  %v3084 = vpack.c.b16 %v2716, %v2700
  %v3085 = vpack.c.b16 %v2717, %v2701
  %v3086 = vpack.c.b16 %v2718, %v2702
  %v3087 = vpack.c.b16 %v2719, %v2703
  %v3088 = vpack.c.b16 %v2720, %v2704
  %v3089 = vpack.c.b16 %v2721, %v2705
  %v3090 = vpack.c.b16 %v2722, %v2706
  %v3091 = vpack.c.b16 %v2723, %v2707
  %v3092 = vpack.c.b16 %v2724, %v2708
  %v3093 = vpack.c.b16 %v2725, %v2709
  %v3094 = vpack.c.b16 %v2742, %v2726
  %v3095 = vpack.c.b16 %v2743, %v2727
  %v3096 = vpack.c.b16 %v2744, %v2728
  %v3097 = vpack.c.b16 %v2745, %v2729
  %v3098 = vpack.c.b16 %v2746, %v2730
  %v3099 = vpack.c.b16 %v2747, %v2731
  %v3100 = vpack.c.b16 %v2748, %v2732
  %v3101 = vpack.c.b16 %v2749, %v2733
  %v3102 = vpack.c.b16 %v2750, %v2734
  %v3103 = vpack.c.b16 %v2751, %v2735
  %v3104 = vpack.c.b16 %v2752, %v2736
  %v3105 = vpack.c.b16 %v2753, %v2737
  %v3106 = vpack.c.b16 %v2754, %v2738
  %v3107 = vpack.c.b16 %v2755, %v2739
  %v3108 = vpack.c.b16 %v2756, %v2740
  %v3109 = vpack.c.b16 %v2757, %v2741
  %v3110 = vpack.c.b16 %v2774, %v2758
  %v3111 = vpack.c.b16 %v2775, %v2759
  %v3112 = vpack.c.b16 %v2776, %v2760
  %v3113 = vpack.c.b16 %v2777, %v2761
  %v3114 = vpack.c.b16 %v2778, %v2762
  %v3115 = vpack.c.b16 %v2779, %v2763
  %v3116 = vpack.c.b16 %v2780, %v2764
  %v3117 = vpack.c.b16 %v2781, %v2765
  %v3118 = vpack.c.b16 %v2782, %v2766
  %v3119 = vpack.c.b16 %v2783, %v2767
  %v3120 = vpack.c.b16 %v2784, %v2768
  %v3121 = vpack.c.b16 %v2785, %v2769
  %v3122 = vpack.c.b16 %v2786, %v2770
  %v3123 = vpack.c.b16 %v2787, %v2771
  %v3124 = vpack.c.b16 %v2788, %v2772
  %v3125 = vpack.c.b16 %v2789, %v2773
  %v3126 = vpack.c.b16 %v2806, %v2790
  %v3127 = vpack.c.b16 %v2807, %v2791
  %v3128 = vpack.c.b16 %v2808, %v2792
  %v3129 = vpack.c.b16 %v2809, %v2793
  %v3130 = vpack.c.b16 %v2810, %v2794
  %v3131 = vpack.c.b16 %v2811, %v2795
  %v3132 = vpack.c.b16 %v2812, %v2796
  %v3133 = vpack.c.b16 %v2813, %v2797
  %v3134 = vpack.c.b16 %v2814, %v2798
  %v3135 = vpack.c.b16 %v2815, %v2799
  %v3136 = vpack.c.b16 %v2816, %v2800
  %v3137 = vpack.c.b16 %v2817, %v2801
  %v3138 = vpack.c.b16 %v2818, %v2802
  %v3139 = vpack.c.b16 %v2819, %v2803
  %v3140 = vpack.c.b16 %v2820, %v2804
  %v3141 = vpack.c.b16 %v2821, %v2805
  %v3142 = vpack.c.b16 %v2838, %v2822
  %v3143 = vpack.c.b16 %v2839, %v2823
  %v3144 = vpack.c.b16 %v2840, %v2824
  %v3145 = vpack.c.b16 %v2841, %v2825
  %v3146 = vpack.c.b16 %v2842, %v2826
  %v3147 = vpack.c.b16 %v2843, %v2827
  %v3148 = vpack.c.b16 %v2844, %v2828
  %v3149 = vpack.c.b16 %v2845, %v2829
  %v3150 = vpack.c.b16 %v2846, %v2830
  %v3151 = vpack.c.b16 %v2847, %v2831
  %v3152 = vpack.c.b16 %v2848, %v2832
  %v3153 = vpack.c.b16 %v2849, %v2833
  %v3154 = vpack.c.b16 %v2850, %v2834
  %v3155 = vpack.c.b16 %v2851, %v2835
  %v3156 = vpack.c.b16 %v2852, %v2836
  %v3157 = vpack.c.b16 %v2853, %v2837
  %v3158 = vpack.c.b16 %v2870, %v2854
  %v3159 = vpack.c.b16 %v2871, %v2855
  %v3160 = vpack.c.b16 %v2872, %v2856
  %v3161 = vpack.c.b16 %v2873, %v2857
  %v3162 = vpack.c.b16 %v2874, %v2858
  %v3163 = vpack.c.b16 %v2875, %v2859
  %v3164 = vpack.c.b16 %v2876, %v2860
  %v3165 = vpack.c.b16 %v2877, %v2861
  %v3166 = vpack.c.b16 %v2878, %v2862
  %v3167 = vpack.c.b16 %v2879, %v2863
  %v3168 = vpack.c.b16 %v2880, %v2864
  %v3169 = vpack.c.b16 %v2881, %v2865
  %v3170 = vpack.c.b16 %v2882, %v2866
  %v3171 = vpack.c.b16 %v2883, %v2867
  %v3172 = vpack.c.b16 %v2884, %v2868
  %v3173 = vpack.c.b16 %v2885, %v2869
  %v3174 = vpack.c.b16 %v2902, %v2886
  %v3175 = vpack.c.b16 %v2903, %v2887
  %v3176 = vpack.c.b16 %v2904, %v2888
  %v3177 = vpack.c.b16 %v2905, %v2889
  %v3178 = vpack.c.b16 %v2906, %v2890
  %v3179 = vpack.c.b16 %v2907, %v2891
  %v3180 = vpack.c.b16 %v2908, %v2892
  %v3181 = vpack.c.b16 %v2909, %v2893
  %v3182 = vpack.c.b16 %v2910, %v2894
  %v3183 = vpack.c.b16 %v2911, %v2895
  %v3184 = vpack.c.b16 %v2912, %v2896
  %v3185 = vpack.c.b16 %v2913, %v2897
  %v3186 = vpack.c.b16 %v2914, %v2898
  %v3187 = vpack.c.b16 %v2915, %v2899
  %v3188 = vpack.c.b16 %v2916, %v2900
  %v3189 = vpack.c.b16 %v2917, %v2901
  %v3190 = vpack.c.b16 %v2934, %v2918
  %v3191 = vpack.c.b16 %v2935, %v2919
  %v3192 = vpack.c.b16 %v2936, %v2920
  %v3193 = vpack.c.b16 %v2937, %v2921
  %v3194 = vpack.c.b16 %v2938, %v2922
  %v3195 = vpack.c.b16 %v2939, %v2923
  %v3196 = vpack.c.b16 %v2940, %v2924
  %v3197 = vpack.c.b16 %v2941, %v2925
  %v3198 = vpack.c.b16 %v2942, %v2926
  %v3199 = vpack.c.b16 %v2943, %v2927
  %v3200 = vpack.c.b16 %v2944, %v2928
  %v3201 = vpack.c.b16 %v2945, %v2929
  %v3202 = vpack.c.b16 %v2946, %v2930
  %v3203 = vpack.c.b16 %v2947, %v2931
  %v3204 = vpack.c.b16 %v2948, %v2932
  %v3205 = vpack.c.b16 %v2949, %v2933
  %3462 = vmatprep.subr.bf16.mxu0 %v2951
  %3463 = vmatpush1.bf16.msra.mxu0 %v2950
  %3464 = vmatprep.subr.bf16.mxu0 %v2967
  %3465 = vmatpush1.bf16.msra.mxu0 %v2966
  %3466 = vmatprep.subr.bf16.mxu0 %v2983
  %3467 = vmatpush1.bf16.msra.mxu0 %v2982
  %3468 = vmatprep.subr.bf16.mxu0 %v2999
  %3469 = vmatpush1.bf16.msra.mxu0 %v2998
  %3470 = vmatprep.subr.bf16.mxu0 %v3015
  %3471 = vmatpush1.bf16.msra.mxu0 %v3014
  %3472 = vmatprep.subr.bf16.mxu0 %v3031
  %3473 = vmatpush1.bf16.msra.mxu0 %v3030
  %3474 = vmatprep.subr.bf16.mxu0 %v3047
  %3475 = vmatpush1.bf16.msra.mxu0 %v3046
  %3476 = vmatprep.subr.bf16.mxu0 %v3063
  %3477 = vmatpush1.bf16.msra.mxu0 %v3062
  %3478 = vmatprep.subr.bf16.mxu0 %v3079
  %3479 = vmatpush1.bf16.msra.mxu0 %v3078
  %3480 = vmatprep.subr.bf16.mxu0 %v3095
  %3481 = vmatpush1.bf16.msra.mxu0 %v3094
  %3482 = vmatprep.subr.bf16.mxu0 %v3111
  %3483 = vmatpush1.bf16.msra.mxu0 %v3110
  %3484 = vmatprep.subr.bf16.mxu0 %v3127
  %3485 = vmatpush1.bf16.msra.mxu0 %v3126
  %3486 = vmatprep.subr.bf16.mxu0 %v3143
  %3487 = vmatpush1.bf16.msra.mxu0 %v3142
  %3488 = vmatprep.subr.bf16.mxu0 %v3159
  %3489 = vmatpush1.bf16.msra.mxu0 %v3158
  %3490 = vmatprep.subr.bf16.mxu0 %v3175
  %3491 = vmatpush1.bf16.msra.mxu0 %v3174
  %3492 = vmatprep.subr.bf16.mxu0 %v3191
  %3493 = vmatpush1.bf16.msra.mxu0 %v3190
  %3494 = vmatprep.mubr.bf16.mxu0 %v2179
  %3495 = vmatmul.mubr.bf16.gmra.mrb[0].mxu0 %v2178
  %v3496 = vpop.f32.mrb[0].mxu0
  %v3497 = vadd.f32 %v1863, %v3496
  %v3498 = vpop.f32.mrb[0].mxu0
  %v3499 = vadd.f32 %v1865, %v3498
  %v3500 = vpop.f32.mrb[0].mxu0
  %v3501 = vadd.f32 %v1867, %v3500
  %v3502 = vpop.f32.mrb[0].mxu0
  %v3503 = vadd.f32 %v1869, %v3502
  %3504 = vdwg.mxu0
  %3505 = vmatprep.subr.bf16.mxu0 %v2953
  %3506 = vmatpush1.bf16.msra.mxu0 %v2952
  %3507 = vmatprep.subr.bf16.mxu0 %v2969
  %3508 = vmatpush1.bf16.msra.mxu0 %v2968
  %3509 = vmatprep.subr.bf16.mxu0 %v2985
  %3510 = vmatpush1.bf16.msra.mxu0 %v2984
  %3511 = vmatprep.subr.bf16.mxu0 %v3001
  %3512 = vmatpush1.bf16.msra.mxu0 %v3000
  %3513 = vmatprep.subr.bf16.mxu0 %v3017
  %3514 = vmatpush1.bf16.msra.mxu0 %v3016
  %3515 = vmatprep.subr.bf16.mxu0 %v3033
  %3516 = vmatpush1.bf16.msra.mxu0 %v3032
  %3517 = vmatprep.subr.bf16.mxu0 %v3049
  %3518 = vmatpush1.bf16.msra.mxu0 %v3048
  %3519 = vmatprep.subr.bf16.mxu0 %v3065
  %3520 = vmatpush1.bf16.msra.mxu0 %v3064
  %3521 = vmatprep.subr.bf16.mxu0 %v3081
  %3522 = vmatpush1.bf16.msra.mxu0 %v3080
  %3523 = vmatprep.subr.bf16.mxu0 %v3097
  %3524 = vmatpush1.bf16.msra.mxu0 %v3096
  %3525 = vmatprep.subr.bf16.mxu0 %v3113
  %3526 = vmatpush1.bf16.msra.mxu0 %v3112
  %3527 = vmatprep.subr.bf16.mxu0 %v3129
  %3528 = vmatpush1.bf16.msra.mxu0 %v3128
  %3529 = vmatprep.subr.bf16.mxu0 %v3145
  %3530 = vmatpush1.bf16.msra.mxu0 %v3144
  %3531 = vmatprep.subr.bf16.mxu0 %v3161
  %3532 = vmatpush1.bf16.msra.mxu0 %v3160
  %3533 = vmatprep.subr.bf16.mxu0 %v3177
  %3534 = vmatpush1.bf16.msra.mxu0 %v3176
  %3535 = vmatprep.subr.bf16.mxu0 %v3193
  %3536 = vmatpush1.bf16.msra.mxu0 %v3192
  %3537 = vmatprep.mubr.bf16.mxu0 %v2179
  %3538 = vmatmul.mubr.bf16.gmra.mrb[0].mxu0 %v2178
  %v3539 = vpop.f32.mrb[0].mxu0
  %v3540 = vadd.f32 %v1906, %v3539
  %v3541 = vpop.f32.mrb[0].mxu0
  %v3542 = vadd.f32 %v1908, %v3541
  %v3543 = vpop.f32.mrb[0].mxu0
  %v3544 = vadd.f32 %v1910, %v3543
  %v3545 = vpop.f32.mrb[0].mxu0
  %v3546 = vadd.f32 %v1912, %v3545
  %3547 = vdwg.mxu0
  %3548 = vmatprep.subr.bf16.mxu0 %v2955
  %3549 = vmatpush1.bf16.msra.mxu0 %v2954
  %3550 = vmatprep.subr.bf16.mxu0 %v2971
  %3551 = vmatpush1.bf16.msra.mxu0 %v2970
  %3552 = vmatprep.subr.bf16.mxu0 %v2987
  %3553 = vmatpush1.bf16.msra.mxu0 %v2986
  %3554 = vmatprep.subr.bf16.mxu0 %v3003
  %3555 = vmatpush1.bf16.msra.mxu0 %v3002
  %3556 = vmatprep.subr.bf16.mxu0 %v3019
  %3557 = vmatpush1.bf16.msra.mxu0 %v3018
  %3558 = vmatprep.subr.bf16.mxu0 %v3035
  %3559 = vmatpush1.bf16.msra.mxu0 %v3034
  %3560 = vmatprep.subr.bf16.mxu0 %v3051
  %3561 = vmatpush1.bf16.msra.mxu0 %v3050
  %3562 = vmatprep.subr.bf16.mxu0 %v3067
  %3563 = vmatpush1.bf16.msra.mxu0 %v3066
  %3564 = vmatprep.subr.bf16.mxu0 %v3083
  %3565 = vmatpush1.bf16.msra.mxu0 %v3082
  %3566 = vmatprep.subr.bf16.mxu0 %v3099
  %3567 = vmatpush1.bf16.msra.mxu0 %v3098
  %3568 = vmatprep.subr.bf16.mxu0 %v3115
  %3569 = vmatpush1.bf16.msra.mxu0 %v3114
  %3570 = vmatprep.subr.bf16.mxu0 %v3131
  %3571 = vmatpush1.bf16.msra.mxu0 %v3130
  %3572 = vmatprep.subr.bf16.mxu0 %v3147
  %3573 = vmatpush1.bf16.msra.mxu0 %v3146
  %3574 = vmatprep.subr.bf16.mxu0 %v3163
  %3575 = vmatpush1.bf16.msra.mxu0 %v3162
  %3576 = vmatprep.subr.bf16.mxu0 %v3179
  %3577 = vmatpush1.bf16.msra.mxu0 %v3178
  %3578 = vmatprep.subr.bf16.mxu0 %v3195
  %3579 = vmatpush1.bf16.msra.mxu0 %v3194
  %3580 = vmatprep.mubr.bf16.mxu0 %v2179
  %3581 = vmatmul.mubr.bf16.gmra.mrb[0].mxu0 %v2178
  %v3582 = vpop.f32.mrb[0].mxu0
  %v3583 = vadd.f32 %v1949, %v3582
  %v3584 = vpop.f32.mrb[0].mxu0
  %v3585 = vadd.f32 %v1951, %v3584
  %v3586 = vpop.f32.mrb[0].mxu0
  %v3587 = vadd.f32 %v1953, %v3586
  %v3588 = vpop.f32.mrb[0].mxu0
  %v3589 = vadd.f32 %v1955, %v3588
  %3590 = vdwg.mxu0
  %3591 = vmatprep.subr.bf16.mxu0 %v2957
  %3592 = vmatpush1.bf16.msra.mxu0 %v2956
  %3593 = vmatprep.subr.bf16.mxu0 %v2973
  %3594 = vmatpush1.bf16.msra.mxu0 %v2972
  %3595 = vmatprep.subr.bf16.mxu0 %v2989
  %3596 = vmatpush1.bf16.msra.mxu0 %v2988
  %3597 = vmatprep.subr.bf16.mxu0 %v3005
  %3598 = vmatpush1.bf16.msra.mxu0 %v3004
  %3599 = vmatprep.subr.bf16.mxu0 %v3021
  %3600 = vmatpush1.bf16.msra.mxu0 %v3020
  %3601 = vmatprep.subr.bf16.mxu0 %v3037
  %3602 = vmatpush1.bf16.msra.mxu0 %v3036
  %3603 = vmatprep.subr.bf16.mxu0 %v3053
  %3604 = vmatpush1.bf16.msra.mxu0 %v3052
  %3605 = vmatprep.subr.bf16.mxu0 %v3069
  %3606 = vmatpush1.bf16.msra.mxu0 %v3068
  %3607 = vmatprep.subr.bf16.mxu0 %v3085
  %3608 = vmatpush1.bf16.msra.mxu0 %v3084
  %3609 = vmatprep.subr.bf16.mxu0 %v3101
  %3610 = vmatpush1.bf16.msra.mxu0 %v3100
  %3611 = vmatprep.subr.bf16.mxu0 %v3117
  %3612 = vmatpush1.bf16.msra.mxu0 %v3116
  %3613 = vmatprep.subr.bf16.mxu0 %v3133
  %3614 = vmatpush1.bf16.msra.mxu0 %v3132
  %3615 = vmatprep.subr.bf16.mxu0 %v3149
  %3616 = vmatpush1.bf16.msra.mxu0 %v3148
  %3617 = vmatprep.subr.bf16.mxu0 %v3165
  %3618 = vmatpush1.bf16.msra.mxu0 %v3164
  %3619 = vmatprep.subr.bf16.mxu0 %v3181
  %3620 = vmatpush1.bf16.msra.mxu0 %v3180
  %3621 = vmatprep.subr.bf16.mxu0 %v3197
  %3622 = vmatpush1.bf16.msra.mxu0 %v3196
  %3623 = vmatprep.mubr.bf16.mxu0 %v2179
  %3624 = vmatmul.mubr.bf16.gmra.mrb[0].mxu0 %v2178
  %v3625 = vpop.f32.mrb[0].mxu0
  %v3626 = vadd.f32 %v1992, %v3625
  %v3627 = vpop.f32.mrb[0].mxu0
  %v3628 = vadd.f32 %v1994, %v3627
  %v3629 = vpop.f32.mrb[0].mxu0
  %v3630 = vadd.f32 %v1996, %v3629
  %v3631 = vpop.f32.mrb[0].mxu0
  %v3632 = vadd.f32 %v1998, %v3631
  %3633 = vdwg.mxu0
  %3634 = vmatprep.subr.bf16.mxu0 %v2959
  %3635 = vmatpush1.bf16.msra.mxu0 %v2958
  %3636 = vmatprep.subr.bf16.mxu0 %v2975
  %3637 = vmatpush1.bf16.msra.mxu0 %v2974
  %3638 = vmatprep.subr.bf16.mxu0 %v2991
  %3639 = vmatpush1.bf16.msra.mxu0 %v2990
  %3640 = vmatprep.subr.bf16.mxu0 %v3007
  %3641 = vmatpush1.bf16.msra.mxu0 %v3006
  %3642 = vmatprep.subr.bf16.mxu0 %v3023
  %3643 = vmatpush1.bf16.msra.mxu0 %v3022
  %3644 = vmatprep.subr.bf16.mxu0 %v3039
  %3645 = vmatpush1.bf16.msra.mxu0 %v3038
  %3646 = vmatprep.subr.bf16.mxu0 %v3055
  %3647 = vmatpush1.bf16.msra.mxu0 %v3054
  %3648 = vmatprep.subr.bf16.mxu0 %v3071
  %3649 = vmatpush1.bf16.msra.mxu0 %v3070
  %3650 = vmatprep.subr.bf16.mxu0 %v3087
  %3651 = vmatpush1.bf16.msra.mxu0 %v3086
  %3652 = vmatprep.subr.bf16.mxu0 %v3103
  %3653 = vmatpush1.bf16.msra.mxu0 %v3102
  %3654 = vmatprep.subr.bf16.mxu0 %v3119
  %3655 = vmatpush1.bf16.msra.mxu0 %v3118
  %3656 = vmatprep.subr.bf16.mxu0 %v3135
  %3657 = vmatpush1.bf16.msra.mxu0 %v3134
  %3658 = vmatprep.subr.bf16.mxu0 %v3151
  %3659 = vmatpush1.bf16.msra.mxu0 %v3150
  %3660 = vmatprep.subr.bf16.mxu0 %v3167
  %3661 = vmatpush1.bf16.msra.mxu0 %v3166
  %3662 = vmatprep.subr.bf16.mxu0 %v3183
  %3663 = vmatpush1.bf16.msra.mxu0 %v3182
  %3664 = vmatprep.subr.bf16.mxu0 %v3199
  %3665 = vmatpush1.bf16.msra.mxu0 %v3198
  %3666 = vmatprep.mubr.bf16.mxu0 %v2179
  %3667 = vmatmul.mubr.bf16.gmra.mrb[0].mxu0 %v2178
  %v3668 = vpop.f32.mrb[0].mxu0
  %v3669 = vadd.f32 %v2035, %v3668
  %v3670 = vpop.f32.mrb[0].mxu0
  %v3671 = vadd.f32 %v2037, %v3670
  %v3672 = vpop.f32.mrb[0].mxu0
  %v3673 = vadd.f32 %v2039, %v3672
  %v3674 = vpop.f32.mrb[0].mxu0
  %v3675 = vadd.f32 %v2041, %v3674
  %3676 = vdwg.mxu0
  %3677 = vmatprep.subr.bf16.mxu0 %v2961
  %3678 = vmatpush1.bf16.msra.mxu0 %v2960
  %3679 = vmatprep.subr.bf16.mxu0 %v2977
  %3680 = vmatpush1.bf16.msra.mxu0 %v2976
  %3681 = vmatprep.subr.bf16.mxu0 %v2993
  %3682 = vmatpush1.bf16.msra.mxu0 %v2992
  %3683 = vmatprep.subr.bf16.mxu0 %v3009
  %3684 = vmatpush1.bf16.msra.mxu0 %v3008
  %3685 = vmatprep.subr.bf16.mxu0 %v3025
  %3686 = vmatpush1.bf16.msra.mxu0 %v3024
  %3687 = vmatprep.subr.bf16.mxu0 %v3041
  %3688 = vmatpush1.bf16.msra.mxu0 %v3040
  %3689 = vmatprep.subr.bf16.mxu0 %v3057
  %3690 = vmatpush1.bf16.msra.mxu0 %v3056
  %3691 = vmatprep.subr.bf16.mxu0 %v3073
  %3692 = vmatpush1.bf16.msra.mxu0 %v3072
  %3693 = vmatprep.subr.bf16.mxu0 %v3089
  %3694 = vmatpush1.bf16.msra.mxu0 %v3088
  %3695 = vmatprep.subr.bf16.mxu0 %v3105
  %3696 = vmatpush1.bf16.msra.mxu0 %v3104
  %3697 = vmatprep.subr.bf16.mxu0 %v3121
  %3698 = vmatpush1.bf16.msra.mxu0 %v3120
  %3699 = vmatprep.subr.bf16.mxu0 %v3137
  %3700 = vmatpush1.bf16.msra.mxu0 %v3136
  %3701 = vmatprep.subr.bf16.mxu0 %v3153
  %3702 = vmatpush1.bf16.msra.mxu0 %v3152
  %3703 = vmatprep.subr.bf16.mxu0 %v3169
  %3704 = vmatpush1.bf16.msra.mxu0 %v3168
  %3705 = vmatprep.subr.bf16.mxu0 %v3185
  %3706 = vmatpush1.bf16.msra.mxu0 %v3184
  %3707 = vmatprep.subr.bf16.mxu0 %v3201
  %3708 = vmatpush1.bf16.msra.mxu0 %v3200
  %3709 = vmatprep.mubr.bf16.mxu0 %v2179
  %3710 = vmatmul.mubr.bf16.gmra.mrb[0].mxu0 %v2178
  %v3711 = vpop.f32.mrb[0].mxu0
  %v3712 = vadd.f32 %v2078, %v3711
  %v3713 = vpop.f32.mrb[0].mxu0
  %v3714 = vadd.f32 %v2080, %v3713
  %v3715 = vpop.f32.mrb[0].mxu0
  %v3716 = vadd.f32 %v2082, %v3715
  %v3717 = vpop.f32.mrb[0].mxu0
  %v3718 = vadd.f32 %v2084, %v3717
  %3719 = vdwg.mxu0
  %3720 = vmatprep.subr.bf16.mxu0 %v2963
  %3721 = vmatpush1.bf16.msra.mxu0 %v2962
  %3722 = vmatprep.subr.bf16.mxu0 %v2979
  %3723 = vmatpush1.bf16.msra.mxu0 %v2978
  %3724 = vmatprep.subr.bf16.mxu0 %v2995
  %3725 = vmatpush1.bf16.msra.mxu0 %v2994
  %3726 = vmatprep.subr.bf16.mxu0 %v3011
  %3727 = vmatpush1.bf16.msra.mxu0 %v3010
  %3728 = vmatprep.subr.bf16.mxu0 %v3027
  %3729 = vmatpush1.bf16.msra.mxu0 %v3026
  %3730 = vmatprep.subr.bf16.mxu0 %v3043
  %3731 = vmatpush1.bf16.msra.mxu0 %v3042
  %3732 = vmatprep.subr.bf16.mxu0 %v3059
  %3733 = vmatpush1.bf16.msra.mxu0 %v3058
  %3734 = vmatprep.subr.bf16.mxu0 %v3075
  %3735 = vmatpush1.bf16.msra.mxu0 %v3074
  %3736 = vmatprep.subr.bf16.mxu0 %v3091
  %3737 = vmatpush1.bf16.msra.mxu0 %v3090
  %3738 = vmatprep.subr.bf16.mxu0 %v3107
  %3739 = vmatpush1.bf16.msra.mxu0 %v3106
  %3740 = vmatprep.subr.bf16.mxu0 %v3123
  %3741 = vmatpush1.bf16.msra.mxu0 %v3122
  %3742 = vmatprep.subr.bf16.mxu0 %v3139
  %3743 = vmatpush1.bf16.msra.mxu0 %v3138
  %3744 = vmatprep.subr.bf16.mxu0 %v3155
  %3745 = vmatpush1.bf16.msra.mxu0 %v3154
  %3746 = vmatprep.subr.bf16.mxu0 %v3171
  %3747 = vmatpush1.bf16.msra.mxu0 %v3170
  %3748 = vmatprep.subr.bf16.mxu0 %v3187
  %3749 = vmatpush1.bf16.msra.mxu0 %v3186
  %3750 = vmatprep.subr.bf16.mxu0 %v3203
  %3751 = vmatpush1.bf16.msra.mxu0 %v3202
  %3752 = vmatprep.mubr.bf16.mxu0 %v2179
  %3753 = vmatmul.mubr.bf16.gmra.mrb[0].mxu0 %v2178
  %v3754 = vpop.f32.mrb[0].mxu0
  %v3755 = vadd.f32 %v2121, %v3754
  %v3756 = vpop.f32.mrb[0].mxu0
  %v3757 = vadd.f32 %v2123, %v3756
  %v3758 = vpop.f32.mrb[0].mxu0
  %v3759 = vadd.f32 %v2125, %v3758
  %v3760 = vpop.f32.mrb[0].mxu0
  %v3761 = vadd.f32 %v2127, %v3760
  %3762 = vdwg.mxu0
  %3763 = vmatprep.subr.bf16.mxu0 %v2965
  %3764 = vmatpush1.bf16.msra.mxu0 %v2964
  %3765 = vmatprep.subr.bf16.mxu0 %v2981
  %3766 = vmatpush1.bf16.msra.mxu0 %v2980
  %3767 = vmatprep.subr.bf16.mxu0 %v2997
  %3768 = vmatpush1.bf16.msra.mxu0 %v2996
  %3769 = vmatprep.subr.bf16.mxu0 %v3013
  %3770 = vmatpush1.bf16.msra.mxu0 %v3012
  %3771 = vmatprep.subr.bf16.mxu0 %v3029
  %3772 = vmatpush1.bf16.msra.mxu0 %v3028
  %3773 = vmatprep.subr.bf16.mxu0 %v3045
  %3774 = vmatpush1.bf16.msra.mxu0 %v3044
  %3775 = vmatprep.subr.bf16.mxu0 %v3061
  %3776 = vmatpush1.bf16.msra.mxu0 %v3060
  %3777 = vmatprep.subr.bf16.mxu0 %v3077
  %3778 = vmatpush1.bf16.msra.mxu0 %v3076
  %3779 = vmatprep.subr.bf16.mxu0 %v3093
  %3780 = vmatpush1.bf16.msra.mxu0 %v3092
  %3781 = vmatprep.subr.bf16.mxu0 %v3109
  %3782 = vmatpush1.bf16.msra.mxu0 %v3108
  %3783 = vmatprep.subr.bf16.mxu0 %v3125
  %3784 = vmatpush1.bf16.msra.mxu0 %v3124
  %3785 = vmatprep.subr.bf16.mxu0 %v3141
  %3786 = vmatpush1.bf16.msra.mxu0 %v3140
  %3787 = vmatprep.subr.bf16.mxu0 %v3157
  %3788 = vmatpush1.bf16.msra.mxu0 %v3156
  %3789 = vmatprep.subr.bf16.mxu0 %v3173
  %3790 = vmatpush1.bf16.msra.mxu0 %v3172
  %3791 = vmatprep.subr.bf16.mxu0 %v3189
  %3792 = vmatpush1.bf16.msra.mxu0 %v3188
  %3793 = vmatprep.subr.bf16.mxu0 %v3205
  %3794 = vmatpush1.bf16.msra.mxu0 %v3204
  %3795 = vmatprep.mubr.bf16.mxu0 %v2179
  %3796 = vmatmul.mubr.bf16.gmra.mrb[0].mxu0 %v2178
  %v3797 = vpop.f32.mrb[0].mxu0
  %v3798 = vadd.f32 %v2164, %v3797
  %v3799 = vpop.f32.mrb[0].mxu0
  %v3800 = vadd.f32 %v2166, %v3799
  %v3801 = vpop.f32.mrb[0].mxu0
  %v3802 = vadd.f32 %v2168, %v3801
  %v3803 = vpop.f32.mrb[0].mxu0
  %v3804 = vadd.f32 %v2170, %v3803
  %3805 = vdwg.mxu0
  %v3806 = vld [vmem:[%s4] sm:$0xff]
  %v3807 = vld [vmem:[%s4 + $0x8] sm:$0xff]
  %v3810 = vlaneseq
  %v3811 = vshrl.u32 %v3810, 7
  %v3812 = vsub.s32 0, %v3811
  %v3813 = vrot.slane %v3806, %v3812
  %v3814 = vlaneseq
  %v3815 = vshrl.u32 %v3814, 7
  %v3816 = vsub.s32 1, %v3815
  %v3817 = vrot.slane %v3806, %v3816
  %v3818 = vlaneseq
  %v3819 = vshrl.u32 %v3818, 7
  %v3820 = vsub.s32 2, %v3819
  %v3821 = vrot.slane %v3806, %v3820
  %v3822 = vlaneseq
  %v3823 = vshrl.u32 %v3822, 7
  %v3824 = vsub.s32 3, %v3823
  %v3825 = vrot.slane %v3806, %v3824
  %v3826 = vlaneseq
  %v3827 = vshrl.u32 %v3826, 7
  %v3828 = vsub.s32 4, %v3827
  %v3829 = vrot.slane %v3806, %v3828
  %v3830 = vlaneseq
  %v3831 = vshrl.u32 %v3830, 7
  %v3832 = vsub.s32 5, %v3831
  %v3833 = vrot.slane %v3806, %v3832
  %v3834 = vlaneseq
  %v3835 = vshrl.u32 %v3834, 7
  %v3836 = vsub.s32 6, %v3835
  %v3837 = vrot.slane %v3806, %v3836
  %v3838 = vlaneseq
  %v3839 = vshrl.u32 %v3838, 7
  %v3840 = vsub.s32 7, %v3839
  %v3841 = vrot.slane %v3806, %v3840
  %v3842 = vlaneseq
  %v3843 = vshrl.u32 %v3842, 7
  %v3844 = vsub.s32 0, %v3843
  %v3845 = vrot.slane %v3807, %v3844
  %v3846 = vlaneseq
  %v3847 = vshrl.u32 %v3846, 7
  %v3848 = vsub.s32 1, %v3847
  %v3849 = vrot.slane %v3807, %v3848
  %v3850 = vlaneseq
  %v3851 = vshrl.u32 %v3850, 7
  %v3852 = vsub.s32 2, %v3851
  %v3853 = vrot.slane %v3807, %v3852
  %v3854 = vlaneseq
  %v3855 = vshrl.u32 %v3854, 7
  %v3856 = vsub.s32 3, %v3855
  %v3857 = vrot.slane %v3807, %v3856
  %v3858 = vlaneseq
  %v3859 = vshrl.u32 %v3858, 7
  %v3860 = vsub.s32 4, %v3859
  %v3861 = vrot.slane %v3807, %v3860
  %v3862 = vlaneseq
  %v3863 = vshrl.u32 %v3862, 7
  %v3864 = vsub.s32 5, %v3863
  %v3865 = vrot.slane %v3807, %v3864
  %v3866 = vlaneseq
  %v3867 = vshrl.u32 %v3866, 7
  %v3868 = vsub.s32 6, %v3867
  %v3869 = vrot.slane %v3807, %v3868
  %v3870 = vlaneseq
  %v3871 = vshrl.u32 %v3870, 7
  %v3872 = vsub.s32 7, %v3871
  %v3873 = vrot.slane %v3807, %v3872
  %v3890 = vadd.f32 %v3497, %v3813
  %v3891 = vadd.f32 %v3499, %v3817
  %v3892 = vadd.f32 %v3540, %v3821
  %v3893 = vadd.f32 %v3542, %v3825
  %v3894 = vadd.f32 %v3583, %v3829
  %v3895 = vadd.f32 %v3585, %v3833
  %v3896 = vadd.f32 %v3626, %v3837
  %v3897 = vadd.f32 %v3628, %v3841
  %v3898 = vadd.f32 %v3669, %v3845
  %v3899 = vadd.f32 %v3671, %v3849
  %v3900 = vadd.f32 %v3712, %v3853
  %v3901 = vadd.f32 %v3714, %v3857
  %v3902 = vadd.f32 %v3755, %v3861
  %v3903 = vadd.f32 %v3757, %v3865
  %v3904 = vadd.f32 %v3798, %v3869
  %v3905 = vadd.f32 %v3800, %v3873
  %v3906 = vadd.f32 %v3501, %v3813
  %v3907 = vadd.f32 %v3503, %v3817
  %v3908 = vadd.f32 %v3544, %v3821
  %v3909 = vadd.f32 %v3546, %v3825
  %v3910 = vadd.f32 %v3587, %v3829
  %v3911 = vadd.f32 %v3589, %v3833
  %v3912 = vadd.f32 %v3630, %v3837
  %v3913 = vadd.f32 %v3632, %v3841
  %v3914 = vadd.f32 %v3673, %v3845
  %v3915 = vadd.f32 %v3675, %v3849
  %v3916 = vadd.f32 %v3716, %v3853
  %v3917 = vadd.f32 %v3718, %v3857
  %v3918 = vadd.f32 %v3759, %v3861
  %v3919 = vadd.f32 %v3761, %v3865
  %v3920 = vadd.f32 %v3802, %v3869
  %v3921 = vadd.f32 %v3804, %v3873
  %3922 = vst [vmem:[%s5] sm:$0xff] %v3890
  %3923 = vst [vmem:[%s5 + $0x8] sm:$0xff] %v3891
  %3924 = vst [vmem:[%s5 + $0x10] sm:$0xff] %v3892
  %3925 = vst [vmem:[%s5 + $0x18] sm:$0xff] %v3893
  %3926 = vst [vmem:[%s5 + $0x20] sm:$0xff] %v3894
  %3927 = vst [vmem:[%s5 + $0x28] sm:$0xff] %v3895
  %3928 = vst [vmem:[%s5 + $0x30] sm:$0xff] %v3896
  %3929 = vst [vmem:[%s5 + $0x38] sm:$0xff] %v3897
  %3930 = vst [vmem:[%s5 + $0x40] sm:$0xff] %v3906
  %3931 = vst [vmem:[%s5 + $0x48] sm:$0xff] %v3907
  %3932 = vst [vmem:[%s5 + $0x50] sm:$0xff] %v3908
  %3933 = vst [vmem:[%s5 + $0x58] sm:$0xff] %v3909
  %3934 = vst [vmem:[%s5 + $0x60] sm:$0xff] %v3910
  %3935 = vst [vmem:[%s5 + $0x68] sm:$0xff] %v3911
  %3936 = vst [vmem:[%s5 + $0x70] sm:$0xff] %v3912
  %3937 = vst [vmem:[%s5 + $0x78] sm:$0xff] %v3913
  %3938 = vst [vmem:[%s6] sm:$0xff] %v3898
  %3939 = vst [vmem:[%s6 + $0x8] sm:$0xff] %v3899
  %3940 = vst [vmem:[%s6 + $0x10] sm:$0xff] %v3900
  %3941 = vst [vmem:[%s6 + $0x18] sm:$0xff] %v3901
  %3942 = vst [vmem:[%s6 + $0x20] sm:$0xff] %v3902
  %3943 = vst [vmem:[%s6 + $0x28] sm:$0xff] %v3903
  %3944 = vst [vmem:[%s6 + $0x30] sm:$0xff] %v3904
  %3945 = vst [vmem:[%s6 + $0x38] sm:$0xff] %v3905
  %3946 = vst [vmem:[%s6 + $0x40] sm:$0xff] %v3914
  %3947 = vst [vmem:[%s6 + $0x48] sm:$0xff] %v3915
  %3948 = vst [vmem:[%s6 + $0x50] sm:$0xff] %v3916
  %3949 = vst [vmem:[%s6 + $0x58] sm:$0xff] %v3917
  %3950 = vst [vmem:[%s6 + $0x60] sm:$0xff] %v3918
  %3951 = vst [vmem:[%s6 + $0x68] sm:$0xff] %v3919
  %3952 = vst [vmem:[%s6 + $0x70] sm:$0xff] %v3920
  %3953 = vst [vmem:[%s6 + $0x78] sm:$0xff] %v3921
  // Predicated region
  $region22: #{acoustic_estimator_forward.9} parent=0 // pred_check
    _
  $region23: #{acoustic_estimator_forward.9} parent=0 // pred_check_branch
    %3955 = sbr.rel (0) target = $region25
  $region24: #{acoustic_estimator_forward.9} parent=0 // pred_region
    _
  $region25: #{acoustic_estimator_forward.9} parent=0 // pred_fallthru
    _
  // Predicated region
  $region26: #{acoustic_estimator_forward.9} parent=0 // pred_check
    _
  $region27: #{acoustic_estimator_forward.9} parent=0 // pred_check_branch
    %3957 = sbr.rel (0) target = $region29
  $region28: #{acoustic_estimator_forward.9} parent=0 // pred_region
    _
  $region29: #{acoustic_estimator_forward.9} parent=0 // pred_fallthru
    _
  // Predicated region
  $region30: #{acoustic_estimator_forward.9} parent=0 // pred_check
    _
  $region31: #{acoustic_estimator_forward.9} parent=0 // pred_check_branch
    %3959 = sbr.rel (0) target = $region33
  $region32: #{acoustic_estimator_forward.9} parent=0 // pred_region
    _
  $region33: #{acoustic_estimator_forward.9} parent=0 // pred_fallthru
    _
  // Predicated region
  $region34: #{acoustic_estimator_forward.9} parent=0 // pred_check
    _
  $region35: #{acoustic_estimator_forward.9} parent=0 // pred_check_branch
    %3961 = sbr.rel (0) target = $region37
  $region36: #{acoustic_estimator_forward.9} parent=0 // pred_region
    _
  $region37: #{acoustic_estimator_forward.9} parent=0 // pred_fallthru
    _

// kernel: acoustic_estimator_forward.7
$region0: #{acoustic_estimator_forward.7}
  #allocation0 [shape = 'u32[]', space=smem, size = 0x4, offset = 0x4, fixed_abs, tag = 'smem constant byte address 0x4 - core index']
  #allocation1 [shape = 'u32[144,128]{1,0:T(1,128)}', space=vmem, size = 0x12000, scoped, tag = 'internal scratch']
  %s0 = inlined_call_operand.vmem [shape: bf16[16,514], index: 0, kind: input, shape index: {}]
  %s1 = inlined_call_operand.hbm [shape: bf16[514,2048], index: 1, kind: input, shape index: {}]
  %s2 = inlined_call_operand.hbm [shape: f32[1,2048], index: 2, kind: input, shape index: {}]
  %s3 = inlined_call_operand.vmem [shape: f32[16,1024], index: 3, kind: output, shape index: {0}]
  %s4 = inlined_call_operand.vmem [shape: f32[16,1024], index: 4, kind: output, shape index: {1}]
  %5 = xla_tuple %s3, %s4
  %s6 = sld [smem:[#allocation0]]
  $region38: #{acoustic_estimator_forward.7} parent=0
    _
  %s8 = ssub.s32 1, %s6
  %s9 = scalar_select 0, %s8, %s6
  $region1: #{acoustic_estimator_forward.7} parent=0
    #allocation2 [shape = 'u8[2129920]{0}', space=vmem, size = 0x208000, scoped, tag = 'input window, operand 1, single buffered']
    #allocation3 [shape = 's32[1]{0}', space=sflag, size = 0x4, scoped, tag = 'scoped memory for acoustic_estimator_forward.7']
    #allocation4 [shape = 'u8[8192]{0}', space=vmem, size = 0x2000, scoped, tag = 'input window, operand 2, single buffered']
    #allocation5 [shape = 's32[1]{0}', space=sflag, size = 0x4, scoped, tag = 'scoped memory for acoustic_estimator_forward.7']
    %10 = vsyncpa [#allocation3], 0
    %11 = vsyncpa [#allocation5], 0
    // Predicated region
    $region2: #{acoustic_estimator_forward.7} parent=1 // pred_check
      _
    $region3: #{acoustic_estimator_forward.7} parent=1 // pred_check_branch
      %13 = sbr.rel (0) target = $region5
    $region4: #{acoustic_estimator_forward.7} parent=1 // pred_region
      _
    $region5: #{acoustic_estimator_forward.7} parent=1 // pred_fallthru
      _
    // Predicated region
    $region6: #{acoustic_estimator_forward.7} parent=1 // pred_check
      _
    $region7: #{acoustic_estimator_forward.7} parent=1 // pred_check_branch
      %15 = sbr.rel (0) target = $region9
    $region8: #{acoustic_estimator_forward.7} parent=1 // pred_region
      %s17 = ssub.s32 66560, 66560
      %18 = vsyncadd [#allocation3], %s17
      %s19 = sshll.u32 [#allocation2], 4
      %s20 = int_to_ptr.vmem [resolvable:$true] %s19
      %25 = dma.hbm_to_vmem [thread:$0]  %s1, 66560, %s20, [#allocation3], 1024, 1024, 64
    $region9: #{acoustic_estimator_forward.7} parent=1 // pred_fallthru
      _
    // Predicated region
    $region10: #{acoustic_estimator_forward.7} parent=1 // pred_check
      _
    $region11: #{acoustic_estimator_forward.7} parent=1 // pred_check_branch
      %27 = sbr.rel (0) target = $region13
    $region12: #{acoustic_estimator_forward.7} parent=1 // pred_region
      %s29 = ssub.s32 256, 256
      %30 = vsyncadd [#allocation5], %s29
      %s32 = sshll.u32 [#allocation4], 4
      %s33 = int_to_ptr.vmem [resolvable:$true] %s32
      %35 = dma.hbm_to_vmem [thread:$0]  %s2, 256, %s33, [#allocation5]
    $region13: #{acoustic_estimator_forward.7} parent=1 // pred_fallthru
      _
    // Predicated region
    $region14: #{acoustic_estimator_forward.7} parent=1 // pred_check
      _
    $region15: #{acoustic_estimator_forward.7} parent=1 // pred_check_branch
      %37 = sbr.rel (0) target = $region17
    $region16: #{acoustic_estimator_forward.7} parent=1 // pred_region
      %38 = dma.done [#allocation3], 66560
    $region17: #{acoustic_estimator_forward.7} parent=1 // pred_fallthru
      _
    // Predicated region
    $region18: #{acoustic_estimator_forward.7} parent=1 // pred_check
      _
    $region19: #{acoustic_estimator_forward.7} parent=1 // pred_check_branch
      %40 = sbr.rel (0) target = $region21
    $region20: #{acoustic_estimator_forward.7} parent=1 // pred_region
      %41 = dma.done [#allocation5], 256
    $region21: #{acoustic_estimator_forward.7} parent=1 // pred_fallthru
      _
    %v43 = vld [vmem:[%s0] sm:$0xff]
    %v44 = vld [vmem:[%s0 + $0x8] sm:$0xff]
    %v45 = vld [vmem:[%s0 + $0x10] sm:$0xf]
    %v46 = vld [vmem:[%s0 + $0x14] sm:$0xff]
    %v47 = vld [vmem:[%s0 + $0x1c] sm:$0xff]
    %v48 = vld [vmem:[%s0 + $0x24] sm:$0xf]
    %v49 = vld [vmem:[#allocation2] sm:$0xff]
    %v50 = vld [vmem:[#allocation2 + $0x8] sm:$0xff]
    %v51 = vld [vmem:[#allocation2 + $0x10] sm:$0xff]
    %v52 = vld [vmem:[#allocation2 + $0x18] sm:$0xff]
    %v53 = vld [vmem:[#allocation2 + $0x20] sm:$0xff]
    %v54 = vld [vmem:[#allocation2 + $0x28] sm:$0xff]
    %v55 = vld [vmem:[#allocation2 + $0x30] sm:$0xff]
    %v56 = vld [vmem:[#allocation2 + $0x38] sm:$0xff]
    %v57 = vld [vmem:[#allocation2 + $0x40] sm:$0xff]
    %v58 = vld [vmem:[#allocation2 + $0x48] sm:$0xff]
    %v59 = vld [vmem:[#allocation2 + $0x50] sm:$0xff]
    %v60 = vld [vmem:[#allocation2 + $0x58] sm:$0xff]
    %v61 = vld [vmem:[#allocation2 + $0x60] sm:$0xff]
    %v62 = vld [vmem:[#allocation2 + $0x68] sm:$0xff]
    %v63 = vld [vmem:[#allocation2 + $0x70] sm:$0xff]
    %v64 = vld [vmem:[#allocation2 + $0x78] sm:$0xff]
    %v65 = vld [vmem:[#allocation2 + $0x80] sm:$0xff]
    %v66 = vld [vmem:[#allocation2 + $0x88] sm:$0xff]
    %v67 = vld [vmem:[#allocation2 + $0x90] sm:$0xff]
    %v68 = vld [vmem:[#allocation2 + $0x98] sm:$0xff]
    %v69 = vld [vmem:[#allocation2 + $0xa0] sm:$0xff]
    %v70 = vld [vmem:[#allocation2 + $0xa8] sm:$0xff]
    %v71 = vld [vmem:[#allocation2 + $0xb0] sm:$0xff]
    %v72 = vld [vmem:[#allocation2 + $0xb8] sm:$0xff]
    %v73 = vld [vmem:[#allocation2 + $0xc0] sm:$0xff]
    %v74 = vld [vmem:[#allocation2 + $0xc8] sm:$0xff]
    %v75 = vld [vmem:[#allocation2 + $0xd0] sm:$0xff]
    %v76 = vld [vmem:[#allocation2 + $0xd8] sm:$0xff]
    %v77 = vld [vmem:[#allocation2 + $0xe0] sm:$0xff]
    %v78 = vld [vmem:[#allocation2 + $0xe8] sm:$0xff]
    %v79 = vld [vmem:[#allocation2 + $0xf0] sm:$0xff]
    %v80 = vld [vmem:[#allocation2 + $0xf8] sm:$0xff]
    %v81 = vld [vmem:[#allocation2 + $0x100] sm:$0xff]
    %v82 = vld [vmem:[#allocation2 + $0x108] sm:$0xff]
    %v83 = vld [vmem:[#allocation2 + $0x110] sm:$0xff]
    %v84 = vld [vmem:[#allocation2 + $0x118] sm:$0xff]
    %v85 = vld [vmem:[#allocation2 + $0x120] sm:$0xff]
    %v86 = vld [vmem:[#allocation2 + $0x128] sm:$0xff]
    %v87 = vld [vmem:[#allocation2 + $0x130] sm:$0xff]
    %v88 = vld [vmem:[#allocation2 + $0x138] sm:$0xff]
    %v89 = vld [vmem:[#allocation2 + $0x140] sm:$0xff]
    %v90 = vld [vmem:[#allocation2 + $0x148] sm:$0xff]
    %v91 = vld [vmem:[#allocation2 + $0x150] sm:$0xff]
    %v92 = vld [vmem:[#allocation2 + $0x158] sm:$0xff]
    %v93 = vld [vmem:[#allocation2 + $0x160] sm:$0xff]
    %v94 = vld [vmem:[#allocation2 + $0x168] sm:$0xff]
    %v95 = vld [vmem:[#allocation2 + $0x170] sm:$0xff]
    %v96 = vld [vmem:[#allocation2 + $0x178] sm:$0xff]
    %v97 = vld [vmem:[#allocation2 + $0x180] sm:$0xff]
    %v98 = vld [vmem:[#allocation2 + $0x188] sm:$0xff]
    %v99 = vld [vmem:[#allocation2 + $0x190] sm:$0xff]
    %v100 = vld [vmem:[#allocation2 + $0x198] sm:$0xff]
    %v101 = vld [vmem:[#allocation2 + $0x1a0] sm:$0xff]
    %v102 = vld [vmem:[#allocation2 + $0x1a8] sm:$0xff]
    %v103 = vld [vmem:[#allocation2 + $0x1b0] sm:$0xff]
    %v104 = vld [vmem:[#allocation2 + $0x1b8] sm:$0xff]
    %v105 = vld [vmem:[#allocation2 + $0x1c0] sm:$0xff]
    %v106 = vld [vmem:[#allocation2 + $0x1c8] sm:$0xff]
    %v107 = vld [vmem:[#allocation2 + $0x1d0] sm:$0xff]
    %v108 = vld [vmem:[#allocation2 + $0x1d8] sm:$0xff]
    %v109 = vld [vmem:[#allocation2 + $0x1e0] sm:$0xff]
    %v110 = vld [vmem:[#allocation2 + $0x1e8] sm:$0xff]
    %v111 = vld [vmem:[#allocation2 + $0x1f0] sm:$0xff]
    %v112 = vld [vmem:[#allocation2 + $0x1f8] sm:$0xff]
    %v113 = vld [vmem:[#allocation2 + $0x200] sm:$0xff]
    %v114 = vld [vmem:[#allocation2 + $0x208] sm:$0xff]
    %v115 = vld [vmem:[#allocation2 + $0x210] sm:$0xff]
    %v116 = vld [vmem:[#allocation2 + $0x218] sm:$0xff]
    %v117 = vld [vmem:[#allocation2 + $0x220] sm:$0xff]
    %v118 = vld [vmem:[#allocation2 + $0x228] sm:$0xff]
    %v119 = vld [vmem:[#allocation2 + $0x230] sm:$0xff]
    %v120 = vld [vmem:[#allocation2 + $0x238] sm:$0xff]
    %v121 = vld [vmem:[#allocation2 + $0x240] sm:$0xff]
    %v122 = vld [vmem:[#allocation2 + $0x248] sm:$0xff]
    %v123 = vld [vmem:[#allocation2 + $0x250] sm:$0xff]
    %v124 = vld [vmem:[#allocation2 + $0x258] sm:$0xff]
    %v125 = vld [vmem:[#allocation2 + $0x260] sm:$0xff]
    %v126 = vld [vmem:[#allocation2 + $0x268] sm:$0xff]
    %v127 = vld [vmem:[#allocation2 + $0x270] sm:$0xff]
    %v128 = vld [vmem:[#allocation2 + $0x278] sm:$0xff]
    %v129 = vld [vmem:[#allocation2 + $0x280] sm:$0xff]
    %v130 = vld [vmem:[#allocation2 + $0x288] sm:$0xff]
    %v131 = vld [vmem:[#allocation2 + $0x290] sm:$0xff]
    %v132 = vld [vmem:[#allocation2 + $0x298] sm:$0xff]
    %v133 = vld [vmem:[#allocation2 + $0x2a0] sm:$0xff]
    %v134 = vld [vmem:[#allocation2 + $0x2a8] sm:$0xff]
    %v135 = vld [vmem:[#allocation2 + $0x2b0] sm:$0xff]
    %v136 = vld [vmem:[#allocation2 + $0x2b8] sm:$0xff]
    %v137 = vld [vmem:[#allocation2 + $0x2c0] sm:$0xff]
    %v138 = vld [vmem:[#allocation2 + $0x2c8] sm:$0xff]
    %v139 = vld [vmem:[#allocation2 + $0x2d0] sm:$0xff]
    %v140 = vld [vmem:[#allocation2 + $0x2d8] sm:$0xff]
    %v141 = vld [vmem:[#allocation2 + $0x2e0] sm:$0xff]
    %v142 = vld [vmem:[#allocation2 + $0x2e8] sm:$0xff]
    %v143 = vld [vmem:[#allocation2 + $0x2f0] sm:$0xff]
    %v144 = vld [vmem:[#allocation2 + $0x2f8] sm:$0xff]
    %v145 = vld [vmem:[#allocation2 + $0x300] sm:$0xff]
    %v146 = vld [vmem:[#allocation2 + $0x308] sm:$0xff]
    %v147 = vld [vmem:[#allocation2 + $0x310] sm:$0xff]
    %v148 = vld [vmem:[#allocation2 + $0x318] sm:$0xff]
    %v149 = vld [vmem:[#allocation2 + $0x320] sm:$0xff]
    %v150 = vld [vmem:[#allocation2 + $0x328] sm:$0xff]
    %v151 = vld [vmem:[#allocation2 + $0x330] sm:$0xff]
    %v152 = vld [vmem:[#allocation2 + $0x338] sm:$0xff]
    %v153 = vld [vmem:[#allocation2 + $0x340] sm:$0xff]
    %v154 = vld [vmem:[#allocation2 + $0x348] sm:$0xff]
    %v155 = vld [vmem:[#allocation2 + $0x350] sm:$0xff]
    %v156 = vld [vmem:[#allocation2 + $0x358] sm:$0xff]
    %v157 = vld [vmem:[#allocation2 + $0x360] sm:$0xff]
    %v158 = vld [vmem:[#allocation2 + $0x368] sm:$0xff]
    %v159 = vld [vmem:[#allocation2 + $0x370] sm:$0xff]
    %v160 = vld [vmem:[#allocation2 + $0x378] sm:$0xff]
    %v161 = vld [vmem:[#allocation2 + $0x380] sm:$0xff]
    %v162 = vld [vmem:[#allocation2 + $0x388] sm:$0xff]
    %v163 = vld [vmem:[#allocation2 + $0x390] sm:$0xff]
    %v164 = vld [vmem:[#allocation2 + $0x398] sm:$0xff]
    %v165 = vld [vmem:[#allocation2 + $0x3a0] sm:$0xff]
    %v166 = vld [vmem:[#allocation2 + $0x3a8] sm:$0xff]
    %v167 = vld [vmem:[#allocation2 + $0x3b0] sm:$0xff]
    %v168 = vld [vmem:[#allocation2 + $0x3b8] sm:$0xff]
    %v169 = vld [vmem:[#allocation2 + $0x3c0] sm:$0xff]
    %v170 = vld [vmem:[#allocation2 + $0x3c8] sm:$0xff]
    %v171 = vld [vmem:[#allocation2 + $0x3d0] sm:$0xff]
    %v172 = vld [vmem:[#allocation2 + $0x3d8] sm:$0xff]
    %v173 = vld [vmem:[#allocation2 + $0x3e0] sm:$0xff]
    %v174 = vld [vmem:[#allocation2 + $0x3e8] sm:$0xff]
    %v175 = vld [vmem:[#allocation2 + $0x3f0] sm:$0xff]
    %v176 = vld [vmem:[#allocation2 + $0x3f8] sm:$0xff]
    %v177 = vld [vmem:[#allocation2 + $0x400] sm:$0xff]
    %v178 = vld [vmem:[#allocation2 + $0x408] sm:$0xff]
    %v179 = vld [vmem:[#allocation2 + $0x410] sm:$0xff]
    %v180 = vld [vmem:[#allocation2 + $0x418] sm:$0xff]
    %v181 = vld [vmem:[#allocation2 + $0x420] sm:$0xff]
    %v182 = vld [vmem:[#allocation2 + $0x428] sm:$0xff]
    %v183 = vld [vmem:[#allocation2 + $0x430] sm:$0xff]
    %v184 = vld [vmem:[#allocation2 + $0x438] sm:$0xff]
    %v185 = vld [vmem:[#allocation2 + $0x440] sm:$0xff]
    %v186 = vld [vmem:[#allocation2 + $0x448] sm:$0xff]
    %v187 = vld [vmem:[#allocation2 + $0x450] sm:$0xff]
    %v188 = vld [vmem:[#allocation2 + $0x458] sm:$0xff]
    %v189 = vld [vmem:[#allocation2 + $0x460] sm:$0xff]
    %v190 = vld [vmem:[#allocation2 + $0x468] sm:$0xff]
    %v191 = vld [vmem:[#allocation2 + $0x470] sm:$0xff]
    %v192 = vld [vmem:[#allocation2 + $0x478] sm:$0xff]
    %v193 = vld [vmem:[#allocation2 + $0x480] sm:$0xff]
    %v194 = vld [vmem:[#allocation2 + $0x488] sm:$0xff]
    %v195 = vld [vmem:[#allocation2 + $0x490] sm:$0xff]
    %v196 = vld [vmem:[#allocation2 + $0x498] sm:$0xff]
    %v197 = vld [vmem:[#allocation2 + $0x4a0] sm:$0xff]
    %v198 = vld [vmem:[#allocation2 + $0x4a8] sm:$0xff]
    %v199 = vld [vmem:[#allocation2 + $0x4b0] sm:$0xff]
    %v200 = vld [vmem:[#allocation2 + $0x4b8] sm:$0xff]
    %v201 = vld [vmem:[#allocation2 + $0x4c0] sm:$0xff]
    %v202 = vld [vmem:[#allocation2 + $0x4c8] sm:$0xff]
    %v203 = vld [vmem:[#allocation2 + $0x4d0] sm:$0xff]
    %v204 = vld [vmem:[#allocation2 + $0x4d8] sm:$0xff]
    %v205 = vld [vmem:[#allocation2 + $0x4e0] sm:$0xff]
    %v206 = vld [vmem:[#allocation2 + $0x4e8] sm:$0xff]
    %v207 = vld [vmem:[#allocation2 + $0x4f0] sm:$0xff]
    %v208 = vld [vmem:[#allocation2 + $0x4f8] sm:$0xff]
    %v209 = vld [vmem:[#allocation2 + $0x500] sm:$0xff]
    %v210 = vld [vmem:[#allocation2 + $0x508] sm:$0xff]
    %v211 = vld [vmem:[#allocation2 + $0x510] sm:$0xff]
    %v212 = vld [vmem:[#allocation2 + $0x518] sm:$0xff]
    %v213 = vld [vmem:[#allocation2 + $0x520] sm:$0xff]
    %v214 = vld [vmem:[#allocation2 + $0x528] sm:$0xff]
    %v215 = vld [vmem:[#allocation2 + $0x530] sm:$0xff]
    %v216 = vld [vmem:[#allocation2 + $0x538] sm:$0xff]
    %v217 = vld [vmem:[#allocation2 + $0x540] sm:$0xff]
    %v218 = vld [vmem:[#allocation2 + $0x548] sm:$0xff]
    %v219 = vld [vmem:[#allocation2 + $0x550] sm:$0xff]
    %v220 = vld [vmem:[#allocation2 + $0x558] sm:$0xff]
    %v221 = vld [vmem:[#allocation2 + $0x560] sm:$0xff]
    %v222 = vld [vmem:[#allocation2 + $0x568] sm:$0xff]
    %v223 = vld [vmem:[#allocation2 + $0x570] sm:$0xff]
    %v224 = vld [vmem:[#allocation2 + $0x578] sm:$0xff]
    %v225 = vld [vmem:[#allocation2 + $0x580] sm:$0xff]
    %v226 = vld [vmem:[#allocation2 + $0x588] sm:$0xff]
    %v227 = vld [vmem:[#allocation2 + $0x590] sm:$0xff]
    %v228 = vld [vmem:[#allocation2 + $0x598] sm:$0xff]
    %v229 = vld [vmem:[#allocation2 + $0x5a0] sm:$0xff]
    %v230 = vld [vmem:[#allocation2 + $0x5a8] sm:$0xff]
    %v231 = vld [vmem:[#allocation2 + $0x5b0] sm:$0xff]
    %v232 = vld [vmem:[#allocation2 + $0x5b8] sm:$0xff]
    %v233 = vld [vmem:[#allocation2 + $0x5c0] sm:$0xff]
    %v234 = vld [vmem:[#allocation2 + $0x5c8] sm:$0xff]
    %v235 = vld [vmem:[#allocation2 + $0x5d0] sm:$0xff]
    %v236 = vld [vmem:[#allocation2 + $0x5d8] sm:$0xff]
    %v237 = vld [vmem:[#allocation2 + $0x5e0] sm:$0xff]
    %v238 = vld [vmem:[#allocation2 + $0x5e8] sm:$0xff]
    %v239 = vld [vmem:[#allocation2 + $0x5f0] sm:$0xff]
    %v240 = vld [vmem:[#allocation2 + $0x5f8] sm:$0xff]
    %v241 = vld [vmem:[#allocation2 + $0x600] sm:$0xff]
    %v242 = vld [vmem:[#allocation2 + $0x608] sm:$0xff]
    %v243 = vld [vmem:[#allocation2 + $0x610] sm:$0xff]
    %v244 = vld [vmem:[#allocation2 + $0x618] sm:$0xff]
    %v245 = vld [vmem:[#allocation2 + $0x620] sm:$0xff]
    %v246 = vld [vmem:[#allocation2 + $0x628] sm:$0xff]
    %v247 = vld [vmem:[#allocation2 + $0x630] sm:$0xff]
    %v248 = vld [vmem:[#allocation2 + $0x638] sm:$0xff]
    %v249 = vld [vmem:[#allocation2 + $0x640] sm:$0xff]
    %v250 = vld [vmem:[#allocation2 + $0x648] sm:$0xff]
    %v251 = vld [vmem:[#allocation2 + $0x650] sm:$0xff]
    %v252 = vld [vmem:[#allocation2 + $0x658] sm:$0xff]
    %v253 = vld [vmem:[#allocation2 + $0x660] sm:$0xff]
    %v254 = vld [vmem:[#allocation2 + $0x668] sm:$0xff]
    %v255 = vld [vmem:[#allocation2 + $0x670] sm:$0xff]
    %v256 = vld [vmem:[#allocation2 + $0x678] sm:$0xff]
    %v257 = vld [vmem:[#allocation2 + $0x680] sm:$0xff]
    %v258 = vld [vmem:[#allocation2 + $0x688] sm:$0xff]
    %v259 = vld [vmem:[#allocation2 + $0x690] sm:$0xff]
    %v260 = vld [vmem:[#allocation2 + $0x698] sm:$0xff]
    %v261 = vld [vmem:[#allocation2 + $0x6a0] sm:$0xff]
    %v262 = vld [vmem:[#allocation2 + $0x6a8] sm:$0xff]
    %v263 = vld [vmem:[#allocation2 + $0x6b0] sm:$0xff]
    %v264 = vld [vmem:[#allocation2 + $0x6b8] sm:$0xff]
    %v265 = vld [vmem:[#allocation2 + $0x6c0] sm:$0xff]
    %v266 = vld [vmem:[#allocation2 + $0x6c8] sm:$0xff]
    %v267 = vld [vmem:[#allocation2 + $0x6d0] sm:$0xff]
    %v268 = vld [vmem:[#allocation2 + $0x6d8] sm:$0xff]
    %v269 = vld [vmem:[#allocation2 + $0x6e0] sm:$0xff]
    %v270 = vld [vmem:[#allocation2 + $0x6e8] sm:$0xff]
    %v271 = vld [vmem:[#allocation2 + $0x6f0] sm:$0xff]
    %v272 = vld [vmem:[#allocation2 + $0x6f8] sm:$0xff]
    %v273 = vld [vmem:[#allocation2 + $0x700] sm:$0xff]
    %v274 = vld [vmem:[#allocation2 + $0x708] sm:$0xff]
    %v275 = vld [vmem:[#allocation2 + $0x710] sm:$0xff]
    %v276 = vld [vmem:[#allocation2 + $0x718] sm:$0xff]
    %v277 = vld [vmem:[#allocation2 + $0x720] sm:$0xff]
    %v278 = vld [vmem:[#allocation2 + $0x728] sm:$0xff]
    %v279 = vld [vmem:[#allocation2 + $0x730] sm:$0xff]
    %v280 = vld [vmem:[#allocation2 + $0x738] sm:$0xff]
    %v281 = vld [vmem:[#allocation2 + $0x740] sm:$0xff]
    %v282 = vld [vmem:[#allocation2 + $0x748] sm:$0xff]
    %v283 = vld [vmem:[#allocation2 + $0x750] sm:$0xff]
    %v284 = vld [vmem:[#allocation2 + $0x758] sm:$0xff]
    %v285 = vld [vmem:[#allocation2 + $0x760] sm:$0xff]
    %v286 = vld [vmem:[#allocation2 + $0x768] sm:$0xff]
    %v287 = vld [vmem:[#allocation2 + $0x770] sm:$0xff]
    %v288 = vld [vmem:[#allocation2 + $0x778] sm:$0xff]
    %v289 = vld [vmem:[#allocation2 + $0x780] sm:$0xff]
    %v290 = vld [vmem:[#allocation2 + $0x788] sm:$0xff]
    %v291 = vld [vmem:[#allocation2 + $0x790] sm:$0xff]
    %v292 = vld [vmem:[#allocation2 + $0x798] sm:$0xff]
    %v293 = vld [vmem:[#allocation2 + $0x7a0] sm:$0xff]
    %v294 = vld [vmem:[#allocation2 + $0x7a8] sm:$0xff]
    %v295 = vld [vmem:[#allocation2 + $0x7b0] sm:$0xff]
    %v296 = vld [vmem:[#allocation2 + $0x7b8] sm:$0xff]
    %v297 = vld [vmem:[#allocation2 + $0x7c0] sm:$0xff]
    %v298 = vld [vmem:[#allocation2 + $0x7c8] sm:$0xff]
    %v299 = vld [vmem:[#allocation2 + $0x7d0] sm:$0xff]
    %v300 = vld [vmem:[#allocation2 + $0x7d8] sm:$0xff]
    %v301 = vld [vmem:[#allocation2 + $0x7e0] sm:$0xff]
    %v302 = vld [vmem:[#allocation2 + $0x7e8] sm:$0xff]
    %v303 = vld [vmem:[#allocation2 + $0x7f0] sm:$0xff]
    %v304 = vld [vmem:[#allocation2 + $0x7f8] sm:$0xff]
    %v305 = vld [vmem:[#allocation2 + $0x800] sm:$0xff]
    %v306 = vld [vmem:[#allocation2 + $0x808] sm:$0xff]
    %v307 = vld [vmem:[#allocation2 + $0x810] sm:$0xff]
    %v308 = vld [vmem:[#allocation2 + $0x818] sm:$0xff]
    %v309 = vld [vmem:[#allocation2 + $0x820] sm:$0xff]
    %v310 = vld [vmem:[#allocation2 + $0x828] sm:$0xff]
    %v311 = vld [vmem:[#allocation2 + $0x830] sm:$0xff]
    %v312 = vld [vmem:[#allocation2 + $0x838] sm:$0xff]
    %v313 = vld [vmem:[#allocation2 + $0x840] sm:$0xff]
    %v314 = vld [vmem:[#allocation2 + $0x848] sm:$0xff]
    %v315 = vld [vmem:[#allocation2 + $0x850] sm:$0xff]
    %v316 = vld [vmem:[#allocation2 + $0x858] sm:$0xff]
    %v317 = vld [vmem:[#allocation2 + $0x860] sm:$0xff]
    %v318 = vld [vmem:[#allocation2 + $0x868] sm:$0xff]
    %v319 = vld [vmem:[#allocation2 + $0x870] sm:$0xff]
    %v320 = vld [vmem:[#allocation2 + $0x878] sm:$0xff]
    %v321 = vld [vmem:[#allocation2 + $0x880] sm:$0xff]
    %v322 = vld [vmem:[#allocation2 + $0x888] sm:$0xff]
    %v323 = vld [vmem:[#allocation2 + $0x890] sm:$0xff]
    %v324 = vld [vmem:[#allocation2 + $0x898] sm:$0xff]
    %v325 = vld [vmem:[#allocation2 + $0x8a0] sm:$0xff]
    %v326 = vld [vmem:[#allocation2 + $0x8a8] sm:$0xff]
    %v327 = vld [vmem:[#allocation2 + $0x8b0] sm:$0xff]
    %v328 = vld [vmem:[#allocation2 + $0x8b8] sm:$0xff]
    %v329 = vld [vmem:[#allocation2 + $0x8c0] sm:$0xff]
    %v330 = vld [vmem:[#allocation2 + $0x8c8] sm:$0xff]
    %v331 = vld [vmem:[#allocation2 + $0x8d0] sm:$0xff]
    %v332 = vld [vmem:[#allocation2 + $0x8d8] sm:$0xff]
    %v333 = vld [vmem:[#allocation2 + $0x8e0] sm:$0xff]
    %v334 = vld [vmem:[#allocation2 + $0x8e8] sm:$0xff]
    %v335 = vld [vmem:[#allocation2 + $0x8f0] sm:$0xff]
    %v336 = vld [vmem:[#allocation2 + $0x8f8] sm:$0xff]
    %v337 = vld [vmem:[#allocation2 + $0x900] sm:$0xff]
    %v338 = vld [vmem:[#allocation2 + $0x908] sm:$0xff]
    %v339 = vld [vmem:[#allocation2 + $0x910] sm:$0xff]
    %v340 = vld [vmem:[#allocation2 + $0x918] sm:$0xff]
    %v341 = vld [vmem:[#allocation2 + $0x920] sm:$0xff]
    %v342 = vld [vmem:[#allocation2 + $0x928] sm:$0xff]
    %v343 = vld [vmem:[#allocation2 + $0x930] sm:$0xff]
    %v344 = vld [vmem:[#allocation2 + $0x938] sm:$0xff]
    %v345 = vld [vmem:[#allocation2 + $0x940] sm:$0xff]
    %v346 = vld [vmem:[#allocation2 + $0x948] sm:$0xff]
    %v347 = vld [vmem:[#allocation2 + $0x950] sm:$0xff]
    %v348 = vld [vmem:[#allocation2 + $0x958] sm:$0xff]
    %v349 = vld [vmem:[#allocation2 + $0x960] sm:$0xff]
    %v350 = vld [vmem:[#allocation2 + $0x968] sm:$0xff]
    %v351 = vld [vmem:[#allocation2 + $0x970] sm:$0xff]
    %v352 = vld [vmem:[#allocation2 + $0x978] sm:$0xff]
    %v353 = vld [vmem:[#allocation2 + $0x980] sm:$0xff]
    %v354 = vld [vmem:[#allocation2 + $0x988] sm:$0xff]
    %v355 = vld [vmem:[#allocation2 + $0x990] sm:$0xff]
    %v356 = vld [vmem:[#allocation2 + $0x998] sm:$0xff]
    %v357 = vld [vmem:[#allocation2 + $0x9a0] sm:$0xff]
    %v358 = vld [vmem:[#allocation2 + $0x9a8] sm:$0xff]
    %v359 = vld [vmem:[#allocation2 + $0x9b0] sm:$0xff]
    %v360 = vld [vmem:[#allocation2 + $0x9b8] sm:$0xff]
    %v361 = vld [vmem:[#allocation2 + $0x9c0] sm:$0xff]
    %v362 = vld [vmem:[#allocation2 + $0x9c8] sm:$0xff]
    %v363 = vld [vmem:[#allocation2 + $0x9d0] sm:$0xff]
    %v364 = vld [vmem:[#allocation2 + $0x9d8] sm:$0xff]
    %v365 = vld [vmem:[#allocation2 + $0x9e0] sm:$0xff]
    %v366 = vld [vmem:[#allocation2 + $0x9e8] sm:$0xff]
    %v367 = vld [vmem:[#allocation2 + $0x9f0] sm:$0xff]
    %v368 = vld [vmem:[#allocation2 + $0x9f8] sm:$0xff]
    %v369 = vld [vmem:[#allocation2 + $0xa00] sm:$0xff]
    %v370 = vld [vmem:[#allocation2 + $0xa08] sm:$0xff]
    %v371 = vld [vmem:[#allocation2 + $0xa10] sm:$0xff]
    %v372 = vld [vmem:[#allocation2 + $0xa18] sm:$0xff]
    %v373 = vld [vmem:[#allocation2 + $0xa20] sm:$0xff]
    %v374 = vld [vmem:[#allocation2 + $0xa28] sm:$0xff]
    %v375 = vld [vmem:[#allocation2 + $0xa30] sm:$0xff]
    %v376 = vld [vmem:[#allocation2 + $0xa38] sm:$0xff]
    %v377 = vld [vmem:[#allocation2 + $0xa40] sm:$0xff]
    %v378 = vld [vmem:[#allocation2 + $0xa48] sm:$0xff]
    %v379 = vld [vmem:[#allocation2 + $0xa50] sm:$0xff]
    %v380 = vld [vmem:[#allocation2 + $0xa58] sm:$0xff]
    %v381 = vld [vmem:[#allocation2 + $0xa60] sm:$0xff]
    %v382 = vld [vmem:[#allocation2 + $0xa68] sm:$0xff]
    %v383 = vld [vmem:[#allocation2 + $0xa70] sm:$0xff]
    %v384 = vld [vmem:[#allocation2 + $0xa78] sm:$0xff]
    %v385 = vld [vmem:[#allocation2 + $0xa80] sm:$0xff]
    %v386 = vld [vmem:[#allocation2 + $0xa88] sm:$0xff]
    %v387 = vld [vmem:[#allocation2 + $0xa90] sm:$0xff]
    %v388 = vld [vmem:[#allocation2 + $0xa98] sm:$0xff]
    %v389 = vld [vmem:[#allocation2 + $0xaa0] sm:$0xff]
    %v390 = vld [vmem:[#allocation2 + $0xaa8] sm:$0xff]
    %v391 = vld [vmem:[#allocation2 + $0xab0] sm:$0xff]
    %v392 = vld [vmem:[#allocation2 + $0xab8] sm:$0xff]
    %v393 = vld [vmem:[#allocation2 + $0xac0] sm:$0xff]
    %v394 = vld [vmem:[#allocation2 + $0xac8] sm:$0xff]
    %v395 = vld [vmem:[#allocation2 + $0xad0] sm:$0xff]
    %v396 = vld [vmem:[#allocation2 + $0xad8] sm:$0xff]
    %v397 = vld [vmem:[#allocation2 + $0xae0] sm:$0xff]
    %v398 = vld [vmem:[#allocation2 + $0xae8] sm:$0xff]
    %v399 = vld [vmem:[#allocation2 + $0xaf0] sm:$0xff]
    %v400 = vld [vmem:[#allocation2 + $0xaf8] sm:$0xff]
    %v401 = vld [vmem:[#allocation2 + $0xb00] sm:$0xff]
    %v402 = vld [vmem:[#allocation2 + $0xb08] sm:$0xff]
    %v403 = vld [vmem:[#allocation2 + $0xb10] sm:$0xff]
    %v404 = vld [vmem:[#allocation2 + $0xb18] sm:$0xff]
    %v405 = vld [vmem:[#allocation2 + $0xb20] sm:$0xff]
    %v406 = vld [vmem:[#allocation2 + $0xb28] sm:$0xff]
    %v407 = vld [vmem:[#allocation2 + $0xb30] sm:$0xff]
    %v408 = vld [vmem:[#allocation2 + $0xb38] sm:$0xff]
    %v409 = vld [vmem:[#allocation2 + $0xb40] sm:$0xff]
    %v410 = vld [vmem:[#allocation2 + $0xb48] sm:$0xff]
    %v411 = vld [vmem:[#allocation2 + $0xb50] sm:$0xff]
    %v412 = vld [vmem:[#allocation2 + $0xb58] sm:$0xff]
    %v413 = vld [vmem:[#allocation2 + $0xb60] sm:$0xff]
    %v414 = vld [vmem:[#allocation2 + $0xb68] sm:$0xff]
    %v415 = vld [vmem:[#allocation2 + $0xb70] sm:$0xff]
    %v416 = vld [vmem:[#allocation2 + $0xb78] sm:$0xff]
    %v417 = vld [vmem:[#allocation2 + $0xb80] sm:$0xff]
    %v418 = vld [vmem:[#allocation2 + $0xb88] sm:$0xff]
    %v419 = vld [vmem:[#allocation2 + $0xb90] sm:$0xff]
    %v420 = vld [vmem:[#allocation2 + $0xb98] sm:$0xff]
    %v421 = vld [vmem:[#allocation2 + $0xba0] sm:$0xff]
    %v422 = vld [vmem:[#allocation2 + $0xba8] sm:$0xff]
    %v423 = vld [vmem:[#allocation2 + $0xbb0] sm:$0xff]
    %v424 = vld [vmem:[#allocation2 + $0xbb8] sm:$0xff]
    %v425 = vld [vmem:[#allocation2 + $0xbc0] sm:$0xff]
    %v426 = vld [vmem:[#allocation2 + $0xbc8] sm:$0xff]
    %v427 = vld [vmem:[#allocation2 + $0xbd0] sm:$0xff]
    %v428 = vld [vmem:[#allocation2 + $0xbd8] sm:$0xff]
    %v429 = vld [vmem:[#allocation2 + $0xbe0] sm:$0xff]
    %v430 = vld [vmem:[#allocation2 + $0xbe8] sm:$0xff]
    %v431 = vld [vmem:[#allocation2 + $0xbf0] sm:$0xff]
    %v432 = vld [vmem:[#allocation2 + $0xbf8] sm:$0xff]
    %v433 = vld [vmem:[#allocation2 + $0xc00] sm:$0xff]
    %v434 = vld [vmem:[#allocation2 + $0xc08] sm:$0xff]
    %v435 = vld [vmem:[#allocation2 + $0xc10] sm:$0xff]
    %v436 = vld [vmem:[#allocation2 + $0xc18] sm:$0xff]
    %v437 = vld [vmem:[#allocation2 + $0xc20] sm:$0xff]
    %v438 = vld [vmem:[#allocation2 + $0xc28] sm:$0xff]
    %v439 = vld [vmem:[#allocation2 + $0xc30] sm:$0xff]
    %v440 = vld [vmem:[#allocation2 + $0xc38] sm:$0xff]
    %v441 = vld [vmem:[#allocation2 + $0xc40] sm:$0xff]
    %v442 = vld [vmem:[#allocation2 + $0xc48] sm:$0xff]
    %v443 = vld [vmem:[#allocation2 + $0xc50] sm:$0xff]
    %v444 = vld [vmem:[#allocation2 + $0xc58] sm:$0xff]
    %v445 = vld [vmem:[#allocation2 + $0xc60] sm:$0xff]
    %v446 = vld [vmem:[#allocation2 + $0xc68] sm:$0xff]
    %v447 = vld [vmem:[#allocation2 + $0xc70] sm:$0xff]
    %v448 = vld [vmem:[#allocation2 + $0xc78] sm:$0xff]
    %v449 = vld [vmem:[#allocation2 + $0xc80] sm:$0xff]
    %v450 = vld [vmem:[#allocation2 + $0xc88] sm:$0xff]
    %v451 = vld [vmem:[#allocation2 + $0xc90] sm:$0xff]
    %v452 = vld [vmem:[#allocation2 + $0xc98] sm:$0xff]
    %v453 = vld [vmem:[#allocation2 + $0xca0] sm:$0xff]
    %v454 = vld [vmem:[#allocation2 + $0xca8] sm:$0xff]
    %v455 = vld [vmem:[#allocation2 + $0xcb0] sm:$0xff]
    %v456 = vld [vmem:[#allocation2 + $0xcb8] sm:$0xff]
    %v457 = vld [vmem:[#allocation2 + $0xcc0] sm:$0xff]
    %v458 = vld [vmem:[#allocation2 + $0xcc8] sm:$0xff]
    %v459 = vld [vmem:[#allocation2 + $0xcd0] sm:$0xff]
    %v460 = vld [vmem:[#allocation2 + $0xcd8] sm:$0xff]
    %v461 = vld [vmem:[#allocation2 + $0xce0] sm:$0xff]
    %v462 = vld [vmem:[#allocation2 + $0xce8] sm:$0xff]
    %v463 = vld [vmem:[#allocation2 + $0xcf0] sm:$0xff]
    %v464 = vld [vmem:[#allocation2 + $0xcf8] sm:$0xff]
    %v465 = vld [vmem:[#allocation2 + $0xd00] sm:$0xff]
    %v466 = vld [vmem:[#allocation2 + $0xd08] sm:$0xff]
    %v467 = vld [vmem:[#allocation2 + $0xd10] sm:$0xff]
    %v468 = vld [vmem:[#allocation2 + $0xd18] sm:$0xff]
    %v469 = vld [vmem:[#allocation2 + $0xd20] sm:$0xff]
    %v470 = vld [vmem:[#allocation2 + $0xd28] sm:$0xff]
    %v471 = vld [vmem:[#allocation2 + $0xd30] sm:$0xff]
    %v472 = vld [vmem:[#allocation2 + $0xd38] sm:$0xff]
    %v473 = vld [vmem:[#allocation2 + $0xd40] sm:$0xff]
    %v474 = vld [vmem:[#allocation2 + $0xd48] sm:$0xff]
    %v475 = vld [vmem:[#allocation2 + $0xd50] sm:$0xff]
    %v476 = vld [vmem:[#allocation2 + $0xd58] sm:$0xff]
    %v477 = vld [vmem:[#allocation2 + $0xd60] sm:$0xff]
    %v478 = vld [vmem:[#allocation2 + $0xd68] sm:$0xff]
    %v479 = vld [vmem:[#allocation2 + $0xd70] sm:$0xff]
    %v480 = vld [vmem:[#allocation2 + $0xd78] sm:$0xff]
    %v481 = vld [vmem:[#allocation2 + $0xd80] sm:$0xff]
    %v482 = vld [vmem:[#allocation2 + $0xd88] sm:$0xff]
    %v483 = vld [vmem:[#allocation2 + $0xd90] sm:$0xff]
    %v484 = vld [vmem:[#allocation2 + $0xd98] sm:$0xff]
    %v485 = vld [vmem:[#allocation2 + $0xda0] sm:$0xff]
    %v486 = vld [vmem:[#allocation2 + $0xda8] sm:$0xff]
    %v487 = vld [vmem:[#allocation2 + $0xdb0] sm:$0xff]
    %v488 = vld [vmem:[#allocation2 + $0xdb8] sm:$0xff]
    %v489 = vld [vmem:[#allocation2 + $0xdc0] sm:$0xff]
    %v490 = vld [vmem:[#allocation2 + $0xdc8] sm:$0xff]
    %v491 = vld [vmem:[#allocation2 + $0xdd0] sm:$0xff]
    %v492 = vld [vmem:[#allocation2 + $0xdd8] sm:$0xff]
    %v493 = vld [vmem:[#allocation2 + $0xde0] sm:$0xff]
    %v494 = vld [vmem:[#allocation2 + $0xde8] sm:$0xff]
    %v495 = vld [vmem:[#allocation2 + $0xdf0] sm:$0xff]
    %v496 = vld [vmem:[#allocation2 + $0xdf8] sm:$0xff]
    %v497 = vld [vmem:[#allocation2 + $0xe00] sm:$0xff]
    %v498 = vld [vmem:[#allocation2 + $0xe08] sm:$0xff]
    %v499 = vld [vmem:[#allocation2 + $0xe10] sm:$0xff]
    %v500 = vld [vmem:[#allocation2 + $0xe18] sm:$0xff]
    %v501 = vld [vmem:[#allocation2 + $0xe20] sm:$0xff]
    %v502 = vld [vmem:[#allocation2 + $0xe28] sm:$0xff]
    %v503 = vld [vmem:[#allocation2 + $0xe30] sm:$0xff]
    %v504 = vld [vmem:[#allocation2 + $0xe38] sm:$0xff]
    %v505 = vld [vmem:[#allocation2 + $0xe40] sm:$0xff]
    %v506 = vld [vmem:[#allocation2 + $0xe48] sm:$0xff]
    %v507 = vld [vmem:[#allocation2 + $0xe50] sm:$0xff]
    %v508 = vld [vmem:[#allocation2 + $0xe58] sm:$0xff]
    %v509 = vld [vmem:[#allocation2 + $0xe60] sm:$0xff]
    %v510 = vld [vmem:[#allocation2 + $0xe68] sm:$0xff]
    %v511 = vld [vmem:[#allocation2 + $0xe70] sm:$0xff]
    %v512 = vld [vmem:[#allocation2 + $0xe78] sm:$0xff]
    %v513 = vld [vmem:[#allocation2 + $0xe80] sm:$0xff]
    %v514 = vld [vmem:[#allocation2 + $0xe88] sm:$0xff]
    %v515 = vld [vmem:[#allocation2 + $0xe90] sm:$0xff]
    %v516 = vld [vmem:[#allocation2 + $0xe98] sm:$0xff]
    %v517 = vld [vmem:[#allocation2 + $0xea0] sm:$0xff]
    %v518 = vld [vmem:[#allocation2 + $0xea8] sm:$0xff]
    %v519 = vld [vmem:[#allocation2 + $0xeb0] sm:$0xff]
    %v520 = vld [vmem:[#allocation2 + $0xeb8] sm:$0xff]
    %v521 = vld [vmem:[#allocation2 + $0xec0] sm:$0xff]
    %v522 = vld [vmem:[#allocation2 + $0xec8] sm:$0xff]
    %v523 = vld [vmem:[#allocation2 + $0xed0] sm:$0xff]
    %v524 = vld [vmem:[#allocation2 + $0xed8] sm:$0xff]
    %v525 = vld [vmem:[#allocation2 + $0xee0] sm:$0xff]
    %v526 = vld [vmem:[#allocation2 + $0xee8] sm:$0xff]
    %v527 = vld [vmem:[#allocation2 + $0xef0] sm:$0xff]
    %v528 = vld [vmem:[#allocation2 + $0xef8] sm:$0xff]
    %v529 = vld [vmem:[#allocation2 + $0xf00] sm:$0xff]
    %v530 = vld [vmem:[#allocation2 + $0xf08] sm:$0xff]
    %v531 = vld [vmem:[#allocation2 + $0xf10] sm:$0xff]
    %v532 = vld [vmem:[#allocation2 + $0xf18] sm:$0xff]
    %v533 = vld [vmem:[#allocation2 + $0xf20] sm:$0xff]
    %v534 = vld [vmem:[#allocation2 + $0xf28] sm:$0xff]
    %v535 = vld [vmem:[#allocation2 + $0xf30] sm:$0xff]
    %v536 = vld [vmem:[#allocation2 + $0xf38] sm:$0xff]
    %v537 = vld [vmem:[#allocation2 + $0xf40] sm:$0xff]
    %v538 = vld [vmem:[#allocation2 + $0xf48] sm:$0xff]
    %v539 = vld [vmem:[#allocation2 + $0xf50] sm:$0xff]
    %v540 = vld [vmem:[#allocation2 + $0xf58] sm:$0xff]
    %v541 = vld [vmem:[#allocation2 + $0xf60] sm:$0xff]
    %v542 = vld [vmem:[#allocation2 + $0xf68] sm:$0xff]
    %v543 = vld [vmem:[#allocation2 + $0xf70] sm:$0xff]
    %v544 = vld [vmem:[#allocation2 + $0xf78] sm:$0xff]
    %v545 = vld [vmem:[#allocation2 + $0xf80] sm:$0xff]
    %v546 = vld [vmem:[#allocation2 + $0xf88] sm:$0xff]
    %v547 = vld [vmem:[#allocation2 + $0xf90] sm:$0xff]
    %v548 = vld [vmem:[#allocation2 + $0xf98] sm:$0xff]
    %v549 = vld [vmem:[#allocation2 + $0xfa0] sm:$0xff]
    %v550 = vld [vmem:[#allocation2 + $0xfa8] sm:$0xff]
    %v551 = vld [vmem:[#allocation2 + $0xfb0] sm:$0xff]
    %v552 = vld [vmem:[#allocation2 + $0xfb8] sm:$0xff]
    %v553 = vld [vmem:[#allocation2 + $0xfc0] sm:$0xff]
    %v554 = vld [vmem:[#allocation2 + $0xfc8] sm:$0xff]
    %v555 = vld [vmem:[#allocation2 + $0xfd0] sm:$0xff]
    %v556 = vld [vmem:[#allocation2 + $0xfd8] sm:$0xff]
    %v557 = vld [vmem:[#allocation2 + $0xfe0] sm:$0xff]
    %v558 = vld [vmem:[#allocation2 + $0xfe8] sm:$0xff]
    %v559 = vld [vmem:[#allocation2 + $0xff0] sm:$0xff]
    %v560 = vld [vmem:[#allocation2 + $0xff8] sm:$0xff]
    %v561 = vld [vmem:[#allocation2 + $0x1000] sm:$0x11]
    %v562 = vld [vmem:[#allocation2 + $0x1008] sm:$0x11]
    %v563 = vld [vmem:[#allocation2 + $0x1010] sm:$0x11]
    %v564 = vld [vmem:[#allocation2 + $0x1018] sm:$0x11]
    %v565 = vld [vmem:[#allocation2 + $0x1020] sm:$0x11]
    %v566 = vld [vmem:[#allocation2 + $0x1028] sm:$0x11]
    %v567 = vld [vmem:[#allocation2 + $0x1030] sm:$0x11]
    %v568 = vld [vmem:[#allocation2 + $0x1038] sm:$0x11]
    %v569 = vld [vmem:[#allocation4] sm:$0xff]
    %v570 = vld [vmem:[#allocation4 + $0x8] sm:$0xff]
    %v573 = vlaneseq
    %v574 = vshrl.u32 %v573, 7
    %v575 = vsub.s32 0, %v574
    %v576 = vrot.slane %v569, %v575
    %v577 = vlaneseq
    %v578 = vshrl.u32 %v577, 7
    %v579 = vsub.s32 1, %v578
    %v580 = vrot.slane %v569, %v579
    %v581 = vlaneseq
    %v582 = vshrl.u32 %v581, 7
    %v583 = vsub.s32 2, %v582
    %v584 = vrot.slane %v569, %v583
    %v585 = vlaneseq
    %v586 = vshrl.u32 %v585, 7
    %v587 = vsub.s32 3, %v586
    %v588 = vrot.slane %v569, %v587
    %v589 = vlaneseq
    %v590 = vshrl.u32 %v589, 7
    %v591 = vsub.s32 4, %v590
    %v592 = vrot.slane %v569, %v591
    %v593 = vlaneseq
    %v594 = vshrl.u32 %v593, 7
    %v595 = vsub.s32 5, %v594
    %v596 = vrot.slane %v569, %v595
    %v597 = vlaneseq
    %v598 = vshrl.u32 %v597, 7
    %v599 = vsub.s32 6, %v598
    %v600 = vrot.slane %v569, %v599
    %v601 = vlaneseq
    %v602 = vshrl.u32 %v601, 7
    %v603 = vsub.s32 7, %v602
    %v604 = vrot.slane %v569, %v603
    %v605 = vlaneseq
    %v606 = vshrl.u32 %v605, 7
    %v607 = vsub.s32 0, %v606
    %v608 = vrot.slane %v570, %v607
    %v609 = vlaneseq
    %v610 = vshrl.u32 %v609, 7
    %v611 = vsub.s32 1, %v610
    %v612 = vrot.slane %v570, %v611
    %v613 = vlaneseq
    %v614 = vshrl.u32 %v613, 7
    %v615 = vsub.s32 2, %v614
    %v616 = vrot.slane %v570, %v615
    %v617 = vlaneseq
    %v618 = vshrl.u32 %v617, 7
    %v619 = vsub.s32 3, %v618
    %v620 = vrot.slane %v570, %v619
    %v621 = vlaneseq
    %v622 = vshrl.u32 %v621, 7
    %v623 = vsub.s32 4, %v622
    %v624 = vrot.slane %v570, %v623
    %v625 = vlaneseq
    %v626 = vshrl.u32 %v625, 7
    %v627 = vsub.s32 5, %v626
    %v628 = vrot.slane %v570, %v627
    %v629 = vlaneseq
    %v630 = vshrl.u32 %v629, 7
    %v631 = vsub.s32 6, %v630
    %v632 = vrot.slane %v570, %v631
    %v633 = vlaneseq
    %v634 = vshrl.u32 %v633, 7
    %v635 = vsub.s32 7, %v634
    %v636 = vrot.slane %v570, %v635
    %v659 = vunpack.c.l.b16 %v43
    %v660 = vunpack.c.h.b16 %v43
    %v661 = vunpack.c.l.b16 %v44
    %v662 = vunpack.c.h.b16 %v44
    %v663 = vunpack.c.l.b16 %v45
    %v664 = vunpack.c.l.b16 %v46
    %v665 = vunpack.c.h.b16 %v46
    %v666 = vunpack.c.l.b16 %v47
    %v667 = vunpack.c.h.b16 %v47
    %v668 = vunpack.c.l.b16 %v48
    %v669 = vpack.c.b16 %v664, %v659
    %v670 = vpack.c.b16 %v665, %v660
    %v671 = vpack.c.b16 %v666, %v661
    %v672 = vpack.c.b16 %v667, %v662
    %v673 = vpack.c.b16 %v668, %v663
    %v1198 = vunpack.c.l.b16 %v49
    %v1199 = vunpack.c.h.b16 %v49
    %v1200 = vunpack.c.l.b16 %v50
    %v1201 = vunpack.c.h.b16 %v50
    %v1202 = vunpack.c.l.b16 %v51
    %v1203 = vunpack.c.h.b16 %v51
    %v1204 = vunpack.c.l.b16 %v52
    %v1205 = vunpack.c.h.b16 %v52
    %v1206 = vunpack.c.l.b16 %v53
    %v1207 = vunpack.c.h.b16 %v53
    %v1208 = vunpack.c.l.b16 %v54
    %v1209 = vunpack.c.h.b16 %v54
    %v1210 = vunpack.c.l.b16 %v55
    %v1211 = vunpack.c.h.b16 %v55
    %v1212 = vunpack.c.l.b16 %v56
    %v1213 = vunpack.c.h.b16 %v56
    %v1214 = vunpack.c.l.b16 %v57
    %v1215 = vunpack.c.h.b16 %v57
    %v1216 = vunpack.c.l.b16 %v58
    %v1217 = vunpack.c.h.b16 %v58
    %v1218 = vunpack.c.l.b16 %v59
    %v1219 = vunpack.c.h.b16 %v59
    %v1220 = vunpack.c.l.b16 %v60
    %v1221 = vunpack.c.h.b16 %v60
    %v1222 = vunpack.c.l.b16 %v61
    %v1223 = vunpack.c.h.b16 %v61
    %v1224 = vunpack.c.l.b16 %v62
    %v1225 = vunpack.c.h.b16 %v62
    %v1226 = vunpack.c.l.b16 %v63
    %v1227 = vunpack.c.h.b16 %v63
    %v1228 = vunpack.c.l.b16 %v64
    %v1229 = vunpack.c.h.b16 %v64
    %v1230 = vunpack.c.l.b16 %v65
    %v1231 = vunpack.c.h.b16 %v65
    %v1232 = vunpack.c.l.b16 %v66
    %v1233 = vunpack.c.h.b16 %v66
    %v1234 = vunpack.c.l.b16 %v67
    %v1235 = vunpack.c.h.b16 %v67
    %v1236 = vunpack.c.l.b16 %v68
    %v1237 = vunpack.c.h.b16 %v68
    %v1238 = vunpack.c.l.b16 %v69
    %v1239 = vunpack.c.h.b16 %v69
    %v1240 = vunpack.c.l.b16 %v70
    %v1241 = vunpack.c.h.b16 %v70
    %v1242 = vunpack.c.l.b16 %v71
    %v1243 = vunpack.c.h.b16 %v71
    %v1244 = vunpack.c.l.b16 %v72
    %v1245 = vunpack.c.h.b16 %v72
    %v1246 = vunpack.c.l.b16 %v73
    %v1247 = vunpack.c.h.b16 %v73
    %v1248 = vunpack.c.l.b16 %v74
    %v1249 = vunpack.c.h.b16 %v74
    %v1250 = vunpack.c.l.b16 %v75
    %v1251 = vunpack.c.h.b16 %v75
    %v1252 = vunpack.c.l.b16 %v76
    %v1253 = vunpack.c.h.b16 %v76
    %v1254 = vunpack.c.l.b16 %v77
    %v1255 = vunpack.c.h.b16 %v77
    %v1256 = vunpack.c.l.b16 %v78
    %v1257 = vunpack.c.h.b16 %v78
    %v1258 = vunpack.c.l.b16 %v79
    %v1259 = vunpack.c.h.b16 %v79
    %v1260 = vunpack.c.l.b16 %v80
    %v1261 = vunpack.c.h.b16 %v80
    %v1262 = vunpack.c.l.b16 %v81
    %v1263 = vunpack.c.h.b16 %v81
    %v1264 = vunpack.c.l.b16 %v82
    %v1265 = vunpack.c.h.b16 %v82
    %v1266 = vunpack.c.l.b16 %v83
    %v1267 = vunpack.c.h.b16 %v83
    %v1268 = vunpack.c.l.b16 %v84
    %v1269 = vunpack.c.h.b16 %v84
    %v1270 = vunpack.c.l.b16 %v85
    %v1271 = vunpack.c.h.b16 %v85
    %v1272 = vunpack.c.l.b16 %v86
    %v1273 = vunpack.c.h.b16 %v86
    %v1274 = vunpack.c.l.b16 %v87
    %v1275 = vunpack.c.h.b16 %v87
    %v1276 = vunpack.c.l.b16 %v88
    %v1277 = vunpack.c.h.b16 %v88
    %v1278 = vunpack.c.l.b16 %v89
    %v1279 = vunpack.c.h.b16 %v89
    %v1280 = vunpack.c.l.b16 %v90
    %v1281 = vunpack.c.h.b16 %v90
    %v1282 = vunpack.c.l.b16 %v91
    %v1283 = vunpack.c.h.b16 %v91
    %v1284 = vunpack.c.l.b16 %v92
    %v1285 = vunpack.c.h.b16 %v92
    %v1286 = vunpack.c.l.b16 %v93
    %v1287 = vunpack.c.h.b16 %v93
    %v1288 = vunpack.c.l.b16 %v94
    %v1289 = vunpack.c.h.b16 %v94
    %v1290 = vunpack.c.l.b16 %v95
    %v1291 = vunpack.c.h.b16 %v95
    %v1292 = vunpack.c.l.b16 %v96
    %v1293 = vunpack.c.h.b16 %v96
    %v1294 = vunpack.c.l.b16 %v97
    %v1295 = vunpack.c.h.b16 %v97
    %v1296 = vunpack.c.l.b16 %v98
    %v1297 = vunpack.c.h.b16 %v98
    %v1298 = vunpack.c.l.b16 %v99
    %v1299 = vunpack.c.h.b16 %v99
    %v1300 = vunpack.c.l.b16 %v100
    %v1301 = vunpack.c.h.b16 %v100
    %v1302 = vunpack.c.l.b16 %v101
    %v1303 = vunpack.c.h.b16 %v101
    %v1304 = vunpack.c.l.b16 %v102
    %v1305 = vunpack.c.h.b16 %v102
    %v1306 = vunpack.c.l.b16 %v103
    %v1307 = vunpack.c.h.b16 %v103
    %v1308 = vunpack.c.l.b16 %v104
    %v1309 = vunpack.c.h.b16 %v104
    %v1310 = vunpack.c.l.b16 %v105
    %v1311 = vunpack.c.h.b16 %v105
    %v1312 = vunpack.c.l.b16 %v106
    %v1313 = vunpack.c.h.b16 %v106
    %v1314 = vunpack.c.l.b16 %v107
    %v1315 = vunpack.c.h.b16 %v107
    %v1316 = vunpack.c.l.b16 %v108
    %v1317 = vunpack.c.h.b16 %v108
    %v1318 = vunpack.c.l.b16 %v109
    %v1319 = vunpack.c.h.b16 %v109
    %v1320 = vunpack.c.l.b16 %v110
    %v1321 = vunpack.c.h.b16 %v110
    %v1322 = vunpack.c.l.b16 %v111
    %v1323 = vunpack.c.h.b16 %v111
    %v1324 = vunpack.c.l.b16 %v112
    %v1325 = vunpack.c.h.b16 %v112
    %v1326 = vunpack.c.l.b16 %v113
    %v1327 = vunpack.c.h.b16 %v113
    %v1328 = vunpack.c.l.b16 %v114
    %v1329 = vunpack.c.h.b16 %v114
    %v1330 = vunpack.c.l.b16 %v115
    %v1331 = vunpack.c.h.b16 %v115
    %v1332 = vunpack.c.l.b16 %v116
    %v1333 = vunpack.c.h.b16 %v116
    %v1334 = vunpack.c.l.b16 %v117
    %v1335 = vunpack.c.h.b16 %v117
    %v1336 = vunpack.c.l.b16 %v118
    %v1337 = vunpack.c.h.b16 %v118
    %v1338 = vunpack.c.l.b16 %v119
    %v1339 = vunpack.c.h.b16 %v119
    %v1340 = vunpack.c.l.b16 %v120
    %v1341 = vunpack.c.h.b16 %v120
    %v1342 = vunpack.c.l.b16 %v121
    %v1343 = vunpack.c.h.b16 %v121
    %v1344 = vunpack.c.l.b16 %v122
    %v1345 = vunpack.c.h.b16 %v122
    %v1346 = vunpack.c.l.b16 %v123
    %v1347 = vunpack.c.h.b16 %v123
    %v1348 = vunpack.c.l.b16 %v124
    %v1349 = vunpack.c.h.b16 %v124
    %v1350 = vunpack.c.l.b16 %v125
    %v1351 = vunpack.c.h.b16 %v125
    %v1352 = vunpack.c.l.b16 %v126
    %v1353 = vunpack.c.h.b16 %v126
    %v1354 = vunpack.c.l.b16 %v127
    %v1355 = vunpack.c.h.b16 %v127
    %v1356 = vunpack.c.l.b16 %v128
    %v1357 = vunpack.c.h.b16 %v128
    %v1358 = vunpack.c.l.b16 %v129
    %v1359 = vunpack.c.h.b16 %v129
    %v1360 = vunpack.c.l.b16 %v130
    %v1361 = vunpack.c.h.b16 %v130
    %v1362 = vunpack.c.l.b16 %v131
    %v1363 = vunpack.c.h.b16 %v131
    %v1364 = vunpack.c.l.b16 %v132
    %v1365 = vunpack.c.h.b16 %v132
    %v1366 = vunpack.c.l.b16 %v133
    %v1367 = vunpack.c.h.b16 %v133
    %v1368 = vunpack.c.l.b16 %v134
    %v1369 = vunpack.c.h.b16 %v134
    %v1370 = vunpack.c.l.b16 %v135
    %v1371 = vunpack.c.h.b16 %v135
    %v1372 = vunpack.c.l.b16 %v136
    %v1373 = vunpack.c.h.b16 %v136
    %v1374 = vunpack.c.l.b16 %v137
    %v1375 = vunpack.c.h.b16 %v137
    %v1376 = vunpack.c.l.b16 %v138
    %v1377 = vunpack.c.h.b16 %v138
    %v1378 = vunpack.c.l.b16 %v139
    %v1379 = vunpack.c.h.b16 %v139
    %v1380 = vunpack.c.l.b16 %v140
    %v1381 = vunpack.c.h.b16 %v140
    %v1382 = vunpack.c.l.b16 %v141
    %v1383 = vunpack.c.h.b16 %v141
    %v1384 = vunpack.c.l.b16 %v142
    %v1385 = vunpack.c.h.b16 %v142
    %v1386 = vunpack.c.l.b16 %v143
    %v1387 = vunpack.c.h.b16 %v143
    %v1388 = vunpack.c.l.b16 %v144
    %v1389 = vunpack.c.h.b16 %v144
    %v1390 = vunpack.c.l.b16 %v145
    %v1391 = vunpack.c.h.b16 %v145
    %v1392 = vunpack.c.l.b16 %v146
    %v1393 = vunpack.c.h.b16 %v146
    %v1394 = vunpack.c.l.b16 %v147
    %v1395 = vunpack.c.h.b16 %v147
    %v1396 = vunpack.c.l.b16 %v148
    %v1397 = vunpack.c.h.b16 %v148
    %v1398 = vunpack.c.l.b16 %v149
    %v1399 = vunpack.c.h.b16 %v149
    %v1400 = vunpack.c.l.b16 %v150
    %v1401 = vunpack.c.h.b16 %v150
    %v1402 = vunpack.c.l.b16 %v151
    %v1403 = vunpack.c.h.b16 %v151
    %v1404 = vunpack.c.l.b16 %v152
    %v1405 = vunpack.c.h.b16 %v152
    %v1406 = vunpack.c.l.b16 %v153
    %v1407 = vunpack.c.h.b16 %v153
    %v1408 = vunpack.c.l.b16 %v154
    %v1409 = vunpack.c.h.b16 %v154
    %v1410 = vunpack.c.l.b16 %v155
    %v1411 = vunpack.c.h.b16 %v155
    %v1412 = vunpack.c.l.b16 %v156
    %v1413 = vunpack.c.h.b16 %v156
    %v1414 = vunpack.c.l.b16 %v157
    %v1415 = vunpack.c.h.b16 %v157
    %v1416 = vunpack.c.l.b16 %v158
    %v1417 = vunpack.c.h.b16 %v158
    %v1418 = vunpack.c.l.b16 %v159
    %v1419 = vunpack.c.h.b16 %v159
    %v1420 = vunpack.c.l.b16 %v160
    %v1421 = vunpack.c.h.b16 %v160
    %v1422 = vunpack.c.l.b16 %v161
    %v1423 = vunpack.c.h.b16 %v161
    %v1424 = vunpack.c.l.b16 %v162
    %v1425 = vunpack.c.h.b16 %v162
    %v1426 = vunpack.c.l.b16 %v163
    %v1427 = vunpack.c.h.b16 %v163
    %v1428 = vunpack.c.l.b16 %v164
    %v1429 = vunpack.c.h.b16 %v164
    %v1430 = vunpack.c.l.b16 %v165
    %v1431 = vunpack.c.h.b16 %v165
    %v1432 = vunpack.c.l.b16 %v166
    %v1433 = vunpack.c.h.b16 %v166
    %v1434 = vunpack.c.l.b16 %v167
    %v1435 = vunpack.c.h.b16 %v167
    %v1436 = vunpack.c.l.b16 %v168
    %v1437 = vunpack.c.h.b16 %v168
    %v1438 = vunpack.c.l.b16 %v169
    %v1439 = vunpack.c.h.b16 %v169
    %v1440 = vunpack.c.l.b16 %v170
    %v1441 = vunpack.c.h.b16 %v170
    %v1442 = vunpack.c.l.b16 %v171
    %v1443 = vunpack.c.h.b16 %v171
    %v1444 = vunpack.c.l.b16 %v172
    %v1445 = vunpack.c.h.b16 %v172
    %v1446 = vunpack.c.l.b16 %v173
    %v1447 = vunpack.c.h.b16 %v173
    %v1448 = vunpack.c.l.b16 %v174
    %v1449 = vunpack.c.h.b16 %v174
    %v1450 = vunpack.c.l.b16 %v175
    %v1451 = vunpack.c.h.b16 %v175
    %v1452 = vunpack.c.l.b16 %v176
    %v1453 = vunpack.c.h.b16 %v176
    %v1454 = vunpack.c.l.b16 %v177
    %v1455 = vunpack.c.h.b16 %v177
    %v1456 = vunpack.c.l.b16 %v178
    %v1457 = vunpack.c.h.b16 %v178
    %v1458 = vunpack.c.l.b16 %v179
    %v1459 = vunpack.c.h.b16 %v179
    %v1460 = vunpack.c.l.b16 %v180
    %v1461 = vunpack.c.h.b16 %v180
    %v1462 = vunpack.c.l.b16 %v181
    %v1463 = vunpack.c.h.b16 %v181
    %v1464 = vunpack.c.l.b16 %v182
    %v1465 = vunpack.c.h.b16 %v182
    %v1466 = vunpack.c.l.b16 %v183
    %v1467 = vunpack.c.h.b16 %v183
    %v1468 = vunpack.c.l.b16 %v184
    %v1469 = vunpack.c.h.b16 %v184
    %v1470 = vunpack.c.l.b16 %v185
    %v1471 = vunpack.c.h.b16 %v185
    %v1472 = vunpack.c.l.b16 %v186
    %v1473 = vunpack.c.h.b16 %v186
    %v1474 = vunpack.c.l.b16 %v187
    %v1475 = vunpack.c.h.b16 %v187
    %v1476 = vunpack.c.l.b16 %v188
    %v1477 = vunpack.c.h.b16 %v188
    %v1478 = vunpack.c.l.b16 %v189
    %v1479 = vunpack.c.h.b16 %v189
    %v1480 = vunpack.c.l.b16 %v190
    %v1481 = vunpack.c.h.b16 %v190
    %v1482 = vunpack.c.l.b16 %v191
    %v1483 = vunpack.c.h.b16 %v191
    %v1484 = vunpack.c.l.b16 %v192
    %v1485 = vunpack.c.h.b16 %v192
    %v1486 = vunpack.c.l.b16 %v193
    %v1487 = vunpack.c.h.b16 %v193
    %v1488 = vunpack.c.l.b16 %v194
    %v1489 = vunpack.c.h.b16 %v194
    %v1490 = vunpack.c.l.b16 %v195
    %v1491 = vunpack.c.h.b16 %v195
    %v1492 = vunpack.c.l.b16 %v196
    %v1493 = vunpack.c.h.b16 %v196
    %v1494 = vunpack.c.l.b16 %v197
    %v1495 = vunpack.c.h.b16 %v197
    %v1496 = vunpack.c.l.b16 %v198
    %v1497 = vunpack.c.h.b16 %v198
    %v1498 = vunpack.c.l.b16 %v199
    %v1499 = vunpack.c.h.b16 %v199
    %v1500 = vunpack.c.l.b16 %v200
    %v1501 = vunpack.c.h.b16 %v200
    %v1502 = vunpack.c.l.b16 %v201
    %v1503 = vunpack.c.h.b16 %v201
    %v1504 = vunpack.c.l.b16 %v202
    %v1505 = vunpack.c.h.b16 %v202
    %v1506 = vunpack.c.l.b16 %v203
    %v1507 = vunpack.c.h.b16 %v203
    %v1508 = vunpack.c.l.b16 %v204
    %v1509 = vunpack.c.h.b16 %v204
    %v1510 = vunpack.c.l.b16 %v205
    %v1511 = vunpack.c.h.b16 %v205
    %v1512 = vunpack.c.l.b16 %v206
    %v1513 = vunpack.c.h.b16 %v206
    %v1514 = vunpack.c.l.b16 %v207
    %v1515 = vunpack.c.h.b16 %v207
    %v1516 = vunpack.c.l.b16 %v208
    %v1517 = vunpack.c.h.b16 %v208
    %v1518 = vunpack.c.l.b16 %v209
    %v1519 = vunpack.c.h.b16 %v209
    %v1520 = vunpack.c.l.b16 %v210
    %v1521 = vunpack.c.h.b16 %v210
    %v1522 = vunpack.c.l.b16 %v211
    %v1523 = vunpack.c.h.b16 %v211
    %v1524 = vunpack.c.l.b16 %v212
    %v1525 = vunpack.c.h.b16 %v212
    %v1526 = vunpack.c.l.b16 %v213
    %v1527 = vunpack.c.h.b16 %v213
    %v1528 = vunpack.c.l.b16 %v214
    %v1529 = vunpack.c.h.b16 %v214
    %v1530 = vunpack.c.l.b16 %v215
    %v1531 = vunpack.c.h.b16 %v215
    %v1532 = vunpack.c.l.b16 %v216
    %v1533 = vunpack.c.h.b16 %v216
    %v1534 = vunpack.c.l.b16 %v217
    %v1535 = vunpack.c.h.b16 %v217
    %v1536 = vunpack.c.l.b16 %v218
    %v1537 = vunpack.c.h.b16 %v218
    %v1538 = vunpack.c.l.b16 %v219
    %v1539 = vunpack.c.h.b16 %v219
    %v1540 = vunpack.c.l.b16 %v220
    %v1541 = vunpack.c.h.b16 %v220
    %v1542 = vunpack.c.l.b16 %v221
    %v1543 = vunpack.c.h.b16 %v221
    %v1544 = vunpack.c.l.b16 %v222
    %v1545 = vunpack.c.h.b16 %v222
    %v1546 = vunpack.c.l.b16 %v223
    %v1547 = vunpack.c.h.b16 %v223
    %v1548 = vunpack.c.l.b16 %v224
    %v1549 = vunpack.c.h.b16 %v224
    %v1550 = vunpack.c.l.b16 %v225
    %v1551 = vunpack.c.h.b16 %v225
    %v1552 = vunpack.c.l.b16 %v226
    %v1553 = vunpack.c.h.b16 %v226
    %v1554 = vunpack.c.l.b16 %v227
    %v1555 = vunpack.c.h.b16 %v227
    %v1556 = vunpack.c.l.b16 %v228
    %v1557 = vunpack.c.h.b16 %v228
    %v1558 = vunpack.c.l.b16 %v229
    %v1559 = vunpack.c.h.b16 %v229
    %v1560 = vunpack.c.l.b16 %v230
    %v1561 = vunpack.c.h.b16 %v230
    %v1562 = vunpack.c.l.b16 %v231
    %v1563 = vunpack.c.h.b16 %v231
    %v1564 = vunpack.c.l.b16 %v232
    %v1565 = vunpack.c.h.b16 %v232
    %v1566 = vunpack.c.l.b16 %v233
    %v1567 = vunpack.c.h.b16 %v233
    %v1568 = vunpack.c.l.b16 %v234
    %v1569 = vunpack.c.h.b16 %v234
    %v1570 = vunpack.c.l.b16 %v235
    %v1571 = vunpack.c.h.b16 %v235
    %v1572 = vunpack.c.l.b16 %v236
    %v1573 = vunpack.c.h.b16 %v236
    %v1574 = vunpack.c.l.b16 %v237
    %v1575 = vunpack.c.h.b16 %v237
    %v1576 = vunpack.c.l.b16 %v238
    %v1577 = vunpack.c.h.b16 %v238
    %v1578 = vunpack.c.l.b16 %v239
    %v1579 = vunpack.c.h.b16 %v239
    %v1580 = vunpack.c.l.b16 %v240
    %v1581 = vunpack.c.h.b16 %v240
    %v1582 = vunpack.c.l.b16 %v241
    %v1583 = vunpack.c.h.b16 %v241
    %v1584 = vunpack.c.l.b16 %v242
    %v1585 = vunpack.c.h.b16 %v242
    %v1586 = vunpack.c.l.b16 %v243
    %v1587 = vunpack.c.h.b16 %v243
    %v1588 = vunpack.c.l.b16 %v244
    %v1589 = vunpack.c.h.b16 %v244
    %v1590 = vunpack.c.l.b16 %v245
    %v1591 = vunpack.c.h.b16 %v245
    %v1592 = vunpack.c.l.b16 %v246
    %v1593 = vunpack.c.h.b16 %v246
    %v1594 = vunpack.c.l.b16 %v247
    %v1595 = vunpack.c.h.b16 %v247
    %v1596 = vunpack.c.l.b16 %v248
    %v1597 = vunpack.c.h.b16 %v248
    %v1598 = vunpack.c.l.b16 %v249
    %v1599 = vunpack.c.h.b16 %v249
    %v1600 = vunpack.c.l.b16 %v250
    %v1601 = vunpack.c.h.b16 %v250
    %v1602 = vunpack.c.l.b16 %v251
    %v1603 = vunpack.c.h.b16 %v251
    %v1604 = vunpack.c.l.b16 %v252
    %v1605 = vunpack.c.h.b16 %v252
    %v1606 = vunpack.c.l.b16 %v253
    %v1607 = vunpack.c.h.b16 %v253
    %v1608 = vunpack.c.l.b16 %v254
    %v1609 = vunpack.c.h.b16 %v254
    %v1610 = vunpack.c.l.b16 %v255
    %v1611 = vunpack.c.h.b16 %v255
    %v1612 = vunpack.c.l.b16 %v256
    %v1613 = vunpack.c.h.b16 %v256
    %v1614 = vunpack.c.l.b16 %v257
    %v1615 = vunpack.c.h.b16 %v257
    %v1616 = vunpack.c.l.b16 %v258
    %v1617 = vunpack.c.h.b16 %v258
    %v1618 = vunpack.c.l.b16 %v259
    %v1619 = vunpack.c.h.b16 %v259
    %v1620 = vunpack.c.l.b16 %v260
    %v1621 = vunpack.c.h.b16 %v260
    %v1622 = vunpack.c.l.b16 %v261
    %v1623 = vunpack.c.h.b16 %v261
    %v1624 = vunpack.c.l.b16 %v262
    %v1625 = vunpack.c.h.b16 %v262
    %v1626 = vunpack.c.l.b16 %v263
    %v1627 = vunpack.c.h.b16 %v263
    %v1628 = vunpack.c.l.b16 %v264
    %v1629 = vunpack.c.h.b16 %v264
    %v1630 = vunpack.c.l.b16 %v265
    %v1631 = vunpack.c.h.b16 %v265
    %v1632 = vunpack.c.l.b16 %v266
    %v1633 = vunpack.c.h.b16 %v266
    %v1634 = vunpack.c.l.b16 %v267
    %v1635 = vunpack.c.h.b16 %v267
    %v1636 = vunpack.c.l.b16 %v268
    %v1637 = vunpack.c.h.b16 %v268
    %v1638 = vunpack.c.l.b16 %v269
    %v1639 = vunpack.c.h.b16 %v269
    %v1640 = vunpack.c.l.b16 %v270
    %v1641 = vunpack.c.h.b16 %v270
    %v1642 = vunpack.c.l.b16 %v271
    %v1643 = vunpack.c.h.b16 %v271
    %v1644 = vunpack.c.l.b16 %v272
    %v1645 = vunpack.c.h.b16 %v272
    %v1646 = vunpack.c.l.b16 %v273
    %v1647 = vunpack.c.h.b16 %v273
    %v1648 = vunpack.c.l.b16 %v274
    %v1649 = vunpack.c.h.b16 %v274
    %v1650 = vunpack.c.l.b16 %v275
    %v1651 = vunpack.c.h.b16 %v275
    %v1652 = vunpack.c.l.b16 %v276
    %v1653 = vunpack.c.h.b16 %v276
    %v1654 = vunpack.c.l.b16 %v277
    %v1655 = vunpack.c.h.b16 %v277
    %v1656 = vunpack.c.l.b16 %v278
    %v1657 = vunpack.c.h.b16 %v278
    %v1658 = vunpack.c.l.b16 %v279
    %v1659 = vunpack.c.h.b16 %v279
    %v1660 = vunpack.c.l.b16 %v280
    %v1661 = vunpack.c.h.b16 %v280
    %v1662 = vunpack.c.l.b16 %v281
    %v1663 = vunpack.c.h.b16 %v281
    %v1664 = vunpack.c.l.b16 %v282
    %v1665 = vunpack.c.h.b16 %v282
    %v1666 = vunpack.c.l.b16 %v283
    %v1667 = vunpack.c.h.b16 %v283
    %v1668 = vunpack.c.l.b16 %v284
    %v1669 = vunpack.c.h.b16 %v284
    %v1670 = vunpack.c.l.b16 %v285
    %v1671 = vunpack.c.h.b16 %v285
    %v1672 = vunpack.c.l.b16 %v286
    %v1673 = vunpack.c.h.b16 %v286
    %v1674 = vunpack.c.l.b16 %v287
    %v1675 = vunpack.c.h.b16 %v287
    %v1676 = vunpack.c.l.b16 %v288
    %v1677 = vunpack.c.h.b16 %v288
    %v1678 = vunpack.c.l.b16 %v289
    %v1679 = vunpack.c.h.b16 %v289
    %v1680 = vunpack.c.l.b16 %v290
    %v1681 = vunpack.c.h.b16 %v290
    %v1682 = vunpack.c.l.b16 %v291
    %v1683 = vunpack.c.h.b16 %v291
    %v1684 = vunpack.c.l.b16 %v292
    %v1685 = vunpack.c.h.b16 %v292
    %v1686 = vunpack.c.l.b16 %v293
    %v1687 = vunpack.c.h.b16 %v293
    %v1688 = vunpack.c.l.b16 %v294
    %v1689 = vunpack.c.h.b16 %v294
    %v1690 = vunpack.c.l.b16 %v295
    %v1691 = vunpack.c.h.b16 %v295
    %v1692 = vunpack.c.l.b16 %v296
    %v1693 = vunpack.c.h.b16 %v296
    %v1694 = vunpack.c.l.b16 %v297
    %v1695 = vunpack.c.h.b16 %v297
    %v1696 = vunpack.c.l.b16 %v298
    %v1697 = vunpack.c.h.b16 %v298
    %v1698 = vunpack.c.l.b16 %v299
    %v1699 = vunpack.c.h.b16 %v299
    %v1700 = vunpack.c.l.b16 %v300
    %v1701 = vunpack.c.h.b16 %v300
    %v1702 = vunpack.c.l.b16 %v301
    %v1703 = vunpack.c.h.b16 %v301
    %v1704 = vunpack.c.l.b16 %v302
    %v1705 = vunpack.c.h.b16 %v302
    %v1706 = vunpack.c.l.b16 %v303
    %v1707 = vunpack.c.h.b16 %v303
    %v1708 = vunpack.c.l.b16 %v304
    %v1709 = vunpack.c.h.b16 %v304
    %v1710 = vunpack.c.l.b16 %v305
    %v1711 = vunpack.c.h.b16 %v305
    %v1712 = vunpack.c.l.b16 %v306
    %v1713 = vunpack.c.h.b16 %v306
    %v1714 = vunpack.c.l.b16 %v307
    %v1715 = vunpack.c.h.b16 %v307
    %v1716 = vunpack.c.l.b16 %v308
    %v1717 = vunpack.c.h.b16 %v308
    %v1718 = vunpack.c.l.b16 %v309
    %v1719 = vunpack.c.h.b16 %v309
    %v1720 = vunpack.c.l.b16 %v310
    %v1721 = vunpack.c.h.b16 %v310
    %v1722 = vunpack.c.l.b16 %v311
    %v1723 = vunpack.c.h.b16 %v311
    %v1724 = vunpack.c.l.b16 %v312
    %v1725 = vunpack.c.h.b16 %v312
    %v1726 = vunpack.c.l.b16 %v313
    %v1727 = vunpack.c.h.b16 %v313
    %v1728 = vunpack.c.l.b16 %v314
    %v1729 = vunpack.c.h.b16 %v314
    %v1730 = vunpack.c.l.b16 %v315
    %v1731 = vunpack.c.h.b16 %v315
    %v1732 = vunpack.c.l.b16 %v316
    %v1733 = vunpack.c.h.b16 %v316
    %v1734 = vunpack.c.l.b16 %v317
    %v1735 = vunpack.c.h.b16 %v317
    %v1736 = vunpack.c.l.b16 %v318
    %v1737 = vunpack.c.h.b16 %v318
    %v1738 = vunpack.c.l.b16 %v319
    %v1739 = vunpack.c.h.b16 %v319
    %v1740 = vunpack.c.l.b16 %v320
    %v1741 = vunpack.c.h.b16 %v320
    %v1742 = vunpack.c.l.b16 %v321
    %v1743 = vunpack.c.h.b16 %v321
    %v1744 = vunpack.c.l.b16 %v322
    %v1745 = vunpack.c.h.b16 %v322
    %v1746 = vunpack.c.l.b16 %v323
    %v1747 = vunpack.c.h.b16 %v323
    %v1748 = vunpack.c.l.b16 %v324
    %v1749 = vunpack.c.h.b16 %v324
    %v1750 = vunpack.c.l.b16 %v325
    %v1751 = vunpack.c.h.b16 %v325
    %v1752 = vunpack.c.l.b16 %v326
    %v1753 = vunpack.c.h.b16 %v326
    %v1754 = vunpack.c.l.b16 %v327
    %v1755 = vunpack.c.h.b16 %v327
    %v1756 = vunpack.c.l.b16 %v328
    %v1757 = vunpack.c.h.b16 %v328
    %v1758 = vunpack.c.l.b16 %v329
    %v1759 = vunpack.c.h.b16 %v329
    %v1760 = vunpack.c.l.b16 %v330
    %v1761 = vunpack.c.h.b16 %v330
    %v1762 = vunpack.c.l.b16 %v331
    %v1763 = vunpack.c.h.b16 %v331
    %v1764 = vunpack.c.l.b16 %v332
    %v1765 = vunpack.c.h.b16 %v332
    %v1766 = vunpack.c.l.b16 %v333
    %v1767 = vunpack.c.h.b16 %v333
    %v1768 = vunpack.c.l.b16 %v334
    %v1769 = vunpack.c.h.b16 %v334
    %v1770 = vunpack.c.l.b16 %v335
    %v1771 = vunpack.c.h.b16 %v335
    %v1772 = vunpack.c.l.b16 %v336
    %v1773 = vunpack.c.h.b16 %v336
    %v1774 = vunpack.c.l.b16 %v337
    %v1775 = vunpack.c.h.b16 %v337
    %v1776 = vunpack.c.l.b16 %v338
    %v1777 = vunpack.c.h.b16 %v338
    %v1778 = vunpack.c.l.b16 %v339
    %v1779 = vunpack.c.h.b16 %v339
    %v1780 = vunpack.c.l.b16 %v340
    %v1781 = vunpack.c.h.b16 %v340
    %v1782 = vunpack.c.l.b16 %v341
    %v1783 = vunpack.c.h.b16 %v341
    %v1784 = vunpack.c.l.b16 %v342
    %v1785 = vunpack.c.h.b16 %v342
    %v1786 = vunpack.c.l.b16 %v343
    %v1787 = vunpack.c.h.b16 %v343
    %v1788 = vunpack.c.l.b16 %v344
    %v1789 = vunpack.c.h.b16 %v344
    %v1790 = vunpack.c.l.b16 %v345
    %v1791 = vunpack.c.h.b16 %v345
    %v1792 = vunpack.c.l.b16 %v346
    %v1793 = vunpack.c.h.b16 %v346
    %v1794 = vunpack.c.l.b16 %v347
    %v1795 = vunpack.c.h.b16 %v347
    %v1796 = vunpack.c.l.b16 %v348
    %v1797 = vunpack.c.h.b16 %v348
    %v1798 = vunpack.c.l.b16 %v349
    %v1799 = vunpack.c.h.b16 %v349
    %v1800 = vunpack.c.l.b16 %v350
    %v1801 = vunpack.c.h.b16 %v350
    %v1802 = vunpack.c.l.b16 %v351
    %v1803 = vunpack.c.h.b16 %v351
    %v1804 = vunpack.c.l.b16 %v352
    %v1805 = vunpack.c.h.b16 %v352
    %v1806 = vunpack.c.l.b16 %v353
    %v1807 = vunpack.c.h.b16 %v353
    %v1808 = vunpack.c.l.b16 %v354
    %v1809 = vunpack.c.h.b16 %v354
    %v1810 = vunpack.c.l.b16 %v355
    %v1811 = vunpack.c.h.b16 %v355
    %v1812 = vunpack.c.l.b16 %v356
    %v1813 = vunpack.c.h.b16 %v356
    %v1814 = vunpack.c.l.b16 %v357
    %v1815 = vunpack.c.h.b16 %v357
    %v1816 = vunpack.c.l.b16 %v358
    %v1817 = vunpack.c.h.b16 %v358
    %v1818 = vunpack.c.l.b16 %v359
    %v1819 = vunpack.c.h.b16 %v359
    %v1820 = vunpack.c.l.b16 %v360
    %v1821 = vunpack.c.h.b16 %v360
    %v1822 = vunpack.c.l.b16 %v361
    %v1823 = vunpack.c.h.b16 %v361
    %v1824 = vunpack.c.l.b16 %v362
    %v1825 = vunpack.c.h.b16 %v362
    %v1826 = vunpack.c.l.b16 %v363
    %v1827 = vunpack.c.h.b16 %v363
    %v1828 = vunpack.c.l.b16 %v364
    %v1829 = vunpack.c.h.b16 %v364
    %v1830 = vunpack.c.l.b16 %v365
    %v1831 = vunpack.c.h.b16 %v365
    %v1832 = vunpack.c.l.b16 %v366
    %v1833 = vunpack.c.h.b16 %v366
    %v1834 = vunpack.c.l.b16 %v367
    %v1835 = vunpack.c.h.b16 %v367
    %v1836 = vunpack.c.l.b16 %v368
    %v1837 = vunpack.c.h.b16 %v368
    %v1838 = vunpack.c.l.b16 %v369
    %v1839 = vunpack.c.h.b16 %v369
    %v1840 = vunpack.c.l.b16 %v370
    %v1841 = vunpack.c.h.b16 %v370
    %v1842 = vunpack.c.l.b16 %v371
    %v1843 = vunpack.c.h.b16 %v371
    %v1844 = vunpack.c.l.b16 %v372
    %v1845 = vunpack.c.h.b16 %v372
    %v1846 = vunpack.c.l.b16 %v373
    %v1847 = vunpack.c.h.b16 %v373
    %v1848 = vunpack.c.l.b16 %v374
    %v1849 = vunpack.c.h.b16 %v374
    %v1850 = vunpack.c.l.b16 %v375
    %v1851 = vunpack.c.h.b16 %v375
    %v1852 = vunpack.c.l.b16 %v376
    %v1853 = vunpack.c.h.b16 %v376
    %v1854 = vunpack.c.l.b16 %v377
    %v1855 = vunpack.c.h.b16 %v377
    %v1856 = vunpack.c.l.b16 %v378
    %v1857 = vunpack.c.h.b16 %v378
    %v1858 = vunpack.c.l.b16 %v379
    %v1859 = vunpack.c.h.b16 %v379
    %v1860 = vunpack.c.l.b16 %v380
    %v1861 = vunpack.c.h.b16 %v380
    %v1862 = vunpack.c.l.b16 %v381
    %v1863 = vunpack.c.h.b16 %v381
    %v1864 = vunpack.c.l.b16 %v382
    %v1865 = vunpack.c.h.b16 %v382
    %v1866 = vunpack.c.l.b16 %v383
    %v1867 = vunpack.c.h.b16 %v383
    %v1868 = vunpack.c.l.b16 %v384
    %v1869 = vunpack.c.h.b16 %v384
    %v1870 = vunpack.c.l.b16 %v385
    %v1871 = vunpack.c.h.b16 %v385
    %v1872 = vunpack.c.l.b16 %v386
    %v1873 = vunpack.c.h.b16 %v386
    %v1874 = vunpack.c.l.b16 %v387
    %v1875 = vunpack.c.h.b16 %v387
    %v1876 = vunpack.c.l.b16 %v388
    %v1877 = vunpack.c.h.b16 %v388
    %v1878 = vunpack.c.l.b16 %v389
    %v1879 = vunpack.c.h.b16 %v389
    %v1880 = vunpack.c.l.b16 %v390
    %v1881 = vunpack.c.h.b16 %v390
    %v1882 = vunpack.c.l.b16 %v391
    %v1883 = vunpack.c.h.b16 %v391
    %v1884 = vunpack.c.l.b16 %v392
    %v1885 = vunpack.c.h.b16 %v392
    %v1886 = vunpack.c.l.b16 %v393
    %v1887 = vunpack.c.h.b16 %v393
    %v1888 = vunpack.c.l.b16 %v394
    %v1889 = vunpack.c.h.b16 %v394
    %v1890 = vunpack.c.l.b16 %v395
    %v1891 = vunpack.c.h.b16 %v395
    %v1892 = vunpack.c.l.b16 %v396
    %v1893 = vunpack.c.h.b16 %v396
    %v1894 = vunpack.c.l.b16 %v397
    %v1895 = vunpack.c.h.b16 %v397
    %v1896 = vunpack.c.l.b16 %v398
    %v1897 = vunpack.c.h.b16 %v398
    %v1898 = vunpack.c.l.b16 %v399
    %v1899 = vunpack.c.h.b16 %v399
    %v1900 = vunpack.c.l.b16 %v400
    %v1901 = vunpack.c.h.b16 %v400
    %v1902 = vunpack.c.l.b16 %v401
    %v1903 = vunpack.c.h.b16 %v401
    %v1904 = vunpack.c.l.b16 %v402
    %v1905 = vunpack.c.h.b16 %v402
    %v1906 = vunpack.c.l.b16 %v403
    %v1907 = vunpack.c.h.b16 %v403
    %v1908 = vunpack.c.l.b16 %v404
    %v1909 = vunpack.c.h.b16 %v404
    %v1910 = vunpack.c.l.b16 %v405
    %v1911 = vunpack.c.h.b16 %v405
    %v1912 = vunpack.c.l.b16 %v406
    %v1913 = vunpack.c.h.b16 %v406
    %v1914 = vunpack.c.l.b16 %v407
    %v1915 = vunpack.c.h.b16 %v407
    %v1916 = vunpack.c.l.b16 %v408
    %v1917 = vunpack.c.h.b16 %v408
    %v1918 = vunpack.c.l.b16 %v409
    %v1919 = vunpack.c.h.b16 %v409
    %v1920 = vunpack.c.l.b16 %v410
    %v1921 = vunpack.c.h.b16 %v410
    %v1922 = vunpack.c.l.b16 %v411
    %v1923 = vunpack.c.h.b16 %v411
    %v1924 = vunpack.c.l.b16 %v412
    %v1925 = vunpack.c.h.b16 %v412
    %v1926 = vunpack.c.l.b16 %v413
    %v1927 = vunpack.c.h.b16 %v413
    %v1928 = vunpack.c.l.b16 %v414
    %v1929 = vunpack.c.h.b16 %v414
    %v1930 = vunpack.c.l.b16 %v415
    %v1931 = vunpack.c.h.b16 %v415
    %v1932 = vunpack.c.l.b16 %v416
    %v1933 = vunpack.c.h.b16 %v416
    %v1934 = vunpack.c.l.b16 %v417
    %v1935 = vunpack.c.h.b16 %v417
    %v1936 = vunpack.c.l.b16 %v418
    %v1937 = vunpack.c.h.b16 %v418
    %v1938 = vunpack.c.l.b16 %v419
    %v1939 = vunpack.c.h.b16 %v419
    %v1940 = vunpack.c.l.b16 %v420
    %v1941 = vunpack.c.h.b16 %v420
    %v1942 = vunpack.c.l.b16 %v421
    %v1943 = vunpack.c.h.b16 %v421
    %v1944 = vunpack.c.l.b16 %v422
    %v1945 = vunpack.c.h.b16 %v422
    %v1946 = vunpack.c.l.b16 %v423
    %v1947 = vunpack.c.h.b16 %v423
    %v1948 = vunpack.c.l.b16 %v424
    %v1949 = vunpack.c.h.b16 %v424
    %v1950 = vunpack.c.l.b16 %v425
    %v1951 = vunpack.c.h.b16 %v425
    %v1952 = vunpack.c.l.b16 %v426
    %v1953 = vunpack.c.h.b16 %v426
    %v1954 = vunpack.c.l.b16 %v427
    %v1955 = vunpack.c.h.b16 %v427
    %v1956 = vunpack.c.l.b16 %v428
    %v1957 = vunpack.c.h.b16 %v428
    %v1958 = vunpack.c.l.b16 %v429
    %v1959 = vunpack.c.h.b16 %v429
    %v1960 = vunpack.c.l.b16 %v430
    %v1961 = vunpack.c.h.b16 %v430
    %v1962 = vunpack.c.l.b16 %v431
    %v1963 = vunpack.c.h.b16 %v431
    %v1964 = vunpack.c.l.b16 %v432
    %v1965 = vunpack.c.h.b16 %v432
    %v1966 = vunpack.c.l.b16 %v433
    %v1967 = vunpack.c.h.b16 %v433
    %v1968 = vunpack.c.l.b16 %v434
    %v1969 = vunpack.c.h.b16 %v434
    %v1970 = vunpack.c.l.b16 %v435
    %v1971 = vunpack.c.h.b16 %v435
    %v1972 = vunpack.c.l.b16 %v436
    %v1973 = vunpack.c.h.b16 %v436
    %v1974 = vunpack.c.l.b16 %v437
    %v1975 = vunpack.c.h.b16 %v437
    %v1976 = vunpack.c.l.b16 %v438
    %v1977 = vunpack.c.h.b16 %v438
    %v1978 = vunpack.c.l.b16 %v439
    %v1979 = vunpack.c.h.b16 %v439
    %v1980 = vunpack.c.l.b16 %v440
    %v1981 = vunpack.c.h.b16 %v440
    %v1982 = vunpack.c.l.b16 %v441
    %v1983 = vunpack.c.h.b16 %v441
    %v1984 = vunpack.c.l.b16 %v442
    %v1985 = vunpack.c.h.b16 %v442
    %v1986 = vunpack.c.l.b16 %v443
    %v1987 = vunpack.c.h.b16 %v443
    %v1988 = vunpack.c.l.b16 %v444
    %v1989 = vunpack.c.h.b16 %v444
    %v1990 = vunpack.c.l.b16 %v445
    %v1991 = vunpack.c.h.b16 %v445
    %v1992 = vunpack.c.l.b16 %v446
    %v1993 = vunpack.c.h.b16 %v446
    %v1994 = vunpack.c.l.b16 %v447
    %v1995 = vunpack.c.h.b16 %v447
    %v1996 = vunpack.c.l.b16 %v448
    %v1997 = vunpack.c.h.b16 %v448
    %v1998 = vunpack.c.l.b16 %v449
    %v1999 = vunpack.c.h.b16 %v449
    %v2000 = vunpack.c.l.b16 %v450
    %v2001 = vunpack.c.h.b16 %v450
    %v2002 = vunpack.c.l.b16 %v451
    %v2003 = vunpack.c.h.b16 %v451
    %v2004 = vunpack.c.l.b16 %v452
    %v2005 = vunpack.c.h.b16 %v452
    %v2006 = vunpack.c.l.b16 %v453
    %v2007 = vunpack.c.h.b16 %v453
    %v2008 = vunpack.c.l.b16 %v454
    %v2009 = vunpack.c.h.b16 %v454
    %v2010 = vunpack.c.l.b16 %v455
    %v2011 = vunpack.c.h.b16 %v455
    %v2012 = vunpack.c.l.b16 %v456
    %v2013 = vunpack.c.h.b16 %v456
    %v2014 = vunpack.c.l.b16 %v457
    %v2015 = vunpack.c.h.b16 %v457
    %v2016 = vunpack.c.l.b16 %v458
    %v2017 = vunpack.c.h.b16 %v458
    %v2018 = vunpack.c.l.b16 %v459
    %v2019 = vunpack.c.h.b16 %v459
    %v2020 = vunpack.c.l.b16 %v460
    %v2021 = vunpack.c.h.b16 %v460
    %v2022 = vunpack.c.l.b16 %v461
    %v2023 = vunpack.c.h.b16 %v461
    %v2024 = vunpack.c.l.b16 %v462
    %v2025 = vunpack.c.h.b16 %v462
    %v2026 = vunpack.c.l.b16 %v463
    %v2027 = vunpack.c.h.b16 %v463
    %v2028 = vunpack.c.l.b16 %v464
    %v2029 = vunpack.c.h.b16 %v464
    %v2030 = vunpack.c.l.b16 %v465
    %v2031 = vunpack.c.h.b16 %v465
    %v2032 = vunpack.c.l.b16 %v466
    %v2033 = vunpack.c.h.b16 %v466
    %v2034 = vunpack.c.l.b16 %v467
    %v2035 = vunpack.c.h.b16 %v467
    %v2036 = vunpack.c.l.b16 %v468
    %v2037 = vunpack.c.h.b16 %v468
    %v2038 = vunpack.c.l.b16 %v469
    %v2039 = vunpack.c.h.b16 %v469
    %v2040 = vunpack.c.l.b16 %v470
    %v2041 = vunpack.c.h.b16 %v470
    %v2042 = vunpack.c.l.b16 %v471
    %v2043 = vunpack.c.h.b16 %v471
    %v2044 = vunpack.c.l.b16 %v472
    %v2045 = vunpack.c.h.b16 %v472
    %v2046 = vunpack.c.l.b16 %v473
    %v2047 = vunpack.c.h.b16 %v473
    %v2048 = vunpack.c.l.b16 %v474
    %v2049 = vunpack.c.h.b16 %v474
    %v2050 = vunpack.c.l.b16 %v475
    %v2051 = vunpack.c.h.b16 %v475
    %v2052 = vunpack.c.l.b16 %v476
    %v2053 = vunpack.c.h.b16 %v476
    %v2054 = vunpack.c.l.b16 %v477
    %v2055 = vunpack.c.h.b16 %v477
    %v2056 = vunpack.c.l.b16 %v478
    %v2057 = vunpack.c.h.b16 %v478
    %v2058 = vunpack.c.l.b16 %v479
    %v2059 = vunpack.c.h.b16 %v479
    %v2060 = vunpack.c.l.b16 %v480
    %v2061 = vunpack.c.h.b16 %v480
    %v2062 = vunpack.c.l.b16 %v481
    %v2063 = vunpack.c.h.b16 %v481
    %v2064 = vunpack.c.l.b16 %v482
    %v2065 = vunpack.c.h.b16 %v482
    %v2066 = vunpack.c.l.b16 %v483
    %v2067 = vunpack.c.h.b16 %v483
    %v2068 = vunpack.c.l.b16 %v484
    %v2069 = vunpack.c.h.b16 %v484
    %v2070 = vunpack.c.l.b16 %v485
    %v2071 = vunpack.c.h.b16 %v485
    %v2072 = vunpack.c.l.b16 %v486
    %v2073 = vunpack.c.h.b16 %v486
    %v2074 = vunpack.c.l.b16 %v487
    %v2075 = vunpack.c.h.b16 %v487
    %v2076 = vunpack.c.l.b16 %v488
    %v2077 = vunpack.c.h.b16 %v488
    %v2078 = vunpack.c.l.b16 %v489
    %v2079 = vunpack.c.h.b16 %v489
    %v2080 = vunpack.c.l.b16 %v490
    %v2081 = vunpack.c.h.b16 %v490
    %v2082 = vunpack.c.l.b16 %v491
    %v2083 = vunpack.c.h.b16 %v491
    %v2084 = vunpack.c.l.b16 %v492
    %v2085 = vunpack.c.h.b16 %v492
    %v2086 = vunpack.c.l.b16 %v493
    %v2087 = vunpack.c.h.b16 %v493
    %v2088 = vunpack.c.l.b16 %v494
    %v2089 = vunpack.c.h.b16 %v494
    %v2090 = vunpack.c.l.b16 %v495
    %v2091 = vunpack.c.h.b16 %v495
    %v2092 = vunpack.c.l.b16 %v496
    %v2093 = vunpack.c.h.b16 %v496
    %v2094 = vunpack.c.l.b16 %v497
    %v2095 = vunpack.c.h.b16 %v497
    %v2096 = vunpack.c.l.b16 %v498
    %v2097 = vunpack.c.h.b16 %v498
    %v2098 = vunpack.c.l.b16 %v499
    %v2099 = vunpack.c.h.b16 %v499
    %v2100 = vunpack.c.l.b16 %v500
    %v2101 = vunpack.c.h.b16 %v500
    %v2102 = vunpack.c.l.b16 %v501
    %v2103 = vunpack.c.h.b16 %v501
    %v2104 = vunpack.c.l.b16 %v502
    %v2105 = vunpack.c.h.b16 %v502
    %v2106 = vunpack.c.l.b16 %v503
    %v2107 = vunpack.c.h.b16 %v503
    %v2108 = vunpack.c.l.b16 %v504
    %v2109 = vunpack.c.h.b16 %v504
    %v2110 = vunpack.c.l.b16 %v505
    %v2111 = vunpack.c.h.b16 %v505
    %v2112 = vunpack.c.l.b16 %v506
    %v2113 = vunpack.c.h.b16 %v506
    %v2114 = vunpack.c.l.b16 %v507
    %v2115 = vunpack.c.h.b16 %v507
    %v2116 = vunpack.c.l.b16 %v508
    %v2117 = vunpack.c.h.b16 %v508
    %v2118 = vunpack.c.l.b16 %v509
    %v2119 = vunpack.c.h.b16 %v509
    %v2120 = vunpack.c.l.b16 %v510
    %v2121 = vunpack.c.h.b16 %v510
    %v2122 = vunpack.c.l.b16 %v511
    %v2123 = vunpack.c.h.b16 %v511
    %v2124 = vunpack.c.l.b16 %v512
    %v2125 = vunpack.c.h.b16 %v512
    %v2126 = vunpack.c.l.b16 %v513
    %v2127 = vunpack.c.h.b16 %v513
    %v2128 = vunpack.c.l.b16 %v514
    %v2129 = vunpack.c.h.b16 %v514
    %v2130 = vunpack.c.l.b16 %v515
    %v2131 = vunpack.c.h.b16 %v515
    %v2132 = vunpack.c.l.b16 %v516
    %v2133 = vunpack.c.h.b16 %v516
    %v2134 = vunpack.c.l.b16 %v517
    %v2135 = vunpack.c.h.b16 %v517
    %v2136 = vunpack.c.l.b16 %v518
    %v2137 = vunpack.c.h.b16 %v518
    %v2138 = vunpack.c.l.b16 %v519
    %v2139 = vunpack.c.h.b16 %v519
    %v2140 = vunpack.c.l.b16 %v520
    %v2141 = vunpack.c.h.b16 %v520
    %v2142 = vunpack.c.l.b16 %v521
    %v2143 = vunpack.c.h.b16 %v521
    %v2144 = vunpack.c.l.b16 %v522
    %v2145 = vunpack.c.h.b16 %v522
    %v2146 = vunpack.c.l.b16 %v523
    %v2147 = vunpack.c.h.b16 %v523
    %v2148 = vunpack.c.l.b16 %v524
    %v2149 = vunpack.c.h.b16 %v524
    %v2150 = vunpack.c.l.b16 %v525
    %v2151 = vunpack.c.h.b16 %v525
    %v2152 = vunpack.c.l.b16 %v526
    %v2153 = vunpack.c.h.b16 %v526
    %v2154 = vunpack.c.l.b16 %v527
    %v2155 = vunpack.c.h.b16 %v527
    %v2156 = vunpack.c.l.b16 %v528
    %v2157 = vunpack.c.h.b16 %v528
    %v2158 = vunpack.c.l.b16 %v529
    %v2159 = vunpack.c.h.b16 %v529
    %v2160 = vunpack.c.l.b16 %v530
    %v2161 = vunpack.c.h.b16 %v530
    %v2162 = vunpack.c.l.b16 %v531
    %v2163 = vunpack.c.h.b16 %v531
    %v2164 = vunpack.c.l.b16 %v532
    %v2165 = vunpack.c.h.b16 %v532
    %v2166 = vunpack.c.l.b16 %v533
    %v2167 = vunpack.c.h.b16 %v533
    %v2168 = vunpack.c.l.b16 %v534
    %v2169 = vunpack.c.h.b16 %v534
    %v2170 = vunpack.c.l.b16 %v535
    %v2171 = vunpack.c.h.b16 %v535
    %v2172 = vunpack.c.l.b16 %v536
    %v2173 = vunpack.c.h.b16 %v536
    %v2174 = vunpack.c.l.b16 %v537
    %v2175 = vunpack.c.h.b16 %v537
    %v2176 = vunpack.c.l.b16 %v538
    %v2177 = vunpack.c.h.b16 %v538
    %v2178 = vunpack.c.l.b16 %v539
    %v2179 = vunpack.c.h.b16 %v539
    %v2180 = vunpack.c.l.b16 %v540
    %v2181 = vunpack.c.h.b16 %v540
    %v2182 = vunpack.c.l.b16 %v541
    %v2183 = vunpack.c.h.b16 %v541
    %v2184 = vunpack.c.l.b16 %v542
    %v2185 = vunpack.c.h.b16 %v542
    %v2186 = vunpack.c.l.b16 %v543
    %v2187 = vunpack.c.h.b16 %v543
    %v2188 = vunpack.c.l.b16 %v544
    %v2189 = vunpack.c.h.b16 %v544
    %v2190 = vunpack.c.l.b16 %v545
    %v2191 = vunpack.c.h.b16 %v545
    %v2192 = vunpack.c.l.b16 %v546
    %v2193 = vunpack.c.h.b16 %v546
    %v2194 = vunpack.c.l.b16 %v547
    %v2195 = vunpack.c.h.b16 %v547
    %v2196 = vunpack.c.l.b16 %v548
    %v2197 = vunpack.c.h.b16 %v548
    %v2198 = vunpack.c.l.b16 %v549
    %v2199 = vunpack.c.h.b16 %v549
    %v2200 = vunpack.c.l.b16 %v550
    %v2201 = vunpack.c.h.b16 %v550
    %v2202 = vunpack.c.l.b16 %v551
    %v2203 = vunpack.c.h.b16 %v551
    %v2204 = vunpack.c.l.b16 %v552
    %v2205 = vunpack.c.h.b16 %v552
    %v2206 = vunpack.c.l.b16 %v553
    %v2207 = vunpack.c.h.b16 %v553
    %v2208 = vunpack.c.l.b16 %v554
    %v2209 = vunpack.c.h.b16 %v554
    %v2210 = vunpack.c.l.b16 %v555
    %v2211 = vunpack.c.h.b16 %v555
    %v2212 = vunpack.c.l.b16 %v556
    %v2213 = vunpack.c.h.b16 %v556
    %v2214 = vunpack.c.l.b16 %v557
    %v2215 = vunpack.c.h.b16 %v557
    %v2216 = vunpack.c.l.b16 %v558
    %v2217 = vunpack.c.h.b16 %v558
    %v2218 = vunpack.c.l.b16 %v559
    %v2219 = vunpack.c.h.b16 %v559
    %v2220 = vunpack.c.l.b16 %v560
    %v2221 = vunpack.c.h.b16 %v560
    %v2222 = vunpack.c.l.b16 %v561
    %v2223 = vunpack.c.h.b16 %v561
    %v2224 = vunpack.c.l.b16 %v562
    %v2225 = vunpack.c.h.b16 %v562
    %v2226 = vunpack.c.l.b16 %v563
    %v2227 = vunpack.c.h.b16 %v563
    %v2228 = vunpack.c.l.b16 %v564
    %v2229 = vunpack.c.h.b16 %v564
    %v2230 = vunpack.c.l.b16 %v565
    %v2231 = vunpack.c.h.b16 %v565
    %v2232 = vunpack.c.l.b16 %v566
    %v2233 = vunpack.c.h.b16 %v566
    %v2234 = vunpack.c.l.b16 %v567
    %v2235 = vunpack.c.h.b16 %v567
    %v2236 = vunpack.c.l.b16 %v568
    %v2237 = vunpack.c.h.b16 %v568
    %v2238 = vpack.c.b16 %v1214, %v1198
    %v2239 = vpack.c.b16 %v1215, %v1199
    %v2240 = vpack.c.b16 %v1216, %v1200
    %v2241 = vpack.c.b16 %v1217, %v1201
    %v2242 = vpack.c.b16 %v1218, %v1202
    %v2243 = vpack.c.b16 %v1219, %v1203
    %v2244 = vpack.c.b16 %v1220, %v1204
    %v2245 = vpack.c.b16 %v1221, %v1205
    %v2246 = vpack.c.b16 %v1222, %v1206
    %v2247 = vpack.c.b16 %v1223, %v1207
    %v2248 = vpack.c.b16 %v1224, %v1208
    %v2249 = vpack.c.b16 %v1225, %v1209
    %v2250 = vpack.c.b16 %v1226, %v1210
    %v2251 = vpack.c.b16 %v1227, %v1211
    %v2252 = vpack.c.b16 %v1228, %v1212
    %v2253 = vpack.c.b16 %v1229, %v1213
    %v2254 = vpack.c.b16 %v1246, %v1230
    %v2255 = vpack.c.b16 %v1247, %v1231
    %v2256 = vpack.c.b16 %v1248, %v1232
    %v2257 = vpack.c.b16 %v1249, %v1233
    %v2258 = vpack.c.b16 %v1250, %v1234
    %v2259 = vpack.c.b16 %v1251, %v1235
    %v2260 = vpack.c.b16 %v1252, %v1236
    %v2261 = vpack.c.b16 %v1253, %v1237
    %v2262 = vpack.c.b16 %v1254, %v1238
    %v2263 = vpack.c.b16 %v1255, %v1239
    %v2264 = vpack.c.b16 %v1256, %v1240
    %v2265 = vpack.c.b16 %v1257, %v1241
    %v2266 = vpack.c.b16 %v1258, %v1242
    %v2267 = vpack.c.b16 %v1259, %v1243
    %v2268 = vpack.c.b16 %v1260, %v1244
    %v2269 = vpack.c.b16 %v1261, %v1245
    %v2270 = vpack.c.b16 %v1278, %v1262
    %v2271 = vpack.c.b16 %v1279, %v1263
    %v2272 = vpack.c.b16 %v1280, %v1264
    %v2273 = vpack.c.b16 %v1281, %v1265
    %v2274 = vpack.c.b16 %v1282, %v1266
    %v2275 = vpack.c.b16 %v1283, %v1267
    %v2276 = vpack.c.b16 %v1284, %v1268
    %v2277 = vpack.c.b16 %v1285, %v1269
    %v2278 = vpack.c.b16 %v1286, %v1270
    %v2279 = vpack.c.b16 %v1287, %v1271
    %v2280 = vpack.c.b16 %v1288, %v1272
    %v2281 = vpack.c.b16 %v1289, %v1273
    %v2282 = vpack.c.b16 %v1290, %v1274
    %v2283 = vpack.c.b16 %v1291, %v1275
    %v2284 = vpack.c.b16 %v1292, %v1276
    %v2285 = vpack.c.b16 %v1293, %v1277
    %v2286 = vpack.c.b16 %v1310, %v1294
    %v2287 = vpack.c.b16 %v1311, %v1295
    %v2288 = vpack.c.b16 %v1312, %v1296
    %v2289 = vpack.c.b16 %v1313, %v1297
    %v2290 = vpack.c.b16 %v1314, %v1298
    %v2291 = vpack.c.b16 %v1315, %v1299
    %v2292 = vpack.c.b16 %v1316, %v1300
    %v2293 = vpack.c.b16 %v1317, %v1301
    %v2294 = vpack.c.b16 %v1318, %v1302
    %v2295 = vpack.c.b16 %v1319, %v1303
    %v2296 = vpack.c.b16 %v1320, %v1304
    %v2297 = vpack.c.b16 %v1321, %v1305
    %v2298 = vpack.c.b16 %v1322, %v1306
    %v2299 = vpack.c.b16 %v1323, %v1307
    %v2300 = vpack.c.b16 %v1324, %v1308
    %v2301 = vpack.c.b16 %v1325, %v1309
    %v2302 = vpack.c.b16 %v1342, %v1326
    %v2303 = vpack.c.b16 %v1343, %v1327
    %v2304 = vpack.c.b16 %v1344, %v1328
    %v2305 = vpack.c.b16 %v1345, %v1329
    %v2306 = vpack.c.b16 %v1346, %v1330
    %v2307 = vpack.c.b16 %v1347, %v1331
    %v2308 = vpack.c.b16 %v1348, %v1332
    %v2309 = vpack.c.b16 %v1349, %v1333
    %v2310 = vpack.c.b16 %v1350, %v1334
    %v2311 = vpack.c.b16 %v1351, %v1335
    %v2312 = vpack.c.b16 %v1352, %v1336
    %v2313 = vpack.c.b16 %v1353, %v1337
    %v2314 = vpack.c.b16 %v1354, %v1338
    %v2315 = vpack.c.b16 %v1355, %v1339
    %v2316 = vpack.c.b16 %v1356, %v1340
    %v2317 = vpack.c.b16 %v1357, %v1341
    %v2318 = vpack.c.b16 %v1374, %v1358
    %v2319 = vpack.c.b16 %v1375, %v1359
    %v2320 = vpack.c.b16 %v1376, %v1360
    %v2321 = vpack.c.b16 %v1377, %v1361
    %v2322 = vpack.c.b16 %v1378, %v1362
    %v2323 = vpack.c.b16 %v1379, %v1363
    %v2324 = vpack.c.b16 %v1380, %v1364
    %v2325 = vpack.c.b16 %v1381, %v1365
    %v2326 = vpack.c.b16 %v1382, %v1366
    %v2327 = vpack.c.b16 %v1383, %v1367
    %v2328 = vpack.c.b16 %v1384, %v1368
    %v2329 = vpack.c.b16 %v1385, %v1369
    %v2330 = vpack.c.b16 %v1386, %v1370
    %v2331 = vpack.c.b16 %v1387, %v1371
    %v2332 = vpack.c.b16 %v1388, %v1372
    %v2333 = vpack.c.b16 %v1389, %v1373
    %v2334 = vpack.c.b16 %v1406, %v1390
    %v2335 = vpack.c.b16 %v1407, %v1391
    %v2336 = vpack.c.b16 %v1408, %v1392
    %v2337 = vpack.c.b16 %v1409, %v1393
    %v2338 = vpack.c.b16 %v1410, %v1394
    %v2339 = vpack.c.b16 %v1411, %v1395
    %v2340 = vpack.c.b16 %v1412, %v1396
    %v2341 = vpack.c.b16 %v1413, %v1397
    %v2342 = vpack.c.b16 %v1414, %v1398
    %v2343 = vpack.c.b16 %v1415, %v1399
    %v2344 = vpack.c.b16 %v1416, %v1400
    %v2345 = vpack.c.b16 %v1417, %v1401
    %v2346 = vpack.c.b16 %v1418, %v1402
    %v2347 = vpack.c.b16 %v1419, %v1403
    %v2348 = vpack.c.b16 %v1420, %v1404
    %v2349 = vpack.c.b16 %v1421, %v1405
    %v2350 = vpack.c.b16 %v1438, %v1422
    %v2351 = vpack.c.b16 %v1439, %v1423
    %v2352 = vpack.c.b16 %v1440, %v1424
    %v2353 = vpack.c.b16 %v1441, %v1425
    %v2354 = vpack.c.b16 %v1442, %v1426
    %v2355 = vpack.c.b16 %v1443, %v1427
    %v2356 = vpack.c.b16 %v1444, %v1428
    %v2357 = vpack.c.b16 %v1445, %v1429
    %v2358 = vpack.c.b16 %v1446, %v1430
    %v2359 = vpack.c.b16 %v1447, %v1431
    %v2360 = vpack.c.b16 %v1448, %v1432
    %v2361 = vpack.c.b16 %v1449, %v1433
    %v2362 = vpack.c.b16 %v1450, %v1434
    %v2363 = vpack.c.b16 %v1451, %v1435
    %v2364 = vpack.c.b16 %v1452, %v1436
    %v2365 = vpack.c.b16 %v1453, %v1437
    %v2366 = vpack.c.b16 %v1470, %v1454
    %v2367 = vpack.c.b16 %v1471, %v1455
    %v2368 = vpack.c.b16 %v1472, %v1456
    %v2369 = vpack.c.b16 %v1473, %v1457
    %v2370 = vpack.c.b16 %v1474, %v1458
    %v2371 = vpack.c.b16 %v1475, %v1459
    %v2372 = vpack.c.b16 %v1476, %v1460
    %v2373 = vpack.c.b16 %v1477, %v1461
    %v2374 = vpack.c.b16 %v1478, %v1462
    %v2375 = vpack.c.b16 %v1479, %v1463
    %v2376 = vpack.c.b16 %v1480, %v1464
    %v2377 = vpack.c.b16 %v1481, %v1465
    %v2378 = vpack.c.b16 %v1482, %v1466
    %v2379 = vpack.c.b16 %v1483, %v1467
    %v2380 = vpack.c.b16 %v1484, %v1468
    %v2381 = vpack.c.b16 %v1485, %v1469
    %v2382 = vpack.c.b16 %v1502, %v1486
    %v2383 = vpack.c.b16 %v1503, %v1487
    %v2384 = vpack.c.b16 %v1504, %v1488
    %v2385 = vpack.c.b16 %v1505, %v1489
    %v2386 = vpack.c.b16 %v1506, %v1490
    %v2387 = vpack.c.b16 %v1507, %v1491
    %v2388 = vpack.c.b16 %v1508, %v1492
    %v2389 = vpack.c.b16 %v1509, %v1493
    %v2390 = vpack.c.b16 %v1510, %v1494
    %v2391 = vpack.c.b16 %v1511, %v1495
    %v2392 = vpack.c.b16 %v1512, %v1496
    %v2393 = vpack.c.b16 %v1513, %v1497
    %v2394 = vpack.c.b16 %v1514, %v1498
    %v2395 = vpack.c.b16 %v1515, %v1499
    %v2396 = vpack.c.b16 %v1516, %v1500
    %v2397 = vpack.c.b16 %v1517, %v1501
    %v2398 = vpack.c.b16 %v1534, %v1518
    %v2399 = vpack.c.b16 %v1535, %v1519
    %v2400 = vpack.c.b16 %v1536, %v1520
    %v2401 = vpack.c.b16 %v1537, %v1521
    %v2402 = vpack.c.b16 %v1538, %v1522
    %v2403 = vpack.c.b16 %v1539, %v1523
    %v2404 = vpack.c.b16 %v1540, %v1524
    %v2405 = vpack.c.b16 %v1541, %v1525
    %v2406 = vpack.c.b16 %v1542, %v1526
    %v2407 = vpack.c.b16 %v1543, %v1527
    %v2408 = vpack.c.b16 %v1544, %v1528
    %v2409 = vpack.c.b16 %v1545, %v1529
    %v2410 = vpack.c.b16 %v1546, %v1530
    %v2411 = vpack.c.b16 %v1547, %v1531
    %v2412 = vpack.c.b16 %v1548, %v1532
    %v2413 = vpack.c.b16 %v1549, %v1533
    %v2414 = vpack.c.b16 %v1566, %v1550
    %v2415 = vpack.c.b16 %v1567, %v1551
    %v2416 = vpack.c.b16 %v1568, %v1552
    %v2417 = vpack.c.b16 %v1569, %v1553
    %v2418 = vpack.c.b16 %v1570, %v1554
    %v2419 = vpack.c.b16 %v1571, %v1555
    %v2420 = vpack.c.b16 %v1572, %v1556
    %v2421 = vpack.c.b16 %v1573, %v1557
    %v2422 = vpack.c.b16 %v1574, %v1558
    %v2423 = vpack.c.b16 %v1575, %v1559
    %v2424 = vpack.c.b16 %v1576, %v1560
    %v2425 = vpack.c.b16 %v1577, %v1561
    %v2426 = vpack.c.b16 %v1578, %v1562
    %v2427 = vpack.c.b16 %v1579, %v1563
    %v2428 = vpack.c.b16 %v1580, %v1564
    %v2429 = vpack.c.b16 %v1581, %v1565
    %v2430 = vpack.c.b16 %v1598, %v1582
    %v2431 = vpack.c.b16 %v1599, %v1583
    %v2432 = vpack.c.b16 %v1600, %v1584
    %v2433 = vpack.c.b16 %v1601, %v1585
    %v2434 = vpack.c.b16 %v1602, %v1586
    %v2435 = vpack.c.b16 %v1603, %v1587
    %v2436 = vpack.c.b16 %v1604, %v1588
    %v2437 = vpack.c.b16 %v1605, %v1589
    %v2438 = vpack.c.b16 %v1606, %v1590
    %v2439 = vpack.c.b16 %v1607, %v1591
    %v2440 = vpack.c.b16 %v1608, %v1592
    %v2441 = vpack.c.b16 %v1609, %v1593
    %v2442 = vpack.c.b16 %v1610, %v1594
    %v2443 = vpack.c.b16 %v1611, %v1595
    %v2444 = vpack.c.b16 %v1612, %v1596
    %v2445 = vpack.c.b16 %v1613, %v1597
    %v2446 = vpack.c.b16 %v1630, %v1614
    %v2447 = vpack.c.b16 %v1631, %v1615
    %v2448 = vpack.c.b16 %v1632, %v1616
    %v2449 = vpack.c.b16 %v1633, %v1617
    %v2450 = vpack.c.b16 %v1634, %v1618
    %v2451 = vpack.c.b16 %v1635, %v1619
    %v2452 = vpack.c.b16 %v1636, %v1620
    %v2453 = vpack.c.b16 %v1637, %v1621
    %v2454 = vpack.c.b16 %v1638, %v1622
    %v2455 = vpack.c.b16 %v1639, %v1623
    %v2456 = vpack.c.b16 %v1640, %v1624
    %v2457 = vpack.c.b16 %v1641, %v1625
    %v2458 = vpack.c.b16 %v1642, %v1626
    %v2459 = vpack.c.b16 %v1643, %v1627
    %v2460 = vpack.c.b16 %v1644, %v1628
    %v2461 = vpack.c.b16 %v1645, %v1629
    %v2462 = vpack.c.b16 %v1662, %v1646
    %v2463 = vpack.c.b16 %v1663, %v1647
    %v2464 = vpack.c.b16 %v1664, %v1648
    %v2465 = vpack.c.b16 %v1665, %v1649
    %v2466 = vpack.c.b16 %v1666, %v1650
    %v2467 = vpack.c.b16 %v1667, %v1651
    %v2468 = vpack.c.b16 %v1668, %v1652
    %v2469 = vpack.c.b16 %v1669, %v1653
    %v2470 = vpack.c.b16 %v1670, %v1654
    %v2471 = vpack.c.b16 %v1671, %v1655
    %v2472 = vpack.c.b16 %v1672, %v1656
    %v2473 = vpack.c.b16 %v1673, %v1657
    %v2474 = vpack.c.b16 %v1674, %v1658
    %v2475 = vpack.c.b16 %v1675, %v1659
    %v2476 = vpack.c.b16 %v1676, %v1660
    %v2477 = vpack.c.b16 %v1677, %v1661
    %v2478 = vpack.c.b16 %v1694, %v1678
    %v2479 = vpack.c.b16 %v1695, %v1679
    %v2480 = vpack.c.b16 %v1696, %v1680
    %v2481 = vpack.c.b16 %v1697, %v1681
    %v2482 = vpack.c.b16 %v1698, %v1682
    %v2483 = vpack.c.b16 %v1699, %v1683
    %v2484 = vpack.c.b16 %v1700, %v1684
    %v2485 = vpack.c.b16 %v1701, %v1685
    %v2486 = vpack.c.b16 %v1702, %v1686
    %v2487 = vpack.c.b16 %v1703, %v1687
    %v2488 = vpack.c.b16 %v1704, %v1688
    %v2489 = vpack.c.b16 %v1705, %v1689
    %v2490 = vpack.c.b16 %v1706, %v1690
    %v2491 = vpack.c.b16 %v1707, %v1691
    %v2492 = vpack.c.b16 %v1708, %v1692
    %v2493 = vpack.c.b16 %v1709, %v1693
    %v2494 = vpack.c.b16 %v1726, %v1710
    %v2495 = vpack.c.b16 %v1727, %v1711
    %v2496 = vpack.c.b16 %v1728, %v1712
    %v2497 = vpack.c.b16 %v1729, %v1713
    %v2498 = vpack.c.b16 %v1730, %v1714
    %v2499 = vpack.c.b16 %v1731, %v1715
    %v2500 = vpack.c.b16 %v1732, %v1716
    %v2501 = vpack.c.b16 %v1733, %v1717
    %v2502 = vpack.c.b16 %v1734, %v1718
    %v2503 = vpack.c.b16 %v1735, %v1719
    %v2504 = vpack.c.b16 %v1736, %v1720
    %v2505 = vpack.c.b16 %v1737, %v1721
    %v2506 = vpack.c.b16 %v1738, %v1722
    %v2507 = vpack.c.b16 %v1739, %v1723
    %v2508 = vpack.c.b16 %v1740, %v1724
    %v2509 = vpack.c.b16 %v1741, %v1725
    %v2510 = vpack.c.b16 %v1758, %v1742
    %v2511 = vpack.c.b16 %v1759, %v1743
    %v2512 = vpack.c.b16 %v1760, %v1744
    %v2513 = vpack.c.b16 %v1761, %v1745
    %v2514 = vpack.c.b16 %v1762, %v1746
    %v2515 = vpack.c.b16 %v1763, %v1747
    %v2516 = vpack.c.b16 %v1764, %v1748
    %v2517 = vpack.c.b16 %v1765, %v1749
    %v2518 = vpack.c.b16 %v1766, %v1750
    %v2519 = vpack.c.b16 %v1767, %v1751
    %v2520 = vpack.c.b16 %v1768, %v1752
    %v2521 = vpack.c.b16 %v1769, %v1753
    %v2522 = vpack.c.b16 %v1770, %v1754
    %v2523 = vpack.c.b16 %v1771, %v1755
    %v2524 = vpack.c.b16 %v1772, %v1756
    %v2525 = vpack.c.b16 %v1773, %v1757
    %v2526 = vpack.c.b16 %v1790, %v1774
    %v2527 = vpack.c.b16 %v1791, %v1775
    %v2528 = vpack.c.b16 %v1792, %v1776
    %v2529 = vpack.c.b16 %v1793, %v1777
    %v2530 = vpack.c.b16 %v1794, %v1778
    %v2531 = vpack.c.b16 %v1795, %v1779
    %v2532 = vpack.c.b16 %v1796, %v1780
    %v2533 = vpack.c.b16 %v1797, %v1781
    %v2534 = vpack.c.b16 %v1798, %v1782
    %v2535 = vpack.c.b16 %v1799, %v1783
    %v2536 = vpack.c.b16 %v1800, %v1784
    %v2537 = vpack.c.b16 %v1801, %v1785
    %v2538 = vpack.c.b16 %v1802, %v1786
    %v2539 = vpack.c.b16 %v1803, %v1787
    %v2540 = vpack.c.b16 %v1804, %v1788
    %v2541 = vpack.c.b16 %v1805, %v1789
    %v2542 = vpack.c.b16 %v1822, %v1806
    %v2543 = vpack.c.b16 %v1823, %v1807
    %v2544 = vpack.c.b16 %v1824, %v1808
    %v2545 = vpack.c.b16 %v1825, %v1809
    %v2546 = vpack.c.b16 %v1826, %v1810
    %v2547 = vpack.c.b16 %v1827, %v1811
    %v2548 = vpack.c.b16 %v1828, %v1812
    %v2549 = vpack.c.b16 %v1829, %v1813
    %v2550 = vpack.c.b16 %v1830, %v1814
    %v2551 = vpack.c.b16 %v1831, %v1815
    %v2552 = vpack.c.b16 %v1832, %v1816
    %v2553 = vpack.c.b16 %v1833, %v1817
    %v2554 = vpack.c.b16 %v1834, %v1818
    %v2555 = vpack.c.b16 %v1835, %v1819
    %v2556 = vpack.c.b16 %v1836, %v1820
    %v2557 = vpack.c.b16 %v1837, %v1821
    %v2558 = vpack.c.b16 %v1854, %v1838
    %v2559 = vpack.c.b16 %v1855, %v1839
    %v2560 = vpack.c.b16 %v1856, %v1840
    %v2561 = vpack.c.b16 %v1857, %v1841
    %v2562 = vpack.c.b16 %v1858, %v1842
    %v2563 = vpack.c.b16 %v1859, %v1843
    %v2564 = vpack.c.b16 %v1860, %v1844
    %v2565 = vpack.c.b16 %v1861, %v1845
    %v2566 = vpack.c.b16 %v1862, %v1846
    %v2567 = vpack.c.b16 %v1863, %v1847
    %v2568 = vpack.c.b16 %v1864, %v1848
    %v2569 = vpack.c.b16 %v1865, %v1849
    %v2570 = vpack.c.b16 %v1866, %v1850
    %v2571 = vpack.c.b16 %v1867, %v1851
    %v2572 = vpack.c.b16 %v1868, %v1852
    %v2573 = vpack.c.b16 %v1869, %v1853
    %v2574 = vpack.c.b16 %v1886, %v1870
    %v2575 = vpack.c.b16 %v1887, %v1871
    %v2576 = vpack.c.b16 %v1888, %v1872
    %v2577 = vpack.c.b16 %v1889, %v1873
    %v2578 = vpack.c.b16 %v1890, %v1874
    %v2579 = vpack.c.b16 %v1891, %v1875
    %v2580 = vpack.c.b16 %v1892, %v1876
    %v2581 = vpack.c.b16 %v1893, %v1877
    %v2582 = vpack.c.b16 %v1894, %v1878
    %v2583 = vpack.c.b16 %v1895, %v1879
    %v2584 = vpack.c.b16 %v1896, %v1880
    %v2585 = vpack.c.b16 %v1897, %v1881
    %v2586 = vpack.c.b16 %v1898, %v1882
    %v2587 = vpack.c.b16 %v1899, %v1883
    %v2588 = vpack.c.b16 %v1900, %v1884
    %v2589 = vpack.c.b16 %v1901, %v1885
    %v2590 = vpack.c.b16 %v1918, %v1902
    %v2591 = vpack.c.b16 %v1919, %v1903
    %v2592 = vpack.c.b16 %v1920, %v1904
    %v2593 = vpack.c.b16 %v1921, %v1905
    %v2594 = vpack.c.b16 %v1922, %v1906
    %v2595 = vpack.c.b16 %v1923, %v1907
    %v2596 = vpack.c.b16 %v1924, %v1908
    %v2597 = vpack.c.b16 %v1925, %v1909
    %v2598 = vpack.c.b16 %v1926, %v1910
    %v2599 = vpack.c.b16 %v1927, %v1911
    %v2600 = vpack.c.b16 %v1928, %v1912
    %v2601 = vpack.c.b16 %v1929, %v1913
    %v2602 = vpack.c.b16 %v1930, %v1914
    %v2603 = vpack.c.b16 %v1931, %v1915
    %v2604 = vpack.c.b16 %v1932, %v1916
    %v2605 = vpack.c.b16 %v1933, %v1917
    %v2606 = vpack.c.b16 %v1950, %v1934
    %v2607 = vpack.c.b16 %v1951, %v1935
    %v2608 = vpack.c.b16 %v1952, %v1936
    %v2609 = vpack.c.b16 %v1953, %v1937
    %v2610 = vpack.c.b16 %v1954, %v1938
    %v2611 = vpack.c.b16 %v1955, %v1939
    %v2612 = vpack.c.b16 %v1956, %v1940
    %v2613 = vpack.c.b16 %v1957, %v1941
    %v2614 = vpack.c.b16 %v1958, %v1942
    %v2615 = vpack.c.b16 %v1959, %v1943
    %v2616 = vpack.c.b16 %v1960, %v1944
    %v2617 = vpack.c.b16 %v1961, %v1945
    %v2618 = vpack.c.b16 %v1962, %v1946
    %v2619 = vpack.c.b16 %v1963, %v1947
    %v2620 = vpack.c.b16 %v1964, %v1948
    %v2621 = vpack.c.b16 %v1965, %v1949
    %v2622 = vpack.c.b16 %v1982, %v1966
    %v2623 = vpack.c.b16 %v1983, %v1967
    %v2624 = vpack.c.b16 %v1984, %v1968
    %v2625 = vpack.c.b16 %v1985, %v1969
    %v2626 = vpack.c.b16 %v1986, %v1970
    %v2627 = vpack.c.b16 %v1987, %v1971
    %v2628 = vpack.c.b16 %v1988, %v1972
    %v2629 = vpack.c.b16 %v1989, %v1973
    %v2630 = vpack.c.b16 %v1990, %v1974
    %v2631 = vpack.c.b16 %v1991, %v1975
    %v2632 = vpack.c.b16 %v1992, %v1976
    %v2633 = vpack.c.b16 %v1993, %v1977
    %v2634 = vpack.c.b16 %v1994, %v1978
    %v2635 = vpack.c.b16 %v1995, %v1979
    %v2636 = vpack.c.b16 %v1996, %v1980
    %v2637 = vpack.c.b16 %v1997, %v1981
    %v2638 = vpack.c.b16 %v2014, %v1998
    %v2639 = vpack.c.b16 %v2015, %v1999
    %v2640 = vpack.c.b16 %v2016, %v2000
    %v2641 = vpack.c.b16 %v2017, %v2001
    %v2642 = vpack.c.b16 %v2018, %v2002
    %v2643 = vpack.c.b16 %v2019, %v2003
    %v2644 = vpack.c.b16 %v2020, %v2004
    %v2645 = vpack.c.b16 %v2021, %v2005
    %v2646 = vpack.c.b16 %v2022, %v2006
    %v2647 = vpack.c.b16 %v2023, %v2007
    %v2648 = vpack.c.b16 %v2024, %v2008
    %v2649 = vpack.c.b16 %v2025, %v2009
    %v2650 = vpack.c.b16 %v2026, %v2010
    %v2651 = vpack.c.b16 %v2027, %v2011
    %v2652 = vpack.c.b16 %v2028, %v2012
    %v2653 = vpack.c.b16 %v2029, %v2013
    %v2654 = vpack.c.b16 %v2046, %v2030
    %v2655 = vpack.c.b16 %v2047, %v2031
    %v2656 = vpack.c.b16 %v2048, %v2032
    %v2657 = vpack.c.b16 %v2049, %v2033
    %v2658 = vpack.c.b16 %v2050, %v2034
    %v2659 = vpack.c.b16 %v2051, %v2035
    %v2660 = vpack.c.b16 %v2052, %v2036
    %v2661 = vpack.c.b16 %v2053, %v2037
    %v2662 = vpack.c.b16 %v2054, %v2038
    %v2663 = vpack.c.b16 %v2055, %v2039
    %v2664 = vpack.c.b16 %v2056, %v2040
    %v2665 = vpack.c.b16 %v2057, %v2041
    %v2666 = vpack.c.b16 %v2058, %v2042
    %v2667 = vpack.c.b16 %v2059, %v2043
    %v2668 = vpack.c.b16 %v2060, %v2044
    %v2669 = vpack.c.b16 %v2061, %v2045
    %v2670 = vpack.c.b16 %v2078, %v2062
    %v2671 = vpack.c.b16 %v2079, %v2063
    %v2672 = vpack.c.b16 %v2080, %v2064
    %v2673 = vpack.c.b16 %v2081, %v2065
    %v2674 = vpack.c.b16 %v2082, %v2066
    %v2675 = vpack.c.b16 %v2083, %v2067
    %v2676 = vpack.c.b16 %v2084, %v2068
    %v2677 = vpack.c.b16 %v2085, %v2069
    %v2678 = vpack.c.b16 %v2086, %v2070
    %v2679 = vpack.c.b16 %v2087, %v2071
    %v2680 = vpack.c.b16 %v2088, %v2072
    %v2681 = vpack.c.b16 %v2089, %v2073
    %v2682 = vpack.c.b16 %v2090, %v2074
    %v2683 = vpack.c.b16 %v2091, %v2075
    %v2684 = vpack.c.b16 %v2092, %v2076
    %v2685 = vpack.c.b16 %v2093, %v2077
    %v2686 = vpack.c.b16 %v2110, %v2094
    %v2687 = vpack.c.b16 %v2111, %v2095
    %v2688 = vpack.c.b16 %v2112, %v2096
    %v2689 = vpack.c.b16 %v2113, %v2097
    %v2690 = vpack.c.b16 %v2114, %v2098
    %v2691 = vpack.c.b16 %v2115, %v2099
    %v2692 = vpack.c.b16 %v2116, %v2100
    %v2693 = vpack.c.b16 %v2117, %v2101
    %v2694 = vpack.c.b16 %v2118, %v2102
    %v2695 = vpack.c.b16 %v2119, %v2103
    %v2696 = vpack.c.b16 %v2120, %v2104
    %v2697 = vpack.c.b16 %v2121, %v2105
    %v2698 = vpack.c.b16 %v2122, %v2106
    %v2699 = vpack.c.b16 %v2123, %v2107
    %v2700 = vpack.c.b16 %v2124, %v2108
    %v2701 = vpack.c.b16 %v2125, %v2109
    %v2702 = vpack.c.b16 %v2142, %v2126
    %v2703 = vpack.c.b16 %v2143, %v2127
    %v2704 = vpack.c.b16 %v2144, %v2128
    %v2705 = vpack.c.b16 %v2145, %v2129
    %v2706 = vpack.c.b16 %v2146, %v2130
    %v2707 = vpack.c.b16 %v2147, %v2131
    %v2708 = vpack.c.b16 %v2148, %v2132
    %v2709 = vpack.c.b16 %v2149, %v2133
    %v2710 = vpack.c.b16 %v2150, %v2134
    %v2711 = vpack.c.b16 %v2151, %v2135
    %v2712 = vpack.c.b16 %v2152, %v2136
    %v2713 = vpack.c.b16 %v2153, %v2137
    %v2714 = vpack.c.b16 %v2154, %v2138
    %v2715 = vpack.c.b16 %v2155, %v2139
    %v2716 = vpack.c.b16 %v2156, %v2140
    %v2717 = vpack.c.b16 %v2157, %v2141
    %v2718 = vpack.c.b16 %v2174, %v2158
    %v2719 = vpack.c.b16 %v2175, %v2159
    %v2720 = vpack.c.b16 %v2176, %v2160
    %v2721 = vpack.c.b16 %v2177, %v2161
    %v2722 = vpack.c.b16 %v2178, %v2162
    %v2723 = vpack.c.b16 %v2179, %v2163
    %v2724 = vpack.c.b16 %v2180, %v2164
    %v2725 = vpack.c.b16 %v2181, %v2165
    %v2726 = vpack.c.b16 %v2182, %v2166
    %v2727 = vpack.c.b16 %v2183, %v2167
    %v2728 = vpack.c.b16 %v2184, %v2168
    %v2729 = vpack.c.b16 %v2185, %v2169
    %v2730 = vpack.c.b16 %v2186, %v2170
    %v2731 = vpack.c.b16 %v2187, %v2171
    %v2732 = vpack.c.b16 %v2188, %v2172
    %v2733 = vpack.c.b16 %v2189, %v2173
    %v2734 = vpack.c.b16 %v2206, %v2190
    %v2735 = vpack.c.b16 %v2207, %v2191
    %v2736 = vpack.c.b16 %v2208, %v2192
    %v2737 = vpack.c.b16 %v2209, %v2193
    %v2738 = vpack.c.b16 %v2210, %v2194
    %v2739 = vpack.c.b16 %v2211, %v2195
    %v2740 = vpack.c.b16 %v2212, %v2196
    %v2741 = vpack.c.b16 %v2213, %v2197
    %v2742 = vpack.c.b16 %v2214, %v2198
    %v2743 = vpack.c.b16 %v2215, %v2199
    %v2744 = vpack.c.b16 %v2216, %v2200
    %v2745 = vpack.c.b16 %v2217, %v2201
    %v2746 = vpack.c.b16 %v2218, %v2202
    %v2747 = vpack.c.b16 %v2219, %v2203
    %v2748 = vpack.c.b16 %v2220, %v2204
    %v2749 = vpack.c.b16 %v2221, %v2205
    %v2750 = vpack.c.b16 %v2222, %v2222
    %v2751 = vpack.c.b16 %v2223, %v2223
    %v2752 = vpack.c.b16 %v2224, %v2224
    %v2753 = vpack.c.b16 %v2225, %v2225
    %v2754 = vpack.c.b16 %v2226, %v2226
    %v2755 = vpack.c.b16 %v2227, %v2227
    %v2756 = vpack.c.b16 %v2228, %v2228
    %v2757 = vpack.c.b16 %v2229, %v2229
    %v2758 = vpack.c.b16 %v2230, %v2230
    %v2759 = vpack.c.b16 %v2231, %v2231
    %v2760 = vpack.c.b16 %v2232, %v2232
    %v2761 = vpack.c.b16 %v2233, %v2233
    %v2762 = vpack.c.b16 %v2234, %v2234
    %v2763 = vpack.c.b16 %v2235, %v2235
    %v2764 = vpack.c.b16 %v2236, %v2236
    %v2765 = vpack.c.b16 %v2237, %v2237
    %vm3278 = vcmask 15360
    %v3280 = vsel %vm3278, %v673, 0
    %vm3282 = vcmask 1040384
    %v3284 = vsel %vm3282, %v2750, 0
    %v3287 = vsel %vm3282, %v2751, 0
    %v3290 = vsel %vm3282, %v2752, 0
    %v3293 = vsel %vm3282, %v2753, 0
    %v3296 = vsel %vm3282, %v2754, 0
    %v3299 = vsel %vm3282, %v2755, 0
    %v3302 = vsel %vm3282, %v2756, 0
    %v3305 = vsel %vm3282, %v2757, 0
    %v3308 = vsel %vm3282, %v2758, 0
    %v3311 = vsel %vm3282, %v2759, 0
    %v3314 = vsel %vm3282, %v2760, 0
    %v3317 = vsel %vm3282, %v2761, 0
    %v3320 = vsel %vm3282, %v2762, 0
    %v3323 = vsel %vm3282, %v2763, 0
    %v3326 = vsel %vm3282, %v2764, 0
    %v3329 = vsel %vm3282, %v2765, 0
    %3331 = vmatprep.subr.bf16.mxu0 %v2239
    %3332 = vmatpush1.bf16.msra.mxu0 %v2238
    %3333 = vmatprep.subr.bf16.mxu0 %v2255
    %3334 = vmatpush1.bf16.msra.mxu0 %v2254
    %3335 = vmatprep.subr.bf16.mxu0 %v2271
    %3336 = vmatpush1.bf16.msra.mxu0 %v2270
    %3337 = vmatprep.subr.bf16.mxu0 %v2287
    %3338 = vmatpush1.bf16.msra.mxu0 %v2286
    %3339 = vmatprep.subr.bf16.mxu0 %v2303
    %3340 = vmatpush1.bf16.msra.mxu0 %v2302
    %3341 = vmatprep.subr.bf16.mxu0 %v2319
    %3342 = vmatpush1.bf16.msra.mxu0 %v2318
    %3343 = vmatprep.subr.bf16.mxu0 %v2335
    %3344 = vmatpush1.bf16.msra.mxu0 %v2334
    %3345 = vmatprep.subr.bf16.mxu0 %v2351
    %3346 = vmatpush1.bf16.msra.mxu0 %v2350
    %3347 = vmatprep.subr.bf16.mxu0 %v2367
    %3348 = vmatpush1.bf16.msra.mxu0 %v2366
    %3349 = vmatprep.subr.bf16.mxu0 %v2383
    %3350 = vmatpush1.bf16.msra.mxu0 %v2382
    %3351 = vmatprep.subr.bf16.mxu0 %v2399
    %3352 = vmatpush1.bf16.msra.mxu0 %v2398
    %3353 = vmatprep.subr.bf16.mxu0 %v2415
    %3354 = vmatpush1.bf16.msra.mxu0 %v2414
    %3355 = vmatprep.subr.bf16.mxu0 %v2431
    %3356 = vmatpush1.bf16.msra.mxu0 %v2430
    %3357 = vmatprep.subr.bf16.mxu0 %v2447
    %3358 = vmatpush1.bf16.msra.mxu0 %v2446
    %3359 = vmatprep.subr.bf16.mxu0 %v2463
    %3360 = vmatpush1.bf16.msra.mxu0 %v2462
    %3361 = vmatprep.subr.bf16.mxu0 %v2479
    %3362 = vmatpush1.bf16.msra.mxu0 %v2478
    %3363 = vmatprep.mubr.bf16.mxu0 %v670
    %3364 = vmatmul.mubr.bf16.gmra.mrb[0].mxu0 %v669
    %v3365 = vpop.f32.mrb[0].mxu0
    %v3366 = vadd.f32 %v576, %v3365
    %v3367 = vpop.f32.mrb[0].mxu0
    %v3368 = vadd.f32 %v580, %v3367
    %v3369 = vpop.f32.mrb[0].mxu0
    %v3370 = vadd.f32 %v576, %v3369
    %v3371 = vpop.f32.mrb[0].mxu0
    %v3372 = vadd.f32 %v580, %v3371
    %3373 = vdwg.mxu0
    %3374 = vmatprep.subr.bf16.mxu0 %v2495
    %3375 = vmatpush1.bf16.msra.mxu0 %v2494
    %3376 = vmatprep.subr.bf16.mxu0 %v2511
    %3377 = vmatpush1.bf16.msra.mxu0 %v2510
    %3378 = vmatprep.subr.bf16.mxu0 %v2527
    %3379 = vmatpush1.bf16.msra.mxu0 %v2526
    %3380 = vmatprep.subr.bf16.mxu0 %v2543
    %3381 = vmatpush1.bf16.msra.mxu0 %v2542
    %3382 = vmatprep.subr.bf16.mxu0 %v2559
    %3383 = vmatpush1.bf16.msra.mxu0 %v2558
    %3384 = vmatprep.subr.bf16.mxu0 %v2575
    %3385 = vmatpush1.bf16.msra.mxu0 %v2574
    %3386 = vmatprep.subr.bf16.mxu0 %v2591
    %3387 = vmatpush1.bf16.msra.mxu0 %v2590
    %3388 = vmatprep.subr.bf16.mxu0 %v2607
    %3389 = vmatpush1.bf16.msra.mxu0 %v2606
    %3390 = vmatprep.subr.bf16.mxu0 %v2623
    %3391 = vmatpush1.bf16.msra.mxu0 %v2622
    %3392 = vmatprep.subr.bf16.mxu0 %v2639
    %3393 = vmatpush1.bf16.msra.mxu0 %v2638
    %3394 = vmatprep.subr.bf16.mxu0 %v2655
    %3395 = vmatpush1.bf16.msra.mxu0 %v2654
    %3396 = vmatprep.subr.bf16.mxu0 %v2671
    %3397 = vmatpush1.bf16.msra.mxu0 %v2670
    %3398 = vmatprep.subr.bf16.mxu0 %v2687
    %3399 = vmatpush1.bf16.msra.mxu0 %v2686
    %3400 = vmatprep.subr.bf16.mxu0 %v2703
    %3401 = vmatpush1.bf16.msra.mxu0 %v2702
    %3402 = vmatprep.subr.bf16.mxu0 %v2719
    %3403 = vmatpush1.bf16.msra.mxu0 %v2718
    %3404 = vmatprep.subr.bf16.mxu0 %v2735
    %3405 = vmatpush1.bf16.msra.mxu0 %v2734
    %3406 = vmatprep.mubr.bf16.mxu0 %v672
    %3407 = vmatmul.mubr.bf16.gmra.mrb[0].mxu0 %v671
    %v3408 = vpop.f32.mrb[0].mxu0
    %v3409 = vadd.f32 %v3366, %v3408
    %v3410 = vpop.f32.mrb[0].mxu0
    %v3411 = vadd.f32 %v3368, %v3410
    %v3412 = vpop.f32.mrb[0].mxu0
    %v3413 = vadd.f32 %v3370, %v3412
    %v3414 = vpop.f32.mrb[0].mxu0
    %v3415 = vadd.f32 %v3372, %v3414
    %3416 = vdwg.mxu0
    %3417 = vmatprep.subr.bf16.mxu0 %v3287
    %3418 = vmatpush1.bf16.msra.mxu0 %v3284
    %3419 = vmatprep.subr.bf16.mxu0 0
    %3420 = vmatpush1.bf16.msra.mxu0 0
    %3421 = vmatprep.subr.bf16.mxu0 0
    %3422 = vmatpush1.bf16.msra.mxu0 0
    %3423 = vmatprep.subr.bf16.mxu0 0
    %3424 = vmatpush1.bf16.msra.mxu0 0
    %3425 = vmatprep.subr.bf16.mxu0 0
    %3426 = vmatpush1.bf16.msra.mxu0 0
    %3427 = vmatprep.subr.bf16.mxu0 0
    %3428 = vmatpush1.bf16.msra.mxu0 0
    %3429 = vmatprep.subr.bf16.mxu0 0
    %3430 = vmatpush1.bf16.msra.mxu0 0
    %3431 = vmatprep.subr.bf16.mxu0 0
    %3432 = vmatpush1.bf16.msra.mxu0 0
    %3433 = vmatprep.subr.bf16.mxu0 0
    %3434 = vmatpush1.bf16.msra.mxu0 0
    %3435 = vmatprep.subr.bf16.mxu0 0
    %3436 = vmatpush1.bf16.msra.mxu0 0
    %3437 = vmatprep.subr.bf16.mxu0 0
    %3438 = vmatpush1.bf16.msra.mxu0 0
    %3439 = vmatprep.subr.bf16.mxu0 0
    %3440 = vmatpush1.bf16.msra.mxu0 0
    %3441 = vmatprep.subr.bf16.mxu0 0
    %3442 = vmatpush1.bf16.msra.mxu0 0
    %3443 = vmatprep.subr.bf16.mxu0 0
    %3444 = vmatpush1.bf16.msra.mxu0 0
    %3445 = vmatprep.subr.bf16.mxu0 0
    %3446 = vmatpush1.bf16.msra.mxu0 0
    %3447 = vmatprep.subr.bf16.mxu0 0
    %3448 = vmatpush1.bf16.msra.mxu0 0
    %3449 = vmatprep.mubr.bf16.mxu0 0
    %3450 = vmatmul.mubr.bf16.gmra.mrb[0].mxu0 %v3280
    %v3451 = vpop.f32.mrb[0].mxu0
    %v3452 = vadd.f32 %v3409, %v3451
    %v3453 = vpop.f32.mrb[0].mxu0
    %v3454 = vadd.f32 %v3411, %v3453
    %v3455 = vpop.f32.mrb[0].mxu0
    %v3456 = vadd.f32 %v3413, %v3455
    %v3457 = vpop.f32.mrb[0].mxu0
    %v3458 = vadd.f32 %v3415, %v3457
    %3459 = vdwg.mxu0
    %3460 = vmatprep.subr.bf16.mxu0 %v2241
    %3461 = vmatpush1.bf16.msra.mxu0 %v2240
    %3462 = vmatprep.subr.bf16.mxu0 %v2257
    %3463 = vmatpush1.bf16.msra.mxu0 %v2256
    %3464 = vmatprep.subr.bf16.mxu0 %v2273
    %3465 = vmatpush1.bf16.msra.mxu0 %v2272
    %3466 = vmatprep.subr.bf16.mxu0 %v2289
    %3467 = vmatpush1.bf16.msra.mxu0 %v2288
    %3468 = vmatprep.subr.bf16.mxu0 %v2305
    %3469 = vmatpush1.bf16.msra.mxu0 %v2304
    %3470 = vmatprep.subr.bf16.mxu0 %v2321
    %3471 = vmatpush1.bf16.msra.mxu0 %v2320
    %3472 = vmatprep.subr.bf16.mxu0 %v2337
    %3473 = vmatpush1.bf16.msra.mxu0 %v2336
    %3474 = vmatprep.subr.bf16.mxu0 %v2353
    %3475 = vmatpush1.bf16.msra.mxu0 %v2352
    %3476 = vmatprep.subr.bf16.mxu0 %v2369
    %3477 = vmatpush1.bf16.msra.mxu0 %v2368
    %3478 = vmatprep.subr.bf16.mxu0 %v2385
    %3479 = vmatpush1.bf16.msra.mxu0 %v2384
    %3480 = vmatprep.subr.bf16.mxu0 %v2401
    %3481 = vmatpush1.bf16.msra.mxu0 %v2400
    %3482 = vmatprep.subr.bf16.mxu0 %v2417
    %3483 = vmatpush1.bf16.msra.mxu0 %v2416
    %3484 = vmatprep.subr.bf16.mxu0 %v2433
    %3485 = vmatpush1.bf16.msra.mxu0 %v2432
    %3486 = vmatprep.subr.bf16.mxu0 %v2449
    %3487 = vmatpush1.bf16.msra.mxu0 %v2448
    %3488 = vmatprep.subr.bf16.mxu0 %v2465
    %3489 = vmatpush1.bf16.msra.mxu0 %v2464
    %3490 = vmatprep.subr.bf16.mxu0 %v2481
    %3491 = vmatpush1.bf16.msra.mxu0 %v2480
    %3492 = vmatprep.mubr.bf16.mxu0 %v670
    %3493 = vmatmul.mubr.bf16.gmra.mrb[0].mxu0 %v669
    %v3494 = vpop.f32.mrb[0].mxu0
    %v3495 = vadd.f32 %v584, %v3494
    %v3496 = vpop.f32.mrb[0].mxu0
    %v3497 = vadd.f32 %v588, %v3496
    %v3498 = vpop.f32.mrb[0].mxu0
    %v3499 = vadd.f32 %v584, %v3498
    %v3500 = vpop.f32.mrb[0].mxu0
    %v3501 = vadd.f32 %v588, %v3500
    %3502 = vdwg.mxu0
    %3503 = vmatprep.subr.bf16.mxu0 %v2497
    %3504 = vmatpush1.bf16.msra.mxu0 %v2496
    %3505 = vmatprep.subr.bf16.mxu0 %v2513
    %3506 = vmatpush1.bf16.msra.mxu0 %v2512
    %3507 = vmatprep.subr.bf16.mxu0 %v2529
    %3508 = vmatpush1.bf16.msra.mxu0 %v2528
    %3509 = vmatprep.subr.bf16.mxu0 %v2545
    %3510 = vmatpush1.bf16.msra.mxu0 %v2544
    %3511 = vmatprep.subr.bf16.mxu0 %v2561
    %3512 = vmatpush1.bf16.msra.mxu0 %v2560
    %3513 = vmatprep.subr.bf16.mxu0 %v2577
    %3514 = vmatpush1.bf16.msra.mxu0 %v2576
    %3515 = vmatprep.subr.bf16.mxu0 %v2593
    %3516 = vmatpush1.bf16.msra.mxu0 %v2592
    %3517 = vmatprep.subr.bf16.mxu0 %v2609
    %3518 = vmatpush1.bf16.msra.mxu0 %v2608
    %3519 = vmatprep.subr.bf16.mxu0 %v2625
    %3520 = vmatpush1.bf16.msra.mxu0 %v2624
    %3521 = vmatprep.subr.bf16.mxu0 %v2641
    %3522 = vmatpush1.bf16.msra.mxu0 %v2640
    %3523 = vmatprep.subr.bf16.mxu0 %v2657
    %3524 = vmatpush1.bf16.msra.mxu0 %v2656
    %3525 = vmatprep.subr.bf16.mxu0 %v2673
    %3526 = vmatpush1.bf16.msra.mxu0 %v2672
    %3527 = vmatprep.subr.bf16.mxu0 %v2689
    %3528 = vmatpush1.bf16.msra.mxu0 %v2688
    %3529 = vmatprep.subr.bf16.mxu0 %v2705
    %3530 = vmatpush1.bf16.msra.mxu0 %v2704
    %3531 = vmatprep.subr.bf16.mxu0 %v2721
    %3532 = vmatpush1.bf16.msra.mxu0 %v2720
    %3533 = vmatprep.subr.bf16.mxu0 %v2737
    %3534 = vmatpush1.bf16.msra.mxu0 %v2736
    %3535 = vmatprep.mubr.bf16.mxu0 %v672
    %3536 = vmatmul.mubr.bf16.gmra.mrb[0].mxu0 %v671
    %v3537 = vpop.f32.mrb[0].mxu0
    %v3538 = vadd.f32 %v3495, %v3537
    %v3539 = vpop.f32.mrb[0].mxu0
    %v3540 = vadd.f32 %v3497, %v3539
    %v3541 = vpop.f32.mrb[0].mxu0
    %v3542 = vadd.f32 %v3499, %v3541
    %v3543 = vpop.f32.mrb[0].mxu0
    %v3544 = vadd.f32 %v3501, %v3543
    %3545 = vdwg.mxu0
    %3546 = vmatprep.subr.bf16.mxu0 %v3293
    %3547 = vmatpush1.bf16.msra.mxu0 %v3290
    %3548 = vmatprep.subr.bf16.mxu0 0
    %3549 = vmatpush1.bf16.msra.mxu0 0
    %3550 = vmatprep.subr.bf16.mxu0 0
    %3551 = vmatpush1.bf16.msra.mxu0 0
    %3552 = vmatprep.subr.bf16.mxu0 0
    %3553 = vmatpush1.bf16.msra.mxu0 0
    %3554 = vmatprep.subr.bf16.mxu0 0
    %3555 = vmatpush1.bf16.msra.mxu0 0
    %3556 = vmatprep.subr.bf16.mxu0 0
    %3557 = vmatpush1.bf16.msra.mxu0 0
    %3558 = vmatprep.subr.bf16.mxu0 0
    %3559 = vmatpush1.bf16.msra.mxu0 0
    %3560 = vmatprep.subr.bf16.mxu0 0
    %3561 = vmatpush1.bf16.msra.mxu0 0
    %3562 = vmatprep.subr.bf16.mxu0 0
    %3563 = vmatpush1.bf16.msra.mxu0 0
    %3564 = vmatprep.subr.bf16.mxu0 0
    %3565 = vmatpush1.bf16.msra.mxu0 0
    %3566 = vmatprep.subr.bf16.mxu0 0
    %3567 = vmatpush1.bf16.msra.mxu0 0
    %3568 = vmatprep.subr.bf16.mxu0 0
    %3569 = vmatpush1.bf16.msra.mxu0 0
    %3570 = vmatprep.subr.bf16.mxu0 0
    %3571 = vmatpush1.bf16.msra.mxu0 0
    %3572 = vmatprep.subr.bf16.mxu0 0
    %3573 = vmatpush1.bf16.msra.mxu0 0
    %3574 = vmatprep.subr.bf16.mxu0 0
    %3575 = vmatpush1.bf16.msra.mxu0 0
    %3576 = vmatprep.subr.bf16.mxu0 0
    %3577 = vmatpush1.bf16.msra.mxu0 0
    %3578 = vmatprep.mubr.bf16.mxu0 0
    %3579 = vmatmul.mubr.bf16.gmra.mrb[0].mxu0 %v3280
    %v3580 = vpop.f32.mrb[0].mxu0
    %v3581 = vadd.f32 %v3538, %v3580
    %v3582 = vpop.f32.mrb[0].mxu0
    %v3583 = vadd.f32 %v3540, %v3582
    %v3584 = vpop.f32.mrb[0].mxu0
    %v3585 = vadd.f32 %v3542, %v3584
    %v3586 = vpop.f32.mrb[0].mxu0
    %v3587 = vadd.f32 %v3544, %v3586
    %3588 = vdwg.mxu0
    %3589 = vmatprep.subr.bf16.mxu0 %v2243
    %3590 = vmatpush1.bf16.msra.mxu0 %v2242
    %3591 = vmatprep.subr.bf16.mxu0 %v2259
    %3592 = vmatpush1.bf16.msra.mxu0 %v2258
    %3593 = vmatprep.subr.bf16.mxu0 %v2275
    %3594 = vmatpush1.bf16.msra.mxu0 %v2274
    %3595 = vmatprep.subr.bf16.mxu0 %v2291
    %3596 = vmatpush1.bf16.msra.mxu0 %v2290
    %3597 = vmatprep.subr.bf16.mxu0 %v2307
    %3598 = vmatpush1.bf16.msra.mxu0 %v2306
    %3599 = vmatprep.subr.bf16.mxu0 %v2323
    %3600 = vmatpush1.bf16.msra.mxu0 %v2322
    %3601 = vmatprep.subr.bf16.mxu0 %v2339
    %3602 = vmatpush1.bf16.msra.mxu0 %v2338
    %3603 = vmatprep.subr.bf16.mxu0 %v2355
    %3604 = vmatpush1.bf16.msra.mxu0 %v2354
    %3605 = vmatprep.subr.bf16.mxu0 %v2371
    %3606 = vmatpush1.bf16.msra.mxu0 %v2370
    %3607 = vmatprep.subr.bf16.mxu0 %v2387
    %3608 = vmatpush1.bf16.msra.mxu0 %v2386
    %3609 = vmatprep.subr.bf16.mxu0 %v2403
    %3610 = vmatpush1.bf16.msra.mxu0 %v2402
    %3611 = vmatprep.subr.bf16.mxu0 %v2419
    %3612 = vmatpush1.bf16.msra.mxu0 %v2418
    %3613 = vmatprep.subr.bf16.mxu0 %v2435
    %3614 = vmatpush1.bf16.msra.mxu0 %v2434
    %3615 = vmatprep.subr.bf16.mxu0 %v2451
    %3616 = vmatpush1.bf16.msra.mxu0 %v2450
    %3617 = vmatprep.subr.bf16.mxu0 %v2467
    %3618 = vmatpush1.bf16.msra.mxu0 %v2466
    %3619 = vmatprep.subr.bf16.mxu0 %v2483
    %3620 = vmatpush1.bf16.msra.mxu0 %v2482
    %3621 = vmatprep.mubr.bf16.mxu0 %v670
    %3622 = vmatmul.mubr.bf16.gmra.mrb[0].mxu0 %v669
    %v3623 = vpop.f32.mrb[0].mxu0
    %v3624 = vadd.f32 %v592, %v3623
    %v3625 = vpop.f32.mrb[0].mxu0
    %v3626 = vadd.f32 %v596, %v3625
    %v3627 = vpop.f32.mrb[0].mxu0
    %v3628 = vadd.f32 %v592, %v3627
    %v3629 = vpop.f32.mrb[0].mxu0
    %v3630 = vadd.f32 %v596, %v3629
    %3631 = vdwg.mxu0
    %3632 = vmatprep.subr.bf16.mxu0 %v2499
    %3633 = vmatpush1.bf16.msra.mxu0 %v2498
    %3634 = vmatprep.subr.bf16.mxu0 %v2515
    %3635 = vmatpush1.bf16.msra.mxu0 %v2514
    %3636 = vmatprep.subr.bf16.mxu0 %v2531
    %3637 = vmatpush1.bf16.msra.mxu0 %v2530
    %3638 = vmatprep.subr.bf16.mxu0 %v2547
    %3639 = vmatpush1.bf16.msra.mxu0 %v2546
    %3640 = vmatprep.subr.bf16.mxu0 %v2563
    %3641 = vmatpush1.bf16.msra.mxu0 %v2562
    %3642 = vmatprep.subr.bf16.mxu0 %v2579
    %3643 = vmatpush1.bf16.msra.mxu0 %v2578
    %3644 = vmatprep.subr.bf16.mxu0 %v2595
    %3645 = vmatpush1.bf16.msra.mxu0 %v2594
    %3646 = vmatprep.subr.bf16.mxu0 %v2611
    %3647 = vmatpush1.bf16.msra.mxu0 %v2610
    %3648 = vmatprep.subr.bf16.mxu0 %v2627
    %3649 = vmatpush1.bf16.msra.mxu0 %v2626
    %3650 = vmatprep.subr.bf16.mxu0 %v2643
    %3651 = vmatpush1.bf16.msra.mxu0 %v2642
    %3652 = vmatprep.subr.bf16.mxu0 %v2659
    %3653 = vmatpush1.bf16.msra.mxu0 %v2658
    %3654 = vmatprep.subr.bf16.mxu0 %v2675
    %3655 = vmatpush1.bf16.msra.mxu0 %v2674
    %3656 = vmatprep.subr.bf16.mxu0 %v2691
    %3657 = vmatpush1.bf16.msra.mxu0 %v2690
    %3658 = vmatprep.subr.bf16.mxu0 %v2707
    %3659 = vmatpush1.bf16.msra.mxu0 %v2706
    %3660 = vmatprep.subr.bf16.mxu0 %v2723
    %3661 = vmatpush1.bf16.msra.mxu0 %v2722
    %3662 = vmatprep.subr.bf16.mxu0 %v2739
    %3663 = vmatpush1.bf16.msra.mxu0 %v2738
    %3664 = vmatprep.mubr.bf16.mxu0 %v672
    %3665 = vmatmul.mubr.bf16.gmra.mrb[0].mxu0 %v671
    %v3666 = vpop.f32.mrb[0].mxu0
    %v3667 = vadd.f32 %v3624, %v3666
    %v3668 = vpop.f32.mrb[0].mxu0
    %v3669 = vadd.f32 %v3626, %v3668
    %v3670 = vpop.f32.mrb[0].mxu0
    %v3671 = vadd.f32 %v3628, %v3670
    %v3672 = vpop.f32.mrb[0].mxu0
    %v3673 = vadd.f32 %v3630, %v3672
    %3674 = vdwg.mxu0
    %3675 = vmatprep.subr.bf16.mxu0 %v3299
    %3676 = vmatpush1.bf16.msra.mxu0 %v3296
    %3677 = vmatprep.subr.bf16.mxu0 0
    %3678 = vmatpush1.bf16.msra.mxu0 0
    %3679 = vmatprep.subr.bf16.mxu0 0
    %3680 = vmatpush1.bf16.msra.mxu0 0
    %3681 = vmatprep.subr.bf16.mxu0 0
    %3682 = vmatpush1.bf16.msra.mxu0 0
    %3683 = vmatprep.subr.bf16.mxu0 0
    %3684 = vmatpush1.bf16.msra.mxu0 0
    %3685 = vmatprep.subr.bf16.mxu0 0
    %3686 = vmatpush1.bf16.msra.mxu0 0
    %3687 = vmatprep.subr.bf16.mxu0 0
    %3688 = vmatpush1.bf16.msra.mxu0 0
    %3689 = vmatprep.subr.bf16.mxu0 0
    %3690 = vmatpush1.bf16.msra.mxu0 0
    %3691 = vmatprep.subr.bf16.mxu0 0
    %3692 = vmatpush1.bf16.msra.mxu0 0
    %3693 = vmatprep.subr.bf16.mxu0 0
    %3694 = vmatpush1.bf16.msra.mxu0 0
    %3695 = vmatprep.subr.bf16.mxu0 0
    %3696 = vmatpush1.bf16.msra.mxu0 0
    %3697 = vmatprep.subr.bf16.mxu0 0
    %3698 = vmatpush1.bf16.msra.mxu0 0
    %3699 = vmatprep.subr.bf16.mxu0 0
    %3700 = vmatpush1.bf16.msra.mxu0 0
    %3701 = vmatprep.subr.bf16.mxu0 0
    %3702 = vmatpush1.bf16.msra.mxu0 0
    %3703 = vmatprep.subr.bf16.mxu0 0
    %3704 = vmatpush1.bf16.msra.mxu0 0
    %3705 = vmatprep.subr.bf16.mxu0 0
    %3706 = vmatpush1.bf16.msra.mxu0 0
    %3707 = vmatprep.mubr.bf16.mxu0 0
    %3708 = vmatmul.mubr.bf16.gmra.mrb[0].mxu0 %v3280
    %v3709 = vpop.f32.mrb[0].mxu0
    %v3710 = vadd.f32 %v3667, %v3709
    %v3711 = vpop.f32.mrb[0].mxu0
    %v3712 = vadd.f32 %v3669, %v3711
    %v3713 = vpop.f32.mrb[0].mxu0
    %v3714 = vadd.f32 %v3671, %v3713
    %v3715 = vpop.f32.mrb[0].mxu0
    %v3716 = vadd.f32 %v3673, %v3715
    %3717 = vdwg.mxu0
    %3718 = vmatprep.subr.bf16.mxu0 %v2245
    %3719 = vmatpush1.bf16.msra.mxu0 %v2244
    %3720 = vmatprep.subr.bf16.mxu0 %v2261
    %3721 = vmatpush1.bf16.msra.mxu0 %v2260
    %3722 = vmatprep.subr.bf16.mxu0 %v2277
    %3723 = vmatpush1.bf16.msra.mxu0 %v2276
    %3724 = vmatprep.subr.bf16.mxu0 %v2293
    %3725 = vmatpush1.bf16.msra.mxu0 %v2292
    %3726 = vmatprep.subr.bf16.mxu0 %v2309
    %3727 = vmatpush1.bf16.msra.mxu0 %v2308
    %3728 = vmatprep.subr.bf16.mxu0 %v2325
    %3729 = vmatpush1.bf16.msra.mxu0 %v2324
    %3730 = vmatprep.subr.bf16.mxu0 %v2341
    %3731 = vmatpush1.bf16.msra.mxu0 %v2340
    %3732 = vmatprep.subr.bf16.mxu0 %v2357
    %3733 = vmatpush1.bf16.msra.mxu0 %v2356
    %3734 = vmatprep.subr.bf16.mxu0 %v2373
    %3735 = vmatpush1.bf16.msra.mxu0 %v2372
    %3736 = vmatprep.subr.bf16.mxu0 %v2389
    %3737 = vmatpush1.bf16.msra.mxu0 %v2388
    %3738 = vmatprep.subr.bf16.mxu0 %v2405
    %3739 = vmatpush1.bf16.msra.mxu0 %v2404
    %3740 = vmatprep.subr.bf16.mxu0 %v2421
    %3741 = vmatpush1.bf16.msra.mxu0 %v2420
    %3742 = vmatprep.subr.bf16.mxu0 %v2437
    %3743 = vmatpush1.bf16.msra.mxu0 %v2436
    %3744 = vmatprep.subr.bf16.mxu0 %v2453
    %3745 = vmatpush1.bf16.msra.mxu0 %v2452
    %3746 = vmatprep.subr.bf16.mxu0 %v2469
    %3747 = vmatpush1.bf16.msra.mxu0 %v2468
    %3748 = vmatprep.subr.bf16.mxu0 %v2485
    %3749 = vmatpush1.bf16.msra.mxu0 %v2484
    %3750 = vmatprep.mubr.bf16.mxu0 %v670
    %3751 = vmatmul.mubr.bf16.gmra.mrb[0].mxu0 %v669
    %v3752 = vpop.f32.mrb[0].mxu0
    %v3753 = vadd.f32 %v600, %v3752
    %v3754 = vpop.f32.mrb[0].mxu0
    %v3755 = vadd.f32 %v604, %v3754
    %v3756 = vpop.f32.mrb[0].mxu0
    %v3757 = vadd.f32 %v600, %v3756
    %v3758 = vpop.f32.mrb[0].mxu0
    %v3759 = vadd.f32 %v604, %v3758
    %3760 = vdwg.mxu0
    %3761 = vmatprep.subr.bf16.mxu0 %v2501
    %3762 = vmatpush1.bf16.msra.mxu0 %v2500
    %3763 = vmatprep.subr.bf16.mxu0 %v2517
    %3764 = vmatpush1.bf16.msra.mxu0 %v2516
    %3765 = vmatprep.subr.bf16.mxu0 %v2533
    %3766 = vmatpush1.bf16.msra.mxu0 %v2532
    %3767 = vmatprep.subr.bf16.mxu0 %v2549
    %3768 = vmatpush1.bf16.msra.mxu0 %v2548
    %3769 = vmatprep.subr.bf16.mxu0 %v2565
    %3770 = vmatpush1.bf16.msra.mxu0 %v2564
    %3771 = vmatprep.subr.bf16.mxu0 %v2581
    %3772 = vmatpush1.bf16.msra.mxu0 %v2580
    %3773 = vmatprep.subr.bf16.mxu0 %v2597
    %3774 = vmatpush1.bf16.msra.mxu0 %v2596
    %3775 = vmatprep.subr.bf16.mxu0 %v2613
    %3776 = vmatpush1.bf16.msra.mxu0 %v2612
    %3777 = vmatprep.subr.bf16.mxu0 %v2629
    %3778 = vmatpush1.bf16.msra.mxu0 %v2628
    %3779 = vmatprep.subr.bf16.mxu0 %v2645
    %3780 = vmatpush1.bf16.msra.mxu0 %v2644
    %3781 = vmatprep.subr.bf16.mxu0 %v2661
    %3782 = vmatpush1.bf16.msra.mxu0 %v2660
    %3783 = vmatprep.subr.bf16.mxu0 %v2677
    %3784 = vmatpush1.bf16.msra.mxu0 %v2676
    %3785 = vmatprep.subr.bf16.mxu0 %v2693
    %3786 = vmatpush1.bf16.msra.mxu0 %v2692
    %3787 = vmatprep.subr.bf16.mxu0 %v2709
    %3788 = vmatpush1.bf16.msra.mxu0 %v2708
    %3789 = vmatprep.subr.bf16.mxu0 %v2725
    %3790 = vmatpush1.bf16.msra.mxu0 %v2724
    %3791 = vmatprep.subr.bf16.mxu0 %v2741
    %3792 = vmatpush1.bf16.msra.mxu0 %v2740
    %3793 = vmatprep.mubr.bf16.mxu0 %v672
    %3794 = vmatmul.mubr.bf16.gmra.mrb[0].mxu0 %v671
    %v3795 = vpop.f32.mrb[0].mxu0
    %v3796 = vadd.f32 %v3753, %v3795
    %v3797 = vpop.f32.mrb[0].mxu0
    %v3798 = vadd.f32 %v3755, %v3797
    %v3799 = vpop.f32.mrb[0].mxu0
    %v3800 = vadd.f32 %v3757, %v3799
    %v3801 = vpop.f32.mrb[0].mxu0
    %v3802 = vadd.f32 %v3759, %v3801
    %3803 = vdwg.mxu0
    %3804 = vmatprep.subr.bf16.mxu0 %v3305
    %3805 = vmatpush1.bf16.msra.mxu0 %v3302
    %3806 = vmatprep.subr.bf16.mxu0 0
    %3807 = vmatpush1.bf16.msra.mxu0 0
    %3808 = vmatprep.subr.bf16.mxu0 0
    %3809 = vmatpush1.bf16.msra.mxu0 0
    %3810 = vmatprep.subr.bf16.mxu0 0
    %3811 = vmatpush1.bf16.msra.mxu0 0
    %3812 = vmatprep.subr.bf16.mxu0 0
    %3813 = vmatpush1.bf16.msra.mxu0 0
    %3814 = vmatprep.subr.bf16.mxu0 0
    %3815 = vmatpush1.bf16.msra.mxu0 0
    %3816 = vmatprep.subr.bf16.mxu0 0
    %3817 = vmatpush1.bf16.msra.mxu0 0
    %3818 = vmatprep.subr.bf16.mxu0 0
    %3819 = vmatpush1.bf16.msra.mxu0 0
    %3820 = vmatprep.subr.bf16.mxu0 0
    %3821 = vmatpush1.bf16.msra.mxu0 0
    %3822 = vmatprep.subr.bf16.mxu0 0
    %3823 = vmatpush1.bf16.msra.mxu0 0
    %3824 = vmatprep.subr.bf16.mxu0 0
    %3825 = vmatpush1.bf16.msra.mxu0 0
    %3826 = vmatprep.subr.bf16.mxu0 0
    %3827 = vmatpush1.bf16.msra.mxu0 0
    %3828 = vmatprep.subr.bf16.mxu0 0
    %3829 = vmatpush1.bf16.msra.mxu0 0
    %3830 = vmatprep.subr.bf16.mxu0 0
    %3831 = vmatpush1.bf16.msra.mxu0 0
    %3832 = vmatprep.subr.bf16.mxu0 0
    %3833 = vmatpush1.bf16.msra.mxu0 0
    %3834 = vmatprep.subr.bf16.mxu0 0
    %3835 = vmatpush1.bf16.msra.mxu0 0
    %3836 = vmatprep.mubr.bf16.mxu0 0
    %3837 = vmatmul.mubr.bf16.gmra.mrb[0].mxu0 %v3280
    %v3838 = vpop.f32.mrb[0].mxu0
    %v3839 = vadd.f32 %v3796, %v3838
    %v3840 = vpop.f32.mrb[0].mxu0
    %v3841 = vadd.f32 %v3798, %v3840
    %v3842 = vpop.f32.mrb[0].mxu0
    %v3843 = vadd.f32 %v3800, %v3842
    %v3844 = vpop.f32.mrb[0].mxu0
    %v3845 = vadd.f32 %v3802, %v3844
    %3846 = vdwg.mxu0
    %3847 = vmatprep.subr.bf16.mxu0 %v2247
    %3848 = vmatpush1.bf16.msra.mxu0 %v2246
    %3849 = vmatprep.subr.bf16.mxu0 %v2263
    %3850 = vmatpush1.bf16.msra.mxu0 %v2262
    %3851 = vmatprep.subr.bf16.mxu0 %v2279
    %3852 = vmatpush1.bf16.msra.mxu0 %v2278
    %3853 = vmatprep.subr.bf16.mxu0 %v2295
    %3854 = vmatpush1.bf16.msra.mxu0 %v2294
    %3855 = vmatprep.subr.bf16.mxu0 %v2311
    %3856 = vmatpush1.bf16.msra.mxu0 %v2310
    %3857 = vmatprep.subr.bf16.mxu0 %v2327
    %3858 = vmatpush1.bf16.msra.mxu0 %v2326
    %3859 = vmatprep.subr.bf16.mxu0 %v2343
    %3860 = vmatpush1.bf16.msra.mxu0 %v2342
    %3861 = vmatprep.subr.bf16.mxu0 %v2359
    %3862 = vmatpush1.bf16.msra.mxu0 %v2358
    %3863 = vmatprep.subr.bf16.mxu0 %v2375
    %3864 = vmatpush1.bf16.msra.mxu0 %v2374
    %3865 = vmatprep.subr.bf16.mxu0 %v2391
    %3866 = vmatpush1.bf16.msra.mxu0 %v2390
    %3867 = vmatprep.subr.bf16.mxu0 %v2407
    %3868 = vmatpush1.bf16.msra.mxu0 %v2406
    %3869 = vmatprep.subr.bf16.mxu0 %v2423
    %3870 = vmatpush1.bf16.msra.mxu0 %v2422
    %3871 = vmatprep.subr.bf16.mxu0 %v2439
    %3872 = vmatpush1.bf16.msra.mxu0 %v2438
    %3873 = vmatprep.subr.bf16.mxu0 %v2455
    %3874 = vmatpush1.bf16.msra.mxu0 %v2454
    %3875 = vmatprep.subr.bf16.mxu0 %v2471
    %3876 = vmatpush1.bf16.msra.mxu0 %v2470
    %3877 = vmatprep.subr.bf16.mxu0 %v2487
    %3878 = vmatpush1.bf16.msra.mxu0 %v2486
    %3879 = vmatprep.mubr.bf16.mxu0 %v670
    %3880 = vmatmul.mubr.bf16.gmra.mrb[0].mxu0 %v669
    %v3881 = vpop.f32.mrb[0].mxu0
    %v3882 = vadd.f32 %v608, %v3881
    %v3883 = vpop.f32.mrb[0].mxu0
    %v3884 = vadd.f32 %v612, %v3883
    %v3885 = vpop.f32.mrb[0].mxu0
    %v3886 = vadd.f32 %v608, %v3885
    %v3887 = vpop.f32.mrb[0].mxu0
    %v3888 = vadd.f32 %v612, %v3887
    %3889 = vdwg.mxu0
    %3890 = vmatprep.subr.bf16.mxu0 %v2503
    %3891 = vmatpush1.bf16.msra.mxu0 %v2502
    %3892 = vmatprep.subr.bf16.mxu0 %v2519
    %3893 = vmatpush1.bf16.msra.mxu0 %v2518
    %3894 = vmatprep.subr.bf16.mxu0 %v2535
    %3895 = vmatpush1.bf16.msra.mxu0 %v2534
    %3896 = vmatprep.subr.bf16.mxu0 %v2551
    %3897 = vmatpush1.bf16.msra.mxu0 %v2550
    %3898 = vmatprep.subr.bf16.mxu0 %v2567
    %3899 = vmatpush1.bf16.msra.mxu0 %v2566
    %3900 = vmatprep.subr.bf16.mxu0 %v2583
    %3901 = vmatpush1.bf16.msra.mxu0 %v2582
    %3902 = vmatprep.subr.bf16.mxu0 %v2599
    %3903 = vmatpush1.bf16.msra.mxu0 %v2598
    %3904 = vmatprep.subr.bf16.mxu0 %v2615
    %3905 = vmatpush1.bf16.msra.mxu0 %v2614
    %3906 = vmatprep.subr.bf16.mxu0 %v2631
    %3907 = vmatpush1.bf16.msra.mxu0 %v2630
    %3908 = vmatprep.subr.bf16.mxu0 %v2647
    %3909 = vmatpush1.bf16.msra.mxu0 %v2646
    %3910 = vmatprep.subr.bf16.mxu0 %v2663
    %3911 = vmatpush1.bf16.msra.mxu0 %v2662
    %3912 = vmatprep.subr.bf16.mxu0 %v2679
    %3913 = vmatpush1.bf16.msra.mxu0 %v2678
    %3914 = vmatprep.subr.bf16.mxu0 %v2695
    %3915 = vmatpush1.bf16.msra.mxu0 %v2694
    %3916 = vmatprep.subr.bf16.mxu0 %v2711
    %3917 = vmatpush1.bf16.msra.mxu0 %v2710
    %3918 = vmatprep.subr.bf16.mxu0 %v2727
    %3919 = vmatpush1.bf16.msra.mxu0 %v2726
    %3920 = vmatprep.subr.bf16.mxu0 %v2743
    %3921 = vmatpush1.bf16.msra.mxu0 %v2742
    %3922 = vmatprep.mubr.bf16.mxu0 %v672
    %3923 = vmatmul.mubr.bf16.gmra.mrb[0].mxu0 %v671
    %v3924 = vpop.f32.mrb[0].mxu0
    %v3925 = vadd.f32 %v3882, %v3924
    %v3926 = vpop.f32.mrb[0].mxu0
    %v3927 = vadd.f32 %v3884, %v3926
    %v3928 = vpop.f32.mrb[0].mxu0
    %v3929 = vadd.f32 %v3886, %v3928
    %v3930 = vpop.f32.mrb[0].mxu0
    %v3931 = vadd.f32 %v3888, %v3930
    %3932 = vdwg.mxu0
    %3933 = vmatprep.subr.bf16.mxu0 %v3311
    %3934 = vmatpush1.bf16.msra.mxu0 %v3308
    %3935 = vmatprep.subr.bf16.mxu0 0
    %3936 = vmatpush1.bf16.msra.mxu0 0
    %3937 = vmatprep.subr.bf16.mxu0 0
    %3938 = vmatpush1.bf16.msra.mxu0 0
    %3939 = vmatprep.subr.bf16.mxu0 0
    %3940 = vmatpush1.bf16.msra.mxu0 0
    %3941 = vmatprep.subr.bf16.mxu0 0
    %3942 = vmatpush1.bf16.msra.mxu0 0
    %3943 = vmatprep.subr.bf16.mxu0 0
    %3944 = vmatpush1.bf16.msra.mxu0 0
    %3945 = vmatprep.subr.bf16.mxu0 0
    %3946 = vmatpush1.bf16.msra.mxu0 0
    %3947 = vmatprep.subr.bf16.mxu0 0
    %3948 = vmatpush1.bf16.msra.mxu0 0
    %3949 = vmatprep.subr.bf16.mxu0 0
    %3950 = vmatpush1.bf16.msra.mxu0 0
    %3951 = vmatprep.subr.bf16.mxu0 0
    %3952 = vmatpush1.bf16.msra.mxu0 0
    %3953 = vmatprep.subr.bf16.mxu0 0
    %3954 = vmatpush1.bf16.msra.mxu0 0
    %3955 = vmatprep.subr.bf16.mxu0 0
    %3956 = vmatpush1.bf16.msra.mxu0 0
    %3957 = vmatprep.subr.bf16.mxu0 0
    %3958 = vmatpush1.bf16.msra.mxu0 0
    %3959 = vmatprep.subr.bf16.mxu0 0
    %3960 = vmatpush1.bf16.msra.mxu0 0
    %3961 = vmatprep.subr.bf16.mxu0 0
    %3962 = vmatpush1.bf16.msra.mxu0 0
    %3963 = vmatprep.subr.bf16.mxu0 0
    %3964 = vmatpush1.bf16.msra.mxu0 0
    %3965 = vmatprep.mubr.bf16.mxu0 0
    %3966 = vmatmul.mubr.bf16.gmra.mrb[0].mxu0 %v3280
    %v3967 = vpop.f32.mrb[0].mxu0
    %v3968 = vadd.f32 %v3925, %v3967
    %v3969 = vpop.f32.mrb[0].mxu0
    %v3970 = vadd.f32 %v3927, %v3969
    %v3971 = vpop.f32.mrb[0].mxu0
    %v3972 = vadd.f32 %v3929, %v3971
    %v3973 = vpop.f32.mrb[0].mxu0
    %v3974 = vadd.f32 %v3931, %v3973
    %3975 = vdwg.mxu0
    %3976 = vmatprep.subr.bf16.mxu0 %v2249
    %3977 = vmatpush1.bf16.msra.mxu0 %v2248
    %3978 = vmatprep.subr.bf16.mxu0 %v2265
    %3979 = vmatpush1.bf16.msra.mxu0 %v2264
    %3980 = vmatprep.subr.bf16.mxu0 %v2281
    %3981 = vmatpush1.bf16.msra.mxu0 %v2280
    %3982 = vmatprep.subr.bf16.mxu0 %v2297
    %3983 = vmatpush1.bf16.msra.mxu0 %v2296
    %3984 = vmatprep.subr.bf16.mxu0 %v2313
    %3985 = vmatpush1.bf16.msra.mxu0 %v2312
    %3986 = vmatprep.subr.bf16.mxu0 %v2329
    %3987 = vmatpush1.bf16.msra.mxu0 %v2328
    %3988 = vmatprep.subr.bf16.mxu0 %v2345
    %3989 = vmatpush1.bf16.msra.mxu0 %v2344
    %3990 = vmatprep.subr.bf16.mxu0 %v2361
    %3991 = vmatpush1.bf16.msra.mxu0 %v2360
    %3992 = vmatprep.subr.bf16.mxu0 %v2377
    %3993 = vmatpush1.bf16.msra.mxu0 %v2376
    %3994 = vmatprep.subr.bf16.mxu0 %v2393
    %3995 = vmatpush1.bf16.msra.mxu0 %v2392
    %3996 = vmatprep.subr.bf16.mxu0 %v2409
    %3997 = vmatpush1.bf16.msra.mxu0 %v2408
    %3998 = vmatprep.subr.bf16.mxu0 %v2425
    %3999 = vmatpush1.bf16.msra.mxu0 %v2424
    %4000 = vmatprep.subr.bf16.mxu0 %v2441
    %4001 = vmatpush1.bf16.msra.mxu0 %v2440
    %4002 = vmatprep.subr.bf16.mxu0 %v2457
    %4003 = vmatpush1.bf16.msra.mxu0 %v2456
    %4004 = vmatprep.subr.bf16.mxu0 %v2473
    %4005 = vmatpush1.bf16.msra.mxu0 %v2472
    %4006 = vmatprep.subr.bf16.mxu0 %v2489
    %4007 = vmatpush1.bf16.msra.mxu0 %v2488
    %4008 = vmatprep.mubr.bf16.mxu0 %v670
    %4009 = vmatmul.mubr.bf16.gmra.mrb[0].mxu0 %v669
    %v4010 = vpop.f32.mrb[0].mxu0
    %v4011 = vadd.f32 %v616, %v4010
    %v4012 = vpop.f32.mrb[0].mxu0
    %v4013 = vadd.f32 %v620, %v4012
    %v4014 = vpop.f32.mrb[0].mxu0
    %v4015 = vadd.f32 %v616, %v4014
    %v4016 = vpop.f32.mrb[0].mxu0
    %v4017 = vadd.f32 %v620, %v4016
    %4018 = vdwg.mxu0
    %4019 = vmatprep.subr.bf16.mxu0 %v2505
    %4020 = vmatpush1.bf16.msra.mxu0 %v2504
    %4021 = vmatprep.subr.bf16.mxu0 %v2521
    %4022 = vmatpush1.bf16.msra.mxu0 %v2520
    %4023 = vmatprep.subr.bf16.mxu0 %v2537
    %4024 = vmatpush1.bf16.msra.mxu0 %v2536
    %4025 = vmatprep.subr.bf16.mxu0 %v2553
    %4026 = vmatpush1.bf16.msra.mxu0 %v2552
    %4027 = vmatprep.subr.bf16.mxu0 %v2569
    %4028 = vmatpush1.bf16.msra.mxu0 %v2568
    %4029 = vmatprep.subr.bf16.mxu0 %v2585
    %4030 = vmatpush1.bf16.msra.mxu0 %v2584
    %4031 = vmatprep.subr.bf16.mxu0 %v2601
    %4032 = vmatpush1.bf16.msra.mxu0 %v2600
    %4033 = vmatprep.subr.bf16.mxu0 %v2617
    %4034 = vmatpush1.bf16.msra.mxu0 %v2616
    %4035 = vmatprep.subr.bf16.mxu0 %v2633
    %4036 = vmatpush1.bf16.msra.mxu0 %v2632
    %4037 = vmatprep.subr.bf16.mxu0 %v2649
    %4038 = vmatpush1.bf16.msra.mxu0 %v2648
    %4039 = vmatprep.subr.bf16.mxu0 %v2665
    %4040 = vmatpush1.bf16.msra.mxu0 %v2664
    %4041 = vmatprep.subr.bf16.mxu0 %v2681
    %4042 = vmatpush1.bf16.msra.mxu0 %v2680
    %4043 = vmatprep.subr.bf16.mxu0 %v2697
    %4044 = vmatpush1.bf16.msra.mxu0 %v2696
    %4045 = vmatprep.subr.bf16.mxu0 %v2713
    %4046 = vmatpush1.bf16.msra.mxu0 %v2712
    %4047 = vmatprep.subr.bf16.mxu0 %v2729
    %4048 = vmatpush1.bf16.msra.mxu0 %v2728
    %4049 = vmatprep.subr.bf16.mxu0 %v2745
    %4050 = vmatpush1.bf16.msra.mxu0 %v2744
    %4051 = vmatprep.mubr.bf16.mxu0 %v672
    %4052 = vmatmul.mubr.bf16.gmra.mrb[0].mxu0 %v671
    %v4053 = vpop.f32.mrb[0].mxu0
    %v4054 = vadd.f32 %v4011, %v4053
    %v4055 = vpop.f32.mrb[0].mxu0
    %v4056 = vadd.f32 %v4013, %v4055
    %v4057 = vpop.f32.mrb[0].mxu0
    %v4058 = vadd.f32 %v4015, %v4057
    %v4059 = vpop.f32.mrb[0].mxu0
    %v4060 = vadd.f32 %v4017, %v4059
    %4061 = vdwg.mxu0
    %4062 = vmatprep.subr.bf16.mxu0 %v3317
    %4063 = vmatpush1.bf16.msra.mxu0 %v3314
    %4064 = vmatprep.subr.bf16.mxu0 0
    %4065 = vmatpush1.bf16.msra.mxu0 0
    %4066 = vmatprep.subr.bf16.mxu0 0
    %4067 = vmatpush1.bf16.msra.mxu0 0
    %4068 = vmatprep.subr.bf16.mxu0 0
    %4069 = vmatpush1.bf16.msra.mxu0 0
    %4070 = vmatprep.subr.bf16.mxu0 0
    %4071 = vmatpush1.bf16.msra.mxu0 0
    %4072 = vmatprep.subr.bf16.mxu0 0
    %4073 = vmatpush1.bf16.msra.mxu0 0
    %4074 = vmatprep.subr.bf16.mxu0 0
    %4075 = vmatpush1.bf16.msra.mxu0 0
    %4076 = vmatprep.subr.bf16.mxu0 0
    %4077 = vmatpush1.bf16.msra.mxu0 0
    %4078 = vmatprep.subr.bf16.mxu0 0
    %4079 = vmatpush1.bf16.msra.mxu0 0
    %4080 = vmatprep.subr.bf16.mxu0 0
    %4081 = vmatpush1.bf16.msra.mxu0 0
    %4082 = vmatprep.subr.bf16.mxu0 0
    %4083 = vmatpush1.bf16.msra.mxu0 0
    %4084 = vmatprep.subr.bf16.mxu0 0
    %4085 = vmatpush1.bf16.msra.mxu0 0
    %4086 = vmatprep.subr.bf16.mxu0 0
    %4087 = vmatpush1.bf16.msra.mxu0 0
    %4088 = vmatprep.subr.bf16.mxu0 0
    %4089 = vmatpush1.bf16.msra.mxu0 0
    %4090 = vmatprep.subr.bf16.mxu0 0
    %4091 = vmatpush1.bf16.msra.mxu0 0
    %4092 = vmatprep.subr.bf16.mxu0 0
    %4093 = vmatpush1.bf16.msra.mxu0 0
    %4094 = vmatprep.mubr.bf16.mxu0 0
    %4095 = vmatmul.mubr.bf16.gmra.mrb[0].mxu0 %v3280
    %v4096 = vpop.f32.mrb[0].mxu0
    %v4097 = vadd.f32 %v4054, %v4096
    %v4098 = vpop.f32.mrb[0].mxu0
    %v4099 = vadd.f32 %v4056, %v4098
    %v4100 = vpop.f32.mrb[0].mxu0
    %v4101 = vadd.f32 %v4058, %v4100
    %v4102 = vpop.f32.mrb[0].mxu0
    %v4103 = vadd.f32 %v4060, %v4102
    %4104 = vdwg.mxu0
    %4105 = vmatprep.subr.bf16.mxu0 %v2251
    %4106 = vmatpush1.bf16.msra.mxu0 %v2250
    %4107 = vmatprep.subr.bf16.mxu0 %v2267
    %4108 = vmatpush1.bf16.msra.mxu0 %v2266
    %4109 = vmatprep.subr.bf16.mxu0 %v2283
    %4110 = vmatpush1.bf16.msra.mxu0 %v2282
    %4111 = vmatprep.subr.bf16.mxu0 %v2299
    %4112 = vmatpush1.bf16.msra.mxu0 %v2298
    %4113 = vmatprep.subr.bf16.mxu0 %v2315
    %4114 = vmatpush1.bf16.msra.mxu0 %v2314
    %4115 = vmatprep.subr.bf16.mxu0 %v2331
    %4116 = vmatpush1.bf16.msra.mxu0 %v2330
    %4117 = vmatprep.subr.bf16.mxu0 %v2347
    %4118 = vmatpush1.bf16.msra.mxu0 %v2346
    %4119 = vmatprep.subr.bf16.mxu0 %v2363
    %4120 = vmatpush1.bf16.msra.mxu0 %v2362
    %4121 = vmatprep.subr.bf16.mxu0 %v2379
    %4122 = vmatpush1.bf16.msra.mxu0 %v2378
    %4123 = vmatprep.subr.bf16.mxu0 %v2395
    %4124 = vmatpush1.bf16.msra.mxu0 %v2394
    %4125 = vmatprep.subr.bf16.mxu0 %v2411
    %4126 = vmatpush1.bf16.msra.mxu0 %v2410
    %4127 = vmatprep.subr.bf16.mxu0 %v2427
    %4128 = vmatpush1.bf16.msra.mxu0 %v2426
    %4129 = vmatprep.subr.bf16.mxu0 %v2443
    %4130 = vmatpush1.bf16.msra.mxu0 %v2442
    %4131 = vmatprep.subr.bf16.mxu0 %v2459
    %4132 = vmatpush1.bf16.msra.mxu0 %v2458
    %4133 = vmatprep.subr.bf16.mxu0 %v2475
    %4134 = vmatpush1.bf16.msra.mxu0 %v2474
    %4135 = vmatprep.subr.bf16.mxu0 %v2491
    %4136 = vmatpush1.bf16.msra.mxu0 %v2490
    %4137 = vmatprep.mubr.bf16.mxu0 %v670
    %4138 = vmatmul.mubr.bf16.gmra.mrb[0].mxu0 %v669
    %v4139 = vpop.f32.mrb[0].mxu0
    %v4140 = vadd.f32 %v624, %v4139
    %v4141 = vpop.f32.mrb[0].mxu0
    %v4142 = vadd.f32 %v628, %v4141
    %v4143 = vpop.f32.mrb[0].mxu0
    %v4144 = vadd.f32 %v624, %v4143
    %v4145 = vpop.f32.mrb[0].mxu0
    %v4146 = vadd.f32 %v628, %v4145
    %4147 = vdwg.mxu0
    %4148 = vmatprep.subr.bf16.mxu0 %v2507
    %4149 = vmatpush1.bf16.msra.mxu0 %v2506
    %4150 = vmatprep.subr.bf16.mxu0 %v2523
    %4151 = vmatpush1.bf16.msra.mxu0 %v2522
    %4152 = vmatprep.subr.bf16.mxu0 %v2539
    %4153 = vmatpush1.bf16.msra.mxu0 %v2538
    %4154 = vmatprep.subr.bf16.mxu0 %v2555
    %4155 = vmatpush1.bf16.msra.mxu0 %v2554
    %4156 = vmatprep.subr.bf16.mxu0 %v2571
    %4157 = vmatpush1.bf16.msra.mxu0 %v2570
    %4158 = vmatprep.subr.bf16.mxu0 %v2587
    %4159 = vmatpush1.bf16.msra.mxu0 %v2586
    %4160 = vmatprep.subr.bf16.mxu0 %v2603
    %4161 = vmatpush1.bf16.msra.mxu0 %v2602
    %4162 = vmatprep.subr.bf16.mxu0 %v2619
    %4163 = vmatpush1.bf16.msra.mxu0 %v2618
    %4164 = vmatprep.subr.bf16.mxu0 %v2635
    %4165 = vmatpush1.bf16.msra.mxu0 %v2634
    %4166 = vmatprep.subr.bf16.mxu0 %v2651
    %4167 = vmatpush1.bf16.msra.mxu0 %v2650
    %4168 = vmatprep.subr.bf16.mxu0 %v2667
    %4169 = vmatpush1.bf16.msra.mxu0 %v2666
    %4170 = vmatprep.subr.bf16.mxu0 %v2683
    %4171 = vmatpush1.bf16.msra.mxu0 %v2682
    %4172 = vmatprep.subr.bf16.mxu0 %v2699
    %4173 = vmatpush1.bf16.msra.mxu0 %v2698
    %4174 = vmatprep.subr.bf16.mxu0 %v2715
    %4175 = vmatpush1.bf16.msra.mxu0 %v2714
    %4176 = vmatprep.subr.bf16.mxu0 %v2731
    %4177 = vmatpush1.bf16.msra.mxu0 %v2730
    %4178 = vmatprep.subr.bf16.mxu0 %v2747
    %4179 = vmatpush1.bf16.msra.mxu0 %v2746
    %4180 = vmatprep.mubr.bf16.mxu0 %v672
    %4181 = vmatmul.mubr.bf16.gmra.mrb[0].mxu0 %v671
    %v4182 = vpop.f32.mrb[0].mxu0
    %v4183 = vadd.f32 %v4140, %v4182
    %v4184 = vpop.f32.mrb[0].mxu0
    %v4185 = vadd.f32 %v4142, %v4184
    %v4186 = vpop.f32.mrb[0].mxu0
    %v4187 = vadd.f32 %v4144, %v4186
    %v4188 = vpop.f32.mrb[0].mxu0
    %v4189 = vadd.f32 %v4146, %v4188
    %4190 = vdwg.mxu0
    %4191 = vmatprep.subr.bf16.mxu0 %v3323
    %4192 = vmatpush1.bf16.msra.mxu0 %v3320
    %4193 = vmatprep.subr.bf16.mxu0 0
    %4194 = vmatpush1.bf16.msra.mxu0 0
    %4195 = vmatprep.subr.bf16.mxu0 0
    %4196 = vmatpush1.bf16.msra.mxu0 0
    %4197 = vmatprep.subr.bf16.mxu0 0
    %4198 = vmatpush1.bf16.msra.mxu0 0
    %4199 = vmatprep.subr.bf16.mxu0 0
    %4200 = vmatpush1.bf16.msra.mxu0 0
    %4201 = vmatprep.subr.bf16.mxu0 0
    %4202 = vmatpush1.bf16.msra.mxu0 0
    %4203 = vmatprep.subr.bf16.mxu0 0
    %4204 = vmatpush1.bf16.msra.mxu0 0
    %4205 = vmatprep.subr.bf16.mxu0 0
    %4206 = vmatpush1.bf16.msra.mxu0 0
    %4207 = vmatprep.subr.bf16.mxu0 0
    %4208 = vmatpush1.bf16.msra.mxu0 0
    %4209 = vmatprep.subr.bf16.mxu0 0
    %4210 = vmatpush1.bf16.msra.mxu0 0
    %4211 = vmatprep.subr.bf16.mxu0 0
    %4212 = vmatpush1.bf16.msra.mxu0 0
    %4213 = vmatprep.subr.bf16.mxu0 0
    %4214 = vmatpush1.bf16.msra.mxu0 0
    %4215 = vmatprep.subr.bf16.mxu0 0
    %4216 = vmatpush1.bf16.msra.mxu0 0
    %4217 = vmatprep.subr.bf16.mxu0 0
    %4218 = vmatpush1.bf16.msra.mxu0 0
    %4219 = vmatprep.subr.bf16.mxu0 0
    %4220 = vmatpush1.bf16.msra.mxu0 0
    %4221 = vmatprep.subr.bf16.mxu0 0
    %4222 = vmatpush1.bf16.msra.mxu0 0
    %4223 = vmatprep.mubr.bf16.mxu0 0
    %4224 = vmatmul.mubr.bf16.gmra.mrb[0].mxu0 %v3280
    %v4225 = vpop.f32.mrb[0].mxu0
    %v4226 = vadd.f32 %v4183, %v4225
    %v4227 = vpop.f32.mrb[0].mxu0
    %v4228 = vadd.f32 %v4185, %v4227
    %v4229 = vpop.f32.mrb[0].mxu0
    %v4230 = vadd.f32 %v4187, %v4229
    %v4231 = vpop.f32.mrb[0].mxu0
    %v4232 = vadd.f32 %v4189, %v4231
    %4233 = vdwg.mxu0
    %4234 = vmatprep.subr.bf16.mxu0 %v2253
    %4235 = vmatpush1.bf16.msra.mxu0 %v2252
    %4236 = vmatprep.subr.bf16.mxu0 %v2269
    %4237 = vmatpush1.bf16.msra.mxu0 %v2268
    %4238 = vmatprep.subr.bf16.mxu0 %v2285
    %4239 = vmatpush1.bf16.msra.mxu0 %v2284
    %4240 = vmatprep.subr.bf16.mxu0 %v2301
    %4241 = vmatpush1.bf16.msra.mxu0 %v2300
    %4242 = vmatprep.subr.bf16.mxu0 %v2317
    %4243 = vmatpush1.bf16.msra.mxu0 %v2316
    %4244 = vmatprep.subr.bf16.mxu0 %v2333
    %4245 = vmatpush1.bf16.msra.mxu0 %v2332
    %4246 = vmatprep.subr.bf16.mxu0 %v2349
    %4247 = vmatpush1.bf16.msra.mxu0 %v2348
    %4248 = vmatprep.subr.bf16.mxu0 %v2365
    %4249 = vmatpush1.bf16.msra.mxu0 %v2364
    %4250 = vmatprep.subr.bf16.mxu0 %v2381
    %4251 = vmatpush1.bf16.msra.mxu0 %v2380
    %4252 = vmatprep.subr.bf16.mxu0 %v2397
    %4253 = vmatpush1.bf16.msra.mxu0 %v2396
    %4254 = vmatprep.subr.bf16.mxu0 %v2413
    %4255 = vmatpush1.bf16.msra.mxu0 %v2412
    %4256 = vmatprep.subr.bf16.mxu0 %v2429
    %4257 = vmatpush1.bf16.msra.mxu0 %v2428
    %4258 = vmatprep.subr.bf16.mxu0 %v2445
    %4259 = vmatpush1.bf16.msra.mxu0 %v2444
    %4260 = vmatprep.subr.bf16.mxu0 %v2461
    %4261 = vmatpush1.bf16.msra.mxu0 %v2460
    %4262 = vmatprep.subr.bf16.mxu0 %v2477
    %4263 = vmatpush1.bf16.msra.mxu0 %v2476
    %4264 = vmatprep.subr.bf16.mxu0 %v2493
    %4265 = vmatpush1.bf16.msra.mxu0 %v2492
    %4266 = vmatprep.mubr.bf16.mxu0 %v670
    %4267 = vmatmul.mubr.bf16.gmra.mrb[0].mxu0 %v669
    %v4268 = vpop.f32.mrb[0].mxu0
    %v4269 = vadd.f32 %v632, %v4268
    %v4270 = vpop.f32.mrb[0].mxu0
    %v4271 = vadd.f32 %v636, %v4270
    %v4272 = vpop.f32.mrb[0].mxu0
    %v4273 = vadd.f32 %v632, %v4272
    %v4274 = vpop.f32.mrb[0].mxu0
    %v4275 = vadd.f32 %v636, %v4274
    %4276 = vdwg.mxu0
    %4277 = vmatprep.subr.bf16.mxu0 %v2509
    %4278 = vmatpush1.bf16.msra.mxu0 %v2508
    %4279 = vmatprep.subr.bf16.mxu0 %v2525
    %4280 = vmatpush1.bf16.msra.mxu0 %v2524
    %4281 = vmatprep.subr.bf16.mxu0 %v2541
    %4282 = vmatpush1.bf16.msra.mxu0 %v2540
    %4283 = vmatprep.subr.bf16.mxu0 %v2557
    %4284 = vmatpush1.bf16.msra.mxu0 %v2556
    %4285 = vmatprep.subr.bf16.mxu0 %v2573
    %4286 = vmatpush1.bf16.msra.mxu0 %v2572
    %4287 = vmatprep.subr.bf16.mxu0 %v2589
    %4288 = vmatpush1.bf16.msra.mxu0 %v2588
    %4289 = vmatprep.subr.bf16.mxu0 %v2605
    %4290 = vmatpush1.bf16.msra.mxu0 %v2604
    %4291 = vmatprep.subr.bf16.mxu0 %v2621
    %4292 = vmatpush1.bf16.msra.mxu0 %v2620
    %4293 = vmatprep.subr.bf16.mxu0 %v2637
    %4294 = vmatpush1.bf16.msra.mxu0 %v2636
    %4295 = vmatprep.subr.bf16.mxu0 %v2653
    %4296 = vmatpush1.bf16.msra.mxu0 %v2652
    %4297 = vmatprep.subr.bf16.mxu0 %v2669
    %4298 = vmatpush1.bf16.msra.mxu0 %v2668
    %4299 = vmatprep.subr.bf16.mxu0 %v2685
    %4300 = vmatpush1.bf16.msra.mxu0 %v2684
    %4301 = vmatprep.subr.bf16.mxu0 %v2701
    %4302 = vmatpush1.bf16.msra.mxu0 %v2700
    %4303 = vmatprep.subr.bf16.mxu0 %v2717
    %4304 = vmatpush1.bf16.msra.mxu0 %v2716
    %4305 = vmatprep.subr.bf16.mxu0 %v2733
    %4306 = vmatpush1.bf16.msra.mxu0 %v2732
    %4307 = vmatprep.subr.bf16.mxu0 %v2749
    %4308 = vmatpush1.bf16.msra.mxu0 %v2748
    %4309 = vmatprep.mubr.bf16.mxu0 %v672
    %4310 = vmatmul.mubr.bf16.gmra.mrb[0].mxu0 %v671
    %v4311 = vpop.f32.mrb[0].mxu0
    %v4312 = vadd.f32 %v4269, %v4311
    %v4313 = vpop.f32.mrb[0].mxu0
    %v4314 = vadd.f32 %v4271, %v4313
    %v4315 = vpop.f32.mrb[0].mxu0
    %v4316 = vadd.f32 %v4273, %v4315
    %v4317 = vpop.f32.mrb[0].mxu0
    %v4318 = vadd.f32 %v4275, %v4317
    %4319 = vdwg.mxu0
    %4320 = vmatprep.subr.bf16.mxu0 %v3329
    %4321 = vmatpush1.bf16.msra.mxu0 %v3326
    %4322 = vmatprep.subr.bf16.mxu0 0
    %4323 = vmatpush1.bf16.msra.mxu0 0
    %4324 = vmatprep.subr.bf16.mxu0 0
    %4325 = vmatpush1.bf16.msra.mxu0 0
    %4326 = vmatprep.subr.bf16.mxu0 0
    %4327 = vmatpush1.bf16.msra.mxu0 0
    %4328 = vmatprep.subr.bf16.mxu0 0
    %4329 = vmatpush1.bf16.msra.mxu0 0
    %4330 = vmatprep.subr.bf16.mxu0 0
    %4331 = vmatpush1.bf16.msra.mxu0 0
    %4332 = vmatprep.subr.bf16.mxu0 0
    %4333 = vmatpush1.bf16.msra.mxu0 0
    %4334 = vmatprep.subr.bf16.mxu0 0
    %4335 = vmatpush1.bf16.msra.mxu0 0
    %4336 = vmatprep.subr.bf16.mxu0 0
    %4337 = vmatpush1.bf16.msra.mxu0 0
    %4338 = vmatprep.subr.bf16.mxu0 0
    %4339 = vmatpush1.bf16.msra.mxu0 0
    %4340 = vmatprep.subr.bf16.mxu0 0
    %4341 = vmatpush1.bf16.msra.mxu0 0
    %4342 = vmatprep.subr.bf16.mxu0 0
    %4343 = vmatpush1.bf16.msra.mxu0 0
    %4344 = vmatprep.subr.bf16.mxu0 0
    %4345 = vmatpush1.bf16.msra.mxu0 0
    %4346 = vmatprep.subr.bf16.mxu0 0
    %4347 = vmatpush1.bf16.msra.mxu0 0
    %4348 = vmatprep.subr.bf16.mxu0 0
    %4349 = vmatpush1.bf16.msra.mxu0 0
    %4350 = vmatprep.subr.bf16.mxu0 0
    %4351 = vmatpush1.bf16.msra.mxu0 0
    %4352 = vmatprep.mubr.bf16.mxu0 0
    %4353 = vmatmul.mubr.bf16.gmra.mrb[0].mxu0 %v3280
    %v4354 = vpop.f32.mrb[0].mxu0
    %v4355 = vadd.f32 %v4312, %v4354
    %v4356 = vpop.f32.mrb[0].mxu0
    %v4357 = vadd.f32 %v4314, %v4356
    %v4358 = vpop.f32.mrb[0].mxu0
    %v4359 = vadd.f32 %v4316, %v4358
    %v4360 = vpop.f32.mrb[0].mxu0
    %v4361 = vadd.f32 %v4318, %v4360
    %4362 = vdwg.mxu0
    %4363 = vst [vmem:[%s3] sm:$0xff] %v3452
    %4364 = vst [vmem:[%s3 + $0x8] sm:$0xff] %v3454
    %4365 = vst [vmem:[%s3 + $0x10] sm:$0xff] %v3581
    %4366 = vst [vmem:[%s3 + $0x18] sm:$0xff] %v3583
    %4367 = vst [vmem:[%s3 + $0x20] sm:$0xff] %v3710
    %4368 = vst [vmem:[%s3 + $0x28] sm:$0xff] %v3712
    %4369 = vst [vmem:[%s3 + $0x30] sm:$0xff] %v3839
    %4370 = vst [vmem:[%s3 + $0x38] sm:$0xff] %v3841
    %4371 = vst [vmem:[%s3 + $0x40] sm:$0xff] %v3456
    %4372 = vst [vmem:[%s3 + $0x48] sm:$0xff] %v3458
    %4373 = vst [vmem:[%s3 + $0x50] sm:$0xff] %v3585
    %4374 = vst [vmem:[%s3 + $0x58] sm:$0xff] %v3587
    %4375 = vst [vmem:[%s3 + $0x60] sm:$0xff] %v3714
    %4376 = vst [vmem:[%s3 + $0x68] sm:$0xff] %v3716
    %4377 = vst [vmem:[%s3 + $0x70] sm:$0xff] %v3843
    %4378 = vst [vmem:[%s3 + $0x78] sm:$0xff] %v3845
    %4379 = vst [vmem:[%s4] sm:$0xff] %v3968
    %4380 = vst [vmem:[%s4 + $0x8] sm:$0xff] %v3970
    %4381 = vst [vmem:[%s4 + $0x10] sm:$0xff] %v4097
    %4382 = vst [vmem:[%s4 + $0x18] sm:$0xff] %v4099
    %4383 = vst [vmem:[%s4 + $0x20] sm:$0xff] %v4226
    %4384 = vst [vmem:[%s4 + $0x28] sm:$0xff] %v4228
    %4385 = vst [vmem:[%s4 + $0x30] sm:$0xff] %v4355
    %4386 = vst [vmem:[%s4 + $0x38] sm:$0xff] %v4357
    %4387 = vst [vmem:[%s4 + $0x40] sm:$0xff] %v3972
    %4388 = vst [vmem:[%s4 + $0x48] sm:$0xff] %v3974
    %4389 = vst [vmem:[%s4 + $0x50] sm:$0xff] %v4101
    %4390 = vst [vmem:[%s4 + $0x58] sm:$0xff] %v4103
    %4391 = vst [vmem:[%s4 + $0x60] sm:$0xff] %v4230
    %4392 = vst [vmem:[%s4 + $0x68] sm:$0xff] %v4232
    %4393 = vst [vmem:[%s4 + $0x70] sm:$0xff] %v4359
    %4394 = vst [vmem:[%s4 + $0x78] sm:$0xff] %v4361
    // Predicated region
    $region22: #{acoustic_estimator_forward.7} parent=1 // pred_check
      _
    $region23: #{acoustic_estimator_forward.7} parent=1 // pred_check_branch
      %4396 = sbr.rel (0) target = $region25
    $region24: #{acoustic_estimator_forward.7} parent=1 // pred_region
      _
    $region25: #{acoustic_estimator_forward.7} parent=1 // pred_fallthru
      _
    // Predicated region
    $region26: #{acoustic_estimator_forward.7} parent=1 // pred_check
      _
    $region27: #{acoustic_estimator_forward.7} parent=1 // pred_check_branch
      %4398 = sbr.rel (0) target = $region29
    $region28: #{acoustic_estimator_forward.7} parent=1 // pred_region
      _
    $region29: #{acoustic_estimator_forward.7} parent=1 // pred_fallthru
      _
    // Predicated region
    $region30: #{acoustic_estimator_forward.7} parent=1 // pred_check
      _
    $region31: #{acoustic_estimator_forward.7} parent=1 // pred_check_branch
      %4400 = sbr.rel (0) target = $region33
    $region32: #{acoustic_estimator_forward.7} parent=1 // pred_region
      _
    $region33: #{acoustic_estimator_forward.7} parent=1 // pred_fallthru
      _
    // Predicated region
    $region34: #{acoustic_estimator_forward.7} parent=1 // pred_check
      _
    $region35: #{acoustic_estimator_forward.7} parent=1 // pred_check_branch
      %4402 = sbr.rel (0) target = $region37
    $region36: #{acoustic_estimator_forward.7} parent=1 // pred_region
      _
    $region37: #{acoustic_estimator_forward.7} parent=1 // pred_fallthru
      _
    %4403 = vsyncpa [#allocation3], 1
    %4404 = vsyncpa [#allocation5], 1

// kernel: acoustic_estimator_forward.13
$region0: #{acoustic_estimator_forward.13}
  #allocation0 [shape = 'u32[]', space=smem, size = 0x4, offset = 0x4, fixed_abs, tag = 'smem constant byte address 0x4 - core index']
  #allocation1 [shape = 'u32[144,128]{1,0:T(1,128)}', space=vmem, size = 0x12000, scoped, tag = 'internal scratch']
  %s0 = inlined_call_operand.vmem [shape: bf16[16,256], index: 0, kind: input, shape index: {}]
  %s1 = inlined_call_operand.vmem [shape: bf16[16,256], index: 1, kind: input, shape index: {}]
  %s2 = inlined_call_operand.vmem [shape: bf16[256,256], index: 2, kind: input, shape index: {}]
  %s3 = inlined_call_operand.vmem [shape: bf16[256,256], index: 3, kind: input, shape index: {}]
  %s4 = inlined_call_operand.vmem [shape: f32[1,256], index: 4, kind: input, shape index: {}]
  %s5 = inlined_call_operand.vmem [shape: bf16[256,128], index: 5, kind: input, shape index: {}]
  %s6 = inlined_call_operand.vmem [shape: f32[1,128], index: 6, kind: input, shape index: {}]
  %s7 = inlined_call_operand.vmem [shape: f32[16,128], index: 7, kind: output, shape index: {}]
  %s8 = sld [smem:[#allocation0]]
  $region38: #{acoustic_estimator_forward.13} parent=0
    _
  %s10 = ssub.s32 1, %s8
  %s11 = scalar_select 0, %s10, %s8
  // Predicated region
  $region2: #{acoustic_estimator_forward.13} parent=0 // pred_check
    _
  $region3: #{acoustic_estimator_forward.13} parent=0 // pred_check_branch
    %13 = sbr.rel (0) target = $region5
  $region4: #{acoustic_estimator_forward.13} parent=0 // pred_region
    _
  $region5: #{acoustic_estimator_forward.13} parent=0 // pred_fallthru
    _
  // Predicated region
  $region6: #{acoustic_estimator_forward.13} parent=0 // pred_check
    _
  $region7: #{acoustic_estimator_forward.13} parent=0 // pred_check_branch
    %15 = sbr.rel (0) target = $region9
  $region8: #{acoustic_estimator_forward.13} parent=0 // pred_region
    _
  $region9: #{acoustic_estimator_forward.13} parent=0 // pred_fallthru
    _
  // Predicated region
  $region10: #{acoustic_estimator_forward.13} parent=0 // pred_check
    _
  $region11: #{acoustic_estimator_forward.13} parent=0 // pred_check_branch
    %17 = sbr.rel (0) target = $region13
  $region12: #{acoustic_estimator_forward.13} parent=0 // pred_region
    _
  $region13: #{acoustic_estimator_forward.13} parent=0 // pred_fallthru
    _
  // Predicated region
  $region14: #{acoustic_estimator_forward.13} parent=0 // pred_check
    _
  $region15: #{acoustic_estimator_forward.13} parent=0 // pred_check_branch
    %19 = sbr.rel (0) target = $region17
  $region16: #{acoustic_estimator_forward.13} parent=0 // pred_region
    _
  $region17: #{acoustic_estimator_forward.13} parent=0 // pred_fallthru
    _
  // Predicated region
  $region18: #{acoustic_estimator_forward.13} parent=0 // pred_check
    _
  $region19: #{acoustic_estimator_forward.13} parent=0 // pred_check_branch
    %21 = sbr.rel (0) target = $region21
  $region20: #{acoustic_estimator_forward.13} parent=0 // pred_region
    _
  $region21: #{acoustic_estimator_forward.13} parent=0 // pred_fallthru
    _
  // Predicated region
  $region22: #{acoustic_estimator_forward.13} parent=0 // pred_check
    _
  $region23: #{acoustic_estimator_forward.13} parent=0 // pred_check_branch
    %23 = sbr.rel (0) target = $region25
  $region24: #{acoustic_estimator_forward.13} parent=0 // pred_region
    _
  $region25: #{acoustic_estimator_forward.13} parent=0 // pred_fallthru
    _
  // Predicated region
  $region26: #{acoustic_estimator_forward.13} parent=0 // pred_check
    _
  $region27: #{acoustic_estimator_forward.13} parent=0 // pred_check_branch
    %25 = sbr.rel (0) target = $region29
  $region28: #{acoustic_estimator_forward.13} parent=0 // pred_region
    _
  $region29: #{acoustic_estimator_forward.13} parent=0 // pred_fallthru
    _
  %v27 = vld [vmem:[%s0] sm:$0xff]
  %v28 = vld [vmem:[%s0 + $0x8] sm:$0xff]
  %v29 = vld [vmem:[%s2] sm:$0xff]
  %v30 = vld [vmem:[%s2 + $0x8] sm:$0xff]
  %v31 = vld [vmem:[%s2 + $0x10] sm:$0xff]
  %v32 = vld [vmem:[%s2 + $0x18] sm:$0xff]
  %v33 = vld [vmem:[%s2 + $0x20] sm:$0xff]
  %v34 = vld [vmem:[%s2 + $0x28] sm:$0xff]
  %v35 = vld [vmem:[%s2 + $0x30] sm:$0xff]
  %v36 = vld [vmem:[%s2 + $0x38] sm:$0xff]
  %v37 = vld [vmem:[%s2 + $0x40] sm:$0xff]
  %v38 = vld [vmem:[%s2 + $0x48] sm:$0xff]
  %v39 = vld [vmem:[%s2 + $0x50] sm:$0xff]
  %v40 = vld [vmem:[%s2 + $0x58] sm:$0xff]
  %v41 = vld [vmem:[%s2 + $0x60] sm:$0xff]
  %v42 = vld [vmem:[%s2 + $0x68] sm:$0xff]
  %v43 = vld [vmem:[%s2 + $0x70] sm:$0xff]
  %v44 = vld [vmem:[%s2 + $0x78] sm:$0xff]
  %v45 = vld [vmem:[%s2 + $0x80] sm:$0xff]
  %v46 = vld [vmem:[%s2 + $0x88] sm:$0xff]
  %v47 = vld [vmem:[%s2 + $0x90] sm:$0xff]
  %v48 = vld [vmem:[%s2 + $0x98] sm:$0xff]
  %v49 = vld [vmem:[%s2 + $0xa0] sm:$0xff]
  %v50 = vld [vmem:[%s2 + $0xa8] sm:$0xff]
  %v51 = vld [vmem:[%s2 + $0xb0] sm:$0xff]
  %v52 = vld [vmem:[%s2 + $0xb8] sm:$0xff]
  %v53 = vld [vmem:[%s2 + $0xc0] sm:$0xff]
  %v54 = vld [vmem:[%s2 + $0xc8] sm:$0xff]
  %v55 = vld [vmem:[%s2 + $0xd0] sm:$0xff]
  %v56 = vld [vmem:[%s2 + $0xd8] sm:$0xff]
  %v57 = vld [vmem:[%s2 + $0xe0] sm:$0xff]
  %v58 = vld [vmem:[%s2 + $0xe8] sm:$0xff]
  %v59 = vld [vmem:[%s2 + $0xf0] sm:$0xff]
  %v60 = vld [vmem:[%s2 + $0xf8] sm:$0xff]
  %v61 = vld [vmem:[%s1] sm:$0xff]
  %v62 = vld [vmem:[%s1 + $0x8] sm:$0xff]
  %v63 = vld [vmem:[%s3] sm:$0xff]
  %v64 = vld [vmem:[%s3 + $0x8] sm:$0xff]
  %v65 = vld [vmem:[%s3 + $0x10] sm:$0xff]
  %v66 = vld [vmem:[%s3 + $0x18] sm:$0xff]
  %v67 = vld [vmem:[%s3 + $0x20] sm:$0xff]
  %v68 = vld [vmem:[%s3 + $0x28] sm:$0xff]
  %v69 = vld [vmem:[%s3 + $0x30] sm:$0xff]
  %v70 = vld [vmem:[%s3 + $0x38] sm:$0xff]
  %v71 = vld [vmem:[%s3 + $0x40] sm:$0xff]
  %v72 = vld [vmem:[%s3 + $0x48] sm:$0xff]
  %v73 = vld [vmem:[%s3 + $0x50] sm:$0xff]
  %v74 = vld [vmem:[%s3 + $0x58] sm:$0xff]
  %v75 = vld [vmem:[%s3 + $0x60] sm:$0xff]
  %v76 = vld [vmem:[%s3 + $0x68] sm:$0xff]
  %v77 = vld [vmem:[%s3 + $0x70] sm:$0xff]
  %v78 = vld [vmem:[%s3 + $0x78] sm:$0xff]
  %v79 = vld [vmem:[%s3 + $0x80] sm:$0xff]
  %v80 = vld [vmem:[%s3 + $0x88] sm:$0xff]
  %v81 = vld [vmem:[%s3 + $0x90] sm:$0xff]
  %v82 = vld [vmem:[%s3 + $0x98] sm:$0xff]
  %v83 = vld [vmem:[%s3 + $0xa0] sm:$0xff]
  %v84 = vld [vmem:[%s3 + $0xa8] sm:$0xff]
  %v85 = vld [vmem:[%s3 + $0xb0] sm:$0xff]
  %v86 = vld [vmem:[%s3 + $0xb8] sm:$0xff]
  %v87 = vld [vmem:[%s3 + $0xc0] sm:$0xff]
  %v88 = vld [vmem:[%s3 + $0xc8] sm:$0xff]
  %v89 = vld [vmem:[%s3 + $0xd0] sm:$0xff]
  %v90 = vld [vmem:[%s3 + $0xd8] sm:$0xff]
  %v91 = vld [vmem:[%s3 + $0xe0] sm:$0xff]
  %v92 = vld [vmem:[%s3 + $0xe8] sm:$0xff]
  %v93 = vld [vmem:[%s3 + $0xf0] sm:$0xff]
  %v94 = vld [vmem:[%s3 + $0xf8] sm:$0xff]
  %v97 = vunpack.c.l.b16 %v61
  %v98 = vunpack.c.h.b16 %v61
  %v99 = vunpack.c.l.b16 %v62
  %v100 = vunpack.c.h.b16 %v62
  %v101 = vpack.c.b16 %v99, %v97
  %v102 = vpack.c.b16 %v100, %v98
  %v137 = vunpack.c.l.b16 %v63
  %v138 = vunpack.c.h.b16 %v63
  %v139 = vunpack.c.l.b16 %v64
  %v140 = vunpack.c.h.b16 %v64
  %v141 = vunpack.c.l.b16 %v65
  %v142 = vunpack.c.h.b16 %v65
  %v143 = vunpack.c.l.b16 %v66
  %v144 = vunpack.c.h.b16 %v66
  %v145 = vunpack.c.l.b16 %v67
  %v146 = vunpack.c.h.b16 %v67
  %v147 = vunpack.c.l.b16 %v68
  %v148 = vunpack.c.h.b16 %v68
  %v149 = vunpack.c.l.b16 %v69
  %v150 = vunpack.c.h.b16 %v69
  %v151 = vunpack.c.l.b16 %v70
  %v152 = vunpack.c.h.b16 %v70
  %v153 = vunpack.c.l.b16 %v71
  %v154 = vunpack.c.h.b16 %v71
  %v155 = vunpack.c.l.b16 %v72
  %v156 = vunpack.c.h.b16 %v72
  %v157 = vunpack.c.l.b16 %v73
  %v158 = vunpack.c.h.b16 %v73
  %v159 = vunpack.c.l.b16 %v74
  %v160 = vunpack.c.h.b16 %v74
  %v161 = vunpack.c.l.b16 %v75
  %v162 = vunpack.c.h.b16 %v75
  %v163 = vunpack.c.l.b16 %v76
  %v164 = vunpack.c.h.b16 %v76
  %v165 = vunpack.c.l.b16 %v77
  %v166 = vunpack.c.h.b16 %v77
  %v167 = vunpack.c.l.b16 %v78
  %v168 = vunpack.c.h.b16 %v78
  %v169 = vunpack.c.l.b16 %v79
  %v170 = vunpack.c.h.b16 %v79
  %v171 = vunpack.c.l.b16 %v80
  %v172 = vunpack.c.h.b16 %v80
  %v173 = vunpack.c.l.b16 %v81
  %v174 = vunpack.c.h.b16 %v81
  %v175 = vunpack.c.l.b16 %v82
  %v176 = vunpack.c.h.b16 %v82
  %v177 = vunpack.c.l.b16 %v83
  %v178 = vunpack.c.h.b16 %v83
  %v179 = vunpack.c.l.b16 %v84
  %v180 = vunpack.c.h.b16 %v84
  %v181 = vunpack.c.l.b16 %v85
  %v182 = vunpack.c.h.b16 %v85
  %v183 = vunpack.c.l.b16 %v86
  %v184 = vunpack.c.h.b16 %v86
  %v185 = vunpack.c.l.b16 %v87
  %v186 = vunpack.c.h.b16 %v87
  %v187 = vunpack.c.l.b16 %v88
  %v188 = vunpack.c.h.b16 %v88
  %v189 = vunpack.c.l.b16 %v89
  %v190 = vunpack.c.h.b16 %v89
  %v191 = vunpack.c.l.b16 %v90
  %v192 = vunpack.c.h.b16 %v90
  %v193 = vunpack.c.l.b16 %v91
  %v194 = vunpack.c.h.b16 %v91
  %v195 = vunpack.c.l.b16 %v92
  %v196 = vunpack.c.h.b16 %v92
  %v197 = vunpack.c.l.b16 %v93
  %v198 = vunpack.c.h.b16 %v93
  %v199 = vunpack.c.l.b16 %v94
  %v200 = vunpack.c.h.b16 %v94
  %v201 = vpack.c.b16 %v139, %v137
  %v202 = vpack.c.b16 %v140, %v138
  %v203 = vpack.c.b16 %v143, %v141
  %v204 = vpack.c.b16 %v144, %v142
  %v205 = vpack.c.b16 %v147, %v145
  %v206 = vpack.c.b16 %v148, %v146
  %v207 = vpack.c.b16 %v151, %v149
  %v208 = vpack.c.b16 %v152, %v150
  %v209 = vpack.c.b16 %v155, %v153
  %v210 = vpack.c.b16 %v156, %v154
  %v211 = vpack.c.b16 %v159, %v157
  %v212 = vpack.c.b16 %v160, %v158
  %v213 = vpack.c.b16 %v163, %v161
  %v214 = vpack.c.b16 %v164, %v162
  %v215 = vpack.c.b16 %v167, %v165
  %v216 = vpack.c.b16 %v168, %v166
  %v217 = vpack.c.b16 %v171, %v169
  %v218 = vpack.c.b16 %v172, %v170
  %v219 = vpack.c.b16 %v175, %v173
  %v220 = vpack.c.b16 %v176, %v174
  %v221 = vpack.c.b16 %v179, %v177
  %v222 = vpack.c.b16 %v180, %v178
  %v223 = vpack.c.b16 %v183, %v181
  %v224 = vpack.c.b16 %v184, %v182
  %v225 = vpack.c.b16 %v187, %v185
  %v226 = vpack.c.b16 %v188, %v186
  %v227 = vpack.c.b16 %v191, %v189
  %v228 = vpack.c.b16 %v192, %v190
  %v229 = vpack.c.b16 %v195, %v193
  %v230 = vpack.c.b16 %v196, %v194
  %v231 = vpack.c.b16 %v199, %v197
  %v232 = vpack.c.b16 %v200, %v198
  %265 = vmatprep.subr.bf16.mxu0 %v202
  %266 = vmatpush1.bf16.msra.mxu0 %v201
  %267 = vmatprep.subr.bf16.mxu0 %v204
  %268 = vmatpush1.bf16.msra.mxu0 %v203
  %269 = vmatprep.subr.bf16.mxu0 %v206
  %270 = vmatpush1.bf16.msra.mxu0 %v205
  %271 = vmatprep.subr.bf16.mxu0 %v208
  %272 = vmatpush1.bf16.msra.mxu0 %v207
  %273 = vmatprep.subr.bf16.mxu0 %v210
  %274 = vmatpush1.bf16.msra.mxu0 %v209
  %275 = vmatprep.subr.bf16.mxu0 %v212
  %276 = vmatpush1.bf16.msra.mxu0 %v211
  %277 = vmatprep.subr.bf16.mxu0 %v214
  %278 = vmatpush1.bf16.msra.mxu0 %v213
  %279 = vmatprep.subr.bf16.mxu0 %v216
  %280 = vmatpush1.bf16.msra.mxu0 %v215
  %281 = vmatprep.subr.bf16.mxu0 %v218
  %282 = vmatpush1.bf16.msra.mxu0 %v217
  %283 = vmatprep.subr.bf16.mxu0 %v220
  %284 = vmatpush1.bf16.msra.mxu0 %v219
  %285 = vmatprep.subr.bf16.mxu0 %v222
  %286 = vmatpush1.bf16.msra.mxu0 %v221
  %287 = vmatprep.subr.bf16.mxu0 %v224
  %288 = vmatpush1.bf16.msra.mxu0 %v223
  %289 = vmatprep.subr.bf16.mxu0 %v226
  %290 = vmatpush1.bf16.msra.mxu0 %v225
  %291 = vmatprep.subr.bf16.mxu0 %v228
  %292 = vmatpush1.bf16.msra.mxu0 %v227
  %293 = vmatprep.subr.bf16.mxu0 %v230
  %294 = vmatpush1.bf16.msra.mxu0 %v229
  %295 = vmatprep.subr.bf16.mxu0 %v232
  %296 = vmatpush1.bf16.msra.mxu0 %v231
  %297 = vmatprep.mubr.bf16.mxu0 %v102
  %298 = vmatmul.mubr.bf16.gmra.mrb[0].mxu0 %v101
  %v299 = vpop.f32.mrb[0].mxu0
  %v300 = vadd.f32 0.0, %v299
  %v301 = vpop.f32.mrb[0].mxu0
  %v302 = vadd.f32 0.0, %v301
  %v303 = vpop.f32.mrb[0].mxu0
  %v304 = vadd.f32 0.0, %v303
  %v305 = vpop.f32.mrb[0].mxu0
  %v306 = vadd.f32 0.0, %v305
  %307 = vdwg.mxu0
  %v310 = vunpack.c.l.b16 %v27
  %v311 = vunpack.c.h.b16 %v27
  %v312 = vunpack.c.l.b16 %v28
  %v313 = vunpack.c.h.b16 %v28
  %v314 = vpack.c.b16 %v312, %v310
  %v315 = vpack.c.b16 %v313, %v311
  %v350 = vunpack.c.l.b16 %v29
  %v351 = vunpack.c.h.b16 %v29
  %v352 = vunpack.c.l.b16 %v30
  %v353 = vunpack.c.h.b16 %v30
  %v354 = vunpack.c.l.b16 %v31
  %v355 = vunpack.c.h.b16 %v31
  %v356 = vunpack.c.l.b16 %v32
  %v357 = vunpack.c.h.b16 %v32
  %v358 = vunpack.c.l.b16 %v33
  %v359 = vunpack.c.h.b16 %v33
  %v360 = vunpack.c.l.b16 %v34
  %v361 = vunpack.c.h.b16 %v34
  %v362 = vunpack.c.l.b16 %v35
  %v363 = vunpack.c.h.b16 %v35
  %v364 = vunpack.c.l.b16 %v36
  %v365 = vunpack.c.h.b16 %v36
  %v366 = vunpack.c.l.b16 %v37
  %v367 = vunpack.c.h.b16 %v37
  %v368 = vunpack.c.l.b16 %v38
  %v369 = vunpack.c.h.b16 %v38
  %v370 = vunpack.c.l.b16 %v39
  %v371 = vunpack.c.h.b16 %v39
  %v372 = vunpack.c.l.b16 %v40
  %v373 = vunpack.c.h.b16 %v40
  %v374 = vunpack.c.l.b16 %v41
  %v375 = vunpack.c.h.b16 %v41
  %v376 = vunpack.c.l.b16 %v42
  %v377 = vunpack.c.h.b16 %v42
  %v378 = vunpack.c.l.b16 %v43
  %v379 = vunpack.c.h.b16 %v43
  %v380 = vunpack.c.l.b16 %v44
  %v381 = vunpack.c.h.b16 %v44
  %v382 = vunpack.c.l.b16 %v45
  %v383 = vunpack.c.h.b16 %v45
  %v384 = vunpack.c.l.b16 %v46
  %v385 = vunpack.c.h.b16 %v46
  %v386 = vunpack.c.l.b16 %v47
  %v387 = vunpack.c.h.b16 %v47
  %v388 = vunpack.c.l.b16 %v48
  %v389 = vunpack.c.h.b16 %v48
  %v390 = vunpack.c.l.b16 %v49
  %v391 = vunpack.c.h.b16 %v49
  %v392 = vunpack.c.l.b16 %v50
  %v393 = vunpack.c.h.b16 %v50
  %v394 = vunpack.c.l.b16 %v51
  %v395 = vunpack.c.h.b16 %v51
  %v396 = vunpack.c.l.b16 %v52
  %v397 = vunpack.c.h.b16 %v52
  %v398 = vunpack.c.l.b16 %v53
  %v399 = vunpack.c.h.b16 %v53
  %v400 = vunpack.c.l.b16 %v54
  %v401 = vunpack.c.h.b16 %v54
  %v402 = vunpack.c.l.b16 %v55
  %v403 = vunpack.c.h.b16 %v55
  %v404 = vunpack.c.l.b16 %v56
  %v405 = vunpack.c.h.b16 %v56
  %v406 = vunpack.c.l.b16 %v57
  %v407 = vunpack.c.h.b16 %v57
  %v408 = vunpack.c.l.b16 %v58
  %v409 = vunpack.c.h.b16 %v58
  %v410 = vunpack.c.l.b16 %v59
  %v411 = vunpack.c.h.b16 %v59
  %v412 = vunpack.c.l.b16 %v60
  %v413 = vunpack.c.h.b16 %v60
  %v414 = vpack.c.b16 %v352, %v350
  %v415 = vpack.c.b16 %v353, %v351
  %v416 = vpack.c.b16 %v356, %v354
  %v417 = vpack.c.b16 %v357, %v355
  %v418 = vpack.c.b16 %v360, %v358
  %v419 = vpack.c.b16 %v361, %v359
  %v420 = vpack.c.b16 %v364, %v362
  %v421 = vpack.c.b16 %v365, %v363
  %v422 = vpack.c.b16 %v368, %v366
  %v423 = vpack.c.b16 %v369, %v367
  %v424 = vpack.c.b16 %v372, %v370
  %v425 = vpack.c.b16 %v373, %v371
  %v426 = vpack.c.b16 %v376, %v374
  %v427 = vpack.c.b16 %v377, %v375
  %v428 = vpack.c.b16 %v380, %v378
  %v429 = vpack.c.b16 %v381, %v379
  %v430 = vpack.c.b16 %v384, %v382
  %v431 = vpack.c.b16 %v385, %v383
  %v432 = vpack.c.b16 %v388, %v386
  %v433 = vpack.c.b16 %v389, %v387
  %v434 = vpack.c.b16 %v392, %v390
  %v435 = vpack.c.b16 %v393, %v391
  %v436 = vpack.c.b16 %v396, %v394
  %v437 = vpack.c.b16 %v397, %v395
  %v438 = vpack.c.b16 %v400, %v398
  %v439 = vpack.c.b16 %v401, %v399
  %v440 = vpack.c.b16 %v404, %v402
  %v441 = vpack.c.b16 %v405, %v403
  %v442 = vpack.c.b16 %v408, %v406
  %v443 = vpack.c.b16 %v409, %v407
  %v444 = vpack.c.b16 %v412, %v410
  %v445 = vpack.c.b16 %v413, %v411
  %478 = vmatprep.subr.bf16.mxu0 %v415
  %479 = vmatpush1.bf16.msra.mxu0 %v414
  %480 = vmatprep.subr.bf16.mxu0 %v417
  %481 = vmatpush1.bf16.msra.mxu0 %v416
  %482 = vmatprep.subr.bf16.mxu0 %v419
  %483 = vmatpush1.bf16.msra.mxu0 %v418
  %484 = vmatprep.subr.bf16.mxu0 %v421
  %485 = vmatpush1.bf16.msra.mxu0 %v420
  %486 = vmatprep.subr.bf16.mxu0 %v423
  %487 = vmatpush1.bf16.msra.mxu0 %v422
  %488 = vmatprep.subr.bf16.mxu0 %v425
  %489 = vmatpush1.bf16.msra.mxu0 %v424
  %490 = vmatprep.subr.bf16.mxu0 %v427
  %491 = vmatpush1.bf16.msra.mxu0 %v426
  %492 = vmatprep.subr.bf16.mxu0 %v429
  %493 = vmatpush1.bf16.msra.mxu0 %v428
  %494 = vmatprep.subr.bf16.mxu0 %v431
  %495 = vmatpush1.bf16.msra.mxu0 %v430
  %496 = vmatprep.subr.bf16.mxu0 %v433
  %497 = vmatpush1.bf16.msra.mxu0 %v432
  %498 = vmatprep.subr.bf16.mxu0 %v435
  %499 = vmatpush1.bf16.msra.mxu0 %v434
  %500 = vmatprep.subr.bf16.mxu0 %v437
  %501 = vmatpush1.bf16.msra.mxu0 %v436
  %502 = vmatprep.subr.bf16.mxu0 %v439
  %503 = vmatpush1.bf16.msra.mxu0 %v438
  %504 = vmatprep.subr.bf16.mxu0 %v441
  %505 = vmatpush1.bf16.msra.mxu0 %v440
  %506 = vmatprep.subr.bf16.mxu0 %v443
  %507 = vmatpush1.bf16.msra.mxu0 %v442
  %508 = vmatprep.subr.bf16.mxu0 %v445
  %509 = vmatpush1.bf16.msra.mxu0 %v444
  %510 = vmatprep.mubr.bf16.mxu0 %v315
  %511 = vmatmul.mubr.bf16.gmra.mrb[0].mxu0 %v314
  %v512 = vpop.f32.mrb[0].mxu0
  %v513 = vadd.f32 %v300, %v512
  %v514 = vpop.f32.mrb[0].mxu0
  %v515 = vadd.f32 %v302, %v514
  %v516 = vpop.f32.mrb[0].mxu0
  %v517 = vadd.f32 %v304, %v516
  %v518 = vpop.f32.mrb[0].mxu0
  %v519 = vadd.f32 %v306, %v518
  %520 = vdwg.mxu0
  %v521 = vld [vmem:[%s4] sm:$0x3]
  %v523 = vlaneseq
  %v524 = vshrl.u32 %v523, 7
  %v525 = vsub.s32 0, %v524
  %v526 = vrot.slane %v521, %v525
  %v527 = vlaneseq
  %v528 = vshrl.u32 %v527, 7
  %v529 = vsub.s32 1, %v528
  %v530 = vrot.slane %v521, %v529
  %v533 = vadd.f32 %v513, %v526
  %v534 = vadd.f32 %v515, %v530
  %v535 = vadd.f32 %v517, %v526
  %v536 = vadd.f32 %v519, %v530
  %v537 = vmax.f32 %v533, 0.0
  %v538 = vmax.f32 %v534, 0.0
  %v539 = vmax.f32 %v535, 0.0
  %v540 = vmax.f32 %v536, 0.0
  %v541 = vpack.c.bf16 %v539, %v537
  %v542 = vpack.c.bf16 %v540, %v538
  %v543 = vld [vmem:[%s5] sm:$0xf]
  %v544 = vld [vmem:[%s5 + $0x4] sm:$0xf]
  %v545 = vld [vmem:[%s5 + $0x8] sm:$0xf]
  %v546 = vld [vmem:[%s5 + $0xc] sm:$0xf]
  %v547 = vld [vmem:[%s5 + $0x10] sm:$0xf]
  %v548 = vld [vmem:[%s5 + $0x14] sm:$0xf]
  %v549 = vld [vmem:[%s5 + $0x18] sm:$0xf]
  %v550 = vld [vmem:[%s5 + $0x1c] sm:$0xf]
  %v551 = vld [vmem:[%s5 + $0x20] sm:$0xf]
  %v552 = vld [vmem:[%s5 + $0x24] sm:$0xf]
  %v553 = vld [vmem:[%s5 + $0x28] sm:$0xf]
  %v554 = vld [vmem:[%s5 + $0x2c] sm:$0xf]
  %v555 = vld [vmem:[%s5 + $0x30] sm:$0xf]
  %v556 = vld [vmem:[%s5 + $0x34] sm:$0xf]
  %v557 = vld [vmem:[%s5 + $0x38] sm:$0xf]
  %v558 = vld [vmem:[%s5 + $0x3c] sm:$0xf]
  %v559 = vld [vmem:[%s5 + $0x40] sm:$0xf]
  %v560 = vld [vmem:[%s5 + $0x44] sm:$0xf]
  %v561 = vld [vmem:[%s5 + $0x48] sm:$0xf]
  %v562 = vld [vmem:[%s5 + $0x4c] sm:$0xf]
  %v563 = vld [vmem:[%s5 + $0x50] sm:$0xf]
  %v564 = vld [vmem:[%s5 + $0x54] sm:$0xf]
  %v565 = vld [vmem:[%s5 + $0x58] sm:$0xf]
  %v566 = vld [vmem:[%s5 + $0x5c] sm:$0xf]
  %v567 = vld [vmem:[%s5 + $0x60] sm:$0xf]
  %v568 = vld [vmem:[%s5 + $0x64] sm:$0xf]
  %v569 = vld [vmem:[%s5 + $0x68] sm:$0xf]
  %v570 = vld [vmem:[%s5 + $0x6c] sm:$0xf]
  %v571 = vld [vmem:[%s5 + $0x70] sm:$0xf]
  %v572 = vld [vmem:[%s5 + $0x74] sm:$0xf]
  %v573 = vld [vmem:[%s5 + $0x78] sm:$0xf]
  %v574 = vld [vmem:[%s5 + $0x7c] sm:$0xf]
  %v575 = vld [vmem:[%s6] sm:$0x1]
  %v577 = vlaneseq
  %v578 = vshrl.u32 %v577, 7
  %v579 = vsub.s32 0, %v578
  %v580 = vrot.slane %v575, %v579
  %v614 = vunpack.c.l.b16 %v543
  %v615 = vunpack.c.l.b16 %v544
  %v616 = vunpack.c.l.b16 %v545
  %v617 = vunpack.c.l.b16 %v546
  %v618 = vunpack.c.l.b16 %v547
  %v619 = vunpack.c.l.b16 %v548
  %v620 = vunpack.c.l.b16 %v549
  %v621 = vunpack.c.l.b16 %v550
  %v622 = vunpack.c.l.b16 %v551
  %v623 = vunpack.c.l.b16 %v552
  %v624 = vunpack.c.l.b16 %v553
  %v625 = vunpack.c.l.b16 %v554
  %v626 = vunpack.c.l.b16 %v555
  %v627 = vunpack.c.l.b16 %v556
  %v628 = vunpack.c.l.b16 %v557
  %v629 = vunpack.c.l.b16 %v558
  %v630 = vunpack.c.l.b16 %v559
  %v631 = vunpack.c.l.b16 %v560
  %v632 = vunpack.c.l.b16 %v561
  %v633 = vunpack.c.l.b16 %v562
  %v634 = vunpack.c.l.b16 %v563
  %v635 = vunpack.c.l.b16 %v564
  %v636 = vunpack.c.l.b16 %v565
  %v637 = vunpack.c.l.b16 %v566
  %v638 = vunpack.c.l.b16 %v567
  %v639 = vunpack.c.l.b16 %v568
  %v640 = vunpack.c.l.b16 %v569
  %v641 = vunpack.c.l.b16 %v570
  %v642 = vunpack.c.l.b16 %v571
  %v643 = vunpack.c.l.b16 %v572
  %v644 = vunpack.c.l.b16 %v573
  %v645 = vunpack.c.l.b16 %v574
  %v646 = vpack.c.b16 %v615, %v614
  %v647 = vpack.c.b16 %v617, %v616
  %v648 = vpack.c.b16 %v619, %v618
  %v649 = vpack.c.b16 %v621, %v620
  %v650 = vpack.c.b16 %v623, %v622
  %v651 = vpack.c.b16 %v625, %v624
  %v652 = vpack.c.b16 %v627, %v626
  %v653 = vpack.c.b16 %v629, %v628
  %v654 = vpack.c.b16 %v631, %v630
  %v655 = vpack.c.b16 %v633, %v632
  %v656 = vpack.c.b16 %v635, %v634
  %v657 = vpack.c.b16 %v637, %v636
  %v658 = vpack.c.b16 %v639, %v638
  %v659 = vpack.c.b16 %v641, %v640
  %v660 = vpack.c.b16 %v643, %v642
  %v661 = vpack.c.b16 %v645, %v644
  %678 = vmatprep.subr.bf16.mxu0 0
  %679 = vmatpush1.bf16.msra.mxu0 %v646
  %680 = vmatprep.subr.bf16.mxu0 0
  %681 = vmatpush1.bf16.msra.mxu0 %v647
  %682 = vmatprep.subr.bf16.mxu0 0
  %683 = vmatpush1.bf16.msra.mxu0 %v648
  %684 = vmatprep.subr.bf16.mxu0 0
  %685 = vmatpush1.bf16.msra.mxu0 %v649
  %686 = vmatprep.subr.bf16.mxu0 0
  %687 = vmatpush1.bf16.msra.mxu0 %v650
  %688 = vmatprep.subr.bf16.mxu0 0
  %689 = vmatpush1.bf16.msra.mxu0 %v651
  %690 = vmatprep.subr.bf16.mxu0 0
  %691 = vmatpush1.bf16.msra.mxu0 %v652
  %692 = vmatprep.subr.bf16.mxu0 0
  %693 = vmatpush1.bf16.msra.mxu0 %v653
  %694 = vmatprep.subr.bf16.mxu0 0
  %695 = vmatpush1.bf16.msra.mxu0 %v654
  %696 = vmatprep.subr.bf16.mxu0 0
  %697 = vmatpush1.bf16.msra.mxu0 %v655
  %698 = vmatprep.subr.bf16.mxu0 0
  %699 = vmatpush1.bf16.msra.mxu0 %v656
  %700 = vmatprep.subr.bf16.mxu0 0
  %701 = vmatpush1.bf16.msra.mxu0 %v657
  %702 = vmatprep.subr.bf16.mxu0 0
  %703 = vmatpush1.bf16.msra.mxu0 %v658
  %704 = vmatprep.subr.bf16.mxu0 0
  %705 = vmatpush1.bf16.msra.mxu0 %v659
  %706 = vmatprep.subr.bf16.mxu0 0
  %707 = vmatpush1.bf16.msra.mxu0 %v660
  %708 = vmatprep.subr.bf16.mxu0 0
  %709 = vmatpush1.bf16.msra.mxu0 %v661
  %710 = vmatprep.mubr.bf16.mxu0 %v542
  %711 = vmatmul.mubr.bf16.gmra.mrb[0].mxu0 %v541
  %v712 = vpop.f32.mrb[0].mxu0
  %v713 = vadd.f32 %v580, %v712
  %v714 = vpop.f32.mrb[0].mxu0
  %v715 = vpop.f32.mrb[0].mxu0
  %v716 = vadd.f32 %v580, %v715
  %v717 = vpop.f32.mrb[0].mxu0
  %718 = vdwg.mxu0
  %719 = vst [vmem:[%s7] sm:$0xff] %v713
  %720 = vst [vmem:[%s7 + $0x8] sm:$0xff] %v716
  // Predicated region
  $region30: #{acoustic_estimator_forward.13} parent=0 // pred_check
    _
  $region31: #{acoustic_estimator_forward.13} parent=0 // pred_check_branch
    %722 = sbr.rel (0) target = $region33
  $region32: #{acoustic_estimator_forward.13} parent=0 // pred_region
    _
  $region33: #{acoustic_estimator_forward.13} parent=0 // pred_fallthru
    _
  // Predicated region
  $region34: #{acoustic_estimator_forward.13} parent=0 // pred_check
    _
  $region35: #{acoustic_estimator_forward.13} parent=0 // pred_check_branch
    %724 = sbr.rel (0) target = $region37
  $region36: #{acoustic_estimator_forward.13} parent=0 // pred_region
    _
  $region37: #{acoustic_estimator_forward.13} parent=0 // pred_fallthru
    _

</llo_original>
